<compile_context>
chip_gen: v5e
topology: v5e:2x2
jax: 0.10.0
libtpu: 0.0.40
codegen_flags: <defaults>
</compile_context>

<pallas_src>
import functools

import jax
import jax.numpy as jnp
from jax.experimental import pallas as pl
from jax.experimental.pallas import tpu as pltpu

_MXU_M = 256  # MXU M dim on v6e/v7x; also a multiple of v5e's 128.


def _round_up(n, m):
    return ((n + m - 1) // m) * m


def feedforward_kernel(x_ref, w1_ref, b1_ref, w2_ref, b2_ref, w3_ref, b3_ref, o_ref):
    # block1: Linear -> ReLU -> Linear -> ReLU  (bf16 MXU inputs, f32 accumulation)
    x = x_ref[...].astype(jnp.bfloat16)  # in-kernel cast: x read once from HBM as f32
    h = jnp.dot(x, w1_ref[...], preferred_element_type=jnp.float32) + b1_ref[...]
    h = jnp.maximum(h, 0.0).astype(jnp.bfloat16)
    h = jnp.dot(h, w2_ref[...], preferred_element_type=jnp.float32) + b2_ref[...]
    h = jnp.maximum(h, 0.0).astype(jnp.bfloat16)
    # projector: Linear (no activation)
    o_ref[...] = (jnp.dot(h, w3_ref[...], preferred_element_type=jnp.float32)
                  + b3_ref[...]).astype(o_ref.dtype)


def _choose_tile_b(B, tile_b):
    """MXU-aligned batch tile; prefers >= 2 grid steps when the batch allows (megacore)."""
    tile_b = min(tile_b, _round_up(B, _MXU_M))
    tile_b = max(_MXU_M, _round_up(tile_b, _MXU_M))
    if B > _MXU_M and pl.cdiv(B, tile_b) < 2:
        tile_b = max(_MXU_M, _round_up(pl.cdiv(B, 2), _MXU_M))
    return tile_b


@functools.partial(jax.jit, static_argnames=("tile_b",))
def feedforward(x_nchw, params, *, tile_b=512):
    """x_nchw: [B, C, H, W] float32. params: pre-transposed weights (bf16) + biases (f32)."""
    B = x_nchw.shape[0]
    x_flat = x_nchw.reshape(B, -1)          # torch.flatten(x, start_dim=1); stays f32
    in_features = x_flat.shape[1]

    # Weights already bf16 from prepare_params(); astype is a no-op then.
    w1 = params["w1"].astype(jnp.bfloat16)
    w2 = params["w2"].astype(jnp.bfloat16)
    w3 = params["w3"].astype(jnp.bfloat16)
    b1, b2, b3 = params["b1"], params["b2"], params["b3"]
    hdim = w1.shape[1]
    out_features = w3.shape[1]

    tile_b = _choose_tile_b(B, tile_b)
    grid = (pl.cdiv(B, tile_b),)            # edge block masked by Pallas; no pad/slice

    # Advisory cost estimate for XLA's scheduler (count padded-edge rows as work).
    rows = grid[0] * tile_b
    flops = 2 * rows * (in_features * hdim + hdim * hdim + hdim * out_features)
    bytes_accessed = (
        B * in_features * 4                                # f32 activations in
        + (w1.size + w2.size + w3.size) * 2                # bf16 weights
        + (b1.size + b2.size + b3.size) * 4                # f32 biases
        + B * out_features * 4                             # f32 output
    )

    const = lambda i: (0, 0)  # weights/biases: same block every step -> VMEM resident
    out = pl.pallas_call(
        feedforward_kernel,
        out_shape=jax.ShapeDtypeStruct((B, out_features), jnp.float32),
        grid=grid,
        in_specs=[
            pl.BlockSpec((tile_b, in_features), lambda i: (i, 0)),   # x tile (f32)
            pl.BlockSpec((in_features, hdim), const),                # w1 (bf16)
            pl.BlockSpec((1, hdim), const),                          # b1 (f32)
            pl.BlockSpec((hdim, hdim), const),                       # w2 (bf16)
            pl.BlockSpec((1, hdim), const),                          # b2 (f32)
            pl.BlockSpec((hdim, out_features), const),               # w3 (bf16)
            pl.BlockSpec((1, out_features), const),                  # b3 (f32)
        ],
        out_specs=pl.BlockSpec((tile_b, out_features), lambda i: (i, 0)),
        compiler_params=pltpu.CompilerParams(
            dimension_semantics=("parallel",),
            vmem_limit_bytes=48 * 1024 * 1024,  # keeps big tiles usable on v5e (16 MiB default)
        ),
        cost_estimate=pl.CostEstimate(
            flops=flops, transcendentals=0, bytes_accessed=bytes_accessed),
    )(x_flat, w1, b1, w2, b2, w3, b3)

    return out


def init_params(key, in_features, hdim, out_features):
    """Deterministic synthetic init. Weights stored as [in, out] (transposed vs PyTorch)."""
    ks = jax.random.split(key, 6)
    scale1 = 1.0 / jnp.sqrt(in_features)
    scale2 = 1.0 / jnp.sqrt(hdim)
    return {
        "w1": jax.random.uniform(ks[0], (in_features, hdim), jnp.float32, -scale1, scale1),
        "b1": jax.random.uniform(ks[1], (1, hdim), jnp.float32, -scale1, scale1),
        "w2": jax.random.uniform(ks[2], (hdim, hdim), jnp.float32, -scale2, scale2),
        "b2": jax.random.uniform(ks[3], (1, hdim), jnp.float32, -scale2, scale2),
        "w3": jax.random.uniform(ks[4], (hdim, out_features), jnp.float32, -scale2, scale2),
        "b3": jax.random.uniform(ks[5], (1, out_features), jnp.float32, -scale2, scale2),
    }


def prepare_params(params):
    """One-time conversion of MXU weights to bf16 (do this once, outside the hot path)."""
    out = dict(params)
    for k in ("w1", "w2", "w3"):
        out[k] = params[k].astype(jnp.bfloat16)
    return out


def feedforward_ref(x_nchw, params):
    """Pure-JAX reference mirroring the kernel's mixed-precision math (bf16 MXU, f32 acc)."""
    x = x_nchw.reshape(x_nchw.shape[0], -1).astype(jnp.bfloat16)
    w1 = params["w1"].astype(jnp.bfloat16)
    w2 = params["w2"].astype(jnp.bfloat16)
    w3 = params["w3"].astype(jnp.bfloat16)
    h = jnp.dot(x, w1, preferred_element_type=jnp.float32) + params["b1"]
    h = jnp.maximum(h, 0.0).astype(jnp.bfloat16)
    h = jnp.dot(h, w2, preferred_element_type=jnp.float32) + params["b2"]
    h = jnp.maximum(h, 0.0).astype(jnp.bfloat16)
    return jnp.dot(h, w3, preferred_element_type=jnp.float32) + params["b3"]


def feedforward_ref_f32(x_nchw, params):
    """Full f32 reference of the PyTorch forward (sanity check on overall semantics)."""
    x = x_nchw.reshape(x_nchw.shape[0], -1)
    h = jnp.maximum(x @ params["w1"] + params["b1"], 0.0)
    h = jnp.maximum(h @ params["w2"] + params["b2"], 0.0)
    return h @ params["w3"] + params["b3"]


if __name__ == "__main__":
    # FeedForward(imgsize=16, out_features=128, in_channels=3) -> in_features = 16*16*3 = 768
    B, C, H, W = 2, 3, 16, 16
    imgsize, in_channels, out_features, hdim = 16, 3, 128, 512
    in_features = imgsize * imgsize * in_channels

    key = jax.random.PRNGKey(0)
    kx, kp = jax.random.split(key)
    x = jax.random.normal(kx, (B, C, H, W), dtype=jnp.float32)
    params_f32 = init_params(kp, in_features, hdim, out_features)
    params = prepare_params(params_f32)   # one-time bf16 weight conversion

    out = feedforward(x, params)
    out = jax.block_until_ready(out)
    assert out.shape == (B, out_features), out.shape

    # Tight check against the same mixed-precision math.
    ref = feedforward_ref(x, params_f32)
    assert jnp.allclose(out, ref, atol=1e-3, rtol=1e-3), float(jnp.max(jnp.abs(out - ref)))

    # Loose check against the pure-f32 PyTorch-equivalent forward (bf16 weight rounding).
    ref32 = feedforward_ref_f32(x, params_f32)
    assert jnp.allclose(out, ref32, atol=5e-2, rtol=5e-2), float(jnp.max(jnp.abs(out - ref32)))

    print("KERNEL_OK")
</pallas_src>

<mosaic_0001>
module attributes {stable_mosaic.version = 11 : i64} {
  func.func @feedforward_kernel(%arg0: i32, %arg1: memref<256x768xf32, #tpu.memory_space<vmem>>, %arg2: memref<768x512xbf16, #tpu.memory_space<vmem>>, %arg3: memref<1x512xf32, #tpu.memory_space<vmem>>, %arg4: memref<512x512xbf16, #tpu.memory_space<vmem>>, %arg5: memref<1x512xf32, #tpu.memory_space<vmem>>, %arg6: memref<512x128xbf16, #tpu.memory_space<vmem>>, %arg7: memref<1x128xf32, #tpu.memory_space<vmem>>, %arg8: memref<256x128xf32, #tpu.memory_space<vmem>>) attributes {dimension_semantics = [#tpu.dimension_semantics<parallel>], iteration_bounds = array<i64: 1>, scalar_prefetch = 0 : i64, scratch_operands = 0 : i64, tpu.core_type = #tpu.core_type<tc>, window_params = [{transform_indices = @transform_0, window_bounds = array<i64: 256, 768>}, {pipeline_mode = #tpu.pipeline_mode<synchronous>, transform_indices = @transform_1, window_bounds = array<i64: 768, 512>}, {pipeline_mode = #tpu.pipeline_mode<synchronous>, transform_indices = @transform_2, window_bounds = array<i64: 1, 512>}, {pipeline_mode = #tpu.pipeline_mode<synchronous>, transform_indices = @transform_3, window_bounds = array<i64: 512, 512>}, {pipeline_mode = #tpu.pipeline_mode<synchronous>, transform_indices = @transform_4, window_bounds = array<i64: 1, 512>}, {pipeline_mode = #tpu.pipeline_mode<synchronous>, transform_indices = @transform_5, window_bounds = array<i64: 512, 128>}, {pipeline_mode = #tpu.pipeline_mode<synchronous>, transform_indices = @transform_6, window_bounds = array<i64: 1, 128>}, {transform_indices = @transform_7, window_bounds = array<i64: 256, 128>}]} {
    %c0 = arith.constant 0 : index
    %c0_0 = arith.constant 0 : index
    %0 = vector.load %arg1[%c0, %c0_0] : memref<256x768xf32, #tpu.memory_space<vmem>>, vector<256x768xf32>
    %1 = arith.truncf %0 : vector<256x768xf32> to vector<256x768xbf16>
    %c0_1 = arith.constant 0 : index
    %c0_2 = arith.constant 0 : index
    %2 = vector.load %arg2[%c0_1, %c0_2] : memref<768x512xbf16, #tpu.memory_space<vmem>>, vector<768x512xbf16>
    %cst = arith.constant dense<0.000000e+00> : vector<256x512xf32>
    %3 = tpu.matmul %1, %2, %cst {dimension_numbers = #tpu.dot_dimension_numbers<[1], [0], [0], [1], [0, 0, 1, 1], [], []>} : vector<256x768xbf16>, vector<768x512xbf16>, vector<256x512xf32> -> vector<256x512xf32>
    %c0_3 = arith.constant 0 : index
    %c0_4 = arith.constant 0 : index
    %4 = vector.load %arg3[%c0_3, %c0_4] : memref<1x512xf32, #tpu.memory_space<vmem>>, vector<1x512xf32>
    %5 = vector.broadcast %4 : vector<1x512xf32> to vector<256x512xf32>
    %6 = arith.addf %3, %5 : vector<256x512xf32>
    %cst_5 = arith.constant 0.000000e+00 : f32
    %7 = vector.broadcast %cst_5 : f32 to vector<256x512xf32>
    %8 = arith.maximumf %6, %7 : vector<256x512xf32>
    %9 = arith.truncf %8 : vector<256x512xf32> to vector<256x512xbf16>
    %c0_6 = arith.constant 0 : index
    %c0_7 = arith.constant 0 : index
    %10 = vector.load %arg4[%c0_6, %c0_7] : memref<512x512xbf16, #tpu.memory_space<vmem>>, vector<512x512xbf16>
    %cst_8 = arith.constant dense<0.000000e+00> : vector<256x512xf32>
    %11 = tpu.matmul %9, %10, %cst_8 {dimension_numbers = #tpu.dot_dimension_numbers<[1], [0], [0], [1], [0, 0, 1, 1], [], []>} : vector<256x512xbf16>, vector<512x512xbf16>, vector<256x512xf32> -> vector<256x512xf32>
    %c0_9 = arith.constant 0 : index
    %c0_10 = arith.constant 0 : index
    %12 = vector.load %arg5[%c0_9, %c0_10] : memref<1x512xf32, #tpu.memory_space<vmem>>, vector<1x512xf32>
    %13 = vector.broadcast %12 : vector<1x512xf32> to vector<256x512xf32>
    %14 = arith.addf %11, %13 : vector<256x512xf32>
    %cst_11 = arith.constant 0.000000e+00 : f32
    %15 = vector.broadcast %cst_11 : f32 to vector<256x512xf32>
    %16 = arith.maximumf %14, %15 : vector<256x512xf32>
    %17 = arith.truncf %16 : vector<256x512xf32> to vector<256x512xbf16>
    %c0_12 = arith.constant 0 : index
    %c0_13 = arith.constant 0 : index
    %18 = vector.load %arg6[%c0_12, %c0_13] : memref<512x128xbf16, #tpu.memory_space<vmem>>, vector<512x128xbf16>
    %cst_14 = arith.constant dense<0.000000e+00> : vector<256x128xf32>
    %19 = tpu.matmul %17, %18, %cst_14 {dimension_numbers = #tpu.dot_dimension_numbers<[1], [0], [0], [1], [0, 0, 1, 1], [], []>} : vector<256x512xbf16>, vector<512x128xbf16>, vector<256x128xf32> -> vector<256x128xf32>
    %c0_15 = arith.constant 0 : index
    %c0_16 = arith.constant 0 : index
    %20 = vector.load %arg7[%c0_15, %c0_16] : memref<1x128xf32, #tpu.memory_space<vmem>>, vector<1x128xf32>
    %21 = vector.broadcast %20 : vector<1x128xf32> to vector<256x128xf32>
    %22 = arith.addf %19, %21 : vector<256x128xf32>
    %c0_17 = arith.constant 0 : index
    %c0_18 = arith.constant 0 : index
    %23 = vector.load %arg8[%c0_17, %c0_18] : memref<256x128xf32, #tpu.memory_space<vmem>>, vector<256x128xf32>
    tpu.vector_store %arg8[%c0_17, %c0_18], %22 {strides = array<i32>} : memref<256x128xf32, #tpu.memory_space<vmem>>, vector<256x128xf32>,
    return
  }
  func.func @transform_0(%arg0: i32) -> (i32, i32) {
    %c0_i32 = arith.constant 0 : i32
    %c0_i32_0 = arith.constant 0 : i32
    return %arg0, %c0_i32 : i32, i32
  }
  func.func @transform_1(%arg0: i32) -> (i32, i32) {
    %c0_i32 = arith.constant 0 : i32
    %c0_i32_0 = arith.constant 0 : i32
    %c0_i32_1 = arith.constant 0 : i32
    return %c0_i32, %c0_i32_0 : i32, i32
  }
  func.func @transform_2(%arg0: i32) -> (i32, i32) {
    %c0_i32 = arith.constant 0 : i32
    %c0_i32_0 = arith.constant 0 : i32
    %c0_i32_1 = arith.constant 0 : i32
    return %c0_i32, %c0_i32_0 : i32, i32
  }
  func.func @transform_3(%arg0: i32) -> (i32, i32) {
    %c0_i32 = arith.constant 0 : i32
    %c0_i32_0 = arith.constant 0 : i32
    %c0_i32_1 = arith.constant 0 : i32
    return %c0_i32, %c0_i32_0 : i32, i32
  }
  func.func @transform_4(%arg0: i32) -> (i32, i32) {
    %c0_i32 = arith.constant 0 : i32
    %c0_i32_0 = arith.constant 0 : i32
    %c0_i32_1 = arith.constant 0 : i32
    return %c0_i32, %c0_i32_0 : i32, i32
  }
  func.func @transform_5(%arg0: i32) -> (i32, i32) {
    %c0_i32 = arith.constant 0 : i32
    %c0_i32_0 = arith.constant 0 : i32
    %c0_i32_1 = arith.constant 0 : i32
    return %c0_i32, %c0_i32_0 : i32, i32
  }
  func.func @transform_6(%arg0: i32) -> (i32, i32) {
    %c0_i32 = arith.constant 0 : i32
    %c0_i32_0 = arith.constant 0 : i32
    %c0_i32_1 = arith.constant 0 : i32
    return %c0_i32, %c0_i32_0 : i32, i32
  }
  func.func @transform_7(%arg0: i32) -> (i32, i32) {
    %c0_i32 = arith.constant 0 : i32
    %c0_i32_0 = arith.constant 0 : i32
    return %arg0, %c0_i32 : i32, i32
  }
}

</mosaic_0001>

<llo_original>
// kernel: feedforward.1
$region0: #{feedforward.1}
  #allocation0 [shape = 'u32[]', space=smem, size = 0x4, offset = 0x4, fixed_abs, tag = 'smem constant byte address 0x4 - core index']
  #allocation1 [shape = 'u32[72,128]{1,0:T(1,128)}', space=vmem, size = 0x9000, scoped, tag = 'internal scratch']
  %s0 = inlined_call_operand.vmem [shape: f32[2,768], index: 0, kind: input, shape index: {}]
  %s1 = inlined_call_operand.hbm [shape: bf16[768,512], index: 1, kind: input, shape index: {}]
  %s2 = inlined_call_operand.vmem [shape: f32[1,512], index: 2, kind: input, shape index: {}]
  %s3 = inlined_call_operand.hbm [shape: bf16[512,512], index: 3, kind: input, shape index: {}]
  %s4 = inlined_call_operand.vmem [shape: f32[1,512], index: 4, kind: input, shape index: {}]
  %s5 = inlined_call_operand.hbm [shape: bf16[512,128], index: 5, kind: input, shape index: {}]
  %s6 = inlined_call_operand.vmem [shape: f32[1,128], index: 6, kind: input, shape index: {}]
  %s7 = inlined_call_operand.hbm [shape: f32[2,128], index: 7, kind: output, shape index: {}]
  %s8 = sld [smem:[#allocation0]]
  $region50: #{feedforward.1} parent=0
    _
  %s10 = ssub.s32 1, %s8
  %s11 = scalar_select 0, %s10, %s8
  $region1: #{feedforward.1} parent=0
    #allocation2 [shape = 'u8[786432]{0}', space=vmem, size = 0xc0000, scoped, tag = 'input window, operand 1, single buffered']
    #allocation3 [shape = 's32[1]{0}', space=sflag, size = 0x4, scoped, tag = 'scoped memory for feedforward.1']
    #allocation4 [shape = 's32[1]{0}', space=sflag, size = 0x4, scoped, tag = 'scoped memory for feedforward.1']
    #allocation5 [shape = 'u8[524288]{0}', space=vmem, size = 0x80000, scoped, tag = 'input window, operand 3, single buffered']
    #allocation6 [shape = 's32[1]{0}', space=sflag, size = 0x4, scoped, tag = 'scoped memory for feedforward.1']
    #allocation7 [shape = 'u8[131072]{0}', space=vmem, size = 0x20000, scoped, tag = 'input window, operand 5, single buffered']
    #allocation8 [shape = 'u8[131072]{0}', space=vmem, size = 0x20000, scoped, tag = 'output window, operand 0, single buffered']
    %12 = vsyncpa [#allocation3], 0
    %13 = vsyncpa [#allocation6], 0
    %14 = vsyncpa [#allocation4], 0
    // Predicated region
    $region2: #{feedforward.1} parent=1 // pred_check
      _
    $region3: #{feedforward.1} parent=1 // pred_check_branch
      %16 = sbr.rel (0) target = $region5
    $region4: #{feedforward.1} parent=1 // pred_region
      _
    $region5: #{feedforward.1} parent=1 // pred_fallthru
      _
    // Predicated region
    $region6: #{feedforward.1} parent=1 // pred_check
      _
    $region7: #{feedforward.1} parent=1 // pred_check_branch
      %18 = sbr.rel (0) target = $region9
    $region8: #{feedforward.1} parent=1 // pred_region
      %20 = vsyncadd [#allocation3], 0
      %s21 = sshll.u32 %s1, 4
      %s22 = int_to_ptr.hbm [resolvable:$true] %s21
      %s23 = sshll.u32 [#allocation2], 4
      %s24 = int_to_ptr.vmem [resolvable:$true] %s23
      %29 = dma.hbm_to_vmem [thread:$0]  %s22, 24576, %s24, [#allocation3], 256, 256, 16
    $region9: #{feedforward.1} parent=1 // pred_fallthru
      _
    // Predicated region
    $region10: #{feedforward.1} parent=1 // pred_check
      _
    $region11: #{feedforward.1} parent=1 // pred_check_branch
      %31 = sbr.rel (0) target = $region13
    $region12: #{feedforward.1} parent=1 // pred_region
      _
    $region13: #{feedforward.1} parent=1 // pred_fallthru
      _
    // Predicated region
    $region14: #{feedforward.1} parent=1 // pred_check
      _
    $region15: #{feedforward.1} parent=1 // pred_check_branch
      %33 = sbr.rel (0) target = $region17
    $region16: #{feedforward.1} parent=1 // pred_region
      %35 = vsyncadd [#allocation6], 0
      %s36 = sshll.u32 %s3, 4
      %s37 = int_to_ptr.hbm [resolvable:$true] %s36
      %s38 = sshll.u32 [#allocation5], 4
      %s39 = int_to_ptr.vmem [resolvable:$true] %s38
      %44 = dma.hbm_to_vmem [thread:$0]  %s37, 16384, %s39, [#allocation6], 256, 256, 16
    $region17: #{feedforward.1} parent=1 // pred_fallthru
      _
    // Predicated region
    $region18: #{feedforward.1} parent=1 // pred_check
      _
    $region19: #{feedforward.1} parent=1 // pred_check_branch
      %46 = sbr.rel (0) target = $region21
    $region20: #{feedforward.1} parent=1 // pred_region
      _
    $region21: #{feedforward.1} parent=1 // pred_fallthru
      _
    // Predicated region
    $region22: #{feedforward.1} parent=1 // pred_check
      _
    $region23: #{feedforward.1} parent=1 // pred_check_branch
      %48 = sbr.rel (0) target = $region25
    $region24: #{feedforward.1} parent=1 // pred_region
      %50 = vsyncadd [#allocation6], 0
      %s51 = sshll.u32 %s5, 4
      %s52 = int_to_ptr.hbm [resolvable:$true] %s51
      %s53 = sshll.u32 [#allocation7], 4
      %s54 = int_to_ptr.vmem [resolvable:$true] %s53
      %59 = dma.hbm_to_vmem [thread:$0]  %s52, 4096, %s54, [#allocation6], 64, 64, 4
    $region25: #{feedforward.1} parent=1 // pred_fallthru
      _
    // Predicated region
    $region26: #{feedforward.1} parent=1 // pred_check
      _
    $region27: #{feedforward.1} parent=1 // pred_check_branch
      %61 = sbr.rel (0) target = $region29
    $region28: #{feedforward.1} parent=1 // pred_region
      _
    $region29: #{feedforward.1} parent=1 // pred_fallthru
      _
    // Predicated region
    $region30: #{feedforward.1} parent=1 // pred_check
      _
    $region31: #{feedforward.1} parent=1 // pred_check_branch
      %63 = sbr.rel (0) target = $region33
    $region32: #{feedforward.1} parent=1 // pred_region
      %65 = dma.done [#allocation3], 24576
    $region33: #{feedforward.1} parent=1 // pred_fallthru
      _
    // Predicated region
    $region34: #{feedforward.1} parent=1 // pred_check
      _
    $region35: #{feedforward.1} parent=1 // pred_check_branch
      %67 = sbr.rel (0) target = $region37
    $region36: #{feedforward.1} parent=1 // pred_region
      %69 = dma.done [#allocation6], 16384
    $region37: #{feedforward.1} parent=1 // pred_fallthru
      _
    // Predicated region
    $region38: #{feedforward.1} parent=1 // pred_check
      _
    $region39: #{feedforward.1} parent=1 // pred_check_branch
      %71 = sbr.rel (0) target = $region41
    $region40: #{feedforward.1} parent=1 // pred_region
      %73 = dma.done [#allocation6], 4096
    $region41: #{feedforward.1} parent=1 // pred_fallthru
      _
    %v74 = vld [vmem:[%s0] sm:$0xff]
    %v75 = vld [vmem:[%s0 + $0x8] sm:$0xf]
    %v76 = vld [vmem:[%s0 + $0xc] sm:$0xff]
    %v77 = vld [vmem:[%s0 + $0x14] sm:$0xf]
    %v78 = vld [vmem:[%s0 + $0x18] sm:$0xff]
    %v79 = vld [vmem:[%s0 + $0x20] sm:$0xf]
    %v80 = vld [vmem:[%s0 + $0x24] sm:$0xff]
    %v81 = vld [vmem:[%s0 + $0x2c] sm:$0xf]
    %v82 = vld [vmem:[%s0 + $0x30] sm:$0xff]
    %v83 = vld [vmem:[%s0 + $0x38] sm:$0xf]
    %v84 = vld [vmem:[%s0 + $0x3c] sm:$0xff]
    %v85 = vld [vmem:[%s0 + $0x44] sm:$0xf]
    %v86 = vld [vmem:[%s0 + $0x48] sm:$0xff]
    %v87 = vld [vmem:[%s0 + $0x50] sm:$0xf]
    %v88 = vld [vmem:[%s0 + $0x54] sm:$0xff]
    %v89 = vld [vmem:[%s0 + $0x5c] sm:$0xf]
    %v90 = vld [vmem:[%s0 + $0x60] sm:$0xff]
    %v91 = vld [vmem:[%s0 + $0x68] sm:$0xf]
    %v92 = vld [vmem:[%s0 + $0x6c] sm:$0xff]
    %v93 = vld [vmem:[%s0 + $0x74] sm:$0xf]
    %v94 = vld [vmem:[%s0 + $0x78] sm:$0xff]
    %v95 = vld [vmem:[%s0 + $0x80] sm:$0xf]
    %v96 = vld [vmem:[%s0 + $0x84] sm:$0xff]
    %v97 = vld [vmem:[%s0 + $0x8c] sm:$0xf]
    %v98 = vld [vmem:[%s0 + $0x90] sm:$0xff]
    %v99 = vld [vmem:[%s0 + $0x98] sm:$0xf]
    %v100 = vld [vmem:[%s0 + $0x9c] sm:$0xff]
    %v101 = vld [vmem:[%s0 + $0xa4] sm:$0xf]
    %v102 = vld [vmem:[%s0 + $0xa8] sm:$0xff]
    %v103 = vld [vmem:[%s0 + $0xb0] sm:$0xf]
    %v104 = vld [vmem:[%s0 + $0xb4] sm:$0xff]
    %v105 = vld [vmem:[%s0 + $0xbc] sm:$0xf]
    %v106 = vld [vmem:[%s0 + $0xc0] sm:$0xff]
    %v107 = vld [vmem:[%s0 + $0xc8] sm:$0xf]
    %v108 = vld [vmem:[%s0 + $0xcc] sm:$0xff]
    %v109 = vld [vmem:[%s0 + $0xd4] sm:$0xf]
    %v110 = vld [vmem:[%s0 + $0xd8] sm:$0xff]
    %v111 = vld [vmem:[%s0 + $0xe0] sm:$0xf]
    %v112 = vld [vmem:[%s0 + $0xe4] sm:$0xff]
    %v113 = vld [vmem:[%s0 + $0xec] sm:$0xf]
    %v114 = vld [vmem:[%s0 + $0xf0] sm:$0xff]
    %v115 = vld [vmem:[%s0 + $0xf8] sm:$0xf]
    %v116 = vld [vmem:[%s0 + $0xfc] sm:$0xff]
    %v117 = vld [vmem:[%s0 + $0x104] sm:$0xf]
    %v118 = vld [vmem:[%s0 + $0x108] sm:$0xff]
    %v119 = vld [vmem:[%s0 + $0x110] sm:$0xf]
    %v120 = vld [vmem:[%s0 + $0x114] sm:$0xff]
    %v121 = vld [vmem:[%s0 + $0x11c] sm:$0xf]
    %v122 = vld [vmem:[%s0 + $0x120] sm:$0xff]
    %v123 = vld [vmem:[%s0 + $0x128] sm:$0xf]
    %v124 = vld [vmem:[%s0 + $0x12c] sm:$0xff]
    %v125 = vld [vmem:[%s0 + $0x134] sm:$0xf]
    %v126 = vld [vmem:[%s0 + $0x138] sm:$0xff]
    %v127 = vld [vmem:[%s0 + $0x140] sm:$0xf]
    %v128 = vld [vmem:[%s0 + $0x144] sm:$0xff]
    %v129 = vld [vmem:[%s0 + $0x14c] sm:$0xf]
    %v130 = vld [vmem:[%s0 + $0x150] sm:$0xff]
    %v131 = vld [vmem:[%s0 + $0x158] sm:$0xf]
    %v132 = vld [vmem:[%s0 + $0x15c] sm:$0xff]
    %v133 = vld [vmem:[%s0 + $0x164] sm:$0xf]
    %v134 = vld [vmem:[%s0 + $0x168] sm:$0xff]
    %v135 = vld [vmem:[%s0 + $0x170] sm:$0xf]
    %v136 = vld [vmem:[%s0 + $0x174] sm:$0xff]
    %v137 = vld [vmem:[%s0 + $0x17c] sm:$0xf]
    %v138 = vld [vmem:[%s0 + $0x180] sm:$0xff]
    %v139 = vld [vmem:[%s0 + $0x188] sm:$0xf]
    %v140 = vld [vmem:[%s0 + $0x18c] sm:$0xff]
    %v141 = vld [vmem:[%s0 + $0x194] sm:$0xf]
    %v142 = vld [vmem:[%s0 + $0x198] sm:$0xff]
    %v143 = vld [vmem:[%s0 + $0x1a0] sm:$0xf]
    %v144 = vld [vmem:[%s0 + $0x1a4] sm:$0xff]
    %v145 = vld [vmem:[%s0 + $0x1ac] sm:$0xf]
    %v146 = vld [vmem:[%s0 + $0x1b0] sm:$0xff]
    %v147 = vld [vmem:[%s0 + $0x1b8] sm:$0xf]
    %v148 = vld [vmem:[%s0 + $0x1bc] sm:$0xff]
    %v149 = vld [vmem:[%s0 + $0x1c4] sm:$0xf]
    %v150 = vld [vmem:[%s0 + $0x1c8] sm:$0xff]
    %v151 = vld [vmem:[%s0 + $0x1d0] sm:$0xf]
    %v152 = vld [vmem:[%s0 + $0x1d4] sm:$0xff]
    %v153 = vld [vmem:[%s0 + $0x1dc] sm:$0xf]
    %v154 = vld [vmem:[%s0 + $0x1e0] sm:$0xff]
    %v155 = vld [vmem:[%s0 + $0x1e8] sm:$0xf]
    %v156 = vld [vmem:[%s0 + $0x1ec] sm:$0xff]
    %v157 = vld [vmem:[%s0 + $0x1f4] sm:$0xf]
    %v158 = vld [vmem:[%s0 + $0x1f8] sm:$0xff]
    %v159 = vld [vmem:[%s0 + $0x200] sm:$0xf]
    %v160 = vld [vmem:[%s0 + $0x204] sm:$0xff]
    %v161 = vld [vmem:[%s0 + $0x20c] sm:$0xf]
    %v162 = vld [vmem:[%s0 + $0x210] sm:$0xff]
    %v163 = vld [vmem:[%s0 + $0x218] sm:$0xf]
    %v164 = vld [vmem:[%s0 + $0x21c] sm:$0xff]
    %v165 = vld [vmem:[%s0 + $0x224] sm:$0xf]
    %v166 = vld [vmem:[%s0 + $0x228] sm:$0xff]
    %v167 = vld [vmem:[%s0 + $0x230] sm:$0xf]
    %v168 = vld [vmem:[%s0 + $0x234] sm:$0xff]
    %v169 = vld [vmem:[%s0 + $0x23c] sm:$0xf]
    %v170 = vld [vmem:[%s0 + $0x240] sm:$0xff]
    %v171 = vld [vmem:[%s0 + $0x248] sm:$0xf]
    %v172 = vld [vmem:[%s0 + $0x24c] sm:$0xff]
    %v173 = vld [vmem:[%s0 + $0x254] sm:$0xf]
    %v174 = vld [vmem:[%s0 + $0x258] sm:$0xff]
    %v175 = vld [vmem:[%s0 + $0x260] sm:$0xf]
    %v176 = vld [vmem:[%s0 + $0x264] sm:$0xff]
    %v177 = vld [vmem:[%s0 + $0x26c] sm:$0xf]
    %v178 = vld [vmem:[%s0 + $0x270] sm:$0xff]
    %v179 = vld [vmem:[%s0 + $0x278] sm:$0xf]
    %v180 = vld [vmem:[%s0 + $0x27c] sm:$0xff]
    %v181 = vld [vmem:[%s0 + $0x284] sm:$0xf]
    %v182 = vld [vmem:[%s0 + $0x288] sm:$0xff]
    %v183 = vld [vmem:[%s0 + $0x290] sm:$0xf]
    %v184 = vld [vmem:[%s0 + $0x294] sm:$0xff]
    %v185 = vld [vmem:[%s0 + $0x29c] sm:$0xf]
    %v186 = vld [vmem:[%s0 + $0x2a0] sm:$0xff]
    %v187 = vld [vmem:[%s0 + $0x2a8] sm:$0xf]
    %v188 = vld [vmem:[%s0 + $0x2ac] sm:$0xff]
    %v189 = vld [vmem:[%s0 + $0x2b4] sm:$0xf]
    %v190 = vld [vmem:[%s0 + $0x2b8] sm:$0xff]
    %v191 = vld [vmem:[%s0 + $0x2c0] sm:$0xf]
    %v192 = vld [vmem:[%s0 + $0x2c4] sm:$0xff]
    %v193 = vld [vmem:[%s0 + $0x2cc] sm:$0xf]
    %v194 = vld [vmem:[%s0 + $0x2d0] sm:$0xff]
    %v195 = vld [vmem:[%s0 + $0x2d8] sm:$0xf]
    %v196 = vld [vmem:[%s0 + $0x2dc] sm:$0xff]
    %v197 = vld [vmem:[%s0 + $0x2e4] sm:$0xf]
    %v198 = vld [vmem:[%s0 + $0x2e8] sm:$0xff]
    %v199 = vld [vmem:[%s0 + $0x2f0] sm:$0xf]
    %v200 = vld [vmem:[%s0 + $0x2f4] sm:$0xff]
    %v201 = vld [vmem:[%s0 + $0x2fc] sm:$0xf]
    %v202 = vld [vmem:[%s0 + $0x300] sm:$0xff]
    %v203 = vld [vmem:[%s0 + $0x308] sm:$0xf]
    %v204 = vld [vmem:[%s0 + $0x30c] sm:$0xff]
    %v205 = vld [vmem:[%s0 + $0x314] sm:$0xf]
    %v206 = vld [vmem:[%s0 + $0x318] sm:$0xff]
    %v207 = vld [vmem:[%s0 + $0x320] sm:$0xf]
    %v208 = vld [vmem:[%s0 + $0x324] sm:$0xff]
    %v209 = vld [vmem:[%s0 + $0x32c] sm:$0xf]
    %v210 = vld [vmem:[%s0 + $0x330] sm:$0xff]
    %v211 = vld [vmem:[%s0 + $0x338] sm:$0xf]
    %v212 = vld [vmem:[%s0 + $0x33c] sm:$0xff]
    %v213 = vld [vmem:[%s0 + $0x344] sm:$0xf]
    %v214 = vld [vmem:[%s0 + $0x348] sm:$0xff]
    %v215 = vld [vmem:[%s0 + $0x350] sm:$0xf]
    %v216 = vld [vmem:[%s0 + $0x354] sm:$0xff]
    %v217 = vld [vmem:[%s0 + $0x35c] sm:$0xf]
    %v218 = vld [vmem:[%s0 + $0x360] sm:$0xff]
    %v219 = vld [vmem:[%s0 + $0x368] sm:$0xf]
    %v220 = vld [vmem:[%s0 + $0x36c] sm:$0xff]
    %v221 = vld [vmem:[%s0 + $0x374] sm:$0xf]
    %v222 = vld [vmem:[%s0 + $0x378] sm:$0xff]
    %v223 = vld [vmem:[%s0 + $0x380] sm:$0xf]
    %v224 = vld [vmem:[%s0 + $0x384] sm:$0xff]
    %v225 = vld [vmem:[%s0 + $0x38c] sm:$0xf]
    %v226 = vld [vmem:[%s0 + $0x390] sm:$0xff]
    %v227 = vld [vmem:[%s0 + $0x398] sm:$0xf]
    %v228 = vld [vmem:[%s0 + $0x39c] sm:$0xff]
    %v229 = vld [vmem:[%s0 + $0x3a4] sm:$0xf]
    %v230 = vld [vmem:[%s0 + $0x3a8] sm:$0xff]
    %v231 = vld [vmem:[%s0 + $0x3b0] sm:$0xf]
    %v232 = vld [vmem:[%s0 + $0x3b4] sm:$0xff]
    %v233 = vld [vmem:[%s0 + $0x3bc] sm:$0xf]
    %v234 = vld [vmem:[%s0 + $0x3c0] sm:$0xff]
    %v235 = vld [vmem:[%s0 + $0x3c8] sm:$0xf]
    %v236 = vld [vmem:[%s0 + $0x3cc] sm:$0xff]
    %v237 = vld [vmem:[%s0 + $0x3d4] sm:$0xf]
    %v238 = vld [vmem:[%s0 + $0x3d8] sm:$0xff]
    %v239 = vld [vmem:[%s0 + $0x3e0] sm:$0xf]
    %v240 = vld [vmem:[%s0 + $0x3e4] sm:$0xff]
    %v241 = vld [vmem:[%s0 + $0x3ec] sm:$0xf]
    %v242 = vld [vmem:[%s0 + $0x3f0] sm:$0xff]
    %v243 = vld [vmem:[%s0 + $0x3f8] sm:$0xf]
    %v244 = vld [vmem:[%s0 + $0x3fc] sm:$0xff]
    %v245 = vld [vmem:[%s0 + $0x404] sm:$0xf]
    %v246 = vld [vmem:[%s0 + $0x408] sm:$0xff]
    %v247 = vld [vmem:[%s0 + $0x410] sm:$0xf]
    %v248 = vld [vmem:[%s0 + $0x414] sm:$0xff]
    %v249 = vld [vmem:[%s0 + $0x41c] sm:$0xf]
    %v250 = vld [vmem:[%s0 + $0x420] sm:$0xff]
    %v251 = vld [vmem:[%s0 + $0x428] sm:$0xf]
    %v252 = vld [vmem:[%s0 + $0x42c] sm:$0xff]
    %v253 = vld [vmem:[%s0 + $0x434] sm:$0xf]
    %v254 = vld [vmem:[%s0 + $0x438] sm:$0xff]
    %v255 = vld [vmem:[%s0 + $0x440] sm:$0xf]
    %v256 = vld [vmem:[%s0 + $0x444] sm:$0xff]
    %v257 = vld [vmem:[%s0 + $0x44c] sm:$0xf]
    %v258 = vld [vmem:[%s0 + $0x450] sm:$0xff]
    %v259 = vld [vmem:[%s0 + $0x458] sm:$0xf]
    %v260 = vld [vmem:[%s0 + $0x45c] sm:$0xff]
    %v261 = vld [vmem:[%s0 + $0x464] sm:$0xf]
    %v262 = vld [vmem:[%s0 + $0x468] sm:$0xff]
    %v263 = vld [vmem:[%s0 + $0x470] sm:$0xf]
    %v264 = vld [vmem:[%s0 + $0x474] sm:$0xff]
    %v265 = vld [vmem:[%s0 + $0x47c] sm:$0xf]
    %v266 = vld [vmem:[%s0 + $0x480] sm:$0xff]
    %v267 = vld [vmem:[%s0 + $0x488] sm:$0xf]
    %v268 = vld [vmem:[%s0 + $0x48c] sm:$0xff]
    %v269 = vld [vmem:[%s0 + $0x494] sm:$0xf]
    %v270 = vld [vmem:[%s0 + $0x498] sm:$0xff]
    %v271 = vld [vmem:[%s0 + $0x4a0] sm:$0xf]
    %v272 = vld [vmem:[%s0 + $0x4a4] sm:$0xff]
    %v273 = vld [vmem:[%s0 + $0x4ac] sm:$0xf]
    %v274 = vld [vmem:[%s0 + $0x4b0] sm:$0xff]
    %v275 = vld [vmem:[%s0 + $0x4b8] sm:$0xf]
    %v276 = vld [vmem:[%s0 + $0x4bc] sm:$0xff]
    %v277 = vld [vmem:[%s0 + $0x4c4] sm:$0xf]
    %v278 = vld [vmem:[%s0 + $0x4c8] sm:$0xff]
    %v279 = vld [vmem:[%s0 + $0x4d0] sm:$0xf]
    %v280 = vld [vmem:[%s0 + $0x4d4] sm:$0xff]
    %v281 = vld [vmem:[%s0 + $0x4dc] sm:$0xf]
    %v282 = vld [vmem:[%s0 + $0x4e0] sm:$0xff]
    %v283 = vld [vmem:[%s0 + $0x4e8] sm:$0xf]
    %v284 = vld [vmem:[%s0 + $0x4ec] sm:$0xff]
    %v285 = vld [vmem:[%s0 + $0x4f4] sm:$0xf]
    %v286 = vld [vmem:[%s0 + $0x4f8] sm:$0xff]
    %v287 = vld [vmem:[%s0 + $0x500] sm:$0xf]
    %v288 = vld [vmem:[%s0 + $0x504] sm:$0xff]
    %v289 = vld [vmem:[%s0 + $0x50c] sm:$0xf]
    %v290 = vld [vmem:[%s0 + $0x510] sm:$0xff]
    %v291 = vld [vmem:[%s0 + $0x518] sm:$0xf]
    %v292 = vld [vmem:[%s0 + $0x51c] sm:$0xff]
    %v293 = vld [vmem:[%s0 + $0x524] sm:$0xf]
    %v294 = vld [vmem:[%s0 + $0x528] sm:$0xff]
    %v295 = vld [vmem:[%s0 + $0x530] sm:$0xf]
    %v296 = vld [vmem:[%s0 + $0x534] sm:$0xff]
    %v297 = vld [vmem:[%s0 + $0x53c] sm:$0xf]
    %v298 = vld [vmem:[%s0 + $0x540] sm:$0xff]
    %v299 = vld [vmem:[%s0 + $0x548] sm:$0xf]
    %v300 = vld [vmem:[%s0 + $0x54c] sm:$0xff]
    %v301 = vld [vmem:[%s0 + $0x554] sm:$0xf]
    %v302 = vld [vmem:[%s0 + $0x558] sm:$0xff]
    %v303 = vld [vmem:[%s0 + $0x560] sm:$0xf]
    %v304 = vld [vmem:[%s0 + $0x564] sm:$0xff]
    %v305 = vld [vmem:[%s0 + $0x56c] sm:$0xf]
    %v306 = vld [vmem:[%s0 + $0x570] sm:$0xff]
    %v307 = vld [vmem:[%s0 + $0x578] sm:$0xf]
    %v308 = vld [vmem:[%s0 + $0x57c] sm:$0xff]
    %v309 = vld [vmem:[%s0 + $0x584] sm:$0xf]
    %v310 = vld [vmem:[%s0 + $0x588] sm:$0xff]
    %v311 = vld [vmem:[%s0 + $0x590] sm:$0xf]
    %v312 = vld [vmem:[%s0 + $0x594] sm:$0xff]
    %v313 = vld [vmem:[%s0 + $0x59c] sm:$0xf]
    %v314 = vld [vmem:[%s0 + $0x5a0] sm:$0xff]
    %v315 = vld [vmem:[%s0 + $0x5a8] sm:$0xf]
    %v316 = vld [vmem:[%s0 + $0x5ac] sm:$0xff]
    %v317 = vld [vmem:[%s0 + $0x5b4] sm:$0xf]
    %v318 = vld [vmem:[%s0 + $0x5b8] sm:$0xff]
    %v319 = vld [vmem:[%s0 + $0x5c0] sm:$0xf]
    %v320 = vld [vmem:[%s0 + $0x5c4] sm:$0xff]
    %v321 = vld [vmem:[%s0 + $0x5cc] sm:$0xf]
    %v322 = vld [vmem:[%s0 + $0x5d0] sm:$0xff]
    %v323 = vld [vmem:[%s0 + $0x5d8] sm:$0xf]
    %v324 = vld [vmem:[%s0 + $0x5dc] sm:$0xff]
    %v325 = vld [vmem:[%s0 + $0x5e4] sm:$0xf]
    %v326 = vld [vmem:[%s0 + $0x5e8] sm:$0xff]
    %v327 = vld [vmem:[%s0 + $0x5f0] sm:$0xf]
    %v328 = vld [vmem:[%s0 + $0x5f4] sm:$0xff]
    %v329 = vld [vmem:[%s0 + $0x5fc] sm:$0xf]
    %586 = vst [vmem:[#allocation1] ss:$4 sm:$0xff] %v74
    %s587 = scalar_lea.vmem [#allocation1], 1
    %588 = vst [vmem:[%s587] ss:$4 sm:$0xff] %v76
    %s589 = scalar_lea.vmem [#allocation1], 2
    %590 = vst [vmem:[%s589] ss:$4 sm:$0xff] %v78
    %s591 = scalar_lea.vmem [#allocation1], 3
    %592 = vst [vmem:[%s591] ss:$4 sm:$0xff] %v80
    %s593 = scalar_lea.vmem [#allocation1], 32
    %594 = vst [vmem:[%s593] ss:$4 sm:$0xff] %v75
    %s595 = scalar_lea.vmem [#allocation1], 33
    %596 = vst [vmem:[%s595] ss:$4 sm:$0xff] %v77
    %s597 = scalar_lea.vmem [#allocation1], 34
    %598 = vst [vmem:[%s597] ss:$4 sm:$0xff] %v79
    %s599 = scalar_lea.vmem [#allocation1], 35
    %600 = vst [vmem:[%s599] ss:$4 sm:$0xff] %v81
    %v601 = vld.sshfl [vmem:[#allocation1] sm:$0xff pattern:$0x73625140]
    %v602 = vld.sshfl [vmem:[#allocation1 + $0x8] sm:$0xff pattern:$0x73625140]
    %v603 = vld.sshfl [vmem:[#allocation1 + $0x10] sm:$0xff pattern:$0x73625140]
    %v604 = vld.sshfl [vmem:[#allocation1 + $0x18] sm:$0xff pattern:$0x73625140]
    %v605 = vld.sshfl [vmem:[#allocation1 + $0x20] sm:$0xff pattern:$0x73625140]
    %v606 = vld.sshfl [vmem:[#allocation1 + $0x28] sm:$0xff pattern:$0x73625140]
    %607 = vst [vmem:[#allocation1] ss:$4 sm:$0xff] %v82
    %608 = vst [vmem:[%s587] ss:$4 sm:$0xff] %v84
    %609 = vst [vmem:[%s589] ss:$4 sm:$0xff] %v86
    %610 = vst [vmem:[%s591] ss:$4 sm:$0xff] %v88
    %611 = vst [vmem:[%s593] ss:$4 sm:$0xff] %v83
    %612 = vst [vmem:[%s595] ss:$4 sm:$0xff] %v85
    %613 = vst [vmem:[%s597] ss:$4 sm:$0xff] %v87
    %614 = vst [vmem:[%s599] ss:$4 sm:$0xff] %v89
    %v615 = vld.sshfl [vmem:[#allocation1] sm:$0xff pattern:$0x73625140]
    %v616 = vld.sshfl [vmem:[#allocation1 + $0x8] sm:$0xff pattern:$0x73625140]
    %v617 = vld.sshfl [vmem:[#allocation1 + $0x10] sm:$0xff pattern:$0x73625140]
    %v618 = vld.sshfl [vmem:[#allocation1 + $0x18] sm:$0xff pattern:$0x73625140]
    %v619 = vld.sshfl [vmem:[#allocation1 + $0x20] sm:$0xff pattern:$0x73625140]
    %v620 = vld.sshfl [vmem:[#allocation1 + $0x28] sm:$0xff pattern:$0x73625140]
    %621 = vst [vmem:[#allocation1] ss:$4 sm:$0xff] %v90
    %622 = vst [vmem:[%s587] ss:$4 sm:$0xff] %v92
    %623 = vst [vmem:[%s589] ss:$4 sm:$0xff] %v94
    %624 = vst [vmem:[%s591] ss:$4 sm:$0xff] %v96
    %625 = vst [vmem:[%s593] ss:$4 sm:$0xff] %v91
    %626 = vst [vmem:[%s595] ss:$4 sm:$0xff] %v93
    %627 = vst [vmem:[%s597] ss:$4 sm:$0xff] %v95
    %628 = vst [vmem:[%s599] ss:$4 sm:$0xff] %v97
    %v629 = vld.sshfl [vmem:[#allocation1] sm:$0xff pattern:$0x73625140]
    %v630 = vld.sshfl [vmem:[#allocation1 + $0x8] sm:$0xff pattern:$0x73625140]
    %v631 = vld.sshfl [vmem:[#allocation1 + $0x10] sm:$0xff pattern:$0x73625140]
    %v632 = vld.sshfl [vmem:[#allocation1 + $0x18] sm:$0xff pattern:$0x73625140]
    %v633 = vld.sshfl [vmem:[#allocation1 + $0x20] sm:$0xff pattern:$0x73625140]
    %v634 = vld.sshfl [vmem:[#allocation1 + $0x28] sm:$0xff pattern:$0x73625140]
    %635 = vst [vmem:[#allocation1] ss:$4 sm:$0xff] %v98
    %636 = vst [vmem:[%s587] ss:$4 sm:$0xff] %v100
    %637 = vst [vmem:[%s589] ss:$4 sm:$0xff] %v102
    %638 = vst [vmem:[%s591] ss:$4 sm:$0xff] %v104
    %639 = vst [vmem:[%s593] ss:$4 sm:$0xff] %v99
    %640 = vst [vmem:[%s595] ss:$4 sm:$0xff] %v101
    %641 = vst [vmem:[%s597] ss:$4 sm:$0xff] %v103
    %642 = vst [vmem:[%s599] ss:$4 sm:$0xff] %v105
    %v643 = vld.sshfl [vmem:[#allocation1] sm:$0xff pattern:$0x73625140]
    %v644 = vld.sshfl [vmem:[#allocation1 + $0x8] sm:$0xff pattern:$0x73625140]
    %v645 = vld.sshfl [vmem:[#allocation1 + $0x10] sm:$0xff pattern:$0x73625140]
    %v646 = vld.sshfl [vmem:[#allocation1 + $0x18] sm:$0xff pattern:$0x73625140]
    %v647 = vld.sshfl [vmem:[#allocation1 + $0x20] sm:$0xff pattern:$0x73625140]
    %v648 = vld.sshfl [vmem:[#allocation1 + $0x28] sm:$0xff pattern:$0x73625140]
    %649 = vst [vmem:[#allocation1] ss:$4 sm:$0xff] %v106
    %650 = vst [vmem:[%s587] ss:$4 sm:$0xff] %v108
    %651 = vst [vmem:[%s589] ss:$4 sm:$0xff] %v110
    %652 = vst [vmem:[%s591] ss:$4 sm:$0xff] %v112
    %653 = vst [vmem:[%s593] ss:$4 sm:$0xff] %v107
    %654 = vst [vmem:[%s595] ss:$4 sm:$0xff] %v109
    %655 = vst [vmem:[%s597] ss:$4 sm:$0xff] %v111
    %656 = vst [vmem:[%s599] ss:$4 sm:$0xff] %v113
    %v657 = vld.sshfl [vmem:[#allocation1] sm:$0xff pattern:$0x73625140]
    %v658 = vld.sshfl [vmem:[#allocation1 + $0x8] sm:$0xff pattern:$0x73625140]
    %v659 = vld.sshfl [vmem:[#allocation1 + $0x10] sm:$0xff pattern:$0x73625140]
    %v660 = vld.sshfl [vmem:[#allocation1 + $0x18] sm:$0xff pattern:$0x73625140]
    %v661 = vld.sshfl [vmem:[#allocation1 + $0x20] sm:$0xff pattern:$0x73625140]
    %v662 = vld.sshfl [vmem:[#allocation1 + $0x28] sm:$0xff pattern:$0x73625140]
    %663 = vst [vmem:[#allocation1] ss:$4 sm:$0xff] %v114
    %664 = vst [vmem:[%s587] ss:$4 sm:$0xff] %v116
    %665 = vst [vmem:[%s589] ss:$4 sm:$0xff] %v118
    %666 = vst [vmem:[%s591] ss:$4 sm:$0xff] %v120
    %667 = vst [vmem:[%s593] ss:$4 sm:$0xff] %v115
    %668 = vst [vmem:[%s595] ss:$4 sm:$0xff] %v117
    %669 = vst [vmem:[%s597] ss:$4 sm:$0xff] %v119
    %670 = vst [vmem:[%s599] ss:$4 sm:$0xff] %v121
    %v671 = vld.sshfl [vmem:[#allocation1] sm:$0xff pattern:$0x73625140]
    %v672 = vld.sshfl [vmem:[#allocation1 + $0x8] sm:$0xff pattern:$0x73625140]
    %v673 = vld.sshfl [vmem:[#allocation1 + $0x10] sm:$0xff pattern:$0x73625140]
    %v674 = vld.sshfl [vmem:[#allocation1 + $0x18] sm:$0xff pattern:$0x73625140]
    %v675 = vld.sshfl [vmem:[#allocation1 + $0x20] sm:$0xff pattern:$0x73625140]
    %v676 = vld.sshfl [vmem:[#allocation1 + $0x28] sm:$0xff pattern:$0x73625140]
    %677 = vst [vmem:[#allocation1] ss:$4 sm:$0xff] %v122
    %678 = vst [vmem:[%s587] ss:$4 sm:$0xff] %v124
    %679 = vst [vmem:[%s589] ss:$4 sm:$0xff] %v126
    %680 = vst [vmem:[%s591] ss:$4 sm:$0xff] %v128
    %681 = vst [vmem:[%s593] ss:$4 sm:$0xff] %v123
    %682 = vst [vmem:[%s595] ss:$4 sm:$0xff] %v125
    %683 = vst [vmem:[%s597] ss:$4 sm:$0xff] %v127
    %684 = vst [vmem:[%s599] ss:$4 sm:$0xff] %v129
    %v685 = vld.sshfl [vmem:[#allocation1] sm:$0xff pattern:$0x73625140]
    %v686 = vld.sshfl [vmem:[#allocation1 + $0x8] sm:$0xff pattern:$0x73625140]
    %v687 = vld.sshfl [vmem:[#allocation1 + $0x10] sm:$0xff pattern:$0x73625140]
    %v688 = vld.sshfl [vmem:[#allocation1 + $0x18] sm:$0xff pattern:$0x73625140]
    %v689 = vld.sshfl [vmem:[#allocation1 + $0x20] sm:$0xff pattern:$0x73625140]
    %v690 = vld.sshfl [vmem:[#allocation1 + $0x28] sm:$0xff pattern:$0x73625140]
    %691 = vst [vmem:[#allocation1] ss:$4 sm:$0xff] %v130
    %692 = vst [vmem:[%s587] ss:$4 sm:$0xff] %v132
    %693 = vst [vmem:[%s589] ss:$4 sm:$0xff] %v134
    %694 = vst [vmem:[%s591] ss:$4 sm:$0xff] %v136
    %695 = vst [vmem:[%s593] ss:$4 sm:$0xff] %v131
    %696 = vst [vmem:[%s595] ss:$4 sm:$0xff] %v133
    %697 = vst [vmem:[%s597] ss:$4 sm:$0xff] %v135
    %698 = vst [vmem:[%s599] ss:$4 sm:$0xff] %v137
    %v699 = vld.sshfl [vmem:[#allocation1] sm:$0xff pattern:$0x73625140]
    %v700 = vld.sshfl [vmem:[#allocation1 + $0x8] sm:$0xff pattern:$0x73625140]
    %v701 = vld.sshfl [vmem:[#allocation1 + $0x10] sm:$0xff pattern:$0x73625140]
    %v702 = vld.sshfl [vmem:[#allocation1 + $0x18] sm:$0xff pattern:$0x73625140]
    %v703 = vld.sshfl [vmem:[#allocation1 + $0x20] sm:$0xff pattern:$0x73625140]
    %v704 = vld.sshfl [vmem:[#allocation1 + $0x28] sm:$0xff pattern:$0x73625140]
    %705 = vst [vmem:[#allocation1] ss:$4 sm:$0xff] %v138
    %706 = vst [vmem:[%s587] ss:$4 sm:$0xff] %v140
    %707 = vst [vmem:[%s589] ss:$4 sm:$0xff] %v142
    %708 = vst [vmem:[%s591] ss:$4 sm:$0xff] %v144
    %709 = vst [vmem:[%s593] ss:$4 sm:$0xff] %v139
    %710 = vst [vmem:[%s595] ss:$4 sm:$0xff] %v141
    %711 = vst [vmem:[%s597] ss:$4 sm:$0xff] %v143
    %712 = vst [vmem:[%s599] ss:$4 sm:$0xff] %v145
    %v713 = vld.sshfl [vmem:[#allocation1] sm:$0xff pattern:$0x73625140]
    %v714 = vld.sshfl [vmem:[#allocation1 + $0x8] sm:$0xff pattern:$0x73625140]
    %v715 = vld.sshfl [vmem:[#allocation1 + $0x10] sm:$0xff pattern:$0x73625140]
    %v716 = vld.sshfl [vmem:[#allocation1 + $0x18] sm:$0xff pattern:$0x73625140]
    %v717 = vld.sshfl [vmem:[#allocation1 + $0x20] sm:$0xff pattern:$0x73625140]
    %v718 = vld.sshfl [vmem:[#allocation1 + $0x28] sm:$0xff pattern:$0x73625140]
    %719 = vst [vmem:[#allocation1] ss:$4 sm:$0xff] %v146
    %720 = vst [vmem:[%s587] ss:$4 sm:$0xff] %v148
    %721 = vst [vmem:[%s589] ss:$4 sm:$0xff] %v150
    %722 = vst [vmem:[%s591] ss:$4 sm:$0xff] %v152
    %723 = vst [vmem:[%s593] ss:$4 sm:$0xff] %v147
    %724 = vst [vmem:[%s595] ss:$4 sm:$0xff] %v149
    %725 = vst [vmem:[%s597] ss:$4 sm:$0xff] %v151
    %726 = vst [vmem:[%s599] ss:$4 sm:$0xff] %v153
    %v727 = vld.sshfl [vmem:[#allocation1] sm:$0xff pattern:$0x73625140]
    %v728 = vld.sshfl [vmem:[#allocation1 + $0x8] sm:$0xff pattern:$0x73625140]
    %v729 = vld.sshfl [vmem:[#allocation1 + $0x10] sm:$0xff pattern:$0x73625140]
    %v730 = vld.sshfl [vmem:[#allocation1 + $0x18] sm:$0xff pattern:$0x73625140]
    %v731 = vld.sshfl [vmem:[#allocation1 + $0x20] sm:$0xff pattern:$0x73625140]
    %v732 = vld.sshfl [vmem:[#allocation1 + $0x28] sm:$0xff pattern:$0x73625140]
    %733 = vst [vmem:[#allocation1] ss:$4 sm:$0xff] %v154
    %734 = vst [vmem:[%s587] ss:$4 sm:$0xff] %v156
    %735 = vst [vmem:[%s589] ss:$4 sm:$0xff] %v158
    %736 = vst [vmem:[%s591] ss:$4 sm:$0xff] %v160
    %737 = vst [vmem:[%s593] ss:$4 sm:$0xff] %v155
    %738 = vst [vmem:[%s595] ss:$4 sm:$0xff] %v157
    %739 = vst [vmem:[%s597] ss:$4 sm:$0xff] %v159
    %740 = vst [vmem:[%s599] ss:$4 sm:$0xff] %v161
    %v741 = vld.sshfl [vmem:[#allocation1] sm:$0xff pattern:$0x73625140]
    %v742 = vld.sshfl [vmem:[#allocation1 + $0x8] sm:$0xff pattern:$0x73625140]
    %v743 = vld.sshfl [vmem:[#allocation1 + $0x10] sm:$0xff pattern:$0x73625140]
    %v744 = vld.sshfl [vmem:[#allocation1 + $0x18] sm:$0xff pattern:$0x73625140]
    %v745 = vld.sshfl [vmem:[#allocation1 + $0x20] sm:$0xff pattern:$0x73625140]
    %v746 = vld.sshfl [vmem:[#allocation1 + $0x28] sm:$0xff pattern:$0x73625140]
    %747 = vst [vmem:[#allocation1] ss:$4 sm:$0xff] %v162
    %748 = vst [vmem:[%s587] ss:$4 sm:$0xff] %v164
    %749 = vst [vmem:[%s589] ss:$4 sm:$0xff] %v166
    %750 = vst [vmem:[%s591] ss:$4 sm:$0xff] %v168
    %751 = vst [vmem:[%s593] ss:$4 sm:$0xff] %v163
    %752 = vst [vmem:[%s595] ss:$4 sm:$0xff] %v165
    %753 = vst [vmem:[%s597] ss:$4 sm:$0xff] %v167
    %754 = vst [vmem:[%s599] ss:$4 sm:$0xff] %v169
    %v755 = vld.sshfl [vmem:[#allocation1] sm:$0xff pattern:$0x73625140]
    %v756 = vld.sshfl [vmem:[#allocation1 + $0x8] sm:$0xff pattern:$0x73625140]
    %v757 = vld.sshfl [vmem:[#allocation1 + $0x10] sm:$0xff pattern:$0x73625140]
    %v758 = vld.sshfl [vmem:[#allocation1 + $0x18] sm:$0xff pattern:$0x73625140]
    %v759 = vld.sshfl [vmem:[#allocation1 + $0x20] sm:$0xff pattern:$0x73625140]
    %v760 = vld.sshfl [vmem:[#allocation1 + $0x28] sm:$0xff pattern:$0x73625140]
    %761 = vst [vmem:[#allocation1] ss:$4 sm:$0xff] %v170
    %762 = vst [vmem:[%s587] ss:$4 sm:$0xff] %v172
    %763 = vst [vmem:[%s589] ss:$4 sm:$0xff] %v174
    %764 = vst [vmem:[%s591] ss:$4 sm:$0xff] %v176
    %765 = vst [vmem:[%s593] ss:$4 sm:$0xff] %v171
    %766 = vst [vmem:[%s595] ss:$4 sm:$0xff] %v173
    %767 = vst [vmem:[%s597] ss:$4 sm:$0xff] %v175
    %768 = vst [vmem:[%s599] ss:$4 sm:$0xff] %v177
    %v769 = vld.sshfl [vmem:[#allocation1] sm:$0xff pattern:$0x73625140]
    %v770 = vld.sshfl [vmem:[#allocation1 + $0x8] sm:$0xff pattern:$0x73625140]
    %v771 = vld.sshfl [vmem:[#allocation1 + $0x10] sm:$0xff pattern:$0x73625140]
    %v772 = vld.sshfl [vmem:[#allocation1 + $0x18] sm:$0xff pattern:$0x73625140]
    %v773 = vld.sshfl [vmem:[#allocation1 + $0x20] sm:$0xff pattern:$0x73625140]
    %v774 = vld.sshfl [vmem:[#allocation1 + $0x28] sm:$0xff pattern:$0x73625140]
    %775 = vst [vmem:[#allocation1] ss:$4 sm:$0xff] %v178
    %776 = vst [vmem:[%s587] ss:$4 sm:$0xff] %v180
    %777 = vst [vmem:[%s589] ss:$4 sm:$0xff] %v182
    %778 = vst [vmem:[%s591] ss:$4 sm:$0xff] %v184
    %779 = vst [vmem:[%s593] ss:$4 sm:$0xff] %v179
    %780 = vst [vmem:[%s595] ss:$4 sm:$0xff] %v181
    %781 = vst [vmem:[%s597] ss:$4 sm:$0xff] %v183
    %782 = vst [vmem:[%s599] ss:$4 sm:$0xff] %v185
    %v783 = vld.sshfl [vmem:[#allocation1] sm:$0xff pattern:$0x73625140]
    %v784 = vld.sshfl [vmem:[#allocation1 + $0x8] sm:$0xff pattern:$0x73625140]
    %v785 = vld.sshfl [vmem:[#allocation1 + $0x10] sm:$0xff pattern:$0x73625140]
    %v786 = vld.sshfl [vmem:[#allocation1 + $0x18] sm:$0xff pattern:$0x73625140]
    %v787 = vld.sshfl [vmem:[#allocation1 + $0x20] sm:$0xff pattern:$0x73625140]
    %v788 = vld.sshfl [vmem:[#allocation1 + $0x28] sm:$0xff pattern:$0x73625140]
    %789 = vst [vmem:[#allocation1] ss:$4 sm:$0xff] %v186
    %790 = vst [vmem:[%s587] ss:$4 sm:$0xff] %v188
    %791 = vst [vmem:[%s589] ss:$4 sm:$0xff] %v190
    %792 = vst [vmem:[%s591] ss:$4 sm:$0xff] %v192
    %793 = vst [vmem:[%s593] ss:$4 sm:$0xff] %v187
    %794 = vst [vmem:[%s595] ss:$4 sm:$0xff] %v189
    %795 = vst [vmem:[%s597] ss:$4 sm:$0xff] %v191
    %796 = vst [vmem:[%s599] ss:$4 sm:$0xff] %v193
    %v797 = vld.sshfl [vmem:[#allocation1] sm:$0xff pattern:$0x73625140]
    %v798 = vld.sshfl [vmem:[#allocation1 + $0x8] sm:$0xff pattern:$0x73625140]
    %v799 = vld.sshfl [vmem:[#allocation1 + $0x10] sm:$0xff pattern:$0x73625140]
    %v800 = vld.sshfl [vmem:[#allocation1 + $0x18] sm:$0xff pattern:$0x73625140]
    %v801 = vld.sshfl [vmem:[#allocation1 + $0x20] sm:$0xff pattern:$0x73625140]
    %v802 = vld.sshfl [vmem:[#allocation1 + $0x28] sm:$0xff pattern:$0x73625140]
    %803 = vst [vmem:[#allocation1] ss:$4 sm:$0xff] %v194
    %804 = vst [vmem:[%s587] ss:$4 sm:$0xff] %v196
    %805 = vst [vmem:[%s589] ss:$4 sm:$0xff] %v198
    %806 = vst [vmem:[%s591] ss:$4 sm:$0xff] %v200
    %807 = vst [vmem:[%s593] ss:$4 sm:$0xff] %v195
    %808 = vst [vmem:[%s595] ss:$4 sm:$0xff] %v197
    %809 = vst [vmem:[%s597] ss:$4 sm:$0xff] %v199
    %810 = vst [vmem:[%s599] ss:$4 sm:$0xff] %v201
    %v811 = vld.sshfl [vmem:[#allocation1] sm:$0xff pattern:$0x73625140]
    %v812 = vld.sshfl [vmem:[#allocation1 + $0x8] sm:$0xff pattern:$0x73625140]
    %v813 = vld.sshfl [vmem:[#allocation1 + $0x10] sm:$0xff pattern:$0x73625140]
    %v814 = vld.sshfl [vmem:[#allocation1 + $0x18] sm:$0xff pattern:$0x73625140]
    %v815 = vld.sshfl [vmem:[#allocation1 + $0x20] sm:$0xff pattern:$0x73625140]
    %v816 = vld.sshfl [vmem:[#allocation1 + $0x28] sm:$0xff pattern:$0x73625140]
    %817 = vst [vmem:[#allocation1] ss:$4 sm:$0xff] %v202
    %818 = vst [vmem:[%s587] ss:$4 sm:$0xff] %v204
    %819 = vst [vmem:[%s589] ss:$4 sm:$0xff] %v206
    %820 = vst [vmem:[%s591] ss:$4 sm:$0xff] %v208
    %821 = vst [vmem:[%s593] ss:$4 sm:$0xff] %v203
    %822 = vst [vmem:[%s595] ss:$4 sm:$0xff] %v205
    %823 = vst [vmem:[%s597] ss:$4 sm:$0xff] %v207
    %824 = vst [vmem:[%s599] ss:$4 sm:$0xff] %v209
    %v825 = vld.sshfl [vmem:[#allocation1] sm:$0xff pattern:$0x73625140]
    %v826 = vld.sshfl [vmem:[#allocation1 + $0x8] sm:$0xff pattern:$0x73625140]
    %v827 = vld.sshfl [vmem:[#allocation1 + $0x10] sm:$0xff pattern:$0x73625140]
    %v828 = vld.sshfl [vmem:[#allocation1 + $0x18] sm:$0xff pattern:$0x73625140]
    %v829 = vld.sshfl [vmem:[#allocation1 + $0x20] sm:$0xff pattern:$0x73625140]
    %v830 = vld.sshfl [vmem:[#allocation1 + $0x28] sm:$0xff pattern:$0x73625140]
    %831 = vst [vmem:[#allocation1] ss:$4 sm:$0xff] %v210
    %832 = vst [vmem:[%s587] ss:$4 sm:$0xff] %v212
    %833 = vst [vmem:[%s589] ss:$4 sm:$0xff] %v214
    %834 = vst [vmem:[%s591] ss:$4 sm:$0xff] %v216
    %835 = vst [vmem:[%s593] ss:$4 sm:$0xff] %v211
    %836 = vst [vmem:[%s595] ss:$4 sm:$0xff] %v213
    %837 = vst [vmem:[%s597] ss:$4 sm:$0xff] %v215
    %838 = vst [vmem:[%s599] ss:$4 sm:$0xff] %v217
    %v839 = vld.sshfl [vmem:[#allocation1] sm:$0xff pattern:$0x73625140]
    %v840 = vld.sshfl [vmem:[#allocation1 + $0x8] sm:$0xff pattern:$0x73625140]
    %v841 = vld.sshfl [vmem:[#allocation1 + $0x10] sm:$0xff pattern:$0x73625140]
    %v842 = vld.sshfl [vmem:[#allocation1 + $0x18] sm:$0xff pattern:$0x73625140]
    %v843 = vld.sshfl [vmem:[#allocation1 + $0x20] sm:$0xff pattern:$0x73625140]
    %v844 = vld.sshfl [vmem:[#allocation1 + $0x28] sm:$0xff pattern:$0x73625140]
    %845 = vst [vmem:[#allocation1] ss:$4 sm:$0xff] %v218
    %846 = vst [vmem:[%s587] ss:$4 sm:$0xff] %v220
    %847 = vst [vmem:[%s589] ss:$4 sm:$0xff] %v222
    %848 = vst [vmem:[%s591] ss:$4 sm:$0xff] %v224
    %849 = vst [vmem:[%s593] ss:$4 sm:$0xff] %v219
    %850 = vst [vmem:[%s595] ss:$4 sm:$0xff] %v221
    %851 = vst [vmem:[%s597] ss:$4 sm:$0xff] %v223
    %852 = vst [vmem:[%s599] ss:$4 sm:$0xff] %v225
    %v853 = vld.sshfl [vmem:[#allocation1] sm:$0xff pattern:$0x73625140]
    %v854 = vld.sshfl [vmem:[#allocation1 + $0x8] sm:$0xff pattern:$0x73625140]
    %v855 = vld.sshfl [vmem:[#allocation1 + $0x10] sm:$0xff pattern:$0x73625140]
    %v856 = vld.sshfl [vmem:[#allocation1 + $0x18] sm:$0xff pattern:$0x73625140]
    %v857 = vld.sshfl [vmem:[#allocation1 + $0x20] sm:$0xff pattern:$0x73625140]
    %v858 = vld.sshfl [vmem:[#allocation1 + $0x28] sm:$0xff pattern:$0x73625140]
    %859 = vst [vmem:[#allocation1] ss:$4 sm:$0xff] %v226
    %860 = vst [vmem:[%s587] ss:$4 sm:$0xff] %v228
    %861 = vst [vmem:[%s589] ss:$4 sm:$0xff] %v230
    %862 = vst [vmem:[%s591] ss:$4 sm:$0xff] %v232
    %863 = vst [vmem:[%s593] ss:$4 sm:$0xff] %v227
    %864 = vst [vmem:[%s595] ss:$4 sm:$0xff] %v229
    %865 = vst [vmem:[%s597] ss:$4 sm:$0xff] %v231
    %866 = vst [vmem:[%s599] ss:$4 sm:$0xff] %v233
    %v867 = vld.sshfl [vmem:[#allocation1] sm:$0xff pattern:$0x73625140]
    %v868 = vld.sshfl [vmem:[#allocation1 + $0x8] sm:$0xff pattern:$0x73625140]
    %v869 = vld.sshfl [vmem:[#allocation1 + $0x10] sm:$0xff pattern:$0x73625140]
    %v870 = vld.sshfl [vmem:[#allocation1 + $0x18] sm:$0xff pattern:$0x73625140]
    %v871 = vld.sshfl [vmem:[#allocation1 + $0x20] sm:$0xff pattern:$0x73625140]
    %v872 = vld.sshfl [vmem:[#allocation1 + $0x28] sm:$0xff pattern:$0x73625140]
    %873 = vst [vmem:[#allocation1] ss:$4 sm:$0xff] %v234
    %874 = vst [vmem:[%s587] ss:$4 sm:$0xff] %v236
    %875 = vst [vmem:[%s589] ss:$4 sm:$0xff] %v238
    %876 = vst [vmem:[%s591] ss:$4 sm:$0xff] %v240
    %877 = vst [vmem:[%s593] ss:$4 sm:$0xff] %v235
    %878 = vst [vmem:[%s595] ss:$4 sm:$0xff] %v237
    %879 = vst [vmem:[%s597] ss:$4 sm:$0xff] %v239
    %880 = vst [vmem:[%s599] ss:$4 sm:$0xff] %v241
    %v881 = vld.sshfl [vmem:[#allocation1] sm:$0xff pattern:$0x73625140]
    %v882 = vld.sshfl [vmem:[#allocation1 + $0x8] sm:$0xff pattern:$0x73625140]
    %v883 = vld.sshfl [vmem:[#allocation1 + $0x10] sm:$0xff pattern:$0x73625140]
    %v884 = vld.sshfl [vmem:[#allocation1 + $0x18] sm:$0xff pattern:$0x73625140]
    %v885 = vld.sshfl [vmem:[#allocation1 + $0x20] sm:$0xff pattern:$0x73625140]
    %v886 = vld.sshfl [vmem:[#allocation1 + $0x28] sm:$0xff pattern:$0x73625140]
    %887 = vst [vmem:[#allocation1] ss:$4 sm:$0xff] %v242
    %888 = vst [vmem:[%s587] ss:$4 sm:$0xff] %v244
    %889 = vst [vmem:[%s589] ss:$4 sm:$0xff] %v246
    %890 = vst [vmem:[%s591] ss:$4 sm:$0xff] %v248
    %891 = vst [vmem:[%s593] ss:$4 sm:$0xff] %v243
    %892 = vst [vmem:[%s595] ss:$4 sm:$0xff] %v245
    %893 = vst [vmem:[%s597] ss:$4 sm:$0xff] %v247
    %894 = vst [vmem:[%s599] ss:$4 sm:$0xff] %v249
    %v895 = vld.sshfl [vmem:[#allocation1] sm:$0xff pattern:$0x73625140]
    %v896 = vld.sshfl [vmem:[#allocation1 + $0x8] sm:$0xff pattern:$0x73625140]
    %v897 = vld.sshfl [vmem:[#allocation1 + $0x10] sm:$0xff pattern:$0x73625140]
    %v898 = vld.sshfl [vmem:[#allocation1 + $0x18] sm:$0xff pattern:$0x73625140]
    %v899 = vld.sshfl [vmem:[#allocation1 + $0x20] sm:$0xff pattern:$0x73625140]
    %v900 = vld.sshfl [vmem:[#allocation1 + $0x28] sm:$0xff pattern:$0x73625140]
    %901 = vst [vmem:[#allocation1] ss:$4 sm:$0xff] %v250
    %902 = vst [vmem:[%s587] ss:$4 sm:$0xff] %v252
    %903 = vst [vmem:[%s589] ss:$4 sm:$0xff] %v254
    %904 = vst [vmem:[%s591] ss:$4 sm:$0xff] %v256
    %905 = vst [vmem:[%s593] ss:$4 sm:$0xff] %v251
    %906 = vst [vmem:[%s595] ss:$4 sm:$0xff] %v253
    %907 = vst [vmem:[%s597] ss:$4 sm:$0xff] %v255
    %908 = vst [vmem:[%s599] ss:$4 sm:$0xff] %v257
    %v909 = vld.sshfl [vmem:[#allocation1] sm:$0xff pattern:$0x73625140]
    %v910 = vld.sshfl [vmem:[#allocation1 + $0x8] sm:$0xff pattern:$0x73625140]
    %v911 = vld.sshfl [vmem:[#allocation1 + $0x10] sm:$0xff pattern:$0x73625140]
    %v912 = vld.sshfl [vmem:[#allocation1 + $0x18] sm:$0xff pattern:$0x73625140]
    %v913 = vld.sshfl [vmem:[#allocation1 + $0x20] sm:$0xff pattern:$0x73625140]
    %v914 = vld.sshfl [vmem:[#allocation1 + $0x28] sm:$0xff pattern:$0x73625140]
    %915 = vst [vmem:[#allocation1] ss:$4 sm:$0xff] %v258
    %916 = vst [vmem:[%s587] ss:$4 sm:$0xff] %v260
    %917 = vst [vmem:[%s589] ss:$4 sm:$0xff] %v262
    %918 = vst [vmem:[%s591] ss:$4 sm:$0xff] %v264
    %919 = vst [vmem:[%s593] ss:$4 sm:$0xff] %v259
    %920 = vst [vmem:[%s595] ss:$4 sm:$0xff] %v261
    %921 = vst [vmem:[%s597] ss:$4 sm:$0xff] %v263
    %922 = vst [vmem:[%s599] ss:$4 sm:$0xff] %v265
    %v923 = vld.sshfl [vmem:[#allocation1] sm:$0xff pattern:$0x73625140]
    %v924 = vld.sshfl [vmem:[#allocation1 + $0x8] sm:$0xff pattern:$0x73625140]
    %v925 = vld.sshfl [vmem:[#allocation1 + $0x10] sm:$0xff pattern:$0x73625140]
    %v926 = vld.sshfl [vmem:[#allocation1 + $0x18] sm:$0xff pattern:$0x73625140]
    %v927 = vld.sshfl [vmem:[#allocation1 + $0x20] sm:$0xff pattern:$0x73625140]
    %v928 = vld.sshfl [vmem:[#allocation1 + $0x28] sm:$0xff pattern:$0x73625140]
    %929 = vst [vmem:[#allocation1] ss:$4 sm:$0xff] %v266
    %930 = vst [vmem:[%s587] ss:$4 sm:$0xff] %v268
    %931 = vst [vmem:[%s589] ss:$4 sm:$0xff] %v270
    %932 = vst [vmem:[%s591] ss:$4 sm:$0xff] %v272
    %933 = vst [vmem:[%s593] ss:$4 sm:$0xff] %v267
    %934 = vst [vmem:[%s595] ss:$4 sm:$0xff] %v269
    %935 = vst [vmem:[%s597] ss:$4 sm:$0xff] %v271
    %936 = vst [vmem:[%s599] ss:$4 sm:$0xff] %v273
    %v937 = vld.sshfl [vmem:[#allocation1] sm:$0xff pattern:$0x73625140]
    %v938 = vld.sshfl [vmem:[#allocation1 + $0x8] sm:$0xff pattern:$0x73625140]
    %v939 = vld.sshfl [vmem:[#allocation1 + $0x10] sm:$0xff pattern:$0x73625140]
    %v940 = vld.sshfl [vmem:[#allocation1 + $0x18] sm:$0xff pattern:$0x73625140]
    %v941 = vld.sshfl [vmem:[#allocation1 + $0x20] sm:$0xff pattern:$0x73625140]
    %v942 = vld.sshfl [vmem:[#allocation1 + $0x28] sm:$0xff pattern:$0x73625140]
    %943 = vst [vmem:[#allocation1] ss:$4 sm:$0xff] %v274
    %944 = vst [vmem:[%s587] ss:$4 sm:$0xff] %v276
    %945 = vst [vmem:[%s589] ss:$4 sm:$0xff] %v278
    %946 = vst [vmem:[%s591] ss:$4 sm:$0xff] %v280
    %947 = vst [vmem:[%s593] ss:$4 sm:$0xff] %v275
    %948 = vst [vmem:[%s595] ss:$4 sm:$0xff] %v277
    %949 = vst [vmem:[%s597] ss:$4 sm:$0xff] %v279
    %950 = vst [vmem:[%s599] ss:$4 sm:$0xff] %v281
    %v951 = vld.sshfl [vmem:[#allocation1] sm:$0xff pattern:$0x73625140]
    %v952 = vld.sshfl [vmem:[#allocation1 + $0x8] sm:$0xff pattern:$0x73625140]
    %v953 = vld.sshfl [vmem:[#allocation1 + $0x10] sm:$0xff pattern:$0x73625140]
    %v954 = vld.sshfl [vmem:[#allocation1 + $0x18] sm:$0xff pattern:$0x73625140]
    %v955 = vld.sshfl [vmem:[#allocation1 + $0x20] sm:$0xff pattern:$0x73625140]
    %v956 = vld.sshfl [vmem:[#allocation1 + $0x28] sm:$0xff pattern:$0x73625140]
    %957 = vst [vmem:[#allocation1] ss:$4 sm:$0xff] %v282
    %958 = vst [vmem:[%s587] ss:$4 sm:$0xff] %v284
    %959 = vst [vmem:[%s589] ss:$4 sm:$0xff] %v286
    %960 = vst [vmem:[%s591] ss:$4 sm:$0xff] %v288
    %961 = vst [vmem:[%s593] ss:$4 sm:$0xff] %v283
    %962 = vst [vmem:[%s595] ss:$4 sm:$0xff] %v285
    %963 = vst [vmem:[%s597] ss:$4 sm:$0xff] %v287
    %964 = vst [vmem:[%s599] ss:$4 sm:$0xff] %v289
    %v965 = vld.sshfl [vmem:[#allocation1] sm:$0xff pattern:$0x73625140]
    %v966 = vld.sshfl [vmem:[#allocation1 + $0x8] sm:$0xff pattern:$0x73625140]
    %v967 = vld.sshfl [vmem:[#allocation1 + $0x10] sm:$0xff pattern:$0x73625140]
    %v968 = vld.sshfl [vmem:[#allocation1 + $0x18] sm:$0xff pattern:$0x73625140]
    %v969 = vld.sshfl [vmem:[#allocation1 + $0x20] sm:$0xff pattern:$0x73625140]
    %v970 = vld.sshfl [vmem:[#allocation1 + $0x28] sm:$0xff pattern:$0x73625140]
    %971 = vst [vmem:[#allocation1] ss:$4 sm:$0xff] %v290
    %972 = vst [vmem:[%s587] ss:$4 sm:$0xff] %v292
    %973 = vst [vmem:[%s589] ss:$4 sm:$0xff] %v294
    %974 = vst [vmem:[%s591] ss:$4 sm:$0xff] %v296
    %975 = vst [vmem:[%s593] ss:$4 sm:$0xff] %v291
    %976 = vst [vmem:[%s595] ss:$4 sm:$0xff] %v293
    %977 = vst [vmem:[%s597] ss:$4 sm:$0xff] %v295
    %978 = vst [vmem:[%s599] ss:$4 sm:$0xff] %v297
    %v979 = vld.sshfl [vmem:[#allocation1] sm:$0xff pattern:$0x73625140]
    %v980 = vld.sshfl [vmem:[#allocation1 + $0x8] sm:$0xff pattern:$0x73625140]
    %v981 = vld.sshfl [vmem:[#allocation1 + $0x10] sm:$0xff pattern:$0x73625140]
    %v982 = vld.sshfl [vmem:[#allocation1 + $0x18] sm:$0xff pattern:$0x73625140]
    %v983 = vld.sshfl [vmem:[#allocation1 + $0x20] sm:$0xff pattern:$0x73625140]
    %v984 = vld.sshfl [vmem:[#allocation1 + $0x28] sm:$0xff pattern:$0x73625140]
    %985 = vst [vmem:[#allocation1] ss:$4 sm:$0xff] %v298
    %986 = vst [vmem:[%s587] ss:$4 sm:$0xff] %v300
    %987 = vst [vmem:[%s589] ss:$4 sm:$0xff] %v302
    %988 = vst [vmem:[%s591] ss:$4 sm:$0xff] %v304
    %989 = vst [vmem:[%s593] ss:$4 sm:$0xff] %v299
    %990 = vst [vmem:[%s595] ss:$4 sm:$0xff] %v301
    %991 = vst [vmem:[%s597] ss:$4 sm:$0xff] %v303
    %992 = vst [vmem:[%s599] ss:$4 sm:$0xff] %v305
    %v993 = vld.sshfl [vmem:[#allocation1] sm:$0xff pattern:$0x73625140]
    %v994 = vld.sshfl [vmem:[#allocation1 + $0x8] sm:$0xff pattern:$0x73625140]
    %v995 = vld.sshfl [vmem:[#allocation1 + $0x10] sm:$0xff pattern:$0x73625140]
    %v996 = vld.sshfl [vmem:[#allocation1 + $0x18] sm:$0xff pattern:$0x73625140]
    %v997 = vld.sshfl [vmem:[#allocation1 + $0x20] sm:$0xff pattern:$0x73625140]
    %v998 = vld.sshfl [vmem:[#allocation1 + $0x28] sm:$0xff pattern:$0x73625140]
    %999 = vst [vmem:[#allocation1] ss:$4 sm:$0xff] %v306
    %1000 = vst [vmem:[%s587] ss:$4 sm:$0xff] %v308
    %1001 = vst [vmem:[%s589] ss:$4 sm:$0xff] %v310
    %1002 = vst [vmem:[%s591] ss:$4 sm:$0xff] %v312
    %1003 = vst [vmem:[%s593] ss:$4 sm:$0xff] %v307
    %1004 = vst [vmem:[%s595] ss:$4 sm:$0xff] %v309
    %1005 = vst [vmem:[%s597] ss:$4 sm:$0xff] %v311
    %1006 = vst [vmem:[%s599] ss:$4 sm:$0xff] %v313
    %v1007 = vld.sshfl [vmem:[#allocation1] sm:$0xff pattern:$0x73625140]
    %v1008 = vld.sshfl [vmem:[#allocation1 + $0x8] sm:$0xff pattern:$0x73625140]
    %v1009 = vld.sshfl [vmem:[#allocation1 + $0x10] sm:$0xff pattern:$0x73625140]
    %v1010 = vld.sshfl [vmem:[#allocation1 + $0x18] sm:$0xff pattern:$0x73625140]
    %v1011 = vld.sshfl [vmem:[#allocation1 + $0x20] sm:$0xff pattern:$0x73625140]
    %v1012 = vld.sshfl [vmem:[#allocation1 + $0x28] sm:$0xff pattern:$0x73625140]
    %1013 = vst [vmem:[#allocation1] ss:$4 sm:$0xff] %v314
    %1014 = vst [vmem:[%s587] ss:$4 sm:$0xff] %v316
    %1015 = vst [vmem:[%s589] ss:$4 sm:$0xff] %v318
    %1016 = vst [vmem:[%s591] ss:$4 sm:$0xff] %v320
    %1017 = vst [vmem:[%s593] ss:$4 sm:$0xff] %v315
    %1018 = vst [vmem:[%s595] ss:$4 sm:$0xff] %v317
    %1019 = vst [vmem:[%s597] ss:$4 sm:$0xff] %v319
    %1020 = vst [vmem:[%s599] ss:$4 sm:$0xff] %v321
    %v1021 = vld.sshfl [vmem:[#allocation1] sm:$0xff pattern:$0x73625140]
    %v1022 = vld.sshfl [vmem:[#allocation1 + $0x8] sm:$0xff pattern:$0x73625140]
    %v1023 = vld.sshfl [vmem:[#allocation1 + $0x10] sm:$0xff pattern:$0x73625140]
    %v1024 = vld.sshfl [vmem:[#allocation1 + $0x18] sm:$0xff pattern:$0x73625140]
    %v1025 = vld.sshfl [vmem:[#allocation1 + $0x20] sm:$0xff pattern:$0x73625140]
    %v1026 = vld.sshfl [vmem:[#allocation1 + $0x28] sm:$0xff pattern:$0x73625140]
    %1027 = vst [vmem:[#allocation1] ss:$4 sm:$0xff] %v322
    %1028 = vst [vmem:[%s587] ss:$4 sm:$0xff] %v324
    %1029 = vst [vmem:[%s589] ss:$4 sm:$0xff] %v326
    %1030 = vst [vmem:[%s591] ss:$4 sm:$0xff] %v328
    %1031 = vst [vmem:[%s593] ss:$4 sm:$0xff] %v323
    %1032 = vst [vmem:[%s595] ss:$4 sm:$0xff] %v325
    %1033 = vst [vmem:[%s597] ss:$4 sm:$0xff] %v327
    %1034 = vst [vmem:[%s599] ss:$4 sm:$0xff] %v329
    %v1035 = vld.sshfl [vmem:[#allocation1] sm:$0xff pattern:$0x73625140]
    %v1036 = vld.sshfl [vmem:[#allocation1 + $0x8] sm:$0xff pattern:$0x73625140]
    %v1037 = vld.sshfl [vmem:[#allocation1 + $0x10] sm:$0xff pattern:$0x73625140]
    %v1038 = vld.sshfl [vmem:[#allocation1 + $0x18] sm:$0xff pattern:$0x73625140]
    %v1039 = vld.sshfl [vmem:[#allocation1 + $0x20] sm:$0xff pattern:$0x73625140]
    %v1040 = vld.sshfl [vmem:[#allocation1 + $0x28] sm:$0xff pattern:$0x73625140]
    %v1233 = vpack.c.bf16 %v615, %v601
    %v1234 = vpack.c.bf16 %v616, %v602
    %v1235 = vpack.c.bf16 %v617, %v603
    %v1236 = vpack.c.bf16 %v618, %v604
    %v1237 = vpack.c.bf16 %v619, %v605
    %v1238 = vpack.c.bf16 %v620, %v606
    %v1239 = vpack.c.bf16 %v643, %v629
    %v1240 = vpack.c.bf16 %v644, %v630
    %v1241 = vpack.c.bf16 %v645, %v631
    %v1242 = vpack.c.bf16 %v646, %v632
    %v1243 = vpack.c.bf16 %v647, %v633
    %v1244 = vpack.c.bf16 %v648, %v634
    %v1245 = vpack.c.bf16 %v671, %v657
    %v1246 = vpack.c.bf16 %v672, %v658
    %v1247 = vpack.c.bf16 %v673, %v659
    %v1248 = vpack.c.bf16 %v674, %v660
    %v1249 = vpack.c.bf16 %v675, %v661
    %v1250 = vpack.c.bf16 %v676, %v662
    %v1251 = vpack.c.bf16 %v699, %v685
    %v1252 = vpack.c.bf16 %v700, %v686
    %v1253 = vpack.c.bf16 %v701, %v687
    %v1254 = vpack.c.bf16 %v702, %v688
    %v1255 = vpack.c.bf16 %v703, %v689
    %v1256 = vpack.c.bf16 %v704, %v690
    %v1257 = vpack.c.bf16 %v727, %v713
    %v1258 = vpack.c.bf16 %v728, %v714
    %v1259 = vpack.c.bf16 %v729, %v715
    %v1260 = vpack.c.bf16 %v730, %v716
    %v1261 = vpack.c.bf16 %v731, %v717
    %v1262 = vpack.c.bf16 %v732, %v718
    %v1263 = vpack.c.bf16 %v755, %v741
    %v1264 = vpack.c.bf16 %v756, %v742
    %v1265 = vpack.c.bf16 %v757, %v743
    %v1266 = vpack.c.bf16 %v758, %v744
    %v1267 = vpack.c.bf16 %v759, %v745
    %v1268 = vpack.c.bf16 %v760, %v746
    %v1269 = vpack.c.bf16 %v783, %v769
    %v1270 = vpack.c.bf16 %v784, %v770
    %v1271 = vpack.c.bf16 %v785, %v771
    %v1272 = vpack.c.bf16 %v786, %v772
    %v1273 = vpack.c.bf16 %v787, %v773
    %v1274 = vpack.c.bf16 %v788, %v774
    %v1275 = vpack.c.bf16 %v811, %v797
    %v1276 = vpack.c.bf16 %v812, %v798
    %v1277 = vpack.c.bf16 %v813, %v799
    %v1278 = vpack.c.bf16 %v814, %v800
    %v1279 = vpack.c.bf16 %v815, %v801
    %v1280 = vpack.c.bf16 %v816, %v802
    %v1281 = vpack.c.bf16 %v839, %v825
    %v1282 = vpack.c.bf16 %v840, %v826
    %v1283 = vpack.c.bf16 %v841, %v827
    %v1284 = vpack.c.bf16 %v842, %v828
    %v1285 = vpack.c.bf16 %v843, %v829
    %v1286 = vpack.c.bf16 %v844, %v830
    %v1287 = vpack.c.bf16 %v867, %v853
    %v1288 = vpack.c.bf16 %v868, %v854
    %v1289 = vpack.c.bf16 %v869, %v855
    %v1290 = vpack.c.bf16 %v870, %v856
    %v1291 = vpack.c.bf16 %v871, %v857
    %v1292 = vpack.c.bf16 %v872, %v858
    %v1293 = vpack.c.bf16 %v895, %v881
    %v1294 = vpack.c.bf16 %v896, %v882
    %v1295 = vpack.c.bf16 %v897, %v883
    %v1296 = vpack.c.bf16 %v898, %v884
    %v1297 = vpack.c.bf16 %v899, %v885
    %v1298 = vpack.c.bf16 %v900, %v886
    %v1299 = vpack.c.bf16 %v923, %v909
    %v1300 = vpack.c.bf16 %v924, %v910
    %v1301 = vpack.c.bf16 %v925, %v911
    %v1302 = vpack.c.bf16 %v926, %v912
    %v1303 = vpack.c.bf16 %v927, %v913
    %v1304 = vpack.c.bf16 %v928, %v914
    %v1305 = vpack.c.bf16 %v951, %v937
    %v1306 = vpack.c.bf16 %v952, %v938
    %v1307 = vpack.c.bf16 %v953, %v939
    %v1308 = vpack.c.bf16 %v954, %v940
    %v1309 = vpack.c.bf16 %v955, %v941
    %v1310 = vpack.c.bf16 %v956, %v942
    %v1311 = vpack.c.bf16 %v979, %v965
    %v1312 = vpack.c.bf16 %v980, %v966
    %v1313 = vpack.c.bf16 %v981, %v967
    %v1314 = vpack.c.bf16 %v982, %v968
    %v1315 = vpack.c.bf16 %v983, %v969
    %v1316 = vpack.c.bf16 %v984, %v970
    %v1317 = vpack.c.bf16 %v1007, %v993
    %v1318 = vpack.c.bf16 %v1008, %v994
    %v1319 = vpack.c.bf16 %v1009, %v995
    %v1320 = vpack.c.bf16 %v1010, %v996
    %v1321 = vpack.c.bf16 %v1011, %v997
    %v1322 = vpack.c.bf16 %v1012, %v998
    %v1323 = vpack.c.bf16 %v1035, %v1021
    %v1324 = vpack.c.bf16 %v1036, %v1022
    %v1325 = vpack.c.bf16 %v1037, %v1023
    %v1326 = vpack.c.bf16 %v1038, %v1024
    %v1327 = vpack.c.bf16 %v1039, %v1025
    %v1328 = vpack.c.bf16 %v1040, %v1026
    %v1329 = vld [vmem:[#allocation2] sm:$0xff]
    %v1330 = vld [vmem:[#allocation2 + $0x8] sm:$0xff]
    %v1331 = vld [vmem:[#allocation2 + $0x10] sm:$0xff]
    %v1332 = vld [vmem:[#allocation2 + $0x18] sm:$0xff]
    %v1333 = vld [vmem:[#allocation2 + $0x20] sm:$0xff]
    %v1334 = vld [vmem:[#allocation2 + $0x28] sm:$0xff]
    %v1335 = vld [vmem:[#allocation2 + $0x30] sm:$0xff]
    %v1336 = vld [vmem:[#allocation2 + $0x38] sm:$0xff]
    %v1337 = vld [vmem:[#allocation2 + $0x40] sm:$0xff]
    %v1338 = vld [vmem:[#allocation2 + $0x48] sm:$0xff]
    %v1339 = vld [vmem:[#allocation2 + $0x50] sm:$0xff]
    %v1340 = vld [vmem:[#allocation2 + $0x58] sm:$0xff]
    %v1341 = vld [vmem:[#allocation2 + $0x60] sm:$0xff]
    %v1342 = vld [vmem:[#allocation2 + $0x68] sm:$0xff]
    %v1343 = vld [vmem:[#allocation2 + $0x70] sm:$0xff]
    %v1344 = vld [vmem:[#allocation2 + $0x78] sm:$0xff]
    %v1345 = vld [vmem:[#allocation2 + $0x80] sm:$0xff]
    %v1346 = vld [vmem:[#allocation2 + $0x88] sm:$0xff]
    %v1347 = vld [vmem:[#allocation2 + $0x90] sm:$0xff]
    %v1348 = vld [vmem:[#allocation2 + $0x98] sm:$0xff]
    %v1349 = vld [vmem:[#allocation2 + $0xa0] sm:$0xff]
    %v1350 = vld [vmem:[#allocation2 + $0xa8] sm:$0xff]
    %v1351 = vld [vmem:[#allocation2 + $0xb0] sm:$0xff]
    %v1352 = vld [vmem:[#allocation2 + $0xb8] sm:$0xff]
    %v1353 = vld [vmem:[#allocation2 + $0xc0] sm:$0xff]
    %v1354 = vld [vmem:[#allocation2 + $0xc8] sm:$0xff]
    %v1355 = vld [vmem:[#allocation2 + $0xd0] sm:$0xff]
    %v1356 = vld [vmem:[#allocation2 + $0xd8] sm:$0xff]
    %v1357 = vld [vmem:[#allocation2 + $0xe0] sm:$0xff]
    %v1358 = vld [vmem:[#allocation2 + $0xe8] sm:$0xff]
    %v1359 = vld [vmem:[#allocation2 + $0xf0] sm:$0xff]
    %v1360 = vld [vmem:[#allocation2 + $0xf8] sm:$0xff]
    %v1361 = vld [vmem:[#allocation2 + $0x100] sm:$0xff]
    %v1362 = vld [vmem:[#allocation2 + $0x108] sm:$0xff]
    %v1363 = vld [vmem:[#allocation2 + $0x110] sm:$0xff]
    %v1364 = vld [vmem:[#allocation2 + $0x118] sm:$0xff]
    %v1365 = vld [vmem:[#allocation2 + $0x120] sm:$0xff]
    %v1366 = vld [vmem:[#allocation2 + $0x128] sm:$0xff]
    %v1367 = vld [vmem:[#allocation2 + $0x130] sm:$0xff]
    %v1368 = vld [vmem:[#allocation2 + $0x138] sm:$0xff]
    %v1369 = vld [vmem:[#allocation2 + $0x140] sm:$0xff]
    %v1370 = vld [vmem:[#allocation2 + $0x148] sm:$0xff]
    %v1371 = vld [vmem:[#allocation2 + $0x150] sm:$0xff]
    %v1372 = vld [vmem:[#allocation2 + $0x158] sm:$0xff]
    %v1373 = vld [vmem:[#allocation2 + $0x160] sm:$0xff]
    %v1374 = vld [vmem:[#allocation2 + $0x168] sm:$0xff]
    %v1375 = vld [vmem:[#allocation2 + $0x170] sm:$0xff]
    %v1376 = vld [vmem:[#allocation2 + $0x178] sm:$0xff]
    %v1377 = vld [vmem:[#allocation2 + $0x180] sm:$0xff]
    %v1378 = vld [vmem:[#allocation2 + $0x188] sm:$0xff]
    %v1379 = vld [vmem:[#allocation2 + $0x190] sm:$0xff]
    %v1380 = vld [vmem:[#allocation2 + $0x198] sm:$0xff]
    %v1381 = vld [vmem:[#allocation2 + $0x1a0] sm:$0xff]
    %v1382 = vld [vmem:[#allocation2 + $0x1a8] sm:$0xff]
    %v1383 = vld [vmem:[#allocation2 + $0x1b0] sm:$0xff]
    %v1384 = vld [vmem:[#allocation2 + $0x1b8] sm:$0xff]
    %v1385 = vld [vmem:[#allocation2 + $0x1c0] sm:$0xff]
    %v1386 = vld [vmem:[#allocation2 + $0x1c8] sm:$0xff]
    %v1387 = vld [vmem:[#allocation2 + $0x1d0] sm:$0xff]
    %v1388 = vld [vmem:[#allocation2 + $0x1d8] sm:$0xff]
    %v1389 = vld [vmem:[#allocation2 + $0x1e0] sm:$0xff]
    %v1390 = vld [vmem:[#allocation2 + $0x1e8] sm:$0xff]
    %v1391 = vld [vmem:[#allocation2 + $0x1f0] sm:$0xff]
    %v1392 = vld [vmem:[#allocation2 + $0x1f8] sm:$0xff]
    %v1393 = vld [vmem:[#allocation2 + $0x200] sm:$0xff]
    %v1394 = vld [vmem:[#allocation2 + $0x208] sm:$0xff]
    %v1395 = vld [vmem:[#allocation2 + $0x210] sm:$0xff]
    %v1396 = vld [vmem:[#allocation2 + $0x218] sm:$0xff]
    %v1397 = vld [vmem:[#allocation2 + $0x220] sm:$0xff]
    %v1398 = vld [vmem:[#allocation2 + $0x228] sm:$0xff]
    %v1399 = vld [vmem:[#allocation2 + $0x230] sm:$0xff]
    %v1400 = vld [vmem:[#allocation2 + $0x238] sm:$0xff]
    %v1401 = vld [vmem:[#allocation2 + $0x240] sm:$0xff]
    %v1402 = vld [vmem:[#allocation2 + $0x248] sm:$0xff]
    %v1403 = vld [vmem:[#allocation2 + $0x250] sm:$0xff]
    %v1404 = vld [vmem:[#allocation2 + $0x258] sm:$0xff]
    %v1405 = vld [vmem:[#allocation2 + $0x260] sm:$0xff]
    %v1406 = vld [vmem:[#allocation2 + $0x268] sm:$0xff]
    %v1407 = vld [vmem:[#allocation2 + $0x270] sm:$0xff]
    %v1408 = vld [vmem:[#allocation2 + $0x278] sm:$0xff]
    %v1409 = vld [vmem:[#allocation2 + $0x280] sm:$0xff]
    %v1410 = vld [vmem:[#allocation2 + $0x288] sm:$0xff]
    %v1411 = vld [vmem:[#allocation2 + $0x290] sm:$0xff]
    %v1412 = vld [vmem:[#allocation2 + $0x298] sm:$0xff]
    %v1413 = vld [vmem:[#allocation2 + $0x2a0] sm:$0xff]
    %v1414 = vld [vmem:[#allocation2 + $0x2a8] sm:$0xff]
    %v1415 = vld [vmem:[#allocation2 + $0x2b0] sm:$0xff]
    %v1416 = vld [vmem:[#allocation2 + $0x2b8] sm:$0xff]
    %v1417 = vld [vmem:[#allocation2 + $0x2c0] sm:$0xff]
    %v1418 = vld [vmem:[#allocation2 + $0x2c8] sm:$0xff]
    %v1419 = vld [vmem:[#allocation2 + $0x2d0] sm:$0xff]
    %v1420 = vld [vmem:[#allocation2 + $0x2d8] sm:$0xff]
    %v1421 = vld [vmem:[#allocation2 + $0x2e0] sm:$0xff]
    %v1422 = vld [vmem:[#allocation2 + $0x2e8] sm:$0xff]
    %v1423 = vld [vmem:[#allocation2 + $0x2f0] sm:$0xff]
    %v1424 = vld [vmem:[#allocation2 + $0x2f8] sm:$0xff]
    %v1425 = vld [vmem:[#allocation2 + $0x300] sm:$0xff]
    %v1426 = vld [vmem:[#allocation2 + $0x308] sm:$0xff]
    %v1427 = vld [vmem:[#allocation2 + $0x310] sm:$0xff]
    %v1428 = vld [vmem:[#allocation2 + $0x318] sm:$0xff]
    %v1429 = vld [vmem:[#allocation2 + $0x320] sm:$0xff]
    %v1430 = vld [vmem:[#allocation2 + $0x328] sm:$0xff]
    %v1431 = vld [vmem:[#allocation2 + $0x330] sm:$0xff]
    %v1432 = vld [vmem:[#allocation2 + $0x338] sm:$0xff]
    %v1433 = vld [vmem:[#allocation2 + $0x340] sm:$0xff]
    %v1434 = vld [vmem:[#allocation2 + $0x348] sm:$0xff]
    %v1435 = vld [vmem:[#allocation2 + $0x350] sm:$0xff]
    %v1436 = vld [vmem:[#allocation2 + $0x358] sm:$0xff]
    %v1437 = vld [vmem:[#allocation2 + $0x360] sm:$0xff]
    %v1438 = vld [vmem:[#allocation2 + $0x368] sm:$0xff]
    %v1439 = vld [vmem:[#allocation2 + $0x370] sm:$0xff]
    %v1440 = vld [vmem:[#allocation2 + $0x378] sm:$0xff]
    %v1441 = vld [vmem:[#allocation2 + $0x380] sm:$0xff]
    %v1442 = vld [vmem:[#allocation2 + $0x388] sm:$0xff]
    %v1443 = vld [vmem:[#allocation2 + $0x390] sm:$0xff]
    %v1444 = vld [vmem:[#allocation2 + $0x398] sm:$0xff]
    %v1445 = vld [vmem:[#allocation2 + $0x3a0] sm:$0xff]
    %v1446 = vld [vmem:[#allocation2 + $0x3a8] sm:$0xff]
    %v1447 = vld [vmem:[#allocation2 + $0x3b0] sm:$0xff]
    %v1448 = vld [vmem:[#allocation2 + $0x3b8] sm:$0xff]
    %v1449 = vld [vmem:[#allocation2 + $0x3c0] sm:$0xff]
    %v1450 = vld [vmem:[#allocation2 + $0x3c8] sm:$0xff]
    %v1451 = vld [vmem:[#allocation2 + $0x3d0] sm:$0xff]
    %v1452 = vld [vmem:[#allocation2 + $0x3d8] sm:$0xff]
    %v1453 = vld [vmem:[#allocation2 + $0x3e0] sm:$0xff]
    %v1454 = vld [vmem:[#allocation2 + $0x3e8] sm:$0xff]
    %v1455 = vld [vmem:[#allocation2 + $0x3f0] sm:$0xff]
    %v1456 = vld [vmem:[#allocation2 + $0x3f8] sm:$0xff]
    %v1457 = vld [vmem:[#allocation2 + $0x400] sm:$0xff]
    %v1458 = vld [vmem:[#allocation2 + $0x408] sm:$0xff]
    %v1459 = vld [vmem:[#allocation2 + $0x410] sm:$0xff]
    %v1460 = vld [vmem:[#allocation2 + $0x418] sm:$0xff]
    %v1461 = vld [vmem:[#allocation2 + $0x420] sm:$0xff]
    %v1462 = vld [vmem:[#allocation2 + $0x428] sm:$0xff]
    %v1463 = vld [vmem:[#allocation2 + $0x430] sm:$0xff]
    %v1464 = vld [vmem:[#allocation2 + $0x438] sm:$0xff]
    %v1465 = vld [vmem:[#allocation2 + $0x440] sm:$0xff]
    %v1466 = vld [vmem:[#allocation2 + $0x448] sm:$0xff]
    %v1467 = vld [vmem:[#allocation2 + $0x450] sm:$0xff]
    %v1468 = vld [vmem:[#allocation2 + $0x458] sm:$0xff]
    %v1469 = vld [vmem:[#allocation2 + $0x460] sm:$0xff]
    %v1470 = vld [vmem:[#allocation2 + $0x468] sm:$0xff]
    %v1471 = vld [vmem:[#allocation2 + $0x470] sm:$0xff]
    %v1472 = vld [vmem:[#allocation2 + $0x478] sm:$0xff]
    %v1473 = vld [vmem:[#allocation2 + $0x480] sm:$0xff]
    %v1474 = vld [vmem:[#allocation2 + $0x488] sm:$0xff]
    %v1475 = vld [vmem:[#allocation2 + $0x490] sm:$0xff]
    %v1476 = vld [vmem:[#allocation2 + $0x498] sm:$0xff]
    %v1477 = vld [vmem:[#allocation2 + $0x4a0] sm:$0xff]
    %v1478 = vld [vmem:[#allocation2 + $0x4a8] sm:$0xff]
    %v1479 = vld [vmem:[#allocation2 + $0x4b0] sm:$0xff]
    %v1480 = vld [vmem:[#allocation2 + $0x4b8] sm:$0xff]
    %v1481 = vld [vmem:[#allocation2 + $0x4c0] sm:$0xff]
    %v1482 = vld [vmem:[#allocation2 + $0x4c8] sm:$0xff]
    %v1483 = vld [vmem:[#allocation2 + $0x4d0] sm:$0xff]
    %v1484 = vld [vmem:[#allocation2 + $0x4d8] sm:$0xff]
    %v1485 = vld [vmem:[#allocation2 + $0x4e0] sm:$0xff]
    %v1486 = vld [vmem:[#allocation2 + $0x4e8] sm:$0xff]
    %v1487 = vld [vmem:[#allocation2 + $0x4f0] sm:$0xff]
    %v1488 = vld [vmem:[#allocation2 + $0x4f8] sm:$0xff]
    %v1489 = vld [vmem:[#allocation2 + $0x500] sm:$0xff]
    %v1490 = vld [vmem:[#allocation2 + $0x508] sm:$0xff]
    %v1491 = vld [vmem:[#allocation2 + $0x510] sm:$0xff]
    %v1492 = vld [vmem:[#allocation2 + $0x518] sm:$0xff]
    %v1493 = vld [vmem:[#allocation2 + $0x520] sm:$0xff]
    %v1494 = vld [vmem:[#allocation2 + $0x528] sm:$0xff]
    %v1495 = vld [vmem:[#allocation2 + $0x530] sm:$0xff]
    %v1496 = vld [vmem:[#allocation2 + $0x538] sm:$0xff]
    %v1497 = vld [vmem:[#allocation2 + $0x540] sm:$0xff]
    %v1498 = vld [vmem:[#allocation2 + $0x548] sm:$0xff]
    %v1499 = vld [vmem:[#allocation2 + $0x550] sm:$0xff]
    %v1500 = vld [vmem:[#allocation2 + $0x558] sm:$0xff]
    %v1501 = vld [vmem:[#allocation2 + $0x560] sm:$0xff]
    %v1502 = vld [vmem:[#allocation2 + $0x568] sm:$0xff]
    %v1503 = vld [vmem:[#allocation2 + $0x570] sm:$0xff]
    %v1504 = vld [vmem:[#allocation2 + $0x578] sm:$0xff]
    %v1505 = vld [vmem:[#allocation2 + $0x580] sm:$0xff]
    %v1506 = vld [vmem:[#allocation2 + $0x588] sm:$0xff]
    %v1507 = vld [vmem:[#allocation2 + $0x590] sm:$0xff]
    %v1508 = vld [vmem:[#allocation2 + $0x598] sm:$0xff]
    %v1509 = vld [vmem:[#allocation2 + $0x5a0] sm:$0xff]
    %v1510 = vld [vmem:[#allocation2 + $0x5a8] sm:$0xff]
    %v1511 = vld [vmem:[#allocation2 + $0x5b0] sm:$0xff]
    %v1512 = vld [vmem:[#allocation2 + $0x5b8] sm:$0xff]
    %v1513 = vld [vmem:[#allocation2 + $0x5c0] sm:$0xff]
    %v1514 = vld [vmem:[#allocation2 + $0x5c8] sm:$0xff]
    %v1515 = vld [vmem:[#allocation2 + $0x5d0] sm:$0xff]
    %v1516 = vld [vmem:[#allocation2 + $0x5d8] sm:$0xff]
    %v1517 = vld [vmem:[#allocation2 + $0x5e0] sm:$0xff]
    %v1518 = vld [vmem:[#allocation2 + $0x5e8] sm:$0xff]
    %v1519 = vld [vmem:[#allocation2 + $0x5f0] sm:$0xff]
    %v1520 = vld [vmem:[#allocation2 + $0x5f8] sm:$0xff]
    %v1521 = vld [vmem:[%s2] sm:$0xf]
    %v1523 = vperm.slane %v1521, 0
    %v1524 = vperm.slane %v1521, 1
    %v1525 = vperm.slane %v1521, 2
    %v1526 = vperm.slane %v1521, 3
    %v1723 = vunpack.c.l.b16 %v1329
    %v1724 = vunpack.c.h.b16 %v1329
    %v1725 = vunpack.c.l.b16 %v1330
    %v1726 = vunpack.c.h.b16 %v1330
    %v1727 = vunpack.c.l.b16 %v1331
    %v1728 = vunpack.c.h.b16 %v1331
    %v1729 = vunpack.c.l.b16 %v1332
    %v1730 = vunpack.c.h.b16 %v1332
    %v1731 = vunpack.c.l.b16 %v1333
    %v1732 = vunpack.c.h.b16 %v1333
    %v1733 = vunpack.c.l.b16 %v1334
    %v1734 = vunpack.c.h.b16 %v1334
    %v1735 = vunpack.c.l.b16 %v1335
    %v1736 = vunpack.c.h.b16 %v1335
    %v1737 = vunpack.c.l.b16 %v1336
    %v1738 = vunpack.c.h.b16 %v1336
    %v1739 = vunpack.c.l.b16 %v1337
    %v1740 = vunpack.c.h.b16 %v1337
    %v1741 = vunpack.c.l.b16 %v1338
    %v1742 = vunpack.c.h.b16 %v1338
    %v1743 = vunpack.c.l.b16 %v1339
    %v1744 = vunpack.c.h.b16 %v1339
    %v1745 = vunpack.c.l.b16 %v1340
    %v1746 = vunpack.c.h.b16 %v1340
    %v1747 = vunpack.c.l.b16 %v1341
    %v1748 = vunpack.c.h.b16 %v1341
    %v1749 = vunpack.c.l.b16 %v1342
    %v1750 = vunpack.c.h.b16 %v1342
    %v1751 = vunpack.c.l.b16 %v1343
    %v1752 = vunpack.c.h.b16 %v1343
    %v1753 = vunpack.c.l.b16 %v1344
    %v1754 = vunpack.c.h.b16 %v1344
    %v1755 = vunpack.c.l.b16 %v1345
    %v1756 = vunpack.c.h.b16 %v1345
    %v1757 = vunpack.c.l.b16 %v1346
    %v1758 = vunpack.c.h.b16 %v1346
    %v1759 = vunpack.c.l.b16 %v1347
    %v1760 = vunpack.c.h.b16 %v1347
    %v1761 = vunpack.c.l.b16 %v1348
    %v1762 = vunpack.c.h.b16 %v1348
    %v1763 = vunpack.c.l.b16 %v1349
    %v1764 = vunpack.c.h.b16 %v1349
    %v1765 = vunpack.c.l.b16 %v1350
    %v1766 = vunpack.c.h.b16 %v1350
    %v1767 = vunpack.c.l.b16 %v1351
    %v1768 = vunpack.c.h.b16 %v1351
    %v1769 = vunpack.c.l.b16 %v1352
    %v1770 = vunpack.c.h.b16 %v1352
    %v1771 = vunpack.c.l.b16 %v1353
    %v1772 = vunpack.c.h.b16 %v1353
    %v1773 = vunpack.c.l.b16 %v1354
    %v1774 = vunpack.c.h.b16 %v1354
    %v1775 = vunpack.c.l.b16 %v1355
    %v1776 = vunpack.c.h.b16 %v1355
    %v1777 = vunpack.c.l.b16 %v1356
    %v1778 = vunpack.c.h.b16 %v1356
    %v1779 = vunpack.c.l.b16 %v1357
    %v1780 = vunpack.c.h.b16 %v1357
    %v1781 = vunpack.c.l.b16 %v1358
    %v1782 = vunpack.c.h.b16 %v1358
    %v1783 = vunpack.c.l.b16 %v1359
    %v1784 = vunpack.c.h.b16 %v1359
    %v1785 = vunpack.c.l.b16 %v1360
    %v1786 = vunpack.c.h.b16 %v1360
    %v1787 = vunpack.c.l.b16 %v1361
    %v1788 = vunpack.c.h.b16 %v1361
    %v1789 = vunpack.c.l.b16 %v1362
    %v1790 = vunpack.c.h.b16 %v1362
    %v1791 = vunpack.c.l.b16 %v1363
    %v1792 = vunpack.c.h.b16 %v1363
    %v1793 = vunpack.c.l.b16 %v1364
    %v1794 = vunpack.c.h.b16 %v1364
    %v1795 = vunpack.c.l.b16 %v1365
    %v1796 = vunpack.c.h.b16 %v1365
    %v1797 = vunpack.c.l.b16 %v1366
    %v1798 = vunpack.c.h.b16 %v1366
    %v1799 = vunpack.c.l.b16 %v1367
    %v1800 = vunpack.c.h.b16 %v1367
    %v1801 = vunpack.c.l.b16 %v1368
    %v1802 = vunpack.c.h.b16 %v1368
    %v1803 = vunpack.c.l.b16 %v1369
    %v1804 = vunpack.c.h.b16 %v1369
    %v1805 = vunpack.c.l.b16 %v1370
    %v1806 = vunpack.c.h.b16 %v1370
    %v1807 = vunpack.c.l.b16 %v1371
    %v1808 = vunpack.c.h.b16 %v1371
    %v1809 = vunpack.c.l.b16 %v1372
    %v1810 = vunpack.c.h.b16 %v1372
    %v1811 = vunpack.c.l.b16 %v1373
    %v1812 = vunpack.c.h.b16 %v1373
    %v1813 = vunpack.c.l.b16 %v1374
    %v1814 = vunpack.c.h.b16 %v1374
    %v1815 = vunpack.c.l.b16 %v1375
    %v1816 = vunpack.c.h.b16 %v1375
    %v1817 = vunpack.c.l.b16 %v1376
    %v1818 = vunpack.c.h.b16 %v1376
    %v1819 = vunpack.c.l.b16 %v1377
    %v1820 = vunpack.c.h.b16 %v1377
    %v1821 = vunpack.c.l.b16 %v1378
    %v1822 = vunpack.c.h.b16 %v1378
    %v1823 = vunpack.c.l.b16 %v1379
    %v1824 = vunpack.c.h.b16 %v1379
    %v1825 = vunpack.c.l.b16 %v1380
    %v1826 = vunpack.c.h.b16 %v1380
    %v1827 = vunpack.c.l.b16 %v1381
    %v1828 = vunpack.c.h.b16 %v1381
    %v1829 = vunpack.c.l.b16 %v1382
    %v1830 = vunpack.c.h.b16 %v1382
    %v1831 = vunpack.c.l.b16 %v1383
    %v1832 = vunpack.c.h.b16 %v1383
    %v1833 = vunpack.c.l.b16 %v1384
    %v1834 = vunpack.c.h.b16 %v1384
    %v1835 = vunpack.c.l.b16 %v1385
    %v1836 = vunpack.c.h.b16 %v1385
    %v1837 = vunpack.c.l.b16 %v1386
    %v1838 = vunpack.c.h.b16 %v1386
    %v1839 = vunpack.c.l.b16 %v1387
    %v1840 = vunpack.c.h.b16 %v1387
    %v1841 = vunpack.c.l.b16 %v1388
    %v1842 = vunpack.c.h.b16 %v1388
    %v1843 = vunpack.c.l.b16 %v1389
    %v1844 = vunpack.c.h.b16 %v1389
    %v1845 = vunpack.c.l.b16 %v1390
    %v1846 = vunpack.c.h.b16 %v1390
    %v1847 = vunpack.c.l.b16 %v1391
    %v1848 = vunpack.c.h.b16 %v1391
    %v1849 = vunpack.c.l.b16 %v1392
    %v1850 = vunpack.c.h.b16 %v1392
    %v1851 = vunpack.c.l.b16 %v1393
    %v1852 = vunpack.c.h.b16 %v1393
    %v1853 = vunpack.c.l.b16 %v1394
    %v1854 = vunpack.c.h.b16 %v1394
    %v1855 = vunpack.c.l.b16 %v1395
    %v1856 = vunpack.c.h.b16 %v1395
    %v1857 = vunpack.c.l.b16 %v1396
    %v1858 = vunpack.c.h.b16 %v1396
    %v1859 = vunpack.c.l.b16 %v1397
    %v1860 = vunpack.c.h.b16 %v1397
    %v1861 = vunpack.c.l.b16 %v1398
    %v1862 = vunpack.c.h.b16 %v1398
    %v1863 = vunpack.c.l.b16 %v1399
    %v1864 = vunpack.c.h.b16 %v1399
    %v1865 = vunpack.c.l.b16 %v1400
    %v1866 = vunpack.c.h.b16 %v1400
    %v1867 = vunpack.c.l.b16 %v1401
    %v1868 = vunpack.c.h.b16 %v1401
    %v1869 = vunpack.c.l.b16 %v1402
    %v1870 = vunpack.c.h.b16 %v1402
    %v1871 = vunpack.c.l.b16 %v1403
    %v1872 = vunpack.c.h.b16 %v1403
    %v1873 = vunpack.c.l.b16 %v1404
    %v1874 = vunpack.c.h.b16 %v1404
    %v1875 = vunpack.c.l.b16 %v1405
    %v1876 = vunpack.c.h.b16 %v1405
    %v1877 = vunpack.c.l.b16 %v1406
    %v1878 = vunpack.c.h.b16 %v1406
    %v1879 = vunpack.c.l.b16 %v1407
    %v1880 = vunpack.c.h.b16 %v1407
    %v1881 = vunpack.c.l.b16 %v1408
    %v1882 = vunpack.c.h.b16 %v1408
    %v1883 = vunpack.c.l.b16 %v1409
    %v1884 = vunpack.c.h.b16 %v1409
    %v1885 = vunpack.c.l.b16 %v1410
    %v1886 = vunpack.c.h.b16 %v1410
    %v1887 = vunpack.c.l.b16 %v1411
    %v1888 = vunpack.c.h.b16 %v1411
    %v1889 = vunpack.c.l.b16 %v1412
    %v1890 = vunpack.c.h.b16 %v1412
    %v1891 = vunpack.c.l.b16 %v1413
    %v1892 = vunpack.c.h.b16 %v1413
    %v1893 = vunpack.c.l.b16 %v1414
    %v1894 = vunpack.c.h.b16 %v1414
    %v1895 = vunpack.c.l.b16 %v1415
    %v1896 = vunpack.c.h.b16 %v1415
    %v1897 = vunpack.c.l.b16 %v1416
    %v1898 = vunpack.c.h.b16 %v1416
    %v1899 = vunpack.c.l.b16 %v1417
    %v1900 = vunpack.c.h.b16 %v1417
    %v1901 = vunpack.c.l.b16 %v1418
    %v1902 = vunpack.c.h.b16 %v1418
    %v1903 = vunpack.c.l.b16 %v1419
    %v1904 = vunpack.c.h.b16 %v1419
    %v1905 = vunpack.c.l.b16 %v1420
    %v1906 = vunpack.c.h.b16 %v1420
    %v1907 = vunpack.c.l.b16 %v1421
    %v1908 = vunpack.c.h.b16 %v1421
    %v1909 = vunpack.c.l.b16 %v1422
    %v1910 = vunpack.c.h.b16 %v1422
    %v1911 = vunpack.c.l.b16 %v1423
    %v1912 = vunpack.c.h.b16 %v1423
    %v1913 = vunpack.c.l.b16 %v1424
    %v1914 = vunpack.c.h.b16 %v1424
    %v1915 = vunpack.c.l.b16 %v1425
    %v1916 = vunpack.c.h.b16 %v1425
    %v1917 = vunpack.c.l.b16 %v1426
    %v1918 = vunpack.c.h.b16 %v1426
    %v1919 = vunpack.c.l.b16 %v1427
    %v1920 = vunpack.c.h.b16 %v1427
    %v1921 = vunpack.c.l.b16 %v1428
    %v1922 = vunpack.c.h.b16 %v1428
    %v1923 = vunpack.c.l.b16 %v1429
    %v1924 = vunpack.c.h.b16 %v1429
    %v1925 = vunpack.c.l.b16 %v1430
    %v1926 = vunpack.c.h.b16 %v1430
    %v1927 = vunpack.c.l.b16 %v1431
    %v1928 = vunpack.c.h.b16 %v1431
    %v1929 = vunpack.c.l.b16 %v1432
    %v1930 = vunpack.c.h.b16 %v1432
    %v1931 = vunpack.c.l.b16 %v1433
    %v1932 = vunpack.c.h.b16 %v1433
    %v1933 = vunpack.c.l.b16 %v1434
    %v1934 = vunpack.c.h.b16 %v1434
    %v1935 = vunpack.c.l.b16 %v1435
    %v1936 = vunpack.c.h.b16 %v1435
    %v1937 = vunpack.c.l.b16 %v1436
    %v1938 = vunpack.c.h.b16 %v1436
    %v1939 = vunpack.c.l.b16 %v1437
    %v1940 = vunpack.c.h.b16 %v1437
    %v1941 = vunpack.c.l.b16 %v1438
    %v1942 = vunpack.c.h.b16 %v1438
    %v1943 = vunpack.c.l.b16 %v1439
    %v1944 = vunpack.c.h.b16 %v1439
    %v1945 = vunpack.c.l.b16 %v1440
    %v1946 = vunpack.c.h.b16 %v1440
    %v1947 = vunpack.c.l.b16 %v1441
    %v1948 = vunpack.c.h.b16 %v1441
    %v1949 = vunpack.c.l.b16 %v1442
    %v1950 = vunpack.c.h.b16 %v1442
    %v1951 = vunpack.c.l.b16 %v1443
    %v1952 = vunpack.c.h.b16 %v1443
    %v1953 = vunpack.c.l.b16 %v1444
    %v1954 = vunpack.c.h.b16 %v1444
    %v1955 = vunpack.c.l.b16 %v1445
    %v1956 = vunpack.c.h.b16 %v1445
    %v1957 = vunpack.c.l.b16 %v1446
    %v1958 = vunpack.c.h.b16 %v1446
    %v1959 = vunpack.c.l.b16 %v1447
    %v1960 = vunpack.c.h.b16 %v1447
    %v1961 = vunpack.c.l.b16 %v1448
    %v1962 = vunpack.c.h.b16 %v1448
    %v1963 = vunpack.c.l.b16 %v1449
    %v1964 = vunpack.c.h.b16 %v1449
    %v1965 = vunpack.c.l.b16 %v1450
    %v1966 = vunpack.c.h.b16 %v1450
    %v1967 = vunpack.c.l.b16 %v1451
    %v1968 = vunpack.c.h.b16 %v1451
    %v1969 = vunpack.c.l.b16 %v1452
    %v1970 = vunpack.c.h.b16 %v1452
    %v1971 = vunpack.c.l.b16 %v1453
    %v1972 = vunpack.c.h.b16 %v1453
    %v1973 = vunpack.c.l.b16 %v1454
    %v1974 = vunpack.c.h.b16 %v1454
    %v1975 = vunpack.c.l.b16 %v1455
    %v1976 = vunpack.c.h.b16 %v1455
    %v1977 = vunpack.c.l.b16 %v1456
    %v1978 = vunpack.c.h.b16 %v1456
    %v1979 = vunpack.c.l.b16 %v1457
    %v1980 = vunpack.c.h.b16 %v1457
    %v1981 = vunpack.c.l.b16 %v1458
    %v1982 = vunpack.c.h.b16 %v1458
    %v1983 = vunpack.c.l.b16 %v1459
    %v1984 = vunpack.c.h.b16 %v1459
    %v1985 = vunpack.c.l.b16 %v1460
    %v1986 = vunpack.c.h.b16 %v1460
    %v1987 = vunpack.c.l.b16 %v1461
    %v1988 = vunpack.c.h.b16 %v1461
    %v1989 = vunpack.c.l.b16 %v1462
    %v1990 = vunpack.c.h.b16 %v1462
    %v1991 = vunpack.c.l.b16 %v1463
    %v1992 = vunpack.c.h.b16 %v1463
    %v1993 = vunpack.c.l.b16 %v1464
    %v1994 = vunpack.c.h.b16 %v1464
    %v1995 = vunpack.c.l.b16 %v1465
    %v1996 = vunpack.c.h.b16 %v1465
    %v1997 = vunpack.c.l.b16 %v1466
    %v1998 = vunpack.c.h.b16 %v1466
    %v1999 = vunpack.c.l.b16 %v1467
    %v2000 = vunpack.c.h.b16 %v1467
    %v2001 = vunpack.c.l.b16 %v1468
    %v2002 = vunpack.c.h.b16 %v1468
    %v2003 = vunpack.c.l.b16 %v1469
    %v2004 = vunpack.c.h.b16 %v1469
    %v2005 = vunpack.c.l.b16 %v1470
    %v2006 = vunpack.c.h.b16 %v1470
    %v2007 = vunpack.c.l.b16 %v1471
    %v2008 = vunpack.c.h.b16 %v1471
    %v2009 = vunpack.c.l.b16 %v1472
    %v2010 = vunpack.c.h.b16 %v1472
    %v2011 = vunpack.c.l.b16 %v1473
    %v2012 = vunpack.c.h.b16 %v1473
    %v2013 = vunpack.c.l.b16 %v1474
    %v2014 = vunpack.c.h.b16 %v1474
    %v2015 = vunpack.c.l.b16 %v1475
    %v2016 = vunpack.c.h.b16 %v1475
    %v2017 = vunpack.c.l.b16 %v1476
    %v2018 = vunpack.c.h.b16 %v1476
    %v2019 = vunpack.c.l.b16 %v1477
    %v2020 = vunpack.c.h.b16 %v1477
    %v2021 = vunpack.c.l.b16 %v1478
    %v2022 = vunpack.c.h.b16 %v1478
    %v2023 = vunpack.c.l.b16 %v1479
    %v2024 = vunpack.c.h.b16 %v1479
    %v2025 = vunpack.c.l.b16 %v1480
    %v2026 = vunpack.c.h.b16 %v1480
    %v2027 = vunpack.c.l.b16 %v1481
    %v2028 = vunpack.c.h.b16 %v1481
    %v2029 = vunpack.c.l.b16 %v1482
    %v2030 = vunpack.c.h.b16 %v1482
    %v2031 = vunpack.c.l.b16 %v1483
    %v2032 = vunpack.c.h.b16 %v1483
    %v2033 = vunpack.c.l.b16 %v1484
    %v2034 = vunpack.c.h.b16 %v1484
    %v2035 = vunpack.c.l.b16 %v1485
    %v2036 = vunpack.c.h.b16 %v1485
    %v2037 = vunpack.c.l.b16 %v1486
    %v2038 = vunpack.c.h.b16 %v1486
    %v2039 = vunpack.c.l.b16 %v1487
    %v2040 = vunpack.c.h.b16 %v1487
    %v2041 = vunpack.c.l.b16 %v1488
    %v2042 = vunpack.c.h.b16 %v1488
    %v2043 = vunpack.c.l.b16 %v1489
    %v2044 = vunpack.c.h.b16 %v1489
    %v2045 = vunpack.c.l.b16 %v1490
    %v2046 = vunpack.c.h.b16 %v1490
    %v2047 = vunpack.c.l.b16 %v1491
    %v2048 = vunpack.c.h.b16 %v1491
    %v2049 = vunpack.c.l.b16 %v1492
    %v2050 = vunpack.c.h.b16 %v1492
    %v2051 = vunpack.c.l.b16 %v1493
    %v2052 = vunpack.c.h.b16 %v1493
    %v2053 = vunpack.c.l.b16 %v1494
    %v2054 = vunpack.c.h.b16 %v1494
    %v2055 = vunpack.c.l.b16 %v1495
    %v2056 = vunpack.c.h.b16 %v1495
    %v2057 = vunpack.c.l.b16 %v1496
    %v2058 = vunpack.c.h.b16 %v1496
    %v2059 = vunpack.c.l.b16 %v1497
    %v2060 = vunpack.c.h.b16 %v1497
    %v2061 = vunpack.c.l.b16 %v1498
    %v2062 = vunpack.c.h.b16 %v1498
    %v2063 = vunpack.c.l.b16 %v1499
    %v2064 = vunpack.c.h.b16 %v1499
    %v2065 = vunpack.c.l.b16 %v1500
    %v2066 = vunpack.c.h.b16 %v1500
    %v2067 = vunpack.c.l.b16 %v1501
    %v2068 = vunpack.c.h.b16 %v1501
    %v2069 = vunpack.c.l.b16 %v1502
    %v2070 = vunpack.c.h.b16 %v1502
    %v2071 = vunpack.c.l.b16 %v1503
    %v2072 = vunpack.c.h.b16 %v1503
    %v2073 = vunpack.c.l.b16 %v1504
    %v2074 = vunpack.c.h.b16 %v1504
    %v2075 = vunpack.c.l.b16 %v1505
    %v2076 = vunpack.c.h.b16 %v1505
    %v2077 = vunpack.c.l.b16 %v1506
    %v2078 = vunpack.c.h.b16 %v1506
    %v2079 = vunpack.c.l.b16 %v1507
    %v2080 = vunpack.c.h.b16 %v1507
    %v2081 = vunpack.c.l.b16 %v1508
    %v2082 = vunpack.c.h.b16 %v1508
    %v2083 = vunpack.c.l.b16 %v1509
    %v2084 = vunpack.c.h.b16 %v1509
    %v2085 = vunpack.c.l.b16 %v1510
    %v2086 = vunpack.c.h.b16 %v1510
    %v2087 = vunpack.c.l.b16 %v1511
    %v2088 = vunpack.c.h.b16 %v1511
    %v2089 = vunpack.c.l.b16 %v1512
    %v2090 = vunpack.c.h.b16 %v1512
    %v2091 = vunpack.c.l.b16 %v1513
    %v2092 = vunpack.c.h.b16 %v1513
    %v2093 = vunpack.c.l.b16 %v1514
    %v2094 = vunpack.c.h.b16 %v1514
    %v2095 = vunpack.c.l.b16 %v1515
    %v2096 = vunpack.c.h.b16 %v1515
    %v2097 = vunpack.c.l.b16 %v1516
    %v2098 = vunpack.c.h.b16 %v1516
    %v2099 = vunpack.c.l.b16 %v1517
    %v2100 = vunpack.c.h.b16 %v1517
    %v2101 = vunpack.c.l.b16 %v1518
    %v2102 = vunpack.c.h.b16 %v1518
    %v2103 = vunpack.c.l.b16 %v1519
    %v2104 = vunpack.c.h.b16 %v1519
    %v2105 = vunpack.c.l.b16 %v1520
    %v2106 = vunpack.c.h.b16 %v1520
    %v2107 = vpack.c.b16 %v1727, %v1723
    %v2108 = vpack.c.b16 %v1728, %v1724
    %v2109 = vpack.c.b16 %v1729, %v1725
    %v2110 = vpack.c.b16 %v1730, %v1726
    %v2111 = vpack.c.b16 %v1735, %v1731
    %v2112 = vpack.c.b16 %v1736, %v1732
    %v2113 = vpack.c.b16 %v1737, %v1733
    %v2114 = vpack.c.b16 %v1738, %v1734
    %v2115 = vpack.c.b16 %v1743, %v1739
    %v2116 = vpack.c.b16 %v1744, %v1740
    %v2117 = vpack.c.b16 %v1745, %v1741
    %v2118 = vpack.c.b16 %v1746, %v1742
    %v2119 = vpack.c.b16 %v1751, %v1747
    %v2120 = vpack.c.b16 %v1752, %v1748
    %v2121 = vpack.c.b16 %v1753, %v1749
    %v2122 = vpack.c.b16 %v1754, %v1750
    %v2123 = vpack.c.b16 %v1759, %v1755
    %v2124 = vpack.c.b16 %v1760, %v1756
    %v2125 = vpack.c.b16 %v1761, %v1757
    %v2126 = vpack.c.b16 %v1762, %v1758
    %v2127 = vpack.c.b16 %v1767, %v1763
    %v2128 = vpack.c.b16 %v1768, %v1764
    %v2129 = vpack.c.b16 %v1769, %v1765
    %v2130 = vpack.c.b16 %v1770, %v1766
    %v2131 = vpack.c.b16 %v1775, %v1771
    %v2132 = vpack.c.b16 %v1776, %v1772
    %v2133 = vpack.c.b16 %v1777, %v1773
    %v2134 = vpack.c.b16 %v1778, %v1774
    %v2135 = vpack.c.b16 %v1783, %v1779
    %v2136 = vpack.c.b16 %v1784, %v1780
    %v2137 = vpack.c.b16 %v1785, %v1781
    %v2138 = vpack.c.b16 %v1786, %v1782
    %v2139 = vpack.c.b16 %v1791, %v1787
    %v2140 = vpack.c.b16 %v1792, %v1788
    %v2141 = vpack.c.b16 %v1793, %v1789
    %v2142 = vpack.c.b16 %v1794, %v1790
    %v2143 = vpack.c.b16 %v1799, %v1795
    %v2144 = vpack.c.b16 %v1800, %v1796
    %v2145 = vpack.c.b16 %v1801, %v1797
    %v2146 = vpack.c.b16 %v1802, %v1798
    %v2147 = vpack.c.b16 %v1807, %v1803
    %v2148 = vpack.c.b16 %v1808, %v1804
    %v2149 = vpack.c.b16 %v1809, %v1805
    %v2150 = vpack.c.b16 %v1810, %v1806
    %v2151 = vpack.c.b16 %v1815, %v1811
    %v2152 = vpack.c.b16 %v1816, %v1812
    %v2153 = vpack.c.b16 %v1817, %v1813
    %v2154 = vpack.c.b16 %v1818, %v1814
    %v2155 = vpack.c.b16 %v1823, %v1819
    %v2156 = vpack.c.b16 %v1824, %v1820
    %v2157 = vpack.c.b16 %v1825, %v1821
    %v2158 = vpack.c.b16 %v1826, %v1822
    %v2159 = vpack.c.b16 %v1831, %v1827
    %v2160 = vpack.c.b16 %v1832, %v1828
    %v2161 = vpack.c.b16 %v1833, %v1829
    %v2162 = vpack.c.b16 %v1834, %v1830
    %v2163 = vpack.c.b16 %v1839, %v1835
    %v2164 = vpack.c.b16 %v1840, %v1836
    %v2165 = vpack.c.b16 %v1841, %v1837
    %v2166 = vpack.c.b16 %v1842, %v1838
    %v2167 = vpack.c.b16 %v1847, %v1843
    %v2168 = vpack.c.b16 %v1848, %v1844
    %v2169 = vpack.c.b16 %v1849, %v1845
    %v2170 = vpack.c.b16 %v1850, %v1846
    %v2171 = vpack.c.b16 %v1855, %v1851
    %v2172 = vpack.c.b16 %v1856, %v1852
    %v2173 = vpack.c.b16 %v1857, %v1853
    %v2174 = vpack.c.b16 %v1858, %v1854
    %v2175 = vpack.c.b16 %v1863, %v1859
    %v2176 = vpack.c.b16 %v1864, %v1860
    %v2177 = vpack.c.b16 %v1865, %v1861
    %v2178 = vpack.c.b16 %v1866, %v1862
    %v2179 = vpack.c.b16 %v1871, %v1867
    %v2180 = vpack.c.b16 %v1872, %v1868
    %v2181 = vpack.c.b16 %v1873, %v1869
    %v2182 = vpack.c.b16 %v1874, %v1870
    %v2183 = vpack.c.b16 %v1879, %v1875
    %v2184 = vpack.c.b16 %v1880, %v1876
    %v2185 = vpack.c.b16 %v1881, %v1877
    %v2186 = vpack.c.b16 %v1882, %v1878
    %v2187 = vpack.c.b16 %v1887, %v1883
    %v2188 = vpack.c.b16 %v1888, %v1884
    %v2189 = vpack.c.b16 %v1889, %v1885
    %v2190 = vpack.c.b16 %v1890, %v1886
    %v2191 = vpack.c.b16 %v1895, %v1891
    %v2192 = vpack.c.b16 %v1896, %v1892
    %v2193 = vpack.c.b16 %v1897, %v1893
    %v2194 = vpack.c.b16 %v1898, %v1894
    %v2195 = vpack.c.b16 %v1903, %v1899
    %v2196 = vpack.c.b16 %v1904, %v1900
    %v2197 = vpack.c.b16 %v1905, %v1901
    %v2198 = vpack.c.b16 %v1906, %v1902
    %v2199 = vpack.c.b16 %v1911, %v1907
    %v2200 = vpack.c.b16 %v1912, %v1908
    %v2201 = vpack.c.b16 %v1913, %v1909
    %v2202 = vpack.c.b16 %v1914, %v1910
    %v2203 = vpack.c.b16 %v1919, %v1915
    %v2204 = vpack.c.b16 %v1920, %v1916
    %v2205 = vpack.c.b16 %v1921, %v1917
    %v2206 = vpack.c.b16 %v1922, %v1918
    %v2207 = vpack.c.b16 %v1927, %v1923
    %v2208 = vpack.c.b16 %v1928, %v1924
    %v2209 = vpack.c.b16 %v1929, %v1925
    %v2210 = vpack.c.b16 %v1930, %v1926
    %v2211 = vpack.c.b16 %v1935, %v1931
    %v2212 = vpack.c.b16 %v1936, %v1932
    %v2213 = vpack.c.b16 %v1937, %v1933
    %v2214 = vpack.c.b16 %v1938, %v1934
    %v2215 = vpack.c.b16 %v1943, %v1939
    %v2216 = vpack.c.b16 %v1944, %v1940
    %v2217 = vpack.c.b16 %v1945, %v1941
    %v2218 = vpack.c.b16 %v1946, %v1942
    %v2219 = vpack.c.b16 %v1951, %v1947
    %v2220 = vpack.c.b16 %v1952, %v1948
    %v2221 = vpack.c.b16 %v1953, %v1949
    %v2222 = vpack.c.b16 %v1954, %v1950
    %v2223 = vpack.c.b16 %v1959, %v1955
    %v2224 = vpack.c.b16 %v1960, %v1956
    %v2225 = vpack.c.b16 %v1961, %v1957
    %v2226 = vpack.c.b16 %v1962, %v1958
    %v2227 = vpack.c.b16 %v1967, %v1963
    %v2228 = vpack.c.b16 %v1968, %v1964
    %v2229 = vpack.c.b16 %v1969, %v1965
    %v2230 = vpack.c.b16 %v1970, %v1966
    %v2231 = vpack.c.b16 %v1975, %v1971
    %v2232 = vpack.c.b16 %v1976, %v1972
    %v2233 = vpack.c.b16 %v1977, %v1973
    %v2234 = vpack.c.b16 %v1978, %v1974
    %v2235 = vpack.c.b16 %v1983, %v1979
    %v2236 = vpack.c.b16 %v1984, %v1980
    %v2237 = vpack.c.b16 %v1985, %v1981
    %v2238 = vpack.c.b16 %v1986, %v1982
    %v2239 = vpack.c.b16 %v1991, %v1987
    %v2240 = vpack.c.b16 %v1992, %v1988
    %v2241 = vpack.c.b16 %v1993, %v1989
    %v2242 = vpack.c.b16 %v1994, %v1990
    %v2243 = vpack.c.b16 %v1999, %v1995
    %v2244 = vpack.c.b16 %v2000, %v1996
    %v2245 = vpack.c.b16 %v2001, %v1997
    %v2246 = vpack.c.b16 %v2002, %v1998
    %v2247 = vpack.c.b16 %v2007, %v2003
    %v2248 = vpack.c.b16 %v2008, %v2004
    %v2249 = vpack.c.b16 %v2009, %v2005
    %v2250 = vpack.c.b16 %v2010, %v2006
    %v2251 = vpack.c.b16 %v2015, %v2011
    %v2252 = vpack.c.b16 %v2016, %v2012
    %v2253 = vpack.c.b16 %v2017, %v2013
    %v2254 = vpack.c.b16 %v2018, %v2014
    %v2255 = vpack.c.b16 %v2023, %v2019
    %v2256 = vpack.c.b16 %v2024, %v2020
    %v2257 = vpack.c.b16 %v2025, %v2021
    %v2258 = vpack.c.b16 %v2026, %v2022
    %v2259 = vpack.c.b16 %v2031, %v2027
    %v2260 = vpack.c.b16 %v2032, %v2028
    %v2261 = vpack.c.b16 %v2033, %v2029
    %v2262 = vpack.c.b16 %v2034, %v2030
    %v2263 = vpack.c.b16 %v2039, %v2035
    %v2264 = vpack.c.b16 %v2040, %v2036
    %v2265 = vpack.c.b16 %v2041, %v2037
    %v2266 = vpack.c.b16 %v2042, %v2038
    %v2267 = vpack.c.b16 %v2047, %v2043
    %v2268 = vpack.c.b16 %v2048, %v2044
    %v2269 = vpack.c.b16 %v2049, %v2045
    %v2270 = vpack.c.b16 %v2050, %v2046
    %v2271 = vpack.c.b16 %v2055, %v2051
    %v2272 = vpack.c.b16 %v2056, %v2052
    %v2273 = vpack.c.b16 %v2057, %v2053
    %v2274 = vpack.c.b16 %v2058, %v2054
    %v2275 = vpack.c.b16 %v2063, %v2059
    %v2276 = vpack.c.b16 %v2064, %v2060
    %v2277 = vpack.c.b16 %v2065, %v2061
    %v2278 = vpack.c.b16 %v2066, %v2062
    %v2279 = vpack.c.b16 %v2071, %v2067
    %v2280 = vpack.c.b16 %v2072, %v2068
    %v2281 = vpack.c.b16 %v2073, %v2069
    %v2282 = vpack.c.b16 %v2074, %v2070
    %v2283 = vpack.c.b16 %v2079, %v2075
    %v2284 = vpack.c.b16 %v2080, %v2076
    %v2285 = vpack.c.b16 %v2081, %v2077
    %v2286 = vpack.c.b16 %v2082, %v2078
    %v2287 = vpack.c.b16 %v2087, %v2083
    %v2288 = vpack.c.b16 %v2088, %v2084
    %v2289 = vpack.c.b16 %v2089, %v2085
    %v2290 = vpack.c.b16 %v2090, %v2086
    %v2291 = vpack.c.b16 %v2095, %v2091
    %v2292 = vpack.c.b16 %v2096, %v2092
    %v2293 = vpack.c.b16 %v2097, %v2093
    %v2294 = vpack.c.b16 %v2098, %v2094
    %v2295 = vpack.c.b16 %v2103, %v2099
    %v2296 = vpack.c.b16 %v2104, %v2100
    %v2297 = vpack.c.b16 %v2105, %v2101
    %v2298 = vpack.c.b16 %v2106, %v2102
    %2491 = vmatpush.bf16.msra.mxu0 %v2135
    %2492 = vmatpush.bf16.msra.mxu0 %v2131
    %2493 = vmatpush.bf16.msra.mxu0 %v2127
    %2494 = vmatpush.bf16.msra.mxu0 %v2123
    %2495 = vmatpush.bf16.msra.mxu0 %v2119
    %2496 = vmatpush.bf16.msra.mxu0 %v2115
    %2497 = vmatpush.bf16.msra.mxu0 %v2111
    %2498 = vmatpush.bf16.msra.mxu0 %v2107
    %2499 = vmatmul.bf16.gmra.mxu0 %v1233
    %v2500 = vpop.f32.mrf.mxu0
    %v2501 = vadd.f32 %v1523, %v2500
    %v2502 = vpop.f32.mrf.mxu0
    %v2503 = vadd.f32 %v1523, %v2502
    %2504 = vmatmul.bf16.gmra.mxu0 %v1239
    %v2505 = vpop.f32.mrf.mxu0
    %v2506 = vadd.f32 %v1523, %v2505
    %v2507 = vpop.f32.mrf.mxu0
    %v2508 = vadd.f32 %v1523, %v2507
    %2509 = vmatmul.bf16.gmra.mxu0 %v1245
    %v2510 = vpop.f32.mrf.mxu0
    %v2511 = vadd.f32 %v1523, %v2510
    %v2512 = vpop.f32.mrf.mxu0
    %v2513 = vadd.f32 %v1523, %v2512
    %2514 = vmatmul.bf16.gmra.mxu0 %v1251
    %v2515 = vpop.f32.mrf.mxu0
    %v2516 = vadd.f32 %v1523, %v2515
    %v2517 = vpop.f32.mrf.mxu0
    %v2518 = vadd.f32 %v1523, %v2517
    %2519 = vmatmul.bf16.gmra.mxu0 %v1257
    %v2520 = vpop.f32.mrf.mxu0
    %v2521 = vadd.f32 %v1523, %v2520
    %v2522 = vpop.f32.mrf.mxu0
    %v2523 = vadd.f32 %v1523, %v2522
    %2524 = vmatmul.bf16.gmra.mxu0 %v1263
    %v2525 = vpop.f32.mrf.mxu0
    %v2526 = vadd.f32 %v1523, %v2525
    %v2527 = vpop.f32.mrf.mxu0
    %v2528 = vadd.f32 %v1523, %v2527
    %2529 = vmatmul.bf16.gmra.mxu0 %v1269
    %v2530 = vpop.f32.mrf.mxu0
    %v2531 = vadd.f32 %v1523, %v2530
    %v2532 = vpop.f32.mrf.mxu0
    %v2533 = vadd.f32 %v1523, %v2532
    %2534 = vmatmul.bf16.gmra.mxu0 %v1275
    %v2535 = vpop.f32.mrf.mxu0
    %v2536 = vadd.f32 %v1523, %v2535
    %v2537 = vpop.f32.mrf.mxu0
    %v2538 = vadd.f32 %v1523, %v2537
    %2539 = vmatmul.bf16.gmra.mxu0 %v1281
    %v2540 = vpop.f32.mrf.mxu0
    %v2541 = vadd.f32 %v1523, %v2540
    %v2542 = vpop.f32.mrf.mxu0
    %v2543 = vadd.f32 %v1523, %v2542
    %2544 = vmatmul.bf16.gmra.mxu0 %v1287
    %v2545 = vpop.f32.mrf.mxu0
    %v2546 = vadd.f32 %v1523, %v2545
    %v2547 = vpop.f32.mrf.mxu0
    %v2548 = vadd.f32 %v1523, %v2547
    %2549 = vmatmul.bf16.gmra.mxu0 %v1293
    %v2550 = vpop.f32.mrf.mxu0
    %v2551 = vadd.f32 %v1523, %v2550
    %v2552 = vpop.f32.mrf.mxu0
    %v2553 = vadd.f32 %v1523, %v2552
    %2554 = vmatmul.bf16.gmra.mxu0 %v1299
    %v2555 = vpop.f32.mrf.mxu0
    %v2556 = vadd.f32 %v1523, %v2555
    %v2557 = vpop.f32.mrf.mxu0
    %v2558 = vadd.f32 %v1523, %v2557
    %2559 = vmatmul.bf16.gmra.mxu0 %v1305
    %v2560 = vpop.f32.mrf.mxu0
    %v2561 = vadd.f32 %v1523, %v2560
    %v2562 = vpop.f32.mrf.mxu0
    %v2563 = vadd.f32 %v1523, %v2562
    %2564 = vmatmul.bf16.gmra.mxu0 %v1311
    %v2565 = vpop.f32.mrf.mxu0
    %v2566 = vadd.f32 %v1523, %v2565
    %v2567 = vpop.f32.mrf.mxu0
    %v2568 = vadd.f32 %v1523, %v2567
    %2569 = vmatmul.bf16.gmra.mxu0 %v1317
    %v2570 = vpop.f32.mrf.mxu0
    %v2571 = vadd.f32 %v1523, %v2570
    %v2572 = vpop.f32.mrf.mxu0
    %v2573 = vadd.f32 %v1523, %v2572
    %2574 = vmatmul.bf16.gmra.mxu0 %v1323
    %v2575 = vpop.f32.mrf.mxu0
    %v2576 = vadd.f32 %v1523, %v2575
    %v2577 = vpop.f32.mrf.mxu0
    %v2578 = vadd.f32 %v1523, %v2577
    %2579 = vdwg.mxu0
    %2580 = vmatpush.bf16.msra.mxu0 %v2167
    %2581 = vmatpush.bf16.msra.mxu0 %v2163
    %2582 = vmatpush.bf16.msra.mxu0 %v2159
    %2583 = vmatpush.bf16.msra.mxu0 %v2155
    %2584 = vmatpush.bf16.msra.mxu0 %v2151
    %2585 = vmatpush.bf16.msra.mxu0 %v2147
    %2586 = vmatpush.bf16.msra.mxu0 %v2143
    %2587 = vmatpush.bf16.msra.mxu0 %v2139
    %2588 = vmatmul.bf16.gmra.mxu0 %v1234
    %v2589 = vpop.f32.mrf.mxu0
    %v2590 = vadd.f32 %v2501, %v2589
    %v2591 = vpop.f32.mrf.mxu0
    %v2592 = vadd.f32 %v2503, %v2591
    %2593 = vmatmul.bf16.gmra.mxu0 %v1240
    %v2594 = vpop.f32.mrf.mxu0
    %v2595 = vadd.f32 %v2506, %v2594
    %v2596 = vpop.f32.mrf.mxu0
    %v2597 = vadd.f32 %v2508, %v2596
    %2598 = vmatmul.bf16.gmra.mxu0 %v1246
    %v2599 = vpop.f32.mrf.mxu0
    %v2600 = vadd.f32 %v2511, %v2599
    %v2601 = vpop.f32.mrf.mxu0
    %v2602 = vadd.f32 %v2513, %v2601
    %2603 = vmatmul.bf16.gmra.mxu0 %v1252
    %v2604 = vpop.f32.mrf.mxu0
    %v2605 = vadd.f32 %v2516, %v2604
    %v2606 = vpop.f32.mrf.mxu0
    %v2607 = vadd.f32 %v2518, %v2606
    %2608 = vmatmul.bf16.gmra.mxu0 %v1258
    %v2609 = vpop.f32.mrf.mxu0
    %v2610 = vadd.f32 %v2521, %v2609
    %v2611 = vpop.f32.mrf.mxu0
    %v2612 = vadd.f32 %v2523, %v2611
    %2613 = vmatmul.bf16.gmra.mxu0 %v1264
    %v2614 = vpop.f32.mrf.mxu0
    %v2615 = vadd.f32 %v2526, %v2614
    %v2616 = vpop.f32.mrf.mxu0
    %v2617 = vadd.f32 %v2528, %v2616
    %2618 = vmatmul.bf16.gmra.mxu0 %v1270
    %v2619 = vpop.f32.mrf.mxu0
    %v2620 = vadd.f32 %v2531, %v2619
    %v2621 = vpop.f32.mrf.mxu0
    %v2622 = vadd.f32 %v2533, %v2621
    %2623 = vmatmul.bf16.gmra.mxu0 %v1276
    %v2624 = vpop.f32.mrf.mxu0
    %v2625 = vadd.f32 %v2536, %v2624
    %v2626 = vpop.f32.mrf.mxu0
    %v2627 = vadd.f32 %v2538, %v2626
    %2628 = vmatmul.bf16.gmra.mxu0 %v1282
    %v2629 = vpop.f32.mrf.mxu0
    %v2630 = vadd.f32 %v2541, %v2629
    %v2631 = vpop.f32.mrf.mxu0
    %v2632 = vadd.f32 %v2543, %v2631
    %2633 = vmatmul.bf16.gmra.mxu0 %v1288
    %v2634 = vpop.f32.mrf.mxu0
    %v2635 = vadd.f32 %v2546, %v2634
    %v2636 = vpop.f32.mrf.mxu0
    %v2637 = vadd.f32 %v2548, %v2636
    %2638 = vmatmul.bf16.gmra.mxu0 %v1294
    %v2639 = vpop.f32.mrf.mxu0
    %v2640 = vadd.f32 %v2551, %v2639
    %v2641 = vpop.f32.mrf.mxu0
    %v2642 = vadd.f32 %v2553, %v2641
    %2643 = vmatmul.bf16.gmra.mxu0 %v1300
    %v2644 = vpop.f32.mrf.mxu0
    %v2645 = vadd.f32 %v2556, %v2644
    %v2646 = vpop.f32.mrf.mxu0
    %v2647 = vadd.f32 %v2558, %v2646
    %2648 = vmatmul.bf16.gmra.mxu0 %v1306
    %v2649 = vpop.f32.mrf.mxu0
    %v2650 = vadd.f32 %v2561, %v2649
    %v2651 = vpop.f32.mrf.mxu0
    %v2652 = vadd.f32 %v2563, %v2651
    %2653 = vmatmul.bf16.gmra.mxu0 %v1312
    %v2654 = vpop.f32.mrf.mxu0
    %v2655 = vadd.f32 %v2566, %v2654
    %v2656 = vpop.f32.mrf.mxu0
    %v2657 = vadd.f32 %v2568, %v2656
    %2658 = vmatmul.bf16.gmra.mxu0 %v1318
    %v2659 = vpop.f32.mrf.mxu0
    %v2660 = vadd.f32 %v2571, %v2659
    %v2661 = vpop.f32.mrf.mxu0
    %v2662 = vadd.f32 %v2573, %v2661
    %2663 = vmatmul.bf16.gmra.mxu0 %v1324
    %v2664 = vpop.f32.mrf.mxu0
    %v2665 = vadd.f32 %v2576, %v2664
    %v2666 = vpop.f32.mrf.mxu0
    %v2667 = vadd.f32 %v2578, %v2666
    %2668 = vdwg.mxu0
    %2669 = vmatpush.bf16.msra.mxu0 %v2199
    %2670 = vmatpush.bf16.msra.mxu0 %v2195
    %2671 = vmatpush.bf16.msra.mxu0 %v2191
    %2672 = vmatpush.bf16.msra.mxu0 %v2187
    %2673 = vmatpush.bf16.msra.mxu0 %v2183
    %2674 = vmatpush.bf16.msra.mxu0 %v2179
    %2675 = vmatpush.bf16.msra.mxu0 %v2175
    %2676 = vmatpush.bf16.msra.mxu0 %v2171
    %2677 = vmatmul.bf16.gmra.mxu0 %v1235
    %v2678 = vpop.f32.mrf.mxu0
    %v2679 = vadd.f32 %v2590, %v2678
    %v2680 = vpop.f32.mrf.mxu0
    %v2681 = vadd.f32 %v2592, %v2680
    %2682 = vmatmul.bf16.gmra.mxu0 %v1241
    %v2683 = vpop.f32.mrf.mxu0
    %v2684 = vadd.f32 %v2595, %v2683
    %v2685 = vpop.f32.mrf.mxu0
    %v2686 = vadd.f32 %v2597, %v2685
    %2687 = vmatmul.bf16.gmra.mxu0 %v1247
    %v2688 = vpop.f32.mrf.mxu0
    %v2689 = vadd.f32 %v2600, %v2688
    %v2690 = vpop.f32.mrf.mxu0
    %v2691 = vadd.f32 %v2602, %v2690
    %2692 = vmatmul.bf16.gmra.mxu0 %v1253
    %v2693 = vpop.f32.mrf.mxu0
    %v2694 = vadd.f32 %v2605, %v2693
    %v2695 = vpop.f32.mrf.mxu0
    %v2696 = vadd.f32 %v2607, %v2695
    %2697 = vmatmul.bf16.gmra.mxu0 %v1259
    %v2698 = vpop.f32.mrf.mxu0
    %v2699 = vadd.f32 %v2610, %v2698
    %v2700 = vpop.f32.mrf.mxu0
    %v2701 = vadd.f32 %v2612, %v2700
    %2702 = vmatmul.bf16.gmra.mxu0 %v1265
    %v2703 = vpop.f32.mrf.mxu0
    %v2704 = vadd.f32 %v2615, %v2703
    %v2705 = vpop.f32.mrf.mxu0
    %v2706 = vadd.f32 %v2617, %v2705
    %2707 = vmatmul.bf16.gmra.mxu0 %v1271
    %v2708 = vpop.f32.mrf.mxu0
    %v2709 = vadd.f32 %v2620, %v2708
    %v2710 = vpop.f32.mrf.mxu0
    %v2711 = vadd.f32 %v2622, %v2710
    %2712 = vmatmul.bf16.gmra.mxu0 %v1277
    %v2713 = vpop.f32.mrf.mxu0
    %v2714 = vadd.f32 %v2625, %v2713
    %v2715 = vpop.f32.mrf.mxu0
    %v2716 = vadd.f32 %v2627, %v2715
    %2717 = vmatmul.bf16.gmra.mxu0 %v1283
    %v2718 = vpop.f32.mrf.mxu0
    %v2719 = vadd.f32 %v2630, %v2718
    %v2720 = vpop.f32.mrf.mxu0
    %v2721 = vadd.f32 %v2632, %v2720
    %2722 = vmatmul.bf16.gmra.mxu0 %v1289
    %v2723 = vpop.f32.mrf.mxu0
    %v2724 = vadd.f32 %v2635, %v2723
    %v2725 = vpop.f32.mrf.mxu0
    %v2726 = vadd.f32 %v2637, %v2725
    %2727 = vmatmul.bf16.gmra.mxu0 %v1295
    %v2728 = vpop.f32.mrf.mxu0
    %v2729 = vadd.f32 %v2640, %v2728
    %v2730 = vpop.f32.mrf.mxu0
    %v2731 = vadd.f32 %v2642, %v2730
    %2732 = vmatmul.bf16.gmra.mxu0 %v1301
    %v2733 = vpop.f32.mrf.mxu0
    %v2734 = vadd.f32 %v2645, %v2733
    %v2735 = vpop.f32.mrf.mxu0
    %v2736 = vadd.f32 %v2647, %v2735
    %2737 = vmatmul.bf16.gmra.mxu0 %v1307
    %v2738 = vpop.f32.mrf.mxu0
    %v2739 = vadd.f32 %v2650, %v2738
    %v2740 = vpop.f32.mrf.mxu0
    %v2741 = vadd.f32 %v2652, %v2740
    %2742 = vmatmul.bf16.gmra.mxu0 %v1313
    %v2743 = vpop.f32.mrf.mxu0
    %v2744 = vadd.f32 %v2655, %v2743
    %v2745 = vpop.f32.mrf.mxu0
    %v2746 = vadd.f32 %v2657, %v2745
    %2747 = vmatmul.bf16.gmra.mxu0 %v1319
    %v2748 = vpop.f32.mrf.mxu0
    %v2749 = vadd.f32 %v2660, %v2748
    %v2750 = vpop.f32.mrf.mxu0
    %v2751 = vadd.f32 %v2662, %v2750
    %2752 = vmatmul.bf16.gmra.mxu0 %v1325
    %v2753 = vpop.f32.mrf.mxu0
    %v2754 = vadd.f32 %v2665, %v2753
    %v2755 = vpop.f32.mrf.mxu0
    %v2756 = vadd.f32 %v2667, %v2755
    %2757 = vdwg.mxu0
    %2758 = vmatpush.bf16.msra.mxu0 %v2231
    %2759 = vmatpush.bf16.msra.mxu0 %v2227
    %2760 = vmatpush.bf16.msra.mxu0 %v2223
    %2761 = vmatpush.bf16.msra.mxu0 %v2219
    %2762 = vmatpush.bf16.msra.mxu0 %v2215
    %2763 = vmatpush.bf16.msra.mxu0 %v2211
    %2764 = vmatpush.bf16.msra.mxu0 %v2207
    %2765 = vmatpush.bf16.msra.mxu0 %v2203
    %2766 = vmatmul.bf16.gmra.mxu0 %v1236
    %v2767 = vpop.f32.mrf.mxu0
    %v2768 = vadd.f32 %v2679, %v2767
    %v2769 = vpop.f32.mrf.mxu0
    %v2770 = vadd.f32 %v2681, %v2769
    %2771 = vmatmul.bf16.gmra.mxu0 %v1242
    %v2772 = vpop.f32.mrf.mxu0
    %v2773 = vadd.f32 %v2684, %v2772
    %v2774 = vpop.f32.mrf.mxu0
    %v2775 = vadd.f32 %v2686, %v2774
    %2776 = vmatmul.bf16.gmra.mxu0 %v1248
    %v2777 = vpop.f32.mrf.mxu0
    %v2778 = vadd.f32 %v2689, %v2777
    %v2779 = vpop.f32.mrf.mxu0
    %v2780 = vadd.f32 %v2691, %v2779
    %2781 = vmatmul.bf16.gmra.mxu0 %v1254
    %v2782 = vpop.f32.mrf.mxu0
    %v2783 = vadd.f32 %v2694, %v2782
    %v2784 = vpop.f32.mrf.mxu0
    %v2785 = vadd.f32 %v2696, %v2784
    %2786 = vmatmul.bf16.gmra.mxu0 %v1260
    %v2787 = vpop.f32.mrf.mxu0
    %v2788 = vadd.f32 %v2699, %v2787
    %v2789 = vpop.f32.mrf.mxu0
    %v2790 = vadd.f32 %v2701, %v2789
    %2791 = vmatmul.bf16.gmra.mxu0 %v1266
    %v2792 = vpop.f32.mrf.mxu0
    %v2793 = vadd.f32 %v2704, %v2792
    %v2794 = vpop.f32.mrf.mxu0
    %v2795 = vadd.f32 %v2706, %v2794
    %2796 = vmatmul.bf16.gmra.mxu0 %v1272
    %v2797 = vpop.f32.mrf.mxu0
    %v2798 = vadd.f32 %v2709, %v2797
    %v2799 = vpop.f32.mrf.mxu0
    %v2800 = vadd.f32 %v2711, %v2799
    %2801 = vmatmul.bf16.gmra.mxu0 %v1278
    %v2802 = vpop.f32.mrf.mxu0
    %v2803 = vadd.f32 %v2714, %v2802
    %v2804 = vpop.f32.mrf.mxu0
    %v2805 = vadd.f32 %v2716, %v2804
    %2806 = vmatmul.bf16.gmra.mxu0 %v1284
    %v2807 = vpop.f32.mrf.mxu0
    %v2808 = vadd.f32 %v2719, %v2807
    %v2809 = vpop.f32.mrf.mxu0
    %v2810 = vadd.f32 %v2721, %v2809
    %2811 = vmatmul.bf16.gmra.mxu0 %v1290
    %v2812 = vpop.f32.mrf.mxu0
    %v2813 = vadd.f32 %v2724, %v2812
    %v2814 = vpop.f32.mrf.mxu0
    %v2815 = vadd.f32 %v2726, %v2814
    %2816 = vmatmul.bf16.gmra.mxu0 %v1296
    %v2817 = vpop.f32.mrf.mxu0
    %v2818 = vadd.f32 %v2729, %v2817
    %v2819 = vpop.f32.mrf.mxu0
    %v2820 = vadd.f32 %v2731, %v2819
    %2821 = vmatmul.bf16.gmra.mxu0 %v1302
    %v2822 = vpop.f32.mrf.mxu0
    %v2823 = vadd.f32 %v2734, %v2822
    %v2824 = vpop.f32.mrf.mxu0
    %v2825 = vadd.f32 %v2736, %v2824
    %2826 = vmatmul.bf16.gmra.mxu0 %v1308
    %v2827 = vpop.f32.mrf.mxu0
    %v2828 = vadd.f32 %v2739, %v2827
    %v2829 = vpop.f32.mrf.mxu0
    %v2830 = vadd.f32 %v2741, %v2829
    %2831 = vmatmul.bf16.gmra.mxu0 %v1314
    %v2832 = vpop.f32.mrf.mxu0
    %v2833 = vadd.f32 %v2744, %v2832
    %v2834 = vpop.f32.mrf.mxu0
    %v2835 = vadd.f32 %v2746, %v2834
    %2836 = vmatmul.bf16.gmra.mxu0 %v1320
    %v2837 = vpop.f32.mrf.mxu0
    %v2838 = vadd.f32 %v2749, %v2837
    %v2839 = vpop.f32.mrf.mxu0
    %v2840 = vadd.f32 %v2751, %v2839
    %2841 = vmatmul.bf16.gmra.mxu0 %v1326
    %v2842 = vpop.f32.mrf.mxu0
    %v2843 = vadd.f32 %v2754, %v2842
    %v2844 = vpop.f32.mrf.mxu0
    %v2845 = vadd.f32 %v2756, %v2844
    %2846 = vdwg.mxu0
    %2847 = vmatpush.bf16.msra.mxu0 %v2263
    %2848 = vmatpush.bf16.msra.mxu0 %v2259
    %2849 = vmatpush.bf16.msra.mxu0 %v2255
    %2850 = vmatpush.bf16.msra.mxu0 %v2251
    %2851 = vmatpush.bf16.msra.mxu0 %v2247
    %2852 = vmatpush.bf16.msra.mxu0 %v2243
    %2853 = vmatpush.bf16.msra.mxu0 %v2239
    %2854 = vmatpush.bf16.msra.mxu0 %v2235
    %2855 = vmatmul.bf16.gmra.mxu0 %v1237
    %v2856 = vpop.f32.mrf.mxu0
    %v2857 = vadd.f32 %v2768, %v2856
    %v2858 = vpop.f32.mrf.mxu0
    %v2859 = vadd.f32 %v2770, %v2858
    %2860 = vmatmul.bf16.gmra.mxu0 %v1243
    %v2861 = vpop.f32.mrf.mxu0
    %v2862 = vadd.f32 %v2773, %v2861
    %v2863 = vpop.f32.mrf.mxu0
    %v2864 = vadd.f32 %v2775, %v2863
    %2865 = vmatmul.bf16.gmra.mxu0 %v1249
    %v2866 = vpop.f32.mrf.mxu0
    %v2867 = vadd.f32 %v2778, %v2866
    %v2868 = vpop.f32.mrf.mxu0
    %v2869 = vadd.f32 %v2780, %v2868
    %2870 = vmatmul.bf16.gmra.mxu0 %v1255
    %v2871 = vpop.f32.mrf.mxu0
    %v2872 = vadd.f32 %v2783, %v2871
    %v2873 = vpop.f32.mrf.mxu0
    %v2874 = vadd.f32 %v2785, %v2873
    %2875 = vmatmul.bf16.gmra.mxu0 %v1261
    %v2876 = vpop.f32.mrf.mxu0
    %v2877 = vadd.f32 %v2788, %v2876
    %v2878 = vpop.f32.mrf.mxu0
    %v2879 = vadd.f32 %v2790, %v2878
    %2880 = vmatmul.bf16.gmra.mxu0 %v1267
    %v2881 = vpop.f32.mrf.mxu0
    %v2882 = vadd.f32 %v2793, %v2881
    %v2883 = vpop.f32.mrf.mxu0
    %v2884 = vadd.f32 %v2795, %v2883
    %2885 = vmatmul.bf16.gmra.mxu0 %v1273
    %v2886 = vpop.f32.mrf.mxu0
    %v2887 = vadd.f32 %v2798, %v2886
    %v2888 = vpop.f32.mrf.mxu0
    %v2889 = vadd.f32 %v2800, %v2888
    %2890 = vmatmul.bf16.gmra.mxu0 %v1279
    %v2891 = vpop.f32.mrf.mxu0
    %v2892 = vadd.f32 %v2803, %v2891
    %v2893 = vpop.f32.mrf.mxu0
    %v2894 = vadd.f32 %v2805, %v2893
    %2895 = vmatmul.bf16.gmra.mxu0 %v1285
    %v2896 = vpop.f32.mrf.mxu0
    %v2897 = vadd.f32 %v2808, %v2896
    %v2898 = vpop.f32.mrf.mxu0
    %v2899 = vadd.f32 %v2810, %v2898
    %2900 = vmatmul.bf16.gmra.mxu0 %v1291
    %v2901 = vpop.f32.mrf.mxu0
    %v2902 = vadd.f32 %v2813, %v2901
    %v2903 = vpop.f32.mrf.mxu0
    %v2904 = vadd.f32 %v2815, %v2903
    %2905 = vmatmul.bf16.gmra.mxu0 %v1297
    %v2906 = vpop.f32.mrf.mxu0
    %v2907 = vadd.f32 %v2818, %v2906
    %v2908 = vpop.f32.mrf.mxu0
    %v2909 = vadd.f32 %v2820, %v2908
    %2910 = vmatmul.bf16.gmra.mxu0 %v1303
    %v2911 = vpop.f32.mrf.mxu0
    %v2912 = vadd.f32 %v2823, %v2911
    %v2913 = vpop.f32.mrf.mxu0
    %v2914 = vadd.f32 %v2825, %v2913
    %2915 = vmatmul.bf16.gmra.mxu0 %v1309
    %v2916 = vpop.f32.mrf.mxu0
    %v2917 = vadd.f32 %v2828, %v2916
    %v2918 = vpop.f32.mrf.mxu0
    %v2919 = vadd.f32 %v2830, %v2918
    %2920 = vmatmul.bf16.gmra.mxu0 %v1315
    %v2921 = vpop.f32.mrf.mxu0
    %v2922 = vadd.f32 %v2833, %v2921
    %v2923 = vpop.f32.mrf.mxu0
    %v2924 = vadd.f32 %v2835, %v2923
    %2925 = vmatmul.bf16.gmra.mxu0 %v1321
    %v2926 = vpop.f32.mrf.mxu0
    %v2927 = vadd.f32 %v2838, %v2926
    %v2928 = vpop.f32.mrf.mxu0
    %v2929 = vadd.f32 %v2840, %v2928
    %2930 = vmatmul.bf16.gmra.mxu0 %v1327
    %v2931 = vpop.f32.mrf.mxu0
    %v2932 = vadd.f32 %v2843, %v2931
    %v2933 = vpop.f32.mrf.mxu0
    %v2934 = vadd.f32 %v2845, %v2933
    %2935 = vdwg.mxu0
    %2936 = vmatpush.bf16.msra.mxu0 %v2295
    %2937 = vmatpush.bf16.msra.mxu0 %v2291
    %2938 = vmatpush.bf16.msra.mxu0 %v2287
    %2939 = vmatpush.bf16.msra.mxu0 %v2283
    %2940 = vmatpush.bf16.msra.mxu0 %v2279
    %2941 = vmatpush.bf16.msra.mxu0 %v2275
    %2942 = vmatpush.bf16.msra.mxu0 %v2271
    %2943 = vmatpush.bf16.msra.mxu0 %v2267
    %2944 = vmatmul.bf16.gmra.mxu0 %v1238
    %v2945 = vpop.f32.mrf.mxu0
    %v2946 = vadd.f32 %v2857, %v2945
    %v2947 = vpop.f32.mrf.mxu0
    %v2948 = vadd.f32 %v2859, %v2947
    %2949 = vmatmul.bf16.gmra.mxu0 %v1244
    %v2950 = vpop.f32.mrf.mxu0
    %v2951 = vadd.f32 %v2862, %v2950
    %v2952 = vpop.f32.mrf.mxu0
    %v2953 = vadd.f32 %v2864, %v2952
    %2954 = vmatmul.bf16.gmra.mxu0 %v1250
    %v2955 = vpop.f32.mrf.mxu0
    %v2956 = vadd.f32 %v2867, %v2955
    %v2957 = vpop.f32.mrf.mxu0
    %v2958 = vadd.f32 %v2869, %v2957
    %2959 = vmatmul.bf16.gmra.mxu0 %v1256
    %v2960 = vpop.f32.mrf.mxu0
    %v2961 = vadd.f32 %v2872, %v2960
    %v2962 = vpop.f32.mrf.mxu0
    %v2963 = vadd.f32 %v2874, %v2962
    %2964 = vmatmul.bf16.gmra.mxu0 %v1262
    %v2965 = vpop.f32.mrf.mxu0
    %v2966 = vadd.f32 %v2877, %v2965
    %v2967 = vpop.f32.mrf.mxu0
    %v2968 = vadd.f32 %v2879, %v2967
    %2969 = vmatmul.bf16.gmra.mxu0 %v1268
    %v2970 = vpop.f32.mrf.mxu0
    %v2971 = vadd.f32 %v2882, %v2970
    %v2972 = vpop.f32.mrf.mxu0
    %v2973 = vadd.f32 %v2884, %v2972
    %2974 = vmatmul.bf16.gmra.mxu0 %v1274
    %v2975 = vpop.f32.mrf.mxu0
    %v2976 = vadd.f32 %v2887, %v2975
    %v2977 = vpop.f32.mrf.mxu0
    %v2978 = vadd.f32 %v2889, %v2977
    %2979 = vmatmul.bf16.gmra.mxu0 %v1280
    %v2980 = vpop.f32.mrf.mxu0
    %v2981 = vadd.f32 %v2892, %v2980
    %v2982 = vpop.f32.mrf.mxu0
    %v2983 = vadd.f32 %v2894, %v2982
    %2984 = vmatmul.bf16.gmra.mxu0 %v1286
    %v2985 = vpop.f32.mrf.mxu0
    %v2986 = vadd.f32 %v2897, %v2985
    %v2987 = vpop.f32.mrf.mxu0
    %v2988 = vadd.f32 %v2899, %v2987
    %2989 = vmatmul.bf16.gmra.mxu0 %v1292
    %v2990 = vpop.f32.mrf.mxu0
    %v2991 = vadd.f32 %v2902, %v2990
    %v2992 = vpop.f32.mrf.mxu0
    %v2993 = vadd.f32 %v2904, %v2992
    %2994 = vmatmul.bf16.gmra.mxu0 %v1298
    %v2995 = vpop.f32.mrf.mxu0
    %v2996 = vadd.f32 %v2907, %v2995
    %v2997 = vpop.f32.mrf.mxu0
    %v2998 = vadd.f32 %v2909, %v2997
    %2999 = vmatmul.bf16.gmra.mxu0 %v1304
    %v3000 = vpop.f32.mrf.mxu0
    %v3001 = vadd.f32 %v2912, %v3000
    %v3002 = vpop.f32.mrf.mxu0
    %v3003 = vadd.f32 %v2914, %v3002
    %3004 = vmatmul.bf16.gmra.mxu0 %v1310
    %v3005 = vpop.f32.mrf.mxu0
    %v3006 = vadd.f32 %v2917, %v3005
    %v3007 = vpop.f32.mrf.mxu0
    %v3008 = vadd.f32 %v2919, %v3007
    %3009 = vmatmul.bf16.gmra.mxu0 %v1316
    %v3010 = vpop.f32.mrf.mxu0
    %v3011 = vadd.f32 %v2922, %v3010
    %v3012 = vpop.f32.mrf.mxu0
    %v3013 = vadd.f32 %v2924, %v3012
    %3014 = vmatmul.bf16.gmra.mxu0 %v1322
    %v3015 = vpop.f32.mrf.mxu0
    %v3016 = vadd.f32 %v2927, %v3015
    %v3017 = vpop.f32.mrf.mxu0
    %v3018 = vadd.f32 %v2929, %v3017
    %3019 = vmatmul.bf16.gmra.mxu0 %v1328
    %v3020 = vpop.f32.mrf.mxu0
    %v3021 = vadd.f32 %v2932, %v3020
    %v3022 = vpop.f32.mrf.mxu0
    %v3023 = vadd.f32 %v2934, %v3022
    %3024 = vdwg.mxu0
    %3025 = vmatpush.bf16.msra.mxu0 %v2136
    %3026 = vmatpush.bf16.msra.mxu0 %v2132
    %3027 = vmatpush.bf16.msra.mxu0 %v2128
    %3028 = vmatpush.bf16.msra.mxu0 %v2124
    %3029 = vmatpush.bf16.msra.mxu0 %v2120
    %3030 = vmatpush.bf16.msra.mxu0 %v2116
    %3031 = vmatpush.bf16.msra.mxu0 %v2112
    %3032 = vmatpush.bf16.msra.mxu0 %v2108
    %3033 = vmatmul.bf16.gmra.mxu0 %v1233
    %v3034 = vpop.f32.mrf.mxu0
    %v3035 = vadd.f32 %v1524, %v3034
    %v3036 = vpop.f32.mrf.mxu0
    %v3037 = vadd.f32 %v1524, %v3036
    %3038 = vmatmul.bf16.gmra.mxu0 %v1239
    %v3039 = vpop.f32.mrf.mxu0
    %v3040 = vadd.f32 %v1524, %v3039
    %v3041 = vpop.f32.mrf.mxu0
    %v3042 = vadd.f32 %v1524, %v3041
    %3043 = vmatmul.bf16.gmra.mxu0 %v1245
    %v3044 = vpop.f32.mrf.mxu0
    %v3045 = vadd.f32 %v1524, %v3044
    %v3046 = vpop.f32.mrf.mxu0
    %v3047 = vadd.f32 %v1524, %v3046
    %3048 = vmatmul.bf16.gmra.mxu0 %v1251
    %v3049 = vpop.f32.mrf.mxu0
    %v3050 = vadd.f32 %v1524, %v3049
    %v3051 = vpop.f32.mrf.mxu0
    %v3052 = vadd.f32 %v1524, %v3051
    %3053 = vmatmul.bf16.gmra.mxu0 %v1257
    %v3054 = vpop.f32.mrf.mxu0
    %v3055 = vadd.f32 %v1524, %v3054
    %v3056 = vpop.f32.mrf.mxu0
    %v3057 = vadd.f32 %v1524, %v3056
    %3058 = vmatmul.bf16.gmra.mxu0 %v1263
    %v3059 = vpop.f32.mrf.mxu0
    %v3060 = vadd.f32 %v1524, %v3059
    %v3061 = vpop.f32.mrf.mxu0
    %v3062 = vadd.f32 %v1524, %v3061
    %3063 = vmatmul.bf16.gmra.mxu0 %v1269
    %v3064 = vpop.f32.mrf.mxu0
    %v3065 = vadd.f32 %v1524, %v3064
    %v3066 = vpop.f32.mrf.mxu0
    %v3067 = vadd.f32 %v1524, %v3066
    %3068 = vmatmul.bf16.gmra.mxu0 %v1275
    %v3069 = vpop.f32.mrf.mxu0
    %v3070 = vadd.f32 %v1524, %v3069
    %v3071 = vpop.f32.mrf.mxu0
    %v3072 = vadd.f32 %v1524, %v3071
    %3073 = vmatmul.bf16.gmra.mxu0 %v1281
    %v3074 = vpop.f32.mrf.mxu0
    %v3075 = vadd.f32 %v1524, %v3074
    %v3076 = vpop.f32.mrf.mxu0
    %v3077 = vadd.f32 %v1524, %v3076
    %3078 = vmatmul.bf16.gmra.mxu0 %v1287
    %v3079 = vpop.f32.mrf.mxu0
    %v3080 = vadd.f32 %v1524, %v3079
    %v3081 = vpop.f32.mrf.mxu0
    %v3082 = vadd.f32 %v1524, %v3081
    %3083 = vmatmul.bf16.gmra.mxu0 %v1293
    %v3084 = vpop.f32.mrf.mxu0
    %v3085 = vadd.f32 %v1524, %v3084
    %v3086 = vpop.f32.mrf.mxu0
    %v3087 = vadd.f32 %v1524, %v3086
    %3088 = vmatmul.bf16.gmra.mxu0 %v1299
    %v3089 = vpop.f32.mrf.mxu0
    %v3090 = vadd.f32 %v1524, %v3089
    %v3091 = vpop.f32.mrf.mxu0
    %v3092 = vadd.f32 %v1524, %v3091
    %3093 = vmatmul.bf16.gmra.mxu0 %v1305
    %v3094 = vpop.f32.mrf.mxu0
    %v3095 = vadd.f32 %v1524, %v3094
    %v3096 = vpop.f32.mrf.mxu0
    %v3097 = vadd.f32 %v1524, %v3096
    %3098 = vmatmul.bf16.gmra.mxu0 %v1311
    %v3099 = vpop.f32.mrf.mxu0
    %v3100 = vadd.f32 %v1524, %v3099
    %v3101 = vpop.f32.mrf.mxu0
    %v3102 = vadd.f32 %v1524, %v3101
    %3103 = vmatmul.bf16.gmra.mxu0 %v1317
    %v3104 = vpop.f32.mrf.mxu0
    %v3105 = vadd.f32 %v1524, %v3104
    %v3106 = vpop.f32.mrf.mxu0
    %v3107 = vadd.f32 %v1524, %v3106
    %3108 = vmatmul.bf16.gmra.mxu0 %v1323
    %v3109 = vpop.f32.mrf.mxu0
    %v3110 = vadd.f32 %v1524, %v3109
    %v3111 = vpop.f32.mrf.mxu0
    %v3112 = vadd.f32 %v1524, %v3111
    %3113 = vdwg.mxu0
    %3114 = vmatpush.bf16.msra.mxu0 %v2168
    %3115 = vmatpush.bf16.msra.mxu0 %v2164
    %3116 = vmatpush.bf16.msra.mxu0 %v2160
    %3117 = vmatpush.bf16.msra.mxu0 %v2156
    %3118 = vmatpush.bf16.msra.mxu0 %v2152
    %3119 = vmatpush.bf16.msra.mxu0 %v2148
    %3120 = vmatpush.bf16.msra.mxu0 %v2144
    %3121 = vmatpush.bf16.msra.mxu0 %v2140
    %3122 = vmatmul.bf16.gmra.mxu0 %v1234
    %v3123 = vpop.f32.mrf.mxu0
    %v3124 = vadd.f32 %v3035, %v3123
    %v3125 = vpop.f32.mrf.mxu0
    %v3126 = vadd.f32 %v3037, %v3125
    %3127 = vmatmul.bf16.gmra.mxu0 %v1240
    %v3128 = vpop.f32.mrf.mxu0
    %v3129 = vadd.f32 %v3040, %v3128
    %v3130 = vpop.f32.mrf.mxu0
    %v3131 = vadd.f32 %v3042, %v3130
    %3132 = vmatmul.bf16.gmra.mxu0 %v1246
    %v3133 = vpop.f32.mrf.mxu0
    %v3134 = vadd.f32 %v3045, %v3133
    %v3135 = vpop.f32.mrf.mxu0
    %v3136 = vadd.f32 %v3047, %v3135
    %3137 = vmatmul.bf16.gmra.mxu0 %v1252
    %v3138 = vpop.f32.mrf.mxu0
    %v3139 = vadd.f32 %v3050, %v3138
    %v3140 = vpop.f32.mrf.mxu0
    %v3141 = vadd.f32 %v3052, %v3140
    %3142 = vmatmul.bf16.gmra.mxu0 %v1258
    %v3143 = vpop.f32.mrf.mxu0
    %v3144 = vadd.f32 %v3055, %v3143
    %v3145 = vpop.f32.mrf.mxu0
    %v3146 = vadd.f32 %v3057, %v3145
    %3147 = vmatmul.bf16.gmra.mxu0 %v1264
    %v3148 = vpop.f32.mrf.mxu0
    %v3149 = vadd.f32 %v3060, %v3148
    %v3150 = vpop.f32.mrf.mxu0
    %v3151 = vadd.f32 %v3062, %v3150
    %3152 = vmatmul.bf16.gmra.mxu0 %v1270
    %v3153 = vpop.f32.mrf.mxu0
    %v3154 = vadd.f32 %v3065, %v3153
    %v3155 = vpop.f32.mrf.mxu0
    %v3156 = vadd.f32 %v3067, %v3155
    %3157 = vmatmul.bf16.gmra.mxu0 %v1276
    %v3158 = vpop.f32.mrf.mxu0
    %v3159 = vadd.f32 %v3070, %v3158
    %v3160 = vpop.f32.mrf.mxu0
    %v3161 = vadd.f32 %v3072, %v3160
    %3162 = vmatmul.bf16.gmra.mxu0 %v1282
    %v3163 = vpop.f32.mrf.mxu0
    %v3164 = vadd.f32 %v3075, %v3163
    %v3165 = vpop.f32.mrf.mxu0
    %v3166 = vadd.f32 %v3077, %v3165
    %3167 = vmatmul.bf16.gmra.mxu0 %v1288
    %v3168 = vpop.f32.mrf.mxu0
    %v3169 = vadd.f32 %v3080, %v3168
    %v3170 = vpop.f32.mrf.mxu0
    %v3171 = vadd.f32 %v3082, %v3170
    %3172 = vmatmul.bf16.gmra.mxu0 %v1294
    %v3173 = vpop.f32.mrf.mxu0
    %v3174 = vadd.f32 %v3085, %v3173
    %v3175 = vpop.f32.mrf.mxu0
    %v3176 = vadd.f32 %v3087, %v3175
    %3177 = vmatmul.bf16.gmra.mxu0 %v1300
    %v3178 = vpop.f32.mrf.mxu0
    %v3179 = vadd.f32 %v3090, %v3178
    %v3180 = vpop.f32.mrf.mxu0
    %v3181 = vadd.f32 %v3092, %v3180
    %3182 = vmatmul.bf16.gmra.mxu0 %v1306
    %v3183 = vpop.f32.mrf.mxu0
    %v3184 = vadd.f32 %v3095, %v3183
    %v3185 = vpop.f32.mrf.mxu0
    %v3186 = vadd.f32 %v3097, %v3185
    %3187 = vmatmul.bf16.gmra.mxu0 %v1312
    %v3188 = vpop.f32.mrf.mxu0
    %v3189 = vadd.f32 %v3100, %v3188
    %v3190 = vpop.f32.mrf.mxu0
    %v3191 = vadd.f32 %v3102, %v3190
    %3192 = vmatmul.bf16.gmra.mxu0 %v1318
    %v3193 = vpop.f32.mrf.mxu0
    %v3194 = vadd.f32 %v3105, %v3193
    %v3195 = vpop.f32.mrf.mxu0
    %v3196 = vadd.f32 %v3107, %v3195
    %3197 = vmatmul.bf16.gmra.mxu0 %v1324
    %v3198 = vpop.f32.mrf.mxu0
    %v3199 = vadd.f32 %v3110, %v3198
    %v3200 = vpop.f32.mrf.mxu0
    %v3201 = vadd.f32 %v3112, %v3200
    %3202 = vdwg.mxu0
    %3203 = vmatpush.bf16.msra.mxu0 %v2200
    %3204 = vmatpush.bf16.msra.mxu0 %v2196
    %3205 = vmatpush.bf16.msra.mxu0 %v2192
    %3206 = vmatpush.bf16.msra.mxu0 %v2188
    %3207 = vmatpush.bf16.msra.mxu0 %v2184
    %3208 = vmatpush.bf16.msra.mxu0 %v2180
    %3209 = vmatpush.bf16.msra.mxu0 %v2176
    %3210 = vmatpush.bf16.msra.mxu0 %v2172
    %3211 = vmatmul.bf16.gmra.mxu0 %v1235
    %v3212 = vpop.f32.mrf.mxu0
    %v3213 = vadd.f32 %v3124, %v3212
    %v3214 = vpop.f32.mrf.mxu0
    %v3215 = vadd.f32 %v3126, %v3214
    %3216 = vmatmul.bf16.gmra.mxu0 %v1241
    %v3217 = vpop.f32.mrf.mxu0
    %v3218 = vadd.f32 %v3129, %v3217
    %v3219 = vpop.f32.mrf.mxu0
    %v3220 = vadd.f32 %v3131, %v3219
    %3221 = vmatmul.bf16.gmra.mxu0 %v1247
    %v3222 = vpop.f32.mrf.mxu0
    %v3223 = vadd.f32 %v3134, %v3222
    %v3224 = vpop.f32.mrf.mxu0
    %v3225 = vadd.f32 %v3136, %v3224
    %3226 = vmatmul.bf16.gmra.mxu0 %v1253
    %v3227 = vpop.f32.mrf.mxu0
    %v3228 = vadd.f32 %v3139, %v3227
    %v3229 = vpop.f32.mrf.mxu0
    %v3230 = vadd.f32 %v3141, %v3229
    %3231 = vmatmul.bf16.gmra.mxu0 %v1259
    %v3232 = vpop.f32.mrf.mxu0
    %v3233 = vadd.f32 %v3144, %v3232
    %v3234 = vpop.f32.mrf.mxu0
    %v3235 = vadd.f32 %v3146, %v3234
    %3236 = vmatmul.bf16.gmra.mxu0 %v1265
    %v3237 = vpop.f32.mrf.mxu0
    %v3238 = vadd.f32 %v3149, %v3237
    %v3239 = vpop.f32.mrf.mxu0
    %v3240 = vadd.f32 %v3151, %v3239
    %3241 = vmatmul.bf16.gmra.mxu0 %v1271
    %v3242 = vpop.f32.mrf.mxu0
    %v3243 = vadd.f32 %v3154, %v3242
    %v3244 = vpop.f32.mrf.mxu0
    %v3245 = vadd.f32 %v3156, %v3244
    %3246 = vmatmul.bf16.gmra.mxu0 %v1277
    %v3247 = vpop.f32.mrf.mxu0
    %v3248 = vadd.f32 %v3159, %v3247
    %v3249 = vpop.f32.mrf.mxu0
    %v3250 = vadd.f32 %v3161, %v3249
    %3251 = vmatmul.bf16.gmra.mxu0 %v1283
    %v3252 = vpop.f32.mrf.mxu0
    %v3253 = vadd.f32 %v3164, %v3252
    %v3254 = vpop.f32.mrf.mxu0
    %v3255 = vadd.f32 %v3166, %v3254
    %3256 = vmatmul.bf16.gmra.mxu0 %v1289
    %v3257 = vpop.f32.mrf.mxu0
    %v3258 = vadd.f32 %v3169, %v3257
    %v3259 = vpop.f32.mrf.mxu0
    %v3260 = vadd.f32 %v3171, %v3259
    %3261 = vmatmul.bf16.gmra.mxu0 %v1295
    %v3262 = vpop.f32.mrf.mxu0
    %v3263 = vadd.f32 %v3174, %v3262
    %v3264 = vpop.f32.mrf.mxu0
    %v3265 = vadd.f32 %v3176, %v3264
    %3266 = vmatmul.bf16.gmra.mxu0 %v1301
    %v3267 = vpop.f32.mrf.mxu0
    %v3268 = vadd.f32 %v3179, %v3267
    %v3269 = vpop.f32.mrf.mxu0
    %v3270 = vadd.f32 %v3181, %v3269
    %3271 = vmatmul.bf16.gmra.mxu0 %v1307
    %v3272 = vpop.f32.mrf.mxu0
    %v3273 = vadd.f32 %v3184, %v3272
    %v3274 = vpop.f32.mrf.mxu0
    %v3275 = vadd.f32 %v3186, %v3274
    %3276 = vmatmul.bf16.gmra.mxu0 %v1313
    %v3277 = vpop.f32.mrf.mxu0
    %v3278 = vadd.f32 %v3189, %v3277
    %v3279 = vpop.f32.mrf.mxu0
    %v3280 = vadd.f32 %v3191, %v3279
    %3281 = vmatmul.bf16.gmra.mxu0 %v1319
    %v3282 = vpop.f32.mrf.mxu0
    %v3283 = vadd.f32 %v3194, %v3282
    %v3284 = vpop.f32.mrf.mxu0
    %v3285 = vadd.f32 %v3196, %v3284
    %3286 = vmatmul.bf16.gmra.mxu0 %v1325
    %v3287 = vpop.f32.mrf.mxu0
    %v3288 = vadd.f32 %v3199, %v3287
    %v3289 = vpop.f32.mrf.mxu0
    %v3290 = vadd.f32 %v3201, %v3289
    %3291 = vdwg.mxu0
    %3292 = vmatpush.bf16.msra.mxu0 %v2232
    %3293 = vmatpush.bf16.msra.mxu0 %v2228
    %3294 = vmatpush.bf16.msra.mxu0 %v2224
    %3295 = vmatpush.bf16.msra.mxu0 %v2220
    %3296 = vmatpush.bf16.msra.mxu0 %v2216
    %3297 = vmatpush.bf16.msra.mxu0 %v2212
    %3298 = vmatpush.bf16.msra.mxu0 %v2208
    %3299 = vmatpush.bf16.msra.mxu0 %v2204
    %3300 = vmatmul.bf16.gmra.mxu0 %v1236
    %v3301 = vpop.f32.mrf.mxu0
    %v3302 = vadd.f32 %v3213, %v3301
    %v3303 = vpop.f32.mrf.mxu0
    %v3304 = vadd.f32 %v3215, %v3303
    %3305 = vmatmul.bf16.gmra.mxu0 %v1242
    %v3306 = vpop.f32.mrf.mxu0
    %v3307 = vadd.f32 %v3218, %v3306
    %v3308 = vpop.f32.mrf.mxu0
    %v3309 = vadd.f32 %v3220, %v3308
    %3310 = vmatmul.bf16.gmra.mxu0 %v1248
    %v3311 = vpop.f32.mrf.mxu0
    %v3312 = vadd.f32 %v3223, %v3311
    %v3313 = vpop.f32.mrf.mxu0
    %v3314 = vadd.f32 %v3225, %v3313
    %3315 = vmatmul.bf16.gmra.mxu0 %v1254
    %v3316 = vpop.f32.mrf.mxu0
    %v3317 = vadd.f32 %v3228, %v3316
    %v3318 = vpop.f32.mrf.mxu0
    %v3319 = vadd.f32 %v3230, %v3318
    %3320 = vmatmul.bf16.gmra.mxu0 %v1260
    %v3321 = vpop.f32.mrf.mxu0
    %v3322 = vadd.f32 %v3233, %v3321
    %v3323 = vpop.f32.mrf.mxu0
    %v3324 = vadd.f32 %v3235, %v3323
    %3325 = vmatmul.bf16.gmra.mxu0 %v1266
    %v3326 = vpop.f32.mrf.mxu0
    %v3327 = vadd.f32 %v3238, %v3326
    %v3328 = vpop.f32.mrf.mxu0
    %v3329 = vadd.f32 %v3240, %v3328
    %3330 = vmatmul.bf16.gmra.mxu0 %v1272
    %v3331 = vpop.f32.mrf.mxu0
    %v3332 = vadd.f32 %v3243, %v3331
    %v3333 = vpop.f32.mrf.mxu0
    %v3334 = vadd.f32 %v3245, %v3333
    %3335 = vmatmul.bf16.gmra.mxu0 %v1278
    %v3336 = vpop.f32.mrf.mxu0
    %v3337 = vadd.f32 %v3248, %v3336
    %v3338 = vpop.f32.mrf.mxu0
    %v3339 = vadd.f32 %v3250, %v3338
    %3340 = vmatmul.bf16.gmra.mxu0 %v1284
    %v3341 = vpop.f32.mrf.mxu0
    %v3342 = vadd.f32 %v3253, %v3341
    %v3343 = vpop.f32.mrf.mxu0
    %v3344 = vadd.f32 %v3255, %v3343
    %3345 = vmatmul.bf16.gmra.mxu0 %v1290
    %v3346 = vpop.f32.mrf.mxu0
    %v3347 = vadd.f32 %v3258, %v3346
    %v3348 = vpop.f32.mrf.mxu0
    %v3349 = vadd.f32 %v3260, %v3348
    %3350 = vmatmul.bf16.gmra.mxu0 %v1296
    %v3351 = vpop.f32.mrf.mxu0
    %v3352 = vadd.f32 %v3263, %v3351
    %v3353 = vpop.f32.mrf.mxu0
    %v3354 = vadd.f32 %v3265, %v3353
    %3355 = vmatmul.bf16.gmra.mxu0 %v1302
    %v3356 = vpop.f32.mrf.mxu0
    %v3357 = vadd.f32 %v3268, %v3356
    %v3358 = vpop.f32.mrf.mxu0
    %v3359 = vadd.f32 %v3270, %v3358
    %3360 = vmatmul.bf16.gmra.mxu0 %v1308
    %v3361 = vpop.f32.mrf.mxu0
    %v3362 = vadd.f32 %v3273, %v3361
    %v3363 = vpop.f32.mrf.mxu0
    %v3364 = vadd.f32 %v3275, %v3363
    %3365 = vmatmul.bf16.gmra.mxu0 %v1314
    %v3366 = vpop.f32.mrf.mxu0
    %v3367 = vadd.f32 %v3278, %v3366
    %v3368 = vpop.f32.mrf.mxu0
    %v3369 = vadd.f32 %v3280, %v3368
    %3370 = vmatmul.bf16.gmra.mxu0 %v1320
    %v3371 = vpop.f32.mrf.mxu0
    %v3372 = vadd.f32 %v3283, %v3371
    %v3373 = vpop.f32.mrf.mxu0
    %v3374 = vadd.f32 %v3285, %v3373
    %3375 = vmatmul.bf16.gmra.mxu0 %v1326
    %v3376 = vpop.f32.mrf.mxu0
    %v3377 = vadd.f32 %v3288, %v3376
    %v3378 = vpop.f32.mrf.mxu0
    %v3379 = vadd.f32 %v3290, %v3378
    %3380 = vdwg.mxu0
    %3381 = vmatpush.bf16.msra.mxu0 %v2264
    %3382 = vmatpush.bf16.msra.mxu0 %v2260
    %3383 = vmatpush.bf16.msra.mxu0 %v2256
    %3384 = vmatpush.bf16.msra.mxu0 %v2252
    %3385 = vmatpush.bf16.msra.mxu0 %v2248
    %3386 = vmatpush.bf16.msra.mxu0 %v2244
    %3387 = vmatpush.bf16.msra.mxu0 %v2240
    %3388 = vmatpush.bf16.msra.mxu0 %v2236
    %3389 = vmatmul.bf16.gmra.mxu0 %v1237
    %v3390 = vpop.f32.mrf.mxu0
    %v3391 = vadd.f32 %v3302, %v3390
    %v3392 = vpop.f32.mrf.mxu0
    %v3393 = vadd.f32 %v3304, %v3392
    %3394 = vmatmul.bf16.gmra.mxu0 %v1243
    %v3395 = vpop.f32.mrf.mxu0
    %v3396 = vadd.f32 %v3307, %v3395
    %v3397 = vpop.f32.mrf.mxu0
    %v3398 = vadd.f32 %v3309, %v3397
    %3399 = vmatmul.bf16.gmra.mxu0 %v1249
    %v3400 = vpop.f32.mrf.mxu0
    %v3401 = vadd.f32 %v3312, %v3400
    %v3402 = vpop.f32.mrf.mxu0
    %v3403 = vadd.f32 %v3314, %v3402
    %3404 = vmatmul.bf16.gmra.mxu0 %v1255
    %v3405 = vpop.f32.mrf.mxu0
    %v3406 = vadd.f32 %v3317, %v3405
    %v3407 = vpop.f32.mrf.mxu0
    %v3408 = vadd.f32 %v3319, %v3407
    %3409 = vmatmul.bf16.gmra.mxu0 %v1261
    %v3410 = vpop.f32.mrf.mxu0
    %v3411 = vadd.f32 %v3322, %v3410
    %v3412 = vpop.f32.mrf.mxu0
    %v3413 = vadd.f32 %v3324, %v3412
    %3414 = vmatmul.bf16.gmra.mxu0 %v1267
    %v3415 = vpop.f32.mrf.mxu0
    %v3416 = vadd.f32 %v3327, %v3415
    %v3417 = vpop.f32.mrf.mxu0
    %v3418 = vadd.f32 %v3329, %v3417
    %3419 = vmatmul.bf16.gmra.mxu0 %v1273
    %v3420 = vpop.f32.mrf.mxu0
    %v3421 = vadd.f32 %v3332, %v3420
    %v3422 = vpop.f32.mrf.mxu0
    %v3423 = vadd.f32 %v3334, %v3422
    %3424 = vmatmul.bf16.gmra.mxu0 %v1279
    %v3425 = vpop.f32.mrf.mxu0
    %v3426 = vadd.f32 %v3337, %v3425
    %v3427 = vpop.f32.mrf.mxu0
    %v3428 = vadd.f32 %v3339, %v3427
    %3429 = vmatmul.bf16.gmra.mxu0 %v1285
    %v3430 = vpop.f32.mrf.mxu0
    %v3431 = vadd.f32 %v3342, %v3430
    %v3432 = vpop.f32.mrf.mxu0
    %v3433 = vadd.f32 %v3344, %v3432
    %3434 = vmatmul.bf16.gmra.mxu0 %v1291
    %v3435 = vpop.f32.mrf.mxu0
    %v3436 = vadd.f32 %v3347, %v3435
    %v3437 = vpop.f32.mrf.mxu0
    %v3438 = vadd.f32 %v3349, %v3437
    %3439 = vmatmul.bf16.gmra.mxu0 %v1297
    %v3440 = vpop.f32.mrf.mxu0
    %v3441 = vadd.f32 %v3352, %v3440
    %v3442 = vpop.f32.mrf.mxu0
    %v3443 = vadd.f32 %v3354, %v3442
    %3444 = vmatmul.bf16.gmra.mxu0 %v1303
    %v3445 = vpop.f32.mrf.mxu0
    %v3446 = vadd.f32 %v3357, %v3445
    %v3447 = vpop.f32.mrf.mxu0
    %v3448 = vadd.f32 %v3359, %v3447
    %3449 = vmatmul.bf16.gmra.mxu0 %v1309
    %v3450 = vpop.f32.mrf.mxu0
    %v3451 = vadd.f32 %v3362, %v3450
    %v3452 = vpop.f32.mrf.mxu0
    %v3453 = vadd.f32 %v3364, %v3452
    %3454 = vmatmul.bf16.gmra.mxu0 %v1315
    %v3455 = vpop.f32.mrf.mxu0
    %v3456 = vadd.f32 %v3367, %v3455
    %v3457 = vpop.f32.mrf.mxu0
    %v3458 = vadd.f32 %v3369, %v3457
    %3459 = vmatmul.bf16.gmra.mxu0 %v1321
    %v3460 = vpop.f32.mrf.mxu0
    %v3461 = vadd.f32 %v3372, %v3460
    %v3462 = vpop.f32.mrf.mxu0
    %v3463 = vadd.f32 %v3374, %v3462
    %3464 = vmatmul.bf16.gmra.mxu0 %v1327
    %v3465 = vpop.f32.mrf.mxu0
    %v3466 = vadd.f32 %v3377, %v3465
    %v3467 = vpop.f32.mrf.mxu0
    %v3468 = vadd.f32 %v3379, %v3467
    %3469 = vdwg.mxu0
    %3470 = vmatpush.bf16.msra.mxu0 %v2296
    %3471 = vmatpush.bf16.msra.mxu0 %v2292
    %3472 = vmatpush.bf16.msra.mxu0 %v2288
    %3473 = vmatpush.bf16.msra.mxu0 %v2284
    %3474 = vmatpush.bf16.msra.mxu0 %v2280
    %3475 = vmatpush.bf16.msra.mxu0 %v2276
    %3476 = vmatpush.bf16.msra.mxu0 %v2272
    %3477 = vmatpush.bf16.msra.mxu0 %v2268
    %3478 = vmatmul.bf16.gmra.mxu0 %v1238
    %v3479 = vpop.f32.mrf.mxu0
    %v3480 = vadd.f32 %v3391, %v3479
    %v3481 = vpop.f32.mrf.mxu0
    %v3482 = vadd.f32 %v3393, %v3481
    %3483 = vmatmul.bf16.gmra.mxu0 %v1244
    %v3484 = vpop.f32.mrf.mxu0
    %v3485 = vadd.f32 %v3396, %v3484
    %v3486 = vpop.f32.mrf.mxu0
    %v3487 = vadd.f32 %v3398, %v3486
    %3488 = vmatmul.bf16.gmra.mxu0 %v1250
    %v3489 = vpop.f32.mrf.mxu0
    %v3490 = vadd.f32 %v3401, %v3489
    %v3491 = vpop.f32.mrf.mxu0
    %v3492 = vadd.f32 %v3403, %v3491
    %3493 = vmatmul.bf16.gmra.mxu0 %v1256
    %v3494 = vpop.f32.mrf.mxu0
    %v3495 = vadd.f32 %v3406, %v3494
    %v3496 = vpop.f32.mrf.mxu0
    %v3497 = vadd.f32 %v3408, %v3496
    %3498 = vmatmul.bf16.gmra.mxu0 %v1262
    %v3499 = vpop.f32.mrf.mxu0
    %v3500 = vadd.f32 %v3411, %v3499
    %v3501 = vpop.f32.mrf.mxu0
    %v3502 = vadd.f32 %v3413, %v3501
    %3503 = vmatmul.bf16.gmra.mxu0 %v1268
    %v3504 = vpop.f32.mrf.mxu0
    %v3505 = vadd.f32 %v3416, %v3504
    %v3506 = vpop.f32.mrf.mxu0
    %v3507 = vadd.f32 %v3418, %v3506
    %3508 = vmatmul.bf16.gmra.mxu0 %v1274
    %v3509 = vpop.f32.mrf.mxu0
    %v3510 = vadd.f32 %v3421, %v3509
    %v3511 = vpop.f32.mrf.mxu0
    %v3512 = vadd.f32 %v3423, %v3511
    %3513 = vmatmul.bf16.gmra.mxu0 %v1280
    %v3514 = vpop.f32.mrf.mxu0
    %v3515 = vadd.f32 %v3426, %v3514
    %v3516 = vpop.f32.mrf.mxu0
    %v3517 = vadd.f32 %v3428, %v3516
    %3518 = vmatmul.bf16.gmra.mxu0 %v1286
    %v3519 = vpop.f32.mrf.mxu0
    %v3520 = vadd.f32 %v3431, %v3519
    %v3521 = vpop.f32.mrf.mxu0
    %v3522 = vadd.f32 %v3433, %v3521
    %3523 = vmatmul.bf16.gmra.mxu0 %v1292
    %v3524 = vpop.f32.mrf.mxu0
    %v3525 = vadd.f32 %v3436, %v3524
    %v3526 = vpop.f32.mrf.mxu0
    %v3527 = vadd.f32 %v3438, %v3526
    %3528 = vmatmul.bf16.gmra.mxu0 %v1298
    %v3529 = vpop.f32.mrf.mxu0
    %v3530 = vadd.f32 %v3441, %v3529
    %v3531 = vpop.f32.mrf.mxu0
    %v3532 = vadd.f32 %v3443, %v3531
    %3533 = vmatmul.bf16.gmra.mxu0 %v1304
    %v3534 = vpop.f32.mrf.mxu0
    %v3535 = vadd.f32 %v3446, %v3534
    %v3536 = vpop.f32.mrf.mxu0
    %v3537 = vadd.f32 %v3448, %v3536
    %3538 = vmatmul.bf16.gmra.mxu0 %v1310
    %v3539 = vpop.f32.mrf.mxu0
    %v3540 = vadd.f32 %v3451, %v3539
    %v3541 = vpop.f32.mrf.mxu0
    %v3542 = vadd.f32 %v3453, %v3541
    %3543 = vmatmul.bf16.gmra.mxu0 %v1316
    %v3544 = vpop.f32.mrf.mxu0
    %v3545 = vadd.f32 %v3456, %v3544
    %v3546 = vpop.f32.mrf.mxu0
    %v3547 = vadd.f32 %v3458, %v3546
    %3548 = vmatmul.bf16.gmra.mxu0 %v1322
    %v3549 = vpop.f32.mrf.mxu0
    %v3550 = vadd.f32 %v3461, %v3549
    %v3551 = vpop.f32.mrf.mxu0
    %v3552 = vadd.f32 %v3463, %v3551
    %3553 = vmatmul.bf16.gmra.mxu0 %v1328
    %v3554 = vpop.f32.mrf.mxu0
    %v3555 = vadd.f32 %v3466, %v3554
    %v3556 = vpop.f32.mrf.mxu0
    %v3557 = vadd.f32 %v3468, %v3556
    %3558 = vdwg.mxu0
    %3559 = vmatpush.bf16.msra.mxu0 %v2137
    %3560 = vmatpush.bf16.msra.mxu0 %v2133
    %3561 = vmatpush.bf16.msra.mxu0 %v2129
    %3562 = vmatpush.bf16.msra.mxu0 %v2125
    %3563 = vmatpush.bf16.msra.mxu0 %v2121
    %3564 = vmatpush.bf16.msra.mxu0 %v2117
    %3565 = vmatpush.bf16.msra.mxu0 %v2113
    %3566 = vmatpush.bf16.msra.mxu0 %v2109
    %3567 = vmatmul.bf16.gmra.mxu0 %v1233
    %v3568 = vpop.f32.mrf.mxu0
    %v3569 = vadd.f32 %v1525, %v3568
    %v3570 = vpop.f32.mrf.mxu0
    %v3571 = vadd.f32 %v1525, %v3570
    %3572 = vmatmul.bf16.gmra.mxu0 %v1239
    %v3573 = vpop.f32.mrf.mxu0
    %v3574 = vadd.f32 %v1525, %v3573
    %v3575 = vpop.f32.mrf.mxu0
    %v3576 = vadd.f32 %v1525, %v3575
    %3577 = vmatmul.bf16.gmra.mxu0 %v1245
    %v3578 = vpop.f32.mrf.mxu0
    %v3579 = vadd.f32 %v1525, %v3578
    %v3580 = vpop.f32.mrf.mxu0
    %v3581 = vadd.f32 %v1525, %v3580
    %3582 = vmatmul.bf16.gmra.mxu0 %v1251
    %v3583 = vpop.f32.mrf.mxu0
    %v3584 = vadd.f32 %v1525, %v3583
    %v3585 = vpop.f32.mrf.mxu0
    %v3586 = vadd.f32 %v1525, %v3585
    %3587 = vmatmul.bf16.gmra.mxu0 %v1257
    %v3588 = vpop.f32.mrf.mxu0
    %v3589 = vadd.f32 %v1525, %v3588
    %v3590 = vpop.f32.mrf.mxu0
    %v3591 = vadd.f32 %v1525, %v3590
    %3592 = vmatmul.bf16.gmra.mxu0 %v1263
    %v3593 = vpop.f32.mrf.mxu0
    %v3594 = vadd.f32 %v1525, %v3593
    %v3595 = vpop.f32.mrf.mxu0
    %v3596 = vadd.f32 %v1525, %v3595
    %3597 = vmatmul.bf16.gmra.mxu0 %v1269
    %v3598 = vpop.f32.mrf.mxu0
    %v3599 = vadd.f32 %v1525, %v3598
    %v3600 = vpop.f32.mrf.mxu0
    %v3601 = vadd.f32 %v1525, %v3600
    %3602 = vmatmul.bf16.gmra.mxu0 %v1275
    %v3603 = vpop.f32.mrf.mxu0
    %v3604 = vadd.f32 %v1525, %v3603
    %v3605 = vpop.f32.mrf.mxu0
    %v3606 = vadd.f32 %v1525, %v3605
    %3607 = vmatmul.bf16.gmra.mxu0 %v1281
    %v3608 = vpop.f32.mrf.mxu0
    %v3609 = vadd.f32 %v1525, %v3608
    %v3610 = vpop.f32.mrf.mxu0
    %v3611 = vadd.f32 %v1525, %v3610
    %3612 = vmatmul.bf16.gmra.mxu0 %v1287
    %v3613 = vpop.f32.mrf.mxu0
    %v3614 = vadd.f32 %v1525, %v3613
    %v3615 = vpop.f32.mrf.mxu0
    %v3616 = vadd.f32 %v1525, %v3615
    %3617 = vmatmul.bf16.gmra.mxu0 %v1293
    %v3618 = vpop.f32.mrf.mxu0
    %v3619 = vadd.f32 %v1525, %v3618
    %v3620 = vpop.f32.mrf.mxu0
    %v3621 = vadd.f32 %v1525, %v3620
    %3622 = vmatmul.bf16.gmra.mxu0 %v1299
    %v3623 = vpop.f32.mrf.mxu0
    %v3624 = vadd.f32 %v1525, %v3623
    %v3625 = vpop.f32.mrf.mxu0
    %v3626 = vadd.f32 %v1525, %v3625
    %3627 = vmatmul.bf16.gmra.mxu0 %v1305
    %v3628 = vpop.f32.mrf.mxu0
    %v3629 = vadd.f32 %v1525, %v3628
    %v3630 = vpop.f32.mrf.mxu0
    %v3631 = vadd.f32 %v1525, %v3630
    %3632 = vmatmul.bf16.gmra.mxu0 %v1311
    %v3633 = vpop.f32.mrf.mxu0
    %v3634 = vadd.f32 %v1525, %v3633
    %v3635 = vpop.f32.mrf.mxu0
    %v3636 = vadd.f32 %v1525, %v3635
    %3637 = vmatmul.bf16.gmra.mxu0 %v1317
    %v3638 = vpop.f32.mrf.mxu0
    %v3639 = vadd.f32 %v1525, %v3638
    %v3640 = vpop.f32.mrf.mxu0
    %v3641 = vadd.f32 %v1525, %v3640
    %3642 = vmatmul.bf16.gmra.mxu0 %v1323
    %v3643 = vpop.f32.mrf.mxu0
    %v3644 = vadd.f32 %v1525, %v3643
    %v3645 = vpop.f32.mrf.mxu0
    %v3646 = vadd.f32 %v1525, %v3645
    %3647 = vdwg.mxu0
    %3648 = vmatpush.bf16.msra.mxu0 %v2169
    %3649 = vmatpush.bf16.msra.mxu0 %v2165
    %3650 = vmatpush.bf16.msra.mxu0 %v2161
    %3651 = vmatpush.bf16.msra.mxu0 %v2157
    %3652 = vmatpush.bf16.msra.mxu0 %v2153
    %3653 = vmatpush.bf16.msra.mxu0 %v2149
    %3654 = vmatpush.bf16.msra.mxu0 %v2145
    %3655 = vmatpush.bf16.msra.mxu0 %v2141
    %3656 = vmatmul.bf16.gmra.mxu0 %v1234
    %v3657 = vpop.f32.mrf.mxu0
    %v3658 = vadd.f32 %v3569, %v3657
    %v3659 = vpop.f32.mrf.mxu0
    %v3660 = vadd.f32 %v3571, %v3659
    %3661 = vmatmul.bf16.gmra.mxu0 %v1240
    %v3662 = vpop.f32.mrf.mxu0
    %v3663 = vadd.f32 %v3574, %v3662
    %v3664 = vpop.f32.mrf.mxu0
    %v3665 = vadd.f32 %v3576, %v3664
    %3666 = vmatmul.bf16.gmra.mxu0 %v1246
    %v3667 = vpop.f32.mrf.mxu0
    %v3668 = vadd.f32 %v3579, %v3667
    %v3669 = vpop.f32.mrf.mxu0
    %v3670 = vadd.f32 %v3581, %v3669
    %3671 = vmatmul.bf16.gmra.mxu0 %v1252
    %v3672 = vpop.f32.mrf.mxu0
    %v3673 = vadd.f32 %v3584, %v3672
    %v3674 = vpop.f32.mrf.mxu0
    %v3675 = vadd.f32 %v3586, %v3674
    %3676 = vmatmul.bf16.gmra.mxu0 %v1258
    %v3677 = vpop.f32.mrf.mxu0
    %v3678 = vadd.f32 %v3589, %v3677
    %v3679 = vpop.f32.mrf.mxu0
    %v3680 = vadd.f32 %v3591, %v3679
    %3681 = vmatmul.bf16.gmra.mxu0 %v1264
    %v3682 = vpop.f32.mrf.mxu0
    %v3683 = vadd.f32 %v3594, %v3682
    %v3684 = vpop.f32.mrf.mxu0
    %v3685 = vadd.f32 %v3596, %v3684
    %3686 = vmatmul.bf16.gmra.mxu0 %v1270
    %v3687 = vpop.f32.mrf.mxu0
    %v3688 = vadd.f32 %v3599, %v3687
    %v3689 = vpop.f32.mrf.mxu0
    %v3690 = vadd.f32 %v3601, %v3689
    %3691 = vmatmul.bf16.gmra.mxu0 %v1276
    %v3692 = vpop.f32.mrf.mxu0
    %v3693 = vadd.f32 %v3604, %v3692
    %v3694 = vpop.f32.mrf.mxu0
    %v3695 = vadd.f32 %v3606, %v3694
    %3696 = vmatmul.bf16.gmra.mxu0 %v1282
    %v3697 = vpop.f32.mrf.mxu0
    %v3698 = vadd.f32 %v3609, %v3697
    %v3699 = vpop.f32.mrf.mxu0
    %v3700 = vadd.f32 %v3611, %v3699
    %3701 = vmatmul.bf16.gmra.mxu0 %v1288
    %v3702 = vpop.f32.mrf.mxu0
    %v3703 = vadd.f32 %v3614, %v3702
    %v3704 = vpop.f32.mrf.mxu0
    %v3705 = vadd.f32 %v3616, %v3704
    %3706 = vmatmul.bf16.gmra.mxu0 %v1294
    %v3707 = vpop.f32.mrf.mxu0
    %v3708 = vadd.f32 %v3619, %v3707
    %v3709 = vpop.f32.mrf.mxu0
    %v3710 = vadd.f32 %v3621, %v3709
    %3711 = vmatmul.bf16.gmra.mxu0 %v1300
    %v3712 = vpop.f32.mrf.mxu0
    %v3713 = vadd.f32 %v3624, %v3712
    %v3714 = vpop.f32.mrf.mxu0
    %v3715 = vadd.f32 %v3626, %v3714
    %3716 = vmatmul.bf16.gmra.mxu0 %v1306
    %v3717 = vpop.f32.mrf.mxu0
    %v3718 = vadd.f32 %v3629, %v3717
    %v3719 = vpop.f32.mrf.mxu0
    %v3720 = vadd.f32 %v3631, %v3719
    %3721 = vmatmul.bf16.gmra.mxu0 %v1312
    %v3722 = vpop.f32.mrf.mxu0
    %v3723 = vadd.f32 %v3634, %v3722
    %v3724 = vpop.f32.mrf.mxu0
    %v3725 = vadd.f32 %v3636, %v3724
    %3726 = vmatmul.bf16.gmra.mxu0 %v1318
    %v3727 = vpop.f32.mrf.mxu0
    %v3728 = vadd.f32 %v3639, %v3727
    %v3729 = vpop.f32.mrf.mxu0
    %v3730 = vadd.f32 %v3641, %v3729
    %3731 = vmatmul.bf16.gmra.mxu0 %v1324
    %v3732 = vpop.f32.mrf.mxu0
    %v3733 = vadd.f32 %v3644, %v3732
    %v3734 = vpop.f32.mrf.mxu0
    %v3735 = vadd.f32 %v3646, %v3734
    %3736 = vdwg.mxu0
    %3737 = vmatpush.bf16.msra.mxu0 %v2201
    %3738 = vmatpush.bf16.msra.mxu0 %v2197
    %3739 = vmatpush.bf16.msra.mxu0 %v2193
    %3740 = vmatpush.bf16.msra.mxu0 %v2189
    %3741 = vmatpush.bf16.msra.mxu0 %v2185
    %3742 = vmatpush.bf16.msra.mxu0 %v2181
    %3743 = vmatpush.bf16.msra.mxu0 %v2177
    %3744 = vmatpush.bf16.msra.mxu0 %v2173
    %3745 = vmatmul.bf16.gmra.mxu0 %v1235
    %v3746 = vpop.f32.mrf.mxu0
    %v3747 = vadd.f32 %v3658, %v3746
    %v3748 = vpop.f32.mrf.mxu0
    %v3749 = vadd.f32 %v3660, %v3748
    %3750 = vmatmul.bf16.gmra.mxu0 %v1241
    %v3751 = vpop.f32.mrf.mxu0
    %v3752 = vadd.f32 %v3663, %v3751
    %v3753 = vpop.f32.mrf.mxu0
    %v3754 = vadd.f32 %v3665, %v3753
    %3755 = vmatmul.bf16.gmra.mxu0 %v1247
    %v3756 = vpop.f32.mrf.mxu0
    %v3757 = vadd.f32 %v3668, %v3756
    %v3758 = vpop.f32.mrf.mxu0
    %v3759 = vadd.f32 %v3670, %v3758
    %3760 = vmatmul.bf16.gmra.mxu0 %v1253
    %v3761 = vpop.f32.mrf.mxu0
    %v3762 = vadd.f32 %v3673, %v3761
    %v3763 = vpop.f32.mrf.mxu0
    %v3764 = vadd.f32 %v3675, %v3763
    %3765 = vmatmul.bf16.gmra.mxu0 %v1259
    %v3766 = vpop.f32.mrf.mxu0
    %v3767 = vadd.f32 %v3678, %v3766
    %v3768 = vpop.f32.mrf.mxu0
    %v3769 = vadd.f32 %v3680, %v3768
    %3770 = vmatmul.bf16.gmra.mxu0 %v1265
    %v3771 = vpop.f32.mrf.mxu0
    %v3772 = vadd.f32 %v3683, %v3771
    %v3773 = vpop.f32.mrf.mxu0
    %v3774 = vadd.f32 %v3685, %v3773
    %3775 = vmatmul.bf16.gmra.mxu0 %v1271
    %v3776 = vpop.f32.mrf.mxu0
    %v3777 = vadd.f32 %v3688, %v3776
    %v3778 = vpop.f32.mrf.mxu0
    %v3779 = vadd.f32 %v3690, %v3778
    %3780 = vmatmul.bf16.gmra.mxu0 %v1277
    %v3781 = vpop.f32.mrf.mxu0
    %v3782 = vadd.f32 %v3693, %v3781
    %v3783 = vpop.f32.mrf.mxu0
    %v3784 = vadd.f32 %v3695, %v3783
    %3785 = vmatmul.bf16.gmra.mxu0 %v1283
    %v3786 = vpop.f32.mrf.mxu0
    %v3787 = vadd.f32 %v3698, %v3786
    %v3788 = vpop.f32.mrf.mxu0
    %v3789 = vadd.f32 %v3700, %v3788
    %3790 = vmatmul.bf16.gmra.mxu0 %v1289
    %v3791 = vpop.f32.mrf.mxu0
    %v3792 = vadd.f32 %v3703, %v3791
    %v3793 = vpop.f32.mrf.mxu0
    %v3794 = vadd.f32 %v3705, %v3793
    %3795 = vmatmul.bf16.gmra.mxu0 %v1295
    %v3796 = vpop.f32.mrf.mxu0
    %v3797 = vadd.f32 %v3708, %v3796
    %v3798 = vpop.f32.mrf.mxu0
    %v3799 = vadd.f32 %v3710, %v3798
    %3800 = vmatmul.bf16.gmra.mxu0 %v1301
    %v3801 = vpop.f32.mrf.mxu0
    %v3802 = vadd.f32 %v3713, %v3801
    %v3803 = vpop.f32.mrf.mxu0
    %v3804 = vadd.f32 %v3715, %v3803
    %3805 = vmatmul.bf16.gmra.mxu0 %v1307
    %v3806 = vpop.f32.mrf.mxu0
    %v3807 = vadd.f32 %v3718, %v3806
    %v3808 = vpop.f32.mrf.mxu0
    %v3809 = vadd.f32 %v3720, %v3808
    %3810 = vmatmul.bf16.gmra.mxu0 %v1313
    %v3811 = vpop.f32.mrf.mxu0
    %v3812 = vadd.f32 %v3723, %v3811
    %v3813 = vpop.f32.mrf.mxu0
    %v3814 = vadd.f32 %v3725, %v3813
    %3815 = vmatmul.bf16.gmra.mxu0 %v1319
    %v3816 = vpop.f32.mrf.mxu0
    %v3817 = vadd.f32 %v3728, %v3816
    %v3818 = vpop.f32.mrf.mxu0
    %v3819 = vadd.f32 %v3730, %v3818
    %3820 = vmatmul.bf16.gmra.mxu0 %v1325
    %v3821 = vpop.f32.mrf.mxu0
    %v3822 = vadd.f32 %v3733, %v3821
    %v3823 = vpop.f32.mrf.mxu0
    %v3824 = vadd.f32 %v3735, %v3823
    %3825 = vdwg.mxu0
    %3826 = vmatpush.bf16.msra.mxu0 %v2233
    %3827 = vmatpush.bf16.msra.mxu0 %v2229
    %3828 = vmatpush.bf16.msra.mxu0 %v2225
    %3829 = vmatpush.bf16.msra.mxu0 %v2221
    %3830 = vmatpush.bf16.msra.mxu0 %v2217
    %3831 = vmatpush.bf16.msra.mxu0 %v2213
    %3832 = vmatpush.bf16.msra.mxu0 %v2209
    %3833 = vmatpush.bf16.msra.mxu0 %v2205
    %3834 = vmatmul.bf16.gmra.mxu0 %v1236
    %v3835 = vpop.f32.mrf.mxu0
    %v3836 = vadd.f32 %v3747, %v3835
    %v3837 = vpop.f32.mrf.mxu0
    %v3838 = vadd.f32 %v3749, %v3837
    %3839 = vmatmul.bf16.gmra.mxu0 %v1242
    %v3840 = vpop.f32.mrf.mxu0
    %v3841 = vadd.f32 %v3752, %v3840
    %v3842 = vpop.f32.mrf.mxu0
    %v3843 = vadd.f32 %v3754, %v3842
    %3844 = vmatmul.bf16.gmra.mxu0 %v1248
    %v3845 = vpop.f32.mrf.mxu0
    %v3846 = vadd.f32 %v3757, %v3845
    %v3847 = vpop.f32.mrf.mxu0
    %v3848 = vadd.f32 %v3759, %v3847
    %3849 = vmatmul.bf16.gmra.mxu0 %v1254
    %v3850 = vpop.f32.mrf.mxu0
    %v3851 = vadd.f32 %v3762, %v3850
    %v3852 = vpop.f32.mrf.mxu0
    %v3853 = vadd.f32 %v3764, %v3852
    %3854 = vmatmul.bf16.gmra.mxu0 %v1260
    %v3855 = vpop.f32.mrf.mxu0
    %v3856 = vadd.f32 %v3767, %v3855
    %v3857 = vpop.f32.mrf.mxu0
    %v3858 = vadd.f32 %v3769, %v3857
    %3859 = vmatmul.bf16.gmra.mxu0 %v1266
    %v3860 = vpop.f32.mrf.mxu0
    %v3861 = vadd.f32 %v3772, %v3860
    %v3862 = vpop.f32.mrf.mxu0
    %v3863 = vadd.f32 %v3774, %v3862
    %3864 = vmatmul.bf16.gmra.mxu0 %v1272
    %v3865 = vpop.f32.mrf.mxu0
    %v3866 = vadd.f32 %v3777, %v3865
    %v3867 = vpop.f32.mrf.mxu0
    %v3868 = vadd.f32 %v3779, %v3867
    %3869 = vmatmul.bf16.gmra.mxu0 %v1278
    %v3870 = vpop.f32.mrf.mxu0
    %v3871 = vadd.f32 %v3782, %v3870
    %v3872 = vpop.f32.mrf.mxu0
    %v3873 = vadd.f32 %v3784, %v3872
    %3874 = vmatmul.bf16.gmra.mxu0 %v1284
    %v3875 = vpop.f32.mrf.mxu0
    %v3876 = vadd.f32 %v3787, %v3875
    %v3877 = vpop.f32.mrf.mxu0
    %v3878 = vadd.f32 %v3789, %v3877
    %3879 = vmatmul.bf16.gmra.mxu0 %v1290
    %v3880 = vpop.f32.mrf.mxu0
    %v3881 = vadd.f32 %v3792, %v3880
    %v3882 = vpop.f32.mrf.mxu0
    %v3883 = vadd.f32 %v3794, %v3882
    %3884 = vmatmul.bf16.gmra.mxu0 %v1296
    %v3885 = vpop.f32.mrf.mxu0
    %v3886 = vadd.f32 %v3797, %v3885
    %v3887 = vpop.f32.mrf.mxu0
    %v3888 = vadd.f32 %v3799, %v3887
    %3889 = vmatmul.bf16.gmra.mxu0 %v1302
    %v3890 = vpop.f32.mrf.mxu0
    %v3891 = vadd.f32 %v3802, %v3890
    %v3892 = vpop.f32.mrf.mxu0
    %v3893 = vadd.f32 %v3804, %v3892
    %3894 = vmatmul.bf16.gmra.mxu0 %v1308
    %v3895 = vpop.f32.mrf.mxu0
    %v3896 = vadd.f32 %v3807, %v3895
    %v3897 = vpop.f32.mrf.mxu0
    %v3898 = vadd.f32 %v3809, %v3897
    %3899 = vmatmul.bf16.gmra.mxu0 %v1314
    %v3900 = vpop.f32.mrf.mxu0
    %v3901 = vadd.f32 %v3812, %v3900
    %v3902 = vpop.f32.mrf.mxu0
    %v3903 = vadd.f32 %v3814, %v3902
    %3904 = vmatmul.bf16.gmra.mxu0 %v1320
    %v3905 = vpop.f32.mrf.mxu0
    %v3906 = vadd.f32 %v3817, %v3905
    %v3907 = vpop.f32.mrf.mxu0
    %v3908 = vadd.f32 %v3819, %v3907
    %3909 = vmatmul.bf16.gmra.mxu0 %v1326
    %v3910 = vpop.f32.mrf.mxu0
    %v3911 = vadd.f32 %v3822, %v3910
    %v3912 = vpop.f32.mrf.mxu0
    %v3913 = vadd.f32 %v3824, %v3912
    %3914 = vdwg.mxu0
    %3915 = vmatpush.bf16.msra.mxu0 %v2265
    %3916 = vmatpush.bf16.msra.mxu0 %v2261
    %3917 = vmatpush.bf16.msra.mxu0 %v2257
    %3918 = vmatpush.bf16.msra.mxu0 %v2253
    %3919 = vmatpush.bf16.msra.mxu0 %v2249
    %3920 = vmatpush.bf16.msra.mxu0 %v2245
    %3921 = vmatpush.bf16.msra.mxu0 %v2241
    %3922 = vmatpush.bf16.msra.mxu0 %v2237
    %3923 = vmatmul.bf16.gmra.mxu0 %v1237
    %v3924 = vpop.f32.mrf.mxu0
    %v3925 = vadd.f32 %v3836, %v3924
    %v3926 = vpop.f32.mrf.mxu0
    %v3927 = vadd.f32 %v3838, %v3926
    %3928 = vmatmul.bf16.gmra.mxu0 %v1243
    %v3929 = vpop.f32.mrf.mxu0
    %v3930 = vadd.f32 %v3841, %v3929
    %v3931 = vpop.f32.mrf.mxu0
    %v3932 = vadd.f32 %v3843, %v3931
    %3933 = vmatmul.bf16.gmra.mxu0 %v1249
    %v3934 = vpop.f32.mrf.mxu0
    %v3935 = vadd.f32 %v3846, %v3934
    %v3936 = vpop.f32.mrf.mxu0
    %v3937 = vadd.f32 %v3848, %v3936
    %3938 = vmatmul.bf16.gmra.mxu0 %v1255
    %v3939 = vpop.f32.mrf.mxu0
    %v3940 = vadd.f32 %v3851, %v3939
    %v3941 = vpop.f32.mrf.mxu0
    %v3942 = vadd.f32 %v3853, %v3941
    %3943 = vmatmul.bf16.gmra.mxu0 %v1261
    %v3944 = vpop.f32.mrf.mxu0
    %v3945 = vadd.f32 %v3856, %v3944
    %v3946 = vpop.f32.mrf.mxu0
    %v3947 = vadd.f32 %v3858, %v3946
    %3948 = vmatmul.bf16.gmra.mxu0 %v1267
    %v3949 = vpop.f32.mrf.mxu0
    %v3950 = vadd.f32 %v3861, %v3949
    %v3951 = vpop.f32.mrf.mxu0
    %v3952 = vadd.f32 %v3863, %v3951
    %3953 = vmatmul.bf16.gmra.mxu0 %v1273
    %v3954 = vpop.f32.mrf.mxu0
    %v3955 = vadd.f32 %v3866, %v3954
    %v3956 = vpop.f32.mrf.mxu0
    %v3957 = vadd.f32 %v3868, %v3956
    %3958 = vmatmul.bf16.gmra.mxu0 %v1279
    %v3959 = vpop.f32.mrf.mxu0
    %v3960 = vadd.f32 %v3871, %v3959
    %v3961 = vpop.f32.mrf.mxu0
    %v3962 = vadd.f32 %v3873, %v3961
    %3963 = vmatmul.bf16.gmra.mxu0 %v1285
    %v3964 = vpop.f32.mrf.mxu0
    %v3965 = vadd.f32 %v3876, %v3964
    %v3966 = vpop.f32.mrf.mxu0
    %v3967 = vadd.f32 %v3878, %v3966
    %3968 = vmatmul.bf16.gmra.mxu0 %v1291
    %v3969 = vpop.f32.mrf.mxu0
    %v3970 = vadd.f32 %v3881, %v3969
    %v3971 = vpop.f32.mrf.mxu0
    %v3972 = vadd.f32 %v3883, %v3971
    %3973 = vmatmul.bf16.gmra.mxu0 %v1297
    %v3974 = vpop.f32.mrf.mxu0
    %v3975 = vadd.f32 %v3886, %v3974
    %v3976 = vpop.f32.mrf.mxu0
    %v3977 = vadd.f32 %v3888, %v3976
    %3978 = vmatmul.bf16.gmra.mxu0 %v1303
    %v3979 = vpop.f32.mrf.mxu0
    %v3980 = vadd.f32 %v3891, %v3979
    %v3981 = vpop.f32.mrf.mxu0
    %v3982 = vadd.f32 %v3893, %v3981
    %3983 = vmatmul.bf16.gmra.mxu0 %v1309
    %v3984 = vpop.f32.mrf.mxu0
    %v3985 = vadd.f32 %v3896, %v3984
    %v3986 = vpop.f32.mrf.mxu0
    %v3987 = vadd.f32 %v3898, %v3986
    %3988 = vmatmul.bf16.gmra.mxu0 %v1315
    %v3989 = vpop.f32.mrf.mxu0
    %v3990 = vadd.f32 %v3901, %v3989
    %v3991 = vpop.f32.mrf.mxu0
    %v3992 = vadd.f32 %v3903, %v3991
    %3993 = vmatmul.bf16.gmra.mxu0 %v1321
    %v3994 = vpop.f32.mrf.mxu0
    %v3995 = vadd.f32 %v3906, %v3994
    %v3996 = vpop.f32.mrf.mxu0
    %v3997 = vadd.f32 %v3908, %v3996
    %3998 = vmatmul.bf16.gmra.mxu0 %v1327
    %v3999 = vpop.f32.mrf.mxu0
    %v4000 = vadd.f32 %v3911, %v3999
    %v4001 = vpop.f32.mrf.mxu0
    %v4002 = vadd.f32 %v3913, %v4001
    %4003 = vdwg.mxu0
    %4004 = vmatpush.bf16.msra.mxu0 %v2297
    %4005 = vmatpush.bf16.msra.mxu0 %v2293
    %4006 = vmatpush.bf16.msra.mxu0 %v2289
    %4007 = vmatpush.bf16.msra.mxu0 %v2285
    %4008 = vmatpush.bf16.msra.mxu0 %v2281
    %4009 = vmatpush.bf16.msra.mxu0 %v2277
    %4010 = vmatpush.bf16.msra.mxu0 %v2273
    %4011 = vmatpush.bf16.msra.mxu0 %v2269
    %4012 = vmatmul.bf16.gmra.mxu0 %v1238
    %v4013 = vpop.f32.mrf.mxu0
    %v4014 = vadd.f32 %v3925, %v4013
    %v4015 = vpop.f32.mrf.mxu0
    %v4016 = vadd.f32 %v3927, %v4015
    %4017 = vmatmul.bf16.gmra.mxu0 %v1244
    %v4018 = vpop.f32.mrf.mxu0
    %v4019 = vadd.f32 %v3930, %v4018
    %v4020 = vpop.f32.mrf.mxu0
    %v4021 = vadd.f32 %v3932, %v4020
    %4022 = vmatmul.bf16.gmra.mxu0 %v1250
    %v4023 = vpop.f32.mrf.mxu0
    %v4024 = vadd.f32 %v3935, %v4023
    %v4025 = vpop.f32.mrf.mxu0
    %v4026 = vadd.f32 %v3937, %v4025
    %4027 = vmatmul.bf16.gmra.mxu0 %v1256
    %v4028 = vpop.f32.mrf.mxu0
    %v4029 = vadd.f32 %v3940, %v4028
    %v4030 = vpop.f32.mrf.mxu0
    %v4031 = vadd.f32 %v3942, %v4030
    %4032 = vmatmul.bf16.gmra.mxu0 %v1262
    %v4033 = vpop.f32.mrf.mxu0
    %v4034 = vadd.f32 %v3945, %v4033
    %v4035 = vpop.f32.mrf.mxu0
    %v4036 = vadd.f32 %v3947, %v4035
    %4037 = vmatmul.bf16.gmra.mxu0 %v1268
    %v4038 = vpop.f32.mrf.mxu0
    %v4039 = vadd.f32 %v3950, %v4038
    %v4040 = vpop.f32.mrf.mxu0
    %v4041 = vadd.f32 %v3952, %v4040
    %4042 = vmatmul.bf16.gmra.mxu0 %v1274
    %v4043 = vpop.f32.mrf.mxu0
    %v4044 = vadd.f32 %v3955, %v4043
    %v4045 = vpop.f32.mrf.mxu0
    %v4046 = vadd.f32 %v3957, %v4045
    %4047 = vmatmul.bf16.gmra.mxu0 %v1280
    %v4048 = vpop.f32.mrf.mxu0
    %v4049 = vadd.f32 %v3960, %v4048
    %v4050 = vpop.f32.mrf.mxu0
    %v4051 = vadd.f32 %v3962, %v4050
    %4052 = vmatmul.bf16.gmra.mxu0 %v1286
    %v4053 = vpop.f32.mrf.mxu0
    %v4054 = vadd.f32 %v3965, %v4053
    %v4055 = vpop.f32.mrf.mxu0
    %v4056 = vadd.f32 %v3967, %v4055
    %4057 = vmatmul.bf16.gmra.mxu0 %v1292
    %v4058 = vpop.f32.mrf.mxu0
    %v4059 = vadd.f32 %v3970, %v4058
    %v4060 = vpop.f32.mrf.mxu0
    %v4061 = vadd.f32 %v3972, %v4060
    %4062 = vmatmul.bf16.gmra.mxu0 %v1298
    %v4063 = vpop.f32.mrf.mxu0
    %v4064 = vadd.f32 %v3975, %v4063
    %v4065 = vpop.f32.mrf.mxu0
    %v4066 = vadd.f32 %v3977, %v4065
    %4067 = vmatmul.bf16.gmra.mxu0 %v1304
    %v4068 = vpop.f32.mrf.mxu0
    %v4069 = vadd.f32 %v3980, %v4068
    %v4070 = vpop.f32.mrf.mxu0
    %v4071 = vadd.f32 %v3982, %v4070
    %4072 = vmatmul.bf16.gmra.mxu0 %v1310
    %v4073 = vpop.f32.mrf.mxu0
    %v4074 = vadd.f32 %v3985, %v4073
    %v4075 = vpop.f32.mrf.mxu0
    %v4076 = vadd.f32 %v3987, %v4075
    %4077 = vmatmul.bf16.gmra.mxu0 %v1316
    %v4078 = vpop.f32.mrf.mxu0
    %v4079 = vadd.f32 %v3990, %v4078
    %v4080 = vpop.f32.mrf.mxu0
    %v4081 = vadd.f32 %v3992, %v4080
    %4082 = vmatmul.bf16.gmra.mxu0 %v1322
    %v4083 = vpop.f32.mrf.mxu0
    %v4084 = vadd.f32 %v3995, %v4083
    %v4085 = vpop.f32.mrf.mxu0
    %v4086 = vadd.f32 %v3997, %v4085
    %4087 = vmatmul.bf16.gmra.mxu0 %v1328
    %v4088 = vpop.f32.mrf.mxu0
    %v4089 = vadd.f32 %v4000, %v4088
    %v4090 = vpop.f32.mrf.mxu0
    %v4091 = vadd.f32 %v4002, %v4090
    %4092 = vdwg.mxu0
    %4093 = vmatpush.bf16.msra.mxu0 %v2138
    %4094 = vmatpush.bf16.msra.mxu0 %v2134
    %4095 = vmatpush.bf16.msra.mxu0 %v2130
    %4096 = vmatpush.bf16.msra.mxu0 %v2126
    %4097 = vmatpush.bf16.msra.mxu0 %v2122
    %4098 = vmatpush.bf16.msra.mxu0 %v2118
    %4099 = vmatpush.bf16.msra.mxu0 %v2114
    %4100 = vmatpush.bf16.msra.mxu0 %v2110
    %4101 = vmatmul.bf16.gmra.mxu0 %v1233
    %v4102 = vpop.f32.mrf.mxu0
    %v4103 = vadd.f32 %v1526, %v4102
    %v4104 = vpop.f32.mrf.mxu0
    %v4105 = vadd.f32 %v1526, %v4104
    %4106 = vmatmul.bf16.gmra.mxu0 %v1239
    %v4107 = vpop.f32.mrf.mxu0
    %v4108 = vadd.f32 %v1526, %v4107
    %v4109 = vpop.f32.mrf.mxu0
    %v4110 = vadd.f32 %v1526, %v4109
    %4111 = vmatmul.bf16.gmra.mxu0 %v1245
    %v4112 = vpop.f32.mrf.mxu0
    %v4113 = vadd.f32 %v1526, %v4112
    %v4114 = vpop.f32.mrf.mxu0
    %v4115 = vadd.f32 %v1526, %v4114
    %4116 = vmatmul.bf16.gmra.mxu0 %v1251
    %v4117 = vpop.f32.mrf.mxu0
    %v4118 = vadd.f32 %v1526, %v4117
    %v4119 = vpop.f32.mrf.mxu0
    %v4120 = vadd.f32 %v1526, %v4119
    %4121 = vmatmul.bf16.gmra.mxu0 %v1257
    %v4122 = vpop.f32.mrf.mxu0
    %v4123 = vadd.f32 %v1526, %v4122
    %v4124 = vpop.f32.mrf.mxu0
    %v4125 = vadd.f32 %v1526, %v4124
    %4126 = vmatmul.bf16.gmra.mxu0 %v1263
    %v4127 = vpop.f32.mrf.mxu0
    %v4128 = vadd.f32 %v1526, %v4127
    %v4129 = vpop.f32.mrf.mxu0
    %v4130 = vadd.f32 %v1526, %v4129
    %4131 = vmatmul.bf16.gmra.mxu0 %v1269
    %v4132 = vpop.f32.mrf.mxu0
    %v4133 = vadd.f32 %v1526, %v4132
    %v4134 = vpop.f32.mrf.mxu0
    %v4135 = vadd.f32 %v1526, %v4134
    %4136 = vmatmul.bf16.gmra.mxu0 %v1275
    %v4137 = vpop.f32.mrf.mxu0
    %v4138 = vadd.f32 %v1526, %v4137
    %v4139 = vpop.f32.mrf.mxu0
    %v4140 = vadd.f32 %v1526, %v4139
    %4141 = vmatmul.bf16.gmra.mxu0 %v1281
    %v4142 = vpop.f32.mrf.mxu0
    %v4143 = vadd.f32 %v1526, %v4142
    %v4144 = vpop.f32.mrf.mxu0
    %v4145 = vadd.f32 %v1526, %v4144
    %4146 = vmatmul.bf16.gmra.mxu0 %v1287
    %v4147 = vpop.f32.mrf.mxu0
    %v4148 = vadd.f32 %v1526, %v4147
    %v4149 = vpop.f32.mrf.mxu0
    %v4150 = vadd.f32 %v1526, %v4149
    %4151 = vmatmul.bf16.gmra.mxu0 %v1293
    %v4152 = vpop.f32.mrf.mxu0
    %v4153 = vadd.f32 %v1526, %v4152
    %v4154 = vpop.f32.mrf.mxu0
    %v4155 = vadd.f32 %v1526, %v4154
    %4156 = vmatmul.bf16.gmra.mxu0 %v1299
    %v4157 = vpop.f32.mrf.mxu0
    %v4158 = vadd.f32 %v1526, %v4157
    %v4159 = vpop.f32.mrf.mxu0
    %v4160 = vadd.f32 %v1526, %v4159
    %4161 = vmatmul.bf16.gmra.mxu0 %v1305
    %v4162 = vpop.f32.mrf.mxu0
    %v4163 = vadd.f32 %v1526, %v4162
    %v4164 = vpop.f32.mrf.mxu0
    %v4165 = vadd.f32 %v1526, %v4164
    %4166 = vmatmul.bf16.gmra.mxu0 %v1311
    %v4167 = vpop.f32.mrf.mxu0
    %v4168 = vadd.f32 %v1526, %v4167
    %v4169 = vpop.f32.mrf.mxu0
    %v4170 = vadd.f32 %v1526, %v4169
    %4171 = vmatmul.bf16.gmra.mxu0 %v1317
    %v4172 = vpop.f32.mrf.mxu0
    %v4173 = vadd.f32 %v1526, %v4172
    %v4174 = vpop.f32.mrf.mxu0
    %v4175 = vadd.f32 %v1526, %v4174
    %4176 = vmatmul.bf16.gmra.mxu0 %v1323
    %v4177 = vpop.f32.mrf.mxu0
    %v4178 = vadd.f32 %v1526, %v4177
    %v4179 = vpop.f32.mrf.mxu0
    %v4180 = vadd.f32 %v1526, %v4179
    %4181 = vdwg.mxu0
    %4182 = vmatpush.bf16.msra.mxu0 %v2170
    %4183 = vmatpush.bf16.msra.mxu0 %v2166
    %4184 = vmatpush.bf16.msra.mxu0 %v2162
    %4185 = vmatpush.bf16.msra.mxu0 %v2158
    %4186 = vmatpush.bf16.msra.mxu0 %v2154
    %4187 = vmatpush.bf16.msra.mxu0 %v2150
    %4188 = vmatpush.bf16.msra.mxu0 %v2146
    %4189 = vmatpush.bf16.msra.mxu0 %v2142
    %4190 = vmatmul.bf16.gmra.mxu0 %v1234
    %v4191 = vpop.f32.mrf.mxu0
    %v4192 = vadd.f32 %v4103, %v4191
    %v4193 = vpop.f32.mrf.mxu0
    %v4194 = vadd.f32 %v4105, %v4193
    %4195 = vmatmul.bf16.gmra.mxu0 %v1240
    %v4196 = vpop.f32.mrf.mxu0
    %v4197 = vadd.f32 %v4108, %v4196
    %v4198 = vpop.f32.mrf.mxu0
    %v4199 = vadd.f32 %v4110, %v4198
    %4200 = vmatmul.bf16.gmra.mxu0 %v1246
    %v4201 = vpop.f32.mrf.mxu0
    %v4202 = vadd.f32 %v4113, %v4201
    %v4203 = vpop.f32.mrf.mxu0
    %v4204 = vadd.f32 %v4115, %v4203
    %4205 = vmatmul.bf16.gmra.mxu0 %v1252
    %v4206 = vpop.f32.mrf.mxu0
    %v4207 = vadd.f32 %v4118, %v4206
    %v4208 = vpop.f32.mrf.mxu0
    %v4209 = vadd.f32 %v4120, %v4208
    %4210 = vmatmul.bf16.gmra.mxu0 %v1258
    %v4211 = vpop.f32.mrf.mxu0
    %v4212 = vadd.f32 %v4123, %v4211
    %v4213 = vpop.f32.mrf.mxu0
    %v4214 = vadd.f32 %v4125, %v4213
    %4215 = vmatmul.bf16.gmra.mxu0 %v1264
    %v4216 = vpop.f32.mrf.mxu0
    %v4217 = vadd.f32 %v4128, %v4216
    %v4218 = vpop.f32.mrf.mxu0
    %v4219 = vadd.f32 %v4130, %v4218
    %4220 = vmatmul.bf16.gmra.mxu0 %v1270
    %v4221 = vpop.f32.mrf.mxu0
    %v4222 = vadd.f32 %v4133, %v4221
    %v4223 = vpop.f32.mrf.mxu0
    %v4224 = vadd.f32 %v4135, %v4223
    %4225 = vmatmul.bf16.gmra.mxu0 %v1276
    %v4226 = vpop.f32.mrf.mxu0
    %v4227 = vadd.f32 %v4138, %v4226
    %v4228 = vpop.f32.mrf.mxu0
    %v4229 = vadd.f32 %v4140, %v4228
    %4230 = vmatmul.bf16.gmra.mxu0 %v1282
    %v4231 = vpop.f32.mrf.mxu0
    %v4232 = vadd.f32 %v4143, %v4231
    %v4233 = vpop.f32.mrf.mxu0
    %v4234 = vadd.f32 %v4145, %v4233
    %4235 = vmatmul.bf16.gmra.mxu0 %v1288
    %v4236 = vpop.f32.mrf.mxu0
    %v4237 = vadd.f32 %v4148, %v4236
    %v4238 = vpop.f32.mrf.mxu0
    %v4239 = vadd.f32 %v4150, %v4238
    %4240 = vmatmul.bf16.gmra.mxu0 %v1294
    %v4241 = vpop.f32.mrf.mxu0
    %v4242 = vadd.f32 %v4153, %v4241
    %v4243 = vpop.f32.mrf.mxu0
    %v4244 = vadd.f32 %v4155, %v4243
    %4245 = vmatmul.bf16.gmra.mxu0 %v1300
    %v4246 = vpop.f32.mrf.mxu0
    %v4247 = vadd.f32 %v4158, %v4246
    %v4248 = vpop.f32.mrf.mxu0
    %v4249 = vadd.f32 %v4160, %v4248
    %4250 = vmatmul.bf16.gmra.mxu0 %v1306
    %v4251 = vpop.f32.mrf.mxu0
    %v4252 = vadd.f32 %v4163, %v4251
    %v4253 = vpop.f32.mrf.mxu0
    %v4254 = vadd.f32 %v4165, %v4253
    %4255 = vmatmul.bf16.gmra.mxu0 %v1312
    %v4256 = vpop.f32.mrf.mxu0
    %v4257 = vadd.f32 %v4168, %v4256
    %v4258 = vpop.f32.mrf.mxu0
    %v4259 = vadd.f32 %v4170, %v4258
    %4260 = vmatmul.bf16.gmra.mxu0 %v1318
    %v4261 = vpop.f32.mrf.mxu0
    %v4262 = vadd.f32 %v4173, %v4261
    %v4263 = vpop.f32.mrf.mxu0
    %v4264 = vadd.f32 %v4175, %v4263
    %4265 = vmatmul.bf16.gmra.mxu0 %v1324
    %v4266 = vpop.f32.mrf.mxu0
    %v4267 = vadd.f32 %v4178, %v4266
    %v4268 = vpop.f32.mrf.mxu0
    %v4269 = vadd.f32 %v4180, %v4268
    %4270 = vdwg.mxu0
    %4271 = vmatpush.bf16.msra.mxu0 %v2202
    %4272 = vmatpush.bf16.msra.mxu0 %v2198
    %4273 = vmatpush.bf16.msra.mxu0 %v2194
    %4274 = vmatpush.bf16.msra.mxu0 %v2190
    %4275 = vmatpush.bf16.msra.mxu0 %v2186
    %4276 = vmatpush.bf16.msra.mxu0 %v2182
    %4277 = vmatpush.bf16.msra.mxu0 %v2178
    %4278 = vmatpush.bf16.msra.mxu0 %v2174
    %4279 = vmatmul.bf16.gmra.mxu0 %v1235
    %v4280 = vpop.f32.mrf.mxu0
    %v4281 = vadd.f32 %v4192, %v4280
    %v4282 = vpop.f32.mrf.mxu0
    %v4283 = vadd.f32 %v4194, %v4282
    %4284 = vmatmul.bf16.gmra.mxu0 %v1241
    %v4285 = vpop.f32.mrf.mxu0
    %v4286 = vadd.f32 %v4197, %v4285
    %v4287 = vpop.f32.mrf.mxu0
    %v4288 = vadd.f32 %v4199, %v4287
    %4289 = vmatmul.bf16.gmra.mxu0 %v1247
    %v4290 = vpop.f32.mrf.mxu0
    %v4291 = vadd.f32 %v4202, %v4290
    %v4292 = vpop.f32.mrf.mxu0
    %v4293 = vadd.f32 %v4204, %v4292
    %4294 = vmatmul.bf16.gmra.mxu0 %v1253
    %v4295 = vpop.f32.mrf.mxu0
    %v4296 = vadd.f32 %v4207, %v4295
    %v4297 = vpop.f32.mrf.mxu0
    %v4298 = vadd.f32 %v4209, %v4297
    %4299 = vmatmul.bf16.gmra.mxu0 %v1259
    %v4300 = vpop.f32.mrf.mxu0
    %v4301 = vadd.f32 %v4212, %v4300
    %v4302 = vpop.f32.mrf.mxu0
    %v4303 = vadd.f32 %v4214, %v4302
    %4304 = vmatmul.bf16.gmra.mxu0 %v1265
    %v4305 = vpop.f32.mrf.mxu0
    %v4306 = vadd.f32 %v4217, %v4305
    %v4307 = vpop.f32.mrf.mxu0
    %v4308 = vadd.f32 %v4219, %v4307
    %4309 = vmatmul.bf16.gmra.mxu0 %v1271
    %v4310 = vpop.f32.mrf.mxu0
    %v4311 = vadd.f32 %v4222, %v4310
    %v4312 = vpop.f32.mrf.mxu0
    %v4313 = vadd.f32 %v4224, %v4312
    %4314 = vmatmul.bf16.gmra.mxu0 %v1277
    %v4315 = vpop.f32.mrf.mxu0
    %v4316 = vadd.f32 %v4227, %v4315
    %v4317 = vpop.f32.mrf.mxu0
    %v4318 = vadd.f32 %v4229, %v4317
    %4319 = vmatmul.bf16.gmra.mxu0 %v1283
    %v4320 = vpop.f32.mrf.mxu0
    %v4321 = vadd.f32 %v4232, %v4320
    %v4322 = vpop.f32.mrf.mxu0
    %v4323 = vadd.f32 %v4234, %v4322
    %4324 = vmatmul.bf16.gmra.mxu0 %v1289
    %v4325 = vpop.f32.mrf.mxu0
    %v4326 = vadd.f32 %v4237, %v4325
    %v4327 = vpop.f32.mrf.mxu0
    %v4328 = vadd.f32 %v4239, %v4327
    %4329 = vmatmul.bf16.gmra.mxu0 %v1295
    %v4330 = vpop.f32.mrf.mxu0
    %v4331 = vadd.f32 %v4242, %v4330
    %v4332 = vpop.f32.mrf.mxu0
    %v4333 = vadd.f32 %v4244, %v4332
    %4334 = vmatmul.bf16.gmra.mxu0 %v1301
    %v4335 = vpop.f32.mrf.mxu0
    %v4336 = vadd.f32 %v4247, %v4335
    %v4337 = vpop.f32.mrf.mxu0
    %v4338 = vadd.f32 %v4249, %v4337
    %4339 = vmatmul.bf16.gmra.mxu0 %v1307
    %v4340 = vpop.f32.mrf.mxu0
    %v4341 = vadd.f32 %v4252, %v4340
    %v4342 = vpop.f32.mrf.mxu0
    %v4343 = vadd.f32 %v4254, %v4342
    %4344 = vmatmul.bf16.gmra.mxu0 %v1313
    %v4345 = vpop.f32.mrf.mxu0
    %v4346 = vadd.f32 %v4257, %v4345
    %v4347 = vpop.f32.mrf.mxu0
    %v4348 = vadd.f32 %v4259, %v4347
    %4349 = vmatmul.bf16.gmra.mxu0 %v1319
    %v4350 = vpop.f32.mrf.mxu0
    %v4351 = vadd.f32 %v4262, %v4350
    %v4352 = vpop.f32.mrf.mxu0
    %v4353 = vadd.f32 %v4264, %v4352
    %4354 = vmatmul.bf16.gmra.mxu0 %v1325
    %v4355 = vpop.f32.mrf.mxu0
    %v4356 = vadd.f32 %v4267, %v4355
    %v4357 = vpop.f32.mrf.mxu0
    %v4358 = vadd.f32 %v4269, %v4357
    %4359 = vdwg.mxu0
    %4360 = vmatpush.bf16.msra.mxu0 %v2234
    %4361 = vmatpush.bf16.msra.mxu0 %v2230
    %4362 = vmatpush.bf16.msra.mxu0 %v2226
    %4363 = vmatpush.bf16.msra.mxu0 %v2222
    %4364 = vmatpush.bf16.msra.mxu0 %v2218
    %4365 = vmatpush.bf16.msra.mxu0 %v2214
    %4366 = vmatpush.bf16.msra.mxu0 %v2210
    %4367 = vmatpush.bf16.msra.mxu0 %v2206
    %4368 = vmatmul.bf16.gmra.mxu0 %v1236
    %v4369 = vpop.f32.mrf.mxu0
    %v4370 = vadd.f32 %v4281, %v4369
    %v4371 = vpop.f32.mrf.mxu0
    %v4372 = vadd.f32 %v4283, %v4371
    %4373 = vmatmul.bf16.gmra.mxu0 %v1242
    %v4374 = vpop.f32.mrf.mxu0
    %v4375 = vadd.f32 %v4286, %v4374
    %v4376 = vpop.f32.mrf.mxu0
    %v4377 = vadd.f32 %v4288, %v4376
    %4378 = vmatmul.bf16.gmra.mxu0 %v1248
    %v4379 = vpop.f32.mrf.mxu0
    %v4380 = vadd.f32 %v4291, %v4379
    %v4381 = vpop.f32.mrf.mxu0
    %v4382 = vadd.f32 %v4293, %v4381
    %4383 = vmatmul.bf16.gmra.mxu0 %v1254
    %v4384 = vpop.f32.mrf.mxu0
    %v4385 = vadd.f32 %v4296, %v4384
    %v4386 = vpop.f32.mrf.mxu0
    %v4387 = vadd.f32 %v4298, %v4386
    %4388 = vmatmul.bf16.gmra.mxu0 %v1260
    %v4389 = vpop.f32.mrf.mxu0
    %v4390 = vadd.f32 %v4301, %v4389
    %v4391 = vpop.f32.mrf.mxu0
    %v4392 = vadd.f32 %v4303, %v4391
    %4393 = vmatmul.bf16.gmra.mxu0 %v1266
    %v4394 = vpop.f32.mrf.mxu0
    %v4395 = vadd.f32 %v4306, %v4394
    %v4396 = vpop.f32.mrf.mxu0
    %v4397 = vadd.f32 %v4308, %v4396
    %4398 = vmatmul.bf16.gmra.mxu0 %v1272
    %v4399 = vpop.f32.mrf.mxu0
    %v4400 = vadd.f32 %v4311, %v4399
    %v4401 = vpop.f32.mrf.mxu0
    %v4402 = vadd.f32 %v4313, %v4401
    %4403 = vmatmul.bf16.gmra.mxu0 %v1278
    %v4404 = vpop.f32.mrf.mxu0
    %v4405 = vadd.f32 %v4316, %v4404
    %v4406 = vpop.f32.mrf.mxu0
    %v4407 = vadd.f32 %v4318, %v4406
    %4408 = vmatmul.bf16.gmra.mxu0 %v1284
    %v4409 = vpop.f32.mrf.mxu0
    %v4410 = vadd.f32 %v4321, %v4409
    %v4411 = vpop.f32.mrf.mxu0
    %v4412 = vadd.f32 %v4323, %v4411
    %4413 = vmatmul.bf16.gmra.mxu0 %v1290
    %v4414 = vpop.f32.mrf.mxu0
    %v4415 = vadd.f32 %v4326, %v4414
    %v4416 = vpop.f32.mrf.mxu0
    %v4417 = vadd.f32 %v4328, %v4416
    %4418 = vmatmul.bf16.gmra.mxu0 %v1296
    %v4419 = vpop.f32.mrf.mxu0
    %v4420 = vadd.f32 %v4331, %v4419
    %v4421 = vpop.f32.mrf.mxu0
    %v4422 = vadd.f32 %v4333, %v4421
    %4423 = vmatmul.bf16.gmra.mxu0 %v1302
    %v4424 = vpop.f32.mrf.mxu0
    %v4425 = vadd.f32 %v4336, %v4424
    %v4426 = vpop.f32.mrf.mxu0
    %v4427 = vadd.f32 %v4338, %v4426
    %4428 = vmatmul.bf16.gmra.mxu0 %v1308
    %v4429 = vpop.f32.mrf.mxu0
    %v4430 = vadd.f32 %v4341, %v4429
    %v4431 = vpop.f32.mrf.mxu0
    %v4432 = vadd.f32 %v4343, %v4431
    %4433 = vmatmul.bf16.gmra.mxu0 %v1314
    %v4434 = vpop.f32.mrf.mxu0
    %v4435 = vadd.f32 %v4346, %v4434
    %v4436 = vpop.f32.mrf.mxu0
    %v4437 = vadd.f32 %v4348, %v4436
    %4438 = vmatmul.bf16.gmra.mxu0 %v1320
    %v4439 = vpop.f32.mrf.mxu0
    %v4440 = vadd.f32 %v4351, %v4439
    %v4441 = vpop.f32.mrf.mxu0
    %v4442 = vadd.f32 %v4353, %v4441
    %4443 = vmatmul.bf16.gmra.mxu0 %v1326
    %v4444 = vpop.f32.mrf.mxu0
    %v4445 = vadd.f32 %v4356, %v4444
    %v4446 = vpop.f32.mrf.mxu0
    %v4447 = vadd.f32 %v4358, %v4446
    %4448 = vdwg.mxu0
    %4449 = vmatpush.bf16.msra.mxu0 %v2266
    %4450 = vmatpush.bf16.msra.mxu0 %v2262
    %4451 = vmatpush.bf16.msra.mxu0 %v2258
    %4452 = vmatpush.bf16.msra.mxu0 %v2254
    %4453 = vmatpush.bf16.msra.mxu0 %v2250
    %4454 = vmatpush.bf16.msra.mxu0 %v2246
    %4455 = vmatpush.bf16.msra.mxu0 %v2242
    %4456 = vmatpush.bf16.msra.mxu0 %v2238
    %4457 = vmatmul.bf16.gmra.mxu0 %v1237
    %v4458 = vpop.f32.mrf.mxu0
    %v4459 = vadd.f32 %v4370, %v4458
    %v4460 = vpop.f32.mrf.mxu0
    %v4461 = vadd.f32 %v4372, %v4460
    %4462 = vmatmul.bf16.gmra.mxu0 %v1243
    %v4463 = vpop.f32.mrf.mxu0
    %v4464 = vadd.f32 %v4375, %v4463
    %v4465 = vpop.f32.mrf.mxu0
    %v4466 = vadd.f32 %v4377, %v4465
    %4467 = vmatmul.bf16.gmra.mxu0 %v1249
    %v4468 = vpop.f32.mrf.mxu0
    %v4469 = vadd.f32 %v4380, %v4468
    %v4470 = vpop.f32.mrf.mxu0
    %v4471 = vadd.f32 %v4382, %v4470
    %4472 = vmatmul.bf16.gmra.mxu0 %v1255
    %v4473 = vpop.f32.mrf.mxu0
    %v4474 = vadd.f32 %v4385, %v4473
    %v4475 = vpop.f32.mrf.mxu0
    %v4476 = vadd.f32 %v4387, %v4475
    %4477 = vmatmul.bf16.gmra.mxu0 %v1261
    %v4478 = vpop.f32.mrf.mxu0
    %v4479 = vadd.f32 %v4390, %v4478
    %v4480 = vpop.f32.mrf.mxu0
    %v4481 = vadd.f32 %v4392, %v4480
    %4482 = vmatmul.bf16.gmra.mxu0 %v1267
    %v4483 = vpop.f32.mrf.mxu0
    %v4484 = vadd.f32 %v4395, %v4483
    %v4485 = vpop.f32.mrf.mxu0
    %v4486 = vadd.f32 %v4397, %v4485
    %4487 = vmatmul.bf16.gmra.mxu0 %v1273
    %v4488 = vpop.f32.mrf.mxu0
    %v4489 = vadd.f32 %v4400, %v4488
    %v4490 = vpop.f32.mrf.mxu0
    %v4491 = vadd.f32 %v4402, %v4490
    %4492 = vmatmul.bf16.gmra.mxu0 %v1279
    %v4493 = vpop.f32.mrf.mxu0
    %v4494 = vadd.f32 %v4405, %v4493
    %v4495 = vpop.f32.mrf.mxu0
    %v4496 = vadd.f32 %v4407, %v4495
    %4497 = vmatmul.bf16.gmra.mxu0 %v1285
    %v4498 = vpop.f32.mrf.mxu0
    %v4499 = vadd.f32 %v4410, %v4498
    %v4500 = vpop.f32.mrf.mxu0
    %v4501 = vadd.f32 %v4412, %v4500
    %4502 = vmatmul.bf16.gmra.mxu0 %v1291
    %v4503 = vpop.f32.mrf.mxu0
    %v4504 = vadd.f32 %v4415, %v4503
    %v4505 = vpop.f32.mrf.mxu0
    %v4506 = vadd.f32 %v4417, %v4505
    %4507 = vmatmul.bf16.gmra.mxu0 %v1297
    %v4508 = vpop.f32.mrf.mxu0
    %v4509 = vadd.f32 %v4420, %v4508
    %v4510 = vpop.f32.mrf.mxu0
    %v4511 = vadd.f32 %v4422, %v4510
    %4512 = vmatmul.bf16.gmra.mxu0 %v1303
    %v4513 = vpop.f32.mrf.mxu0
    %v4514 = vadd.f32 %v4425, %v4513
    %v4515 = vpop.f32.mrf.mxu0
    %v4516 = vadd.f32 %v4427, %v4515
    %4517 = vmatmul.bf16.gmra.mxu0 %v1309
    %v4518 = vpop.f32.mrf.mxu0
    %v4519 = vadd.f32 %v4430, %v4518
    %v4520 = vpop.f32.mrf.mxu0
    %v4521 = vadd.f32 %v4432, %v4520
    %4522 = vmatmul.bf16.gmra.mxu0 %v1315
    %v4523 = vpop.f32.mrf.mxu0
    %v4524 = vadd.f32 %v4435, %v4523
    %v4525 = vpop.f32.mrf.mxu0
    %v4526 = vadd.f32 %v4437, %v4525
    %4527 = vmatmul.bf16.gmra.mxu0 %v1321
    %v4528 = vpop.f32.mrf.mxu0
    %v4529 = vadd.f32 %v4440, %v4528
    %v4530 = vpop.f32.mrf.mxu0
    %v4531 = vadd.f32 %v4442, %v4530
    %4532 = vmatmul.bf16.gmra.mxu0 %v1327
    %v4533 = vpop.f32.mrf.mxu0
    %v4534 = vadd.f32 %v4445, %v4533
    %v4535 = vpop.f32.mrf.mxu0
    %v4536 = vadd.f32 %v4447, %v4535
    %4537 = vdwg.mxu0
    %4538 = vmatpush.bf16.msra.mxu0 %v2298
    %4539 = vmatpush.bf16.msra.mxu0 %v2294
    %4540 = vmatpush.bf16.msra.mxu0 %v2290
    %4541 = vmatpush.bf16.msra.mxu0 %v2286
    %4542 = vmatpush.bf16.msra.mxu0 %v2282
    %4543 = vmatpush.bf16.msra.mxu0 %v2278
    %4544 = vmatpush.bf16.msra.mxu0 %v2274
    %4545 = vmatpush.bf16.msra.mxu0 %v2270
    %4546 = vmatmul.bf16.gmra.mxu0 %v1238
    %v4547 = vpop.f32.mrf.mxu0
    %v4548 = vadd.f32 %v4459, %v4547
    %v4549 = vpop.f32.mrf.mxu0
    %v4550 = vadd.f32 %v4461, %v4549
    %4551 = vmatmul.bf16.gmra.mxu0 %v1244
    %v4552 = vpop.f32.mrf.mxu0
    %v4553 = vadd.f32 %v4464, %v4552
    %v4554 = vpop.f32.mrf.mxu0
    %v4555 = vadd.f32 %v4466, %v4554
    %4556 = vmatmul.bf16.gmra.mxu0 %v1250
    %v4557 = vpop.f32.mrf.mxu0
    %v4558 = vadd.f32 %v4469, %v4557
    %v4559 = vpop.f32.mrf.mxu0
    %v4560 = vadd.f32 %v4471, %v4559
    %4561 = vmatmul.bf16.gmra.mxu0 %v1256
    %v4562 = vpop.f32.mrf.mxu0
    %v4563 = vadd.f32 %v4474, %v4562
    %v4564 = vpop.f32.mrf.mxu0
    %v4565 = vadd.f32 %v4476, %v4564
    %4566 = vmatmul.bf16.gmra.mxu0 %v1262
    %v4567 = vpop.f32.mrf.mxu0
    %v4568 = vadd.f32 %v4479, %v4567
    %v4569 = vpop.f32.mrf.mxu0
    %v4570 = vadd.f32 %v4481, %v4569
    %4571 = vmatmul.bf16.gmra.mxu0 %v1268
    %v4572 = vpop.f32.mrf.mxu0
    %v4573 = vadd.f32 %v4484, %v4572
    %v4574 = vpop.f32.mrf.mxu0
    %v4575 = vadd.f32 %v4486, %v4574
    %4576 = vmatmul.bf16.gmra.mxu0 %v1274
    %v4577 = vpop.f32.mrf.mxu0
    %v4578 = vadd.f32 %v4489, %v4577
    %v4579 = vpop.f32.mrf.mxu0
    %v4580 = vadd.f32 %v4491, %v4579
    %4581 = vmatmul.bf16.gmra.mxu0 %v1280
    %v4582 = vpop.f32.mrf.mxu0
    %v4583 = vadd.f32 %v4494, %v4582
    %v4584 = vpop.f32.mrf.mxu0
    %v4585 = vadd.f32 %v4496, %v4584
    %4586 = vmatmul.bf16.gmra.mxu0 %v1286
    %v4587 = vpop.f32.mrf.mxu0
    %v4588 = vadd.f32 %v4499, %v4587
    %v4589 = vpop.f32.mrf.mxu0
    %v4590 = vadd.f32 %v4501, %v4589
    %4591 = vmatmul.bf16.gmra.mxu0 %v1292
    %v4592 = vpop.f32.mrf.mxu0
    %v4593 = vadd.f32 %v4504, %v4592
    %v4594 = vpop.f32.mrf.mxu0
    %v4595 = vadd.f32 %v4506, %v4594
    %4596 = vmatmul.bf16.gmra.mxu0 %v1298
    %v4597 = vpop.f32.mrf.mxu0
    %v4598 = vadd.f32 %v4509, %v4597
    %v4599 = vpop.f32.mrf.mxu0
    %v4600 = vadd.f32 %v4511, %v4599
    %4601 = vmatmul.bf16.gmra.mxu0 %v1304
    %v4602 = vpop.f32.mrf.mxu0
    %v4603 = vadd.f32 %v4514, %v4602
    %v4604 = vpop.f32.mrf.mxu0
    %v4605 = vadd.f32 %v4516, %v4604
    %4606 = vmatmul.bf16.gmra.mxu0 %v1310
    %v4607 = vpop.f32.mrf.mxu0
    %v4608 = vadd.f32 %v4519, %v4607
    %v4609 = vpop.f32.mrf.mxu0
    %v4610 = vadd.f32 %v4521, %v4609
    %4611 = vmatmul.bf16.gmra.mxu0 %v1316
    %v4612 = vpop.f32.mrf.mxu0
    %v4613 = vadd.f32 %v4524, %v4612
    %v4614 = vpop.f32.mrf.mxu0
    %v4615 = vadd.f32 %v4526, %v4614
    %4616 = vmatmul.bf16.gmra.mxu0 %v1322
    %v4617 = vpop.f32.mrf.mxu0
    %v4618 = vadd.f32 %v4529, %v4617
    %v4619 = vpop.f32.mrf.mxu0
    %v4620 = vadd.f32 %v4531, %v4619
    %4621 = vmatmul.bf16.gmra.mxu0 %v1328
    %v4622 = vpop.f32.mrf.mxu0
    %v4623 = vadd.f32 %v4534, %v4622
    %v4624 = vpop.f32.mrf.mxu0
    %v4625 = vadd.f32 %v4536, %v4624
    %4626 = vdwg.mxu0
    %v4627 = vmax.f32 %v2946, 0.0
    %v4628 = vmax.f32 %v3480, 0.0
    %v4629 = vmax.f32 %v4014, 0.0
    %v4630 = vmax.f32 %v4548, 0.0
    %v4631 = vmax.f32 %v2948, 0.0
    %v4632 = vmax.f32 %v3482, 0.0
    %v4633 = vmax.f32 %v4016, 0.0
    %v4634 = vmax.f32 %v4550, 0.0
    %v4635 = vmax.f32 %v2951, 0.0
    %v4636 = vmax.f32 %v3485, 0.0
    %v4637 = vmax.f32 %v4019, 0.0
    %v4638 = vmax.f32 %v4553, 0.0
    %v4639 = vmax.f32 %v2953, 0.0
    %v4640 = vmax.f32 %v3487, 0.0
    %v4641 = vmax.f32 %v4021, 0.0
    %v4642 = vmax.f32 %v4555, 0.0
    %v4643 = vmax.f32 %v2956, 0.0
    %v4644 = vmax.f32 %v3490, 0.0
    %v4645 = vmax.f32 %v4024, 0.0
    %v4646 = vmax.f32 %v4558, 0.0
    %v4647 = vmax.f32 %v2958, 0.0
    %v4648 = vmax.f32 %v3492, 0.0
    %v4649 = vmax.f32 %v4026, 0.0
    %v4650 = vmax.f32 %v4560, 0.0
    %v4651 = vmax.f32 %v2961, 0.0
    %v4652 = vmax.f32 %v3495, 0.0
    %v4653 = vmax.f32 %v4029, 0.0
    %v4654 = vmax.f32 %v4563, 0.0
    %v4655 = vmax.f32 %v2963, 0.0
    %v4656 = vmax.f32 %v3497, 0.0
    %v4657 = vmax.f32 %v4031, 0.0
    %v4658 = vmax.f32 %v4565, 0.0
    %v4659 = vmax.f32 %v2966, 0.0
    %v4660 = vmax.f32 %v3500, 0.0
    %v4661 = vmax.f32 %v4034, 0.0
    %v4662 = vmax.f32 %v4568, 0.0
    %v4663 = vmax.f32 %v2968, 0.0
    %v4664 = vmax.f32 %v3502, 0.0
    %v4665 = vmax.f32 %v4036, 0.0
    %v4666 = vmax.f32 %v4570, 0.0
    %v4667 = vmax.f32 %v2971, 0.0
    %v4668 = vmax.f32 %v3505, 0.0
    %v4669 = vmax.f32 %v4039, 0.0
    %v4670 = vmax.f32 %v4573, 0.0
    %v4671 = vmax.f32 %v2973, 0.0
    %v4672 = vmax.f32 %v3507, 0.0
    %v4673 = vmax.f32 %v4041, 0.0
    %v4674 = vmax.f32 %v4575, 0.0
    %v4675 = vmax.f32 %v2976, 0.0
    %v4676 = vmax.f32 %v3510, 0.0
    %v4677 = vmax.f32 %v4044, 0.0
    %v4678 = vmax.f32 %v4578, 0.0
    %v4679 = vmax.f32 %v2978, 0.0
    %v4680 = vmax.f32 %v3512, 0.0
    %v4681 = vmax.f32 %v4046, 0.0
    %v4682 = vmax.f32 %v4580, 0.0
    %v4683 = vmax.f32 %v2981, 0.0
    %v4684 = vmax.f32 %v3515, 0.0
    %v4685 = vmax.f32 %v4049, 0.0
    %v4686 = vmax.f32 %v4583, 0.0
    %v4687 = vmax.f32 %v2983, 0.0
    %v4688 = vmax.f32 %v3517, 0.0
    %v4689 = vmax.f32 %v4051, 0.0
    %v4690 = vmax.f32 %v4585, 0.0
    %v4691 = vmax.f32 %v2986, 0.0
    %v4692 = vmax.f32 %v3520, 0.0
    %v4693 = vmax.f32 %v4054, 0.0
    %v4694 = vmax.f32 %v4588, 0.0
    %v4695 = vmax.f32 %v2988, 0.0
    %v4696 = vmax.f32 %v3522, 0.0
    %v4697 = vmax.f32 %v4056, 0.0
    %v4698 = vmax.f32 %v4590, 0.0
    %v4699 = vmax.f32 %v2991, 0.0
    %v4700 = vmax.f32 %v3525, 0.0
    %v4701 = vmax.f32 %v4059, 0.0
    %v4702 = vmax.f32 %v4593, 0.0
    %v4703 = vmax.f32 %v2993, 0.0
    %v4704 = vmax.f32 %v3527, 0.0
    %v4705 = vmax.f32 %v4061, 0.0
    %v4706 = vmax.f32 %v4595, 0.0
    %v4707 = vmax.f32 %v2996, 0.0
    %v4708 = vmax.f32 %v3530, 0.0
    %v4709 = vmax.f32 %v4064, 0.0
    %v4710 = vmax.f32 %v4598, 0.0
    %v4711 = vmax.f32 %v2998, 0.0
    %v4712 = vmax.f32 %v3532, 0.0
    %v4713 = vmax.f32 %v4066, 0.0
    %v4714 = vmax.f32 %v4600, 0.0
    %v4715 = vmax.f32 %v3001, 0.0
    %v4716 = vmax.f32 %v3535, 0.0
    %v4717 = vmax.f32 %v4069, 0.0
    %v4718 = vmax.f32 %v4603, 0.0
    %v4719 = vmax.f32 %v3003, 0.0
    %v4720 = vmax.f32 %v3537, 0.0
    %v4721 = vmax.f32 %v4071, 0.0
    %v4722 = vmax.f32 %v4605, 0.0
    %v4723 = vmax.f32 %v3006, 0.0
    %v4724 = vmax.f32 %v3540, 0.0
    %v4725 = vmax.f32 %v4074, 0.0
    %v4726 = vmax.f32 %v4608, 0.0
    %v4727 = vmax.f32 %v3008, 0.0
    %v4728 = vmax.f32 %v3542, 0.0
    %v4729 = vmax.f32 %v4076, 0.0
    %v4730 = vmax.f32 %v4610, 0.0
    %v4731 = vmax.f32 %v3011, 0.0
    %v4732 = vmax.f32 %v3545, 0.0
    %v4733 = vmax.f32 %v4079, 0.0
    %v4734 = vmax.f32 %v4613, 0.0
    %v4735 = vmax.f32 %v3013, 0.0
    %v4736 = vmax.f32 %v3547, 0.0
    %v4737 = vmax.f32 %v4081, 0.0
    %v4738 = vmax.f32 %v4615, 0.0
    %v4739 = vmax.f32 %v3016, 0.0
    %v4740 = vmax.f32 %v3550, 0.0
    %v4741 = vmax.f32 %v4084, 0.0
    %v4742 = vmax.f32 %v4618, 0.0
    %v4743 = vmax.f32 %v3018, 0.0
    %v4744 = vmax.f32 %v3552, 0.0
    %v4745 = vmax.f32 %v4086, 0.0
    %v4746 = vmax.f32 %v4620, 0.0
    %v4747 = vmax.f32 %v3021, 0.0
    %v4748 = vmax.f32 %v3555, 0.0
    %v4749 = vmax.f32 %v4089, 0.0
    %v4750 = vmax.f32 %v4623, 0.0
    %v4751 = vmax.f32 %v3023, 0.0
    %v4752 = vmax.f32 %v3557, 0.0
    %v4753 = vmax.f32 %v4091, 0.0
    %v4754 = vmax.f32 %v4625, 0.0
    %v4755 = vpack.c.bf16 %v4631, %v4627
    %v4756 = vpack.c.bf16 %v4632, %v4628
    %v4757 = vpack.c.bf16 %v4633, %v4629
    %v4758 = vpack.c.bf16 %v4634, %v4630
    %v4759 = vpack.c.bf16 %v4639, %v4635
    %v4760 = vpack.c.bf16 %v4640, %v4636
    %v4761 = vpack.c.bf16 %v4641, %v4637
    %v4762 = vpack.c.bf16 %v4642, %v4638
    %v4763 = vpack.c.bf16 %v4647, %v4643
    %v4764 = vpack.c.bf16 %v4648, %v4644
    %v4765 = vpack.c.bf16 %v4649, %v4645
    %v4766 = vpack.c.bf16 %v4650, %v4646
    %v4767 = vpack.c.bf16 %v4655, %v4651
    %v4768 = vpack.c.bf16 %v4656, %v4652
    %v4769 = vpack.c.bf16 %v4657, %v4653
    %v4770 = vpack.c.bf16 %v4658, %v4654
    %v4771 = vpack.c.bf16 %v4663, %v4659
    %v4772 = vpack.c.bf16 %v4664, %v4660
    %v4773 = vpack.c.bf16 %v4665, %v4661
    %v4774 = vpack.c.bf16 %v4666, %v4662
    %v4775 = vpack.c.bf16 %v4671, %v4667
    %v4776 = vpack.c.bf16 %v4672, %v4668
    %v4777 = vpack.c.bf16 %v4673, %v4669
    %v4778 = vpack.c.bf16 %v4674, %v4670
    %v4779 = vpack.c.bf16 %v4679, %v4675
    %v4780 = vpack.c.bf16 %v4680, %v4676
    %v4781 = vpack.c.bf16 %v4681, %v4677
    %v4782 = vpack.c.bf16 %v4682, %v4678
    %v4783 = vpack.c.bf16 %v4687, %v4683
    %v4784 = vpack.c.bf16 %v4688, %v4684
    %v4785 = vpack.c.bf16 %v4689, %v4685
    %v4786 = vpack.c.bf16 %v4690, %v4686
    %v4787 = vpack.c.bf16 %v4695, %v4691
    %v4788 = vpack.c.bf16 %v4696, %v4692
    %v4789 = vpack.c.bf16 %v4697, %v4693
    %v4790 = vpack.c.bf16 %v4698, %v4694
    %v4791 = vpack.c.bf16 %v4703, %v4699
    %v4792 = vpack.c.bf16 %v4704, %v4700
    %v4793 = vpack.c.bf16 %v4705, %v4701
    %v4794 = vpack.c.bf16 %v4706, %v4702
    %v4795 = vpack.c.bf16 %v4711, %v4707
    %v4796 = vpack.c.bf16 %v4712, %v4708
    %v4797 = vpack.c.bf16 %v4713, %v4709
    %v4798 = vpack.c.bf16 %v4714, %v4710
    %v4799 = vpack.c.bf16 %v4719, %v4715
    %v4800 = vpack.c.bf16 %v4720, %v4716
    %v4801 = vpack.c.bf16 %v4721, %v4717
    %v4802 = vpack.c.bf16 %v4722, %v4718
    %v4803 = vpack.c.bf16 %v4727, %v4723
    %v4804 = vpack.c.bf16 %v4728, %v4724
    %v4805 = vpack.c.bf16 %v4729, %v4725
    %v4806 = vpack.c.bf16 %v4730, %v4726
    %v4807 = vpack.c.bf16 %v4735, %v4731
    %v4808 = vpack.c.bf16 %v4736, %v4732
    %v4809 = vpack.c.bf16 %v4737, %v4733
    %v4810 = vpack.c.bf16 %v4738, %v4734
    %v4811 = vpack.c.bf16 %v4743, %v4739
    %v4812 = vpack.c.bf16 %v4744, %v4740
    %v4813 = vpack.c.bf16 %v4745, %v4741
    %v4814 = vpack.c.bf16 %v4746, %v4742
    %v4815 = vpack.c.bf16 %v4751, %v4747
    %v4816 = vpack.c.bf16 %v4752, %v4748
    %v4817 = vpack.c.bf16 %v4753, %v4749
    %v4818 = vpack.c.bf16 %v4754, %v4750
    %v4819 = vld [vmem:[#allocation5] sm:$0xff]
    %v4820 = vld [vmem:[#allocation5 + $0x8] sm:$0xff]
    %v4821 = vld [vmem:[#allocation5 + $0x10] sm:$0xff]
    %v4822 = vld [vmem:[#allocation5 + $0x18] sm:$0xff]
    %v4823 = vld [vmem:[#allocation5 + $0x20] sm:$0xff]
    %v4824 = vld [vmem:[#allocation5 + $0x28] sm:$0xff]
    %v4825 = vld [vmem:[#allocation5 + $0x30] sm:$0xff]
    %v4826 = vld [vmem:[#allocation5 + $0x38] sm:$0xff]
    %v4827 = vld [vmem:[#allocation5 + $0x40] sm:$0xff]
    %v4828 = vld [vmem:[#allocation5 + $0x48] sm:$0xff]
    %v4829 = vld [vmem:[#allocation5 + $0x50] sm:$0xff]
    %v4830 = vld [vmem:[#allocation5 + $0x58] sm:$0xff]
    %v4831 = vld [vmem:[#allocation5 + $0x60] sm:$0xff]
    %v4832 = vld [vmem:[#allocation5 + $0x68] sm:$0xff]
    %v4833 = vld [vmem:[#allocation5 + $0x70] sm:$0xff]
    %v4834 = vld [vmem:[#allocation5 + $0x78] sm:$0xff]
    %v4835 = vld [vmem:[#allocation5 + $0x80] sm:$0xff]
    %v4836 = vld [vmem:[#allocation5 + $0x88] sm:$0xff]
    %v4837 = vld [vmem:[#allocation5 + $0x90] sm:$0xff]
    %v4838 = vld [vmem:[#allocation5 + $0x98] sm:$0xff]
    %v4839 = vld [vmem:[#allocation5 + $0xa0] sm:$0xff]
    %v4840 = vld [vmem:[#allocation5 + $0xa8] sm:$0xff]
    %v4841 = vld [vmem:[#allocation5 + $0xb0] sm:$0xff]
    %v4842 = vld [vmem:[#allocation5 + $0xb8] sm:$0xff]
    %v4843 = vld [vmem:[#allocation5 + $0xc0] sm:$0xff]
    %v4844 = vld [vmem:[#allocation5 + $0xc8] sm:$0xff]
    %v4845 = vld [vmem:[#allocation5 + $0xd0] sm:$0xff]
    %v4846 = vld [vmem:[#allocation5 + $0xd8] sm:$0xff]
    %v4847 = vld [vmem:[#allocation5 + $0xe0] sm:$0xff]
    %v4848 = vld [vmem:[#allocation5 + $0xe8] sm:$0xff]
    %v4849 = vld [vmem:[#allocation5 + $0xf0] sm:$0xff]
    %v4850 = vld [vmem:[#allocation5 + $0xf8] sm:$0xff]
    %v4851 = vld [vmem:[#allocation5 + $0x100] sm:$0xff]
    %v4852 = vld [vmem:[#allocation5 + $0x108] sm:$0xff]
    %v4853 = vld [vmem:[#allocation5 + $0x110] sm:$0xff]
    %v4854 = vld [vmem:[#allocation5 + $0x118] sm:$0xff]
    %v4855 = vld [vmem:[#allocation5 + $0x120] sm:$0xff]
    %v4856 = vld [vmem:[#allocation5 + $0x128] sm:$0xff]
    %v4857 = vld [vmem:[#allocation5 + $0x130] sm:$0xff]
    %v4858 = vld [vmem:[#allocation5 + $0x138] sm:$0xff]
    %v4859 = vld [vmem:[#allocation5 + $0x140] sm:$0xff]
    %v4860 = vld [vmem:[#allocation5 + $0x148] sm:$0xff]
    %v4861 = vld [vmem:[#allocation5 + $0x150] sm:$0xff]
    %v4862 = vld [vmem:[#allocation5 + $0x158] sm:$0xff]
    %v4863 = vld [vmem:[#allocation5 + $0x160] sm:$0xff]
    %v4864 = vld [vmem:[#allocation5 + $0x168] sm:$0xff]
    %v4865 = vld [vmem:[#allocation5 + $0x170] sm:$0xff]
    %v4866 = vld [vmem:[#allocation5 + $0x178] sm:$0xff]
    %v4867 = vld [vmem:[#allocation5 + $0x180] sm:$0xff]
    %v4868 = vld [vmem:[#allocation5 + $0x188] sm:$0xff]
    %v4869 = vld [vmem:[#allocation5 + $0x190] sm:$0xff]
    %v4870 = vld [vmem:[#allocation5 + $0x198] sm:$0xff]
    %v4871 = vld [vmem:[#allocation5 + $0x1a0] sm:$0xff]
    %v4872 = vld [vmem:[#allocation5 + $0x1a8] sm:$0xff]
    %v4873 = vld [vmem:[#allocation5 + $0x1b0] sm:$0xff]
    %v4874 = vld [vmem:[#allocation5 + $0x1b8] sm:$0xff]
    %v4875 = vld [vmem:[#allocation5 + $0x1c0] sm:$0xff]
    %v4876 = vld [vmem:[#allocation5 + $0x1c8] sm:$0xff]
    %v4877 = vld [vmem:[#allocation5 + $0x1d0] sm:$0xff]
    %v4878 = vld [vmem:[#allocation5 + $0x1d8] sm:$0xff]
    %v4879 = vld [vmem:[#allocation5 + $0x1e0] sm:$0xff]
    %v4880 = vld [vmem:[#allocation5 + $0x1e8] sm:$0xff]
    %v4881 = vld [vmem:[#allocation5 + $0x1f0] sm:$0xff]
    %v4882 = vld [vmem:[#allocation5 + $0x1f8] sm:$0xff]
    %v4883 = vld [vmem:[#allocation5 + $0x200] sm:$0xff]
    %v4884 = vld [vmem:[#allocation5 + $0x208] sm:$0xff]
    %v4885 = vld [vmem:[#allocation5 + $0x210] sm:$0xff]
    %v4886 = vld [vmem:[#allocation5 + $0x218] sm:$0xff]
    %v4887 = vld [vmem:[#allocation5 + $0x220] sm:$0xff]
    %v4888 = vld [vmem:[#allocation5 + $0x228] sm:$0xff]
    %v4889 = vld [vmem:[#allocation5 + $0x230] sm:$0xff]
    %v4890 = vld [vmem:[#allocation5 + $0x238] sm:$0xff]
    %v4891 = vld [vmem:[#allocation5 + $0x240] sm:$0xff]
    %v4892 = vld [vmem:[#allocation5 + $0x248] sm:$0xff]
    %v4893 = vld [vmem:[#allocation5 + $0x250] sm:$0xff]
    %v4894 = vld [vmem:[#allocation5 + $0x258] sm:$0xff]
    %v4895 = vld [vmem:[#allocation5 + $0x260] sm:$0xff]
    %v4896 = vld [vmem:[#allocation5 + $0x268] sm:$0xff]
    %v4897 = vld [vmem:[#allocation5 + $0x270] sm:$0xff]
    %v4898 = vld [vmem:[#allocation5 + $0x278] sm:$0xff]
    %v4899 = vld [vmem:[#allocation5 + $0x280] sm:$0xff]
    %v4900 = vld [vmem:[#allocation5 + $0x288] sm:$0xff]
    %v4901 = vld [vmem:[#allocation5 + $0x290] sm:$0xff]
    %v4902 = vld [vmem:[#allocation5 + $0x298] sm:$0xff]
    %v4903 = vld [vmem:[#allocation5 + $0x2a0] sm:$0xff]
    %v4904 = vld [vmem:[#allocation5 + $0x2a8] sm:$0xff]
    %v4905 = vld [vmem:[#allocation5 + $0x2b0] sm:$0xff]
    %v4906 = vld [vmem:[#allocation5 + $0x2b8] sm:$0xff]
    %v4907 = vld [vmem:[#allocation5 + $0x2c0] sm:$0xff]
    %v4908 = vld [vmem:[#allocation5 + $0x2c8] sm:$0xff]
    %v4909 = vld [vmem:[#allocation5 + $0x2d0] sm:$0xff]
    %v4910 = vld [vmem:[#allocation5 + $0x2d8] sm:$0xff]
    %v4911 = vld [vmem:[#allocation5 + $0x2e0] sm:$0xff]
    %v4912 = vld [vmem:[#allocation5 + $0x2e8] sm:$0xff]
    %v4913 = vld [vmem:[#allocation5 + $0x2f0] sm:$0xff]
    %v4914 = vld [vmem:[#allocation5 + $0x2f8] sm:$0xff]
    %v4915 = vld [vmem:[#allocation5 + $0x300] sm:$0xff]
    %v4916 = vld [vmem:[#allocation5 + $0x308] sm:$0xff]
    %v4917 = vld [vmem:[#allocation5 + $0x310] sm:$0xff]
    %v4918 = vld [vmem:[#allocation5 + $0x318] sm:$0xff]
    %v4919 = vld [vmem:[#allocation5 + $0x320] sm:$0xff]
    %v4920 = vld [vmem:[#allocation5 + $0x328] sm:$0xff]
    %v4921 = vld [vmem:[#allocation5 + $0x330] sm:$0xff]
    %v4922 = vld [vmem:[#allocation5 + $0x338] sm:$0xff]
    %v4923 = vld [vmem:[#allocation5 + $0x340] sm:$0xff]
    %v4924 = vld [vmem:[#allocation5 + $0x348] sm:$0xff]
    %v4925 = vld [vmem:[#allocation5 + $0x350] sm:$0xff]
    %v4926 = vld [vmem:[#allocation5 + $0x358] sm:$0xff]
    %v4927 = vld [vmem:[#allocation5 + $0x360] sm:$0xff]
    %v4928 = vld [vmem:[#allocation5 + $0x368] sm:$0xff]
    %v4929 = vld [vmem:[#allocation5 + $0x370] sm:$0xff]
    %v4930 = vld [vmem:[#allocation5 + $0x378] sm:$0xff]
    %v4931 = vld [vmem:[#allocation5 + $0x380] sm:$0xff]
    %v4932 = vld [vmem:[#allocation5 + $0x388] sm:$0xff]
    %v4933 = vld [vmem:[#allocation5 + $0x390] sm:$0xff]
    %v4934 = vld [vmem:[#allocation5 + $0x398] sm:$0xff]
    %v4935 = vld [vmem:[#allocation5 + $0x3a0] sm:$0xff]
    %v4936 = vld [vmem:[#allocation5 + $0x3a8] sm:$0xff]
    %v4937 = vld [vmem:[#allocation5 + $0x3b0] sm:$0xff]
    %v4938 = vld [vmem:[#allocation5 + $0x3b8] sm:$0xff]
    %v4939 = vld [vmem:[#allocation5 + $0x3c0] sm:$0xff]
    %v4940 = vld [vmem:[#allocation5 + $0x3c8] sm:$0xff]
    %v4941 = vld [vmem:[#allocation5 + $0x3d0] sm:$0xff]
    %v4942 = vld [vmem:[#allocation5 + $0x3d8] sm:$0xff]
    %v4943 = vld [vmem:[#allocation5 + $0x3e0] sm:$0xff]
    %v4944 = vld [vmem:[#allocation5 + $0x3e8] sm:$0xff]
    %v4945 = vld [vmem:[#allocation5 + $0x3f0] sm:$0xff]
    %v4946 = vld [vmem:[#allocation5 + $0x3f8] sm:$0xff]
    %v4947 = vld [vmem:[%s4] sm:$0xf]
    %v4949 = vperm.slane %v4947, 0
    %v4950 = vperm.slane %v4947, 1
    %v4951 = vperm.slane %v4947, 2
    %v4952 = vperm.slane %v4947, 3
    %v5085 = vunpack.c.l.b16 %v4819
    %v5086 = vunpack.c.h.b16 %v4819
    %v5087 = vunpack.c.l.b16 %v4820
    %v5088 = vunpack.c.h.b16 %v4820
    %v5089 = vunpack.c.l.b16 %v4821
    %v5090 = vunpack.c.h.b16 %v4821
    %v5091 = vunpack.c.l.b16 %v4822
    %v5092 = vunpack.c.h.b16 %v4822
    %v5093 = vunpack.c.l.b16 %v4823
    %v5094 = vunpack.c.h.b16 %v4823
    %v5095 = vunpack.c.l.b16 %v4824
    %v5096 = vunpack.c.h.b16 %v4824
    %v5097 = vunpack.c.l.b16 %v4825
    %v5098 = vunpack.c.h.b16 %v4825
    %v5099 = vunpack.c.l.b16 %v4826
    %v5100 = vunpack.c.h.b16 %v4826
    %v5101 = vunpack.c.l.b16 %v4827
    %v5102 = vunpack.c.h.b16 %v4827
    %v5103 = vunpack.c.l.b16 %v4828
    %v5104 = vunpack.c.h.b16 %v4828
    %v5105 = vunpack.c.l.b16 %v4829
    %v5106 = vunpack.c.h.b16 %v4829
    %v5107 = vunpack.c.l.b16 %v4830
    %v5108 = vunpack.c.h.b16 %v4830
    %v5109 = vunpack.c.l.b16 %v4831
    %v5110 = vunpack.c.h.b16 %v4831
    %v5111 = vunpack.c.l.b16 %v4832
    %v5112 = vunpack.c.h.b16 %v4832
    %v5113 = vunpack.c.l.b16 %v4833
    %v5114 = vunpack.c.h.b16 %v4833
    %v5115 = vunpack.c.l.b16 %v4834
    %v5116 = vunpack.c.h.b16 %v4834
    %v5117 = vunpack.c.l.b16 %v4835
    %v5118 = vunpack.c.h.b16 %v4835
    %v5119 = vunpack.c.l.b16 %v4836
    %v5120 = vunpack.c.h.b16 %v4836
    %v5121 = vunpack.c.l.b16 %v4837
    %v5122 = vunpack.c.h.b16 %v4837
    %v5123 = vunpack.c.l.b16 %v4838
    %v5124 = vunpack.c.h.b16 %v4838
    %v5125 = vunpack.c.l.b16 %v4839
    %v5126 = vunpack.c.h.b16 %v4839
    %v5127 = vunpack.c.l.b16 %v4840
    %v5128 = vunpack.c.h.b16 %v4840
    %v5129 = vunpack.c.l.b16 %v4841
    %v5130 = vunpack.c.h.b16 %v4841
    %v5131 = vunpack.c.l.b16 %v4842
    %v5132 = vunpack.c.h.b16 %v4842
    %v5133 = vunpack.c.l.b16 %v4843
    %v5134 = vunpack.c.h.b16 %v4843
    %v5135 = vunpack.c.l.b16 %v4844
    %v5136 = vunpack.c.h.b16 %v4844
    %v5137 = vunpack.c.l.b16 %v4845
    %v5138 = vunpack.c.h.b16 %v4845
    %v5139 = vunpack.c.l.b16 %v4846
    %v5140 = vunpack.c.h.b16 %v4846
    %v5141 = vunpack.c.l.b16 %v4847
    %v5142 = vunpack.c.h.b16 %v4847
    %v5143 = vunpack.c.l.b16 %v4848
    %v5144 = vunpack.c.h.b16 %v4848
    %v5145 = vunpack.c.l.b16 %v4849
    %v5146 = vunpack.c.h.b16 %v4849
    %v5147 = vunpack.c.l.b16 %v4850
    %v5148 = vunpack.c.h.b16 %v4850
    %v5149 = vunpack.c.l.b16 %v4851
    %v5150 = vunpack.c.h.b16 %v4851
    %v5151 = vunpack.c.l.b16 %v4852
    %v5152 = vunpack.c.h.b16 %v4852
    %v5153 = vunpack.c.l.b16 %v4853
    %v5154 = vunpack.c.h.b16 %v4853
    %v5155 = vunpack.c.l.b16 %v4854
    %v5156 = vunpack.c.h.b16 %v4854
    %v5157 = vunpack.c.l.b16 %v4855
    %v5158 = vunpack.c.h.b16 %v4855
    %v5159 = vunpack.c.l.b16 %v4856
    %v5160 = vunpack.c.h.b16 %v4856
    %v5161 = vunpack.c.l.b16 %v4857
    %v5162 = vunpack.c.h.b16 %v4857
    %v5163 = vunpack.c.l.b16 %v4858
    %v5164 = vunpack.c.h.b16 %v4858
    %v5165 = vunpack.c.l.b16 %v4859
    %v5166 = vunpack.c.h.b16 %v4859
    %v5167 = vunpack.c.l.b16 %v4860
    %v5168 = vunpack.c.h.b16 %v4860
    %v5169 = vunpack.c.l.b16 %v4861
    %v5170 = vunpack.c.h.b16 %v4861
    %v5171 = vunpack.c.l.b16 %v4862
    %v5172 = vunpack.c.h.b16 %v4862
    %v5173 = vunpack.c.l.b16 %v4863
    %v5174 = vunpack.c.h.b16 %v4863
    %v5175 = vunpack.c.l.b16 %v4864
    %v5176 = vunpack.c.h.b16 %v4864
    %v5177 = vunpack.c.l.b16 %v4865
    %v5178 = vunpack.c.h.b16 %v4865
    %v5179 = vunpack.c.l.b16 %v4866
    %v5180 = vunpack.c.h.b16 %v4866
    %v5181 = vunpack.c.l.b16 %v4867
    %v5182 = vunpack.c.h.b16 %v4867
    %v5183 = vunpack.c.l.b16 %v4868
    %v5184 = vunpack.c.h.b16 %v4868
    %v5185 = vunpack.c.l.b16 %v4869
    %v5186 = vunpack.c.h.b16 %v4869
    %v5187 = vunpack.c.l.b16 %v4870
    %v5188 = vunpack.c.h.b16 %v4870
    %v5189 = vunpack.c.l.b16 %v4871
    %v5190 = vunpack.c.h.b16 %v4871
    %v5191 = vunpack.c.l.b16 %v4872
    %v5192 = vunpack.c.h.b16 %v4872
    %v5193 = vunpack.c.l.b16 %v4873
    %v5194 = vunpack.c.h.b16 %v4873
    %v5195 = vunpack.c.l.b16 %v4874
    %v5196 = vunpack.c.h.b16 %v4874
    %v5197 = vunpack.c.l.b16 %v4875
    %v5198 = vunpack.c.h.b16 %v4875
    %v5199 = vunpack.c.l.b16 %v4876
    %v5200 = vunpack.c.h.b16 %v4876
    %v5201 = vunpack.c.l.b16 %v4877
    %v5202 = vunpack.c.h.b16 %v4877
    %v5203 = vunpack.c.l.b16 %v4878
    %v5204 = vunpack.c.h.b16 %v4878
    %v5205 = vunpack.c.l.b16 %v4879
    %v5206 = vunpack.c.h.b16 %v4879
    %v5207 = vunpack.c.l.b16 %v4880
    %v5208 = vunpack.c.h.b16 %v4880
    %v5209 = vunpack.c.l.b16 %v4881
    %v5210 = vunpack.c.h.b16 %v4881
    %v5211 = vunpack.c.l.b16 %v4882
    %v5212 = vunpack.c.h.b16 %v4882
    %v5213 = vunpack.c.l.b16 %v4883
    %v5214 = vunpack.c.h.b16 %v4883
    %v5215 = vunpack.c.l.b16 %v4884
    %v5216 = vunpack.c.h.b16 %v4884
    %v5217 = vunpack.c.l.b16 %v4885
    %v5218 = vunpack.c.h.b16 %v4885
    %v5219 = vunpack.c.l.b16 %v4886
    %v5220 = vunpack.c.h.b16 %v4886
    %v5221 = vunpack.c.l.b16 %v4887
    %v5222 = vunpack.c.h.b16 %v4887
    %v5223 = vunpack.c.l.b16 %v4888
    %v5224 = vunpack.c.h.b16 %v4888
    %v5225 = vunpack.c.l.b16 %v4889
    %v5226 = vunpack.c.h.b16 %v4889
    %v5227 = vunpack.c.l.b16 %v4890
    %v5228 = vunpack.c.h.b16 %v4890
    %v5229 = vunpack.c.l.b16 %v4891
    %v5230 = vunpack.c.h.b16 %v4891
    %v5231 = vunpack.c.l.b16 %v4892
    %v5232 = vunpack.c.h.b16 %v4892
    %v5233 = vunpack.c.l.b16 %v4893
    %v5234 = vunpack.c.h.b16 %v4893
    %v5235 = vunpack.c.l.b16 %v4894
    %v5236 = vunpack.c.h.b16 %v4894
    %v5237 = vunpack.c.l.b16 %v4895
    %v5238 = vunpack.c.h.b16 %v4895
    %v5239 = vunpack.c.l.b16 %v4896
    %v5240 = vunpack.c.h.b16 %v4896
    %v5241 = vunpack.c.l.b16 %v4897
    %v5242 = vunpack.c.h.b16 %v4897
    %v5243 = vunpack.c.l.b16 %v4898
    %v5244 = vunpack.c.h.b16 %v4898
    %v5245 = vunpack.c.l.b16 %v4899
    %v5246 = vunpack.c.h.b16 %v4899
    %v5247 = vunpack.c.l.b16 %v4900
    %v5248 = vunpack.c.h.b16 %v4900
    %v5249 = vunpack.c.l.b16 %v4901
    %v5250 = vunpack.c.h.b16 %v4901
    %v5251 = vunpack.c.l.b16 %v4902
    %v5252 = vunpack.c.h.b16 %v4902
    %v5253 = vunpack.c.l.b16 %v4903
    %v5254 = vunpack.c.h.b16 %v4903
    %v5255 = vunpack.c.l.b16 %v4904
    %v5256 = vunpack.c.h.b16 %v4904
    %v5257 = vunpack.c.l.b16 %v4905
    %v5258 = vunpack.c.h.b16 %v4905
    %v5259 = vunpack.c.l.b16 %v4906
    %v5260 = vunpack.c.h.b16 %v4906
    %v5261 = vunpack.c.l.b16 %v4907
    %v5262 = vunpack.c.h.b16 %v4907
    %v5263 = vunpack.c.l.b16 %v4908
    %v5264 = vunpack.c.h.b16 %v4908
    %v5265 = vunpack.c.l.b16 %v4909
    %v5266 = vunpack.c.h.b16 %v4909
    %v5267 = vunpack.c.l.b16 %v4910
    %v5268 = vunpack.c.h.b16 %v4910
    %v5269 = vunpack.c.l.b16 %v4911
    %v5270 = vunpack.c.h.b16 %v4911
    %v5271 = vunpack.c.l.b16 %v4912
    %v5272 = vunpack.c.h.b16 %v4912
    %v5273 = vunpack.c.l.b16 %v4913
    %v5274 = vunpack.c.h.b16 %v4913
    %v5275 = vunpack.c.l.b16 %v4914
    %v5276 = vunpack.c.h.b16 %v4914
    %v5277 = vunpack.c.l.b16 %v4915
    %v5278 = vunpack.c.h.b16 %v4915
    %v5279 = vunpack.c.l.b16 %v4916
    %v5280 = vunpack.c.h.b16 %v4916
    %v5281 = vunpack.c.l.b16 %v4917
    %v5282 = vunpack.c.h.b16 %v4917
    %v5283 = vunpack.c.l.b16 %v4918
    %v5284 = vunpack.c.h.b16 %v4918
    %v5285 = vunpack.c.l.b16 %v4919
    %v5286 = vunpack.c.h.b16 %v4919
    %v5287 = vunpack.c.l.b16 %v4920
    %v5288 = vunpack.c.h.b16 %v4920
    %v5289 = vunpack.c.l.b16 %v4921
    %v5290 = vunpack.c.h.b16 %v4921
    %v5291 = vunpack.c.l.b16 %v4922
    %v5292 = vunpack.c.h.b16 %v4922
    %v5293 = vunpack.c.l.b16 %v4923
    %v5294 = vunpack.c.h.b16 %v4923
    %v5295 = vunpack.c.l.b16 %v4924
    %v5296 = vunpack.c.h.b16 %v4924
    %v5297 = vunpack.c.l.b16 %v4925
    %v5298 = vunpack.c.h.b16 %v4925
    %v5299 = vunpack.c.l.b16 %v4926
    %v5300 = vunpack.c.h.b16 %v4926
    %v5301 = vunpack.c.l.b16 %v4927
    %v5302 = vunpack.c.h.b16 %v4927
    %v5303 = vunpack.c.l.b16 %v4928
    %v5304 = vunpack.c.h.b16 %v4928
    %v5305 = vunpack.c.l.b16 %v4929
    %v5306 = vunpack.c.h.b16 %v4929
    %v5307 = vunpack.c.l.b16 %v4930
    %v5308 = vunpack.c.h.b16 %v4930
    %v5309 = vunpack.c.l.b16 %v4931
    %v5310 = vunpack.c.h.b16 %v4931
    %v5311 = vunpack.c.l.b16 %v4932
    %v5312 = vunpack.c.h.b16 %v4932
    %v5313 = vunpack.c.l.b16 %v4933
    %v5314 = vunpack.c.h.b16 %v4933
    %v5315 = vunpack.c.l.b16 %v4934
    %v5316 = vunpack.c.h.b16 %v4934
    %v5317 = vunpack.c.l.b16 %v4935
    %v5318 = vunpack.c.h.b16 %v4935
    %v5319 = vunpack.c.l.b16 %v4936
    %v5320 = vunpack.c.h.b16 %v4936
    %v5321 = vunpack.c.l.b16 %v4937
    %v5322 = vunpack.c.h.b16 %v4937
    %v5323 = vunpack.c.l.b16 %v4938
    %v5324 = vunpack.c.h.b16 %v4938
    %v5325 = vunpack.c.l.b16 %v4939
    %v5326 = vunpack.c.h.b16 %v4939
    %v5327 = vunpack.c.l.b16 %v4940
    %v5328 = vunpack.c.h.b16 %v4940
    %v5329 = vunpack.c.l.b16 %v4941
    %v5330 = vunpack.c.h.b16 %v4941
    %v5331 = vunpack.c.l.b16 %v4942
    %v5332 = vunpack.c.h.b16 %v4942
    %v5333 = vunpack.c.l.b16 %v4943
    %v5334 = vunpack.c.h.b16 %v4943
    %v5335 = vunpack.c.l.b16 %v4944
    %v5336 = vunpack.c.h.b16 %v4944
    %v5337 = vunpack.c.l.b16 %v4945
    %v5338 = vunpack.c.h.b16 %v4945
    %v5339 = vunpack.c.l.b16 %v4946
    %v5340 = vunpack.c.h.b16 %v4946
    %v5341 = vpack.c.b16 %v5089, %v5085
    %v5342 = vpack.c.b16 %v5090, %v5086
    %v5343 = vpack.c.b16 %v5091, %v5087
    %v5344 = vpack.c.b16 %v5092, %v5088
    %v5345 = vpack.c.b16 %v5097, %v5093
    %v5346 = vpack.c.b16 %v5098, %v5094
    %v5347 = vpack.c.b16 %v5099, %v5095
    %v5348 = vpack.c.b16 %v5100, %v5096
    %v5349 = vpack.c.b16 %v5105, %v5101
    %v5350 = vpack.c.b16 %v5106, %v5102
    %v5351 = vpack.c.b16 %v5107, %v5103
    %v5352 = vpack.c.b16 %v5108, %v5104
    %v5353 = vpack.c.b16 %v5113, %v5109
    %v5354 = vpack.c.b16 %v5114, %v5110
    %v5355 = vpack.c.b16 %v5115, %v5111
    %v5356 = vpack.c.b16 %v5116, %v5112
    %v5357 = vpack.c.b16 %v5121, %v5117
    %v5358 = vpack.c.b16 %v5122, %v5118
    %v5359 = vpack.c.b16 %v5123, %v5119
    %v5360 = vpack.c.b16 %v5124, %v5120
    %v5361 = vpack.c.b16 %v5129, %v5125
    %v5362 = vpack.c.b16 %v5130, %v5126
    %v5363 = vpack.c.b16 %v5131, %v5127
    %v5364 = vpack.c.b16 %v5132, %v5128
    %v5365 = vpack.c.b16 %v5137, %v5133
    %v5366 = vpack.c.b16 %v5138, %v5134
    %v5367 = vpack.c.b16 %v5139, %v5135
    %v5368 = vpack.c.b16 %v5140, %v5136
    %v5369 = vpack.c.b16 %v5145, %v5141
    %v5370 = vpack.c.b16 %v5146, %v5142
    %v5371 = vpack.c.b16 %v5147, %v5143
    %v5372 = vpack.c.b16 %v5148, %v5144
    %v5373 = vpack.c.b16 %v5153, %v5149
    %v5374 = vpack.c.b16 %v5154, %v5150
    %v5375 = vpack.c.b16 %v5155, %v5151
    %v5376 = vpack.c.b16 %v5156, %v5152
    %v5377 = vpack.c.b16 %v5161, %v5157
    %v5378 = vpack.c.b16 %v5162, %v5158
    %v5379 = vpack.c.b16 %v5163, %v5159
    %v5380 = vpack.c.b16 %v5164, %v5160
    %v5381 = vpack.c.b16 %v5169, %v5165
    %v5382 = vpack.c.b16 %v5170, %v5166
    %v5383 = vpack.c.b16 %v5171, %v5167
    %v5384 = vpack.c.b16 %v5172, %v5168
    %v5385 = vpack.c.b16 %v5177, %v5173
    %v5386 = vpack.c.b16 %v5178, %v5174
    %v5387 = vpack.c.b16 %v5179, %v5175
    %v5388 = vpack.c.b16 %v5180, %v5176
    %v5389 = vpack.c.b16 %v5185, %v5181
    %v5390 = vpack.c.b16 %v5186, %v5182
    %v5391 = vpack.c.b16 %v5187, %v5183
    %v5392 = vpack.c.b16 %v5188, %v5184
    %v5393 = vpack.c.b16 %v5193, %v5189
    %v5394 = vpack.c.b16 %v5194, %v5190
    %v5395 = vpack.c.b16 %v5195, %v5191
    %v5396 = vpack.c.b16 %v5196, %v5192
    %v5397 = vpack.c.b16 %v5201, %v5197
    %v5398 = vpack.c.b16 %v5202, %v5198
    %v5399 = vpack.c.b16 %v5203, %v5199
    %v5400 = vpack.c.b16 %v5204, %v5200
    %v5401 = vpack.c.b16 %v5209, %v5205
    %v5402 = vpack.c.b16 %v5210, %v5206
    %v5403 = vpack.c.b16 %v5211, %v5207
    %v5404 = vpack.c.b16 %v5212, %v5208
    %v5405 = vpack.c.b16 %v5217, %v5213
    %v5406 = vpack.c.b16 %v5218, %v5214
    %v5407 = vpack.c.b16 %v5219, %v5215
    %v5408 = vpack.c.b16 %v5220, %v5216
    %v5409 = vpack.c.b16 %v5225, %v5221
    %v5410 = vpack.c.b16 %v5226, %v5222
    %v5411 = vpack.c.b16 %v5227, %v5223
    %v5412 = vpack.c.b16 %v5228, %v5224
    %v5413 = vpack.c.b16 %v5233, %v5229
    %v5414 = vpack.c.b16 %v5234, %v5230
    %v5415 = vpack.c.b16 %v5235, %v5231
    %v5416 = vpack.c.b16 %v5236, %v5232
    %v5417 = vpack.c.b16 %v5241, %v5237
    %v5418 = vpack.c.b16 %v5242, %v5238
    %v5419 = vpack.c.b16 %v5243, %v5239
    %v5420 = vpack.c.b16 %v5244, %v5240
    %v5421 = vpack.c.b16 %v5249, %v5245
    %v5422 = vpack.c.b16 %v5250, %v5246
    %v5423 = vpack.c.b16 %v5251, %v5247
    %v5424 = vpack.c.b16 %v5252, %v5248
    %v5425 = vpack.c.b16 %v5257, %v5253
    %v5426 = vpack.c.b16 %v5258, %v5254
    %v5427 = vpack.c.b16 %v5259, %v5255
    %v5428 = vpack.c.b16 %v5260, %v5256
    %v5429 = vpack.c.b16 %v5265, %v5261
    %v5430 = vpack.c.b16 %v5266, %v5262
    %v5431 = vpack.c.b16 %v5267, %v5263
    %v5432 = vpack.c.b16 %v5268, %v5264
    %v5433 = vpack.c.b16 %v5273, %v5269
    %v5434 = vpack.c.b16 %v5274, %v5270
    %v5435 = vpack.c.b16 %v5275, %v5271
    %v5436 = vpack.c.b16 %v5276, %v5272
    %v5437 = vpack.c.b16 %v5281, %v5277
    %v5438 = vpack.c.b16 %v5282, %v5278
    %v5439 = vpack.c.b16 %v5283, %v5279
    %v5440 = vpack.c.b16 %v5284, %v5280
    %v5441 = vpack.c.b16 %v5289, %v5285
    %v5442 = vpack.c.b16 %v5290, %v5286
    %v5443 = vpack.c.b16 %v5291, %v5287
    %v5444 = vpack.c.b16 %v5292, %v5288
    %v5445 = vpack.c.b16 %v5297, %v5293
    %v5446 = vpack.c.b16 %v5298, %v5294
    %v5447 = vpack.c.b16 %v5299, %v5295
    %v5448 = vpack.c.b16 %v5300, %v5296
    %v5449 = vpack.c.b16 %v5305, %v5301
    %v5450 = vpack.c.b16 %v5306, %v5302
    %v5451 = vpack.c.b16 %v5307, %v5303
    %v5452 = vpack.c.b16 %v5308, %v5304
    %v5453 = vpack.c.b16 %v5313, %v5309
    %v5454 = vpack.c.b16 %v5314, %v5310
    %v5455 = vpack.c.b16 %v5315, %v5311
    %v5456 = vpack.c.b16 %v5316, %v5312
    %v5457 = vpack.c.b16 %v5321, %v5317
    %v5458 = vpack.c.b16 %v5322, %v5318
    %v5459 = vpack.c.b16 %v5323, %v5319
    %v5460 = vpack.c.b16 %v5324, %v5320
    %v5461 = vpack.c.b16 %v5329, %v5325
    %v5462 = vpack.c.b16 %v5330, %v5326
    %v5463 = vpack.c.b16 %v5331, %v5327
    %v5464 = vpack.c.b16 %v5332, %v5328
    %v5465 = vpack.c.b16 %v5337, %v5333
    %v5466 = vpack.c.b16 %v5338, %v5334
    %v5467 = vpack.c.b16 %v5339, %v5335
    %v5468 = vpack.c.b16 %v5340, %v5336
    %5597 = vmatpush.bf16.msra.mxu0 %v5369
    %5598 = vmatpush.bf16.msra.mxu0 %v5365
    %5599 = vmatpush.bf16.msra.mxu0 %v5361
    %5600 = vmatpush.bf16.msra.mxu0 %v5357
    %5601 = vmatpush.bf16.msra.mxu0 %v5353
    %5602 = vmatpush.bf16.msra.mxu0 %v5349
    %5603 = vmatpush.bf16.msra.mxu0 %v5345
    %5604 = vmatpush.bf16.msra.mxu0 %v5341
    %5605 = vmatmul.bf16.gmra.mxu0 %v4755
    %v5606 = vpop.f32.mrf.mxu0
    %v5607 = vadd.f32 %v4949, %v5606
    %v5608 = vpop.f32.mrf.mxu0
    %v5609 = vadd.f32 %v4949, %v5608
    %5610 = vmatmul.bf16.gmra.mxu0 %v4759
    %v5611 = vpop.f32.mrf.mxu0
    %v5612 = vadd.f32 %v4949, %v5611
    %v5613 = vpop.f32.mrf.mxu0
    %v5614 = vadd.f32 %v4949, %v5613
    %5615 = vmatmul.bf16.gmra.mxu0 %v4763
    %v5616 = vpop.f32.mrf.mxu0
    %v5617 = vadd.f32 %v4949, %v5616
    %v5618 = vpop.f32.mrf.mxu0
    %v5619 = vadd.f32 %v4949, %v5618
    %5620 = vmatmul.bf16.gmra.mxu0 %v4767
    %v5621 = vpop.f32.mrf.mxu0
    %v5622 = vadd.f32 %v4949, %v5621
    %v5623 = vpop.f32.mrf.mxu0
    %v5624 = vadd.f32 %v4949, %v5623
    %5625 = vmatmul.bf16.gmra.mxu0 %v4771
    %v5626 = vpop.f32.mrf.mxu0
    %v5627 = vadd.f32 %v4949, %v5626
    %v5628 = vpop.f32.mrf.mxu0
    %v5629 = vadd.f32 %v4949, %v5628
    %5630 = vmatmul.bf16.gmra.mxu0 %v4775
    %v5631 = vpop.f32.mrf.mxu0
    %v5632 = vadd.f32 %v4949, %v5631
    %v5633 = vpop.f32.mrf.mxu0
    %v5634 = vadd.f32 %v4949, %v5633
    %5635 = vmatmul.bf16.gmra.mxu0 %v4779
    %v5636 = vpop.f32.mrf.mxu0
    %v5637 = vadd.f32 %v4949, %v5636
    %v5638 = vpop.f32.mrf.mxu0
    %v5639 = vadd.f32 %v4949, %v5638
    %5640 = vmatmul.bf16.gmra.mxu0 %v4783
    %v5641 = vpop.f32.mrf.mxu0
    %v5642 = vadd.f32 %v4949, %v5641
    %v5643 = vpop.f32.mrf.mxu0
    %v5644 = vadd.f32 %v4949, %v5643
    %5645 = vmatmul.bf16.gmra.mxu0 %v4787
    %v5646 = vpop.f32.mrf.mxu0
    %v5647 = vadd.f32 %v4949, %v5646
    %v5648 = vpop.f32.mrf.mxu0
    %v5649 = vadd.f32 %v4949, %v5648
    %5650 = vmatmul.bf16.gmra.mxu0 %v4791
    %v5651 = vpop.f32.mrf.mxu0
    %v5652 = vadd.f32 %v4949, %v5651
    %v5653 = vpop.f32.mrf.mxu0
    %v5654 = vadd.f32 %v4949, %v5653
    %5655 = vmatmul.bf16.gmra.mxu0 %v4795
    %v5656 = vpop.f32.mrf.mxu0
    %v5657 = vadd.f32 %v4949, %v5656
    %v5658 = vpop.f32.mrf.mxu0
    %v5659 = vadd.f32 %v4949, %v5658
    %5660 = vmatmul.bf16.gmra.mxu0 %v4799
    %v5661 = vpop.f32.mrf.mxu0
    %v5662 = vadd.f32 %v4949, %v5661
    %v5663 = vpop.f32.mrf.mxu0
    %v5664 = vadd.f32 %v4949, %v5663
    %5665 = vmatmul.bf16.gmra.mxu0 %v4803
    %v5666 = vpop.f32.mrf.mxu0
    %v5667 = vadd.f32 %v4949, %v5666
    %v5668 = vpop.f32.mrf.mxu0
    %v5669 = vadd.f32 %v4949, %v5668
    %5670 = vmatmul.bf16.gmra.mxu0 %v4807
    %v5671 = vpop.f32.mrf.mxu0
    %v5672 = vadd.f32 %v4949, %v5671
    %v5673 = vpop.f32.mrf.mxu0
    %v5674 = vadd.f32 %v4949, %v5673
    %5675 = vmatmul.bf16.gmra.mxu0 %v4811
    %v5676 = vpop.f32.mrf.mxu0
    %v5677 = vadd.f32 %v4949, %v5676
    %v5678 = vpop.f32.mrf.mxu0
    %v5679 = vadd.f32 %v4949, %v5678
    %5680 = vmatmul.bf16.gmra.mxu0 %v4815
    %v5681 = vpop.f32.mrf.mxu0
    %v5682 = vadd.f32 %v4949, %v5681
    %v5683 = vpop.f32.mrf.mxu0
    %v5684 = vadd.f32 %v4949, %v5683
    %5685 = vdwg.mxu0
    %5686 = vmatpush.bf16.msra.mxu0 %v5401
    %5687 = vmatpush.bf16.msra.mxu0 %v5397
    %5688 = vmatpush.bf16.msra.mxu0 %v5393
    %5689 = vmatpush.bf16.msra.mxu0 %v5389
    %5690 = vmatpush.bf16.msra.mxu0 %v5385
    %5691 = vmatpush.bf16.msra.mxu0 %v5381
    %5692 = vmatpush.bf16.msra.mxu0 %v5377
    %5693 = vmatpush.bf16.msra.mxu0 %v5373
    %5694 = vmatmul.bf16.gmra.mxu0 %v4756
    %v5695 = vpop.f32.mrf.mxu0
    %v5696 = vadd.f32 %v5607, %v5695
    %v5697 = vpop.f32.mrf.mxu0
    %v5698 = vadd.f32 %v5609, %v5697
    %5699 = vmatmul.bf16.gmra.mxu0 %v4760
    %v5700 = vpop.f32.mrf.mxu0
    %v5701 = vadd.f32 %v5612, %v5700
    %v5702 = vpop.f32.mrf.mxu0
    %v5703 = vadd.f32 %v5614, %v5702
    %5704 = vmatmul.bf16.gmra.mxu0 %v4764
    %v5705 = vpop.f32.mrf.mxu0
    %v5706 = vadd.f32 %v5617, %v5705
    %v5707 = vpop.f32.mrf.mxu0
    %v5708 = vadd.f32 %v5619, %v5707
    %5709 = vmatmul.bf16.gmra.mxu0 %v4768
    %v5710 = vpop.f32.mrf.mxu0
    %v5711 = vadd.f32 %v5622, %v5710
    %v5712 = vpop.f32.mrf.mxu0
    %v5713 = vadd.f32 %v5624, %v5712
    %5714 = vmatmul.bf16.gmra.mxu0 %v4772
    %v5715 = vpop.f32.mrf.mxu0
    %v5716 = vadd.f32 %v5627, %v5715
    %v5717 = vpop.f32.mrf.mxu0
    %v5718 = vadd.f32 %v5629, %v5717
    %5719 = vmatmul.bf16.gmra.mxu0 %v4776
    %v5720 = vpop.f32.mrf.mxu0
    %v5721 = vadd.f32 %v5632, %v5720
    %v5722 = vpop.f32.mrf.mxu0
    %v5723 = vadd.f32 %v5634, %v5722
    %5724 = vmatmul.bf16.gmra.mxu0 %v4780
    %v5725 = vpop.f32.mrf.mxu0
    %v5726 = vadd.f32 %v5637, %v5725
    %v5727 = vpop.f32.mrf.mxu0
    %v5728 = vadd.f32 %v5639, %v5727
    %5729 = vmatmul.bf16.gmra.mxu0 %v4784
    %v5730 = vpop.f32.mrf.mxu0
    %v5731 = vadd.f32 %v5642, %v5730
    %v5732 = vpop.f32.mrf.mxu0
    %v5733 = vadd.f32 %v5644, %v5732
    %5734 = vmatmul.bf16.gmra.mxu0 %v4788
    %v5735 = vpop.f32.mrf.mxu0
    %v5736 = vadd.f32 %v5647, %v5735
    %v5737 = vpop.f32.mrf.mxu0
    %v5738 = vadd.f32 %v5649, %v5737
    %5739 = vmatmul.bf16.gmra.mxu0 %v4792
    %v5740 = vpop.f32.mrf.mxu0
    %v5741 = vadd.f32 %v5652, %v5740
    %v5742 = vpop.f32.mrf.mxu0
    %v5743 = vadd.f32 %v5654, %v5742
    %5744 = vmatmul.bf16.gmra.mxu0 %v4796
    %v5745 = vpop.f32.mrf.mxu0
    %v5746 = vadd.f32 %v5657, %v5745
    %v5747 = vpop.f32.mrf.mxu0
    %v5748 = vadd.f32 %v5659, %v5747
    %5749 = vmatmul.bf16.gmra.mxu0 %v4800
    %v5750 = vpop.f32.mrf.mxu0
    %v5751 = vadd.f32 %v5662, %v5750
    %v5752 = vpop.f32.mrf.mxu0
    %v5753 = vadd.f32 %v5664, %v5752
    %5754 = vmatmul.bf16.gmra.mxu0 %v4804
    %v5755 = vpop.f32.mrf.mxu0
    %v5756 = vadd.f32 %v5667, %v5755
    %v5757 = vpop.f32.mrf.mxu0
    %v5758 = vadd.f32 %v5669, %v5757
    %5759 = vmatmul.bf16.gmra.mxu0 %v4808
    %v5760 = vpop.f32.mrf.mxu0
    %v5761 = vadd.f32 %v5672, %v5760
    %v5762 = vpop.f32.mrf.mxu0
    %v5763 = vadd.f32 %v5674, %v5762
    %5764 = vmatmul.bf16.gmra.mxu0 %v4812
    %v5765 = vpop.f32.mrf.mxu0
    %v5766 = vadd.f32 %v5677, %v5765
    %v5767 = vpop.f32.mrf.mxu0
    %v5768 = vadd.f32 %v5679, %v5767
    %5769 = vmatmul.bf16.gmra.mxu0 %v4816
    %v5770 = vpop.f32.mrf.mxu0
    %v5771 = vadd.f32 %v5682, %v5770
    %v5772 = vpop.f32.mrf.mxu0
    %v5773 = vadd.f32 %v5684, %v5772
    %5774 = vdwg.mxu0
    %5775 = vmatpush.bf16.msra.mxu0 %v5433
    %5776 = vmatpush.bf16.msra.mxu0 %v5429
    %5777 = vmatpush.bf16.msra.mxu0 %v5425
    %5778 = vmatpush.bf16.msra.mxu0 %v5421
    %5779 = vmatpush.bf16.msra.mxu0 %v5417
    %5780 = vmatpush.bf16.msra.mxu0 %v5413
    %5781 = vmatpush.bf16.msra.mxu0 %v5409
    %5782 = vmatpush.bf16.msra.mxu0 %v5405
    %5783 = vmatmul.bf16.gmra.mxu0 %v4757
    %v5784 = vpop.f32.mrf.mxu0
    %v5785 = vadd.f32 %v5696, %v5784
    %v5786 = vpop.f32.mrf.mxu0
    %v5787 = vadd.f32 %v5698, %v5786
    %5788 = vmatmul.bf16.gmra.mxu0 %v4761
    %v5789 = vpop.f32.mrf.mxu0
    %v5790 = vadd.f32 %v5701, %v5789
    %v5791 = vpop.f32.mrf.mxu0
    %v5792 = vadd.f32 %v5703, %v5791
    %5793 = vmatmul.bf16.gmra.mxu0 %v4765
    %v5794 = vpop.f32.mrf.mxu0
    %v5795 = vadd.f32 %v5706, %v5794
    %v5796 = vpop.f32.mrf.mxu0
    %v5797 = vadd.f32 %v5708, %v5796
    %5798 = vmatmul.bf16.gmra.mxu0 %v4769
    %v5799 = vpop.f32.mrf.mxu0
    %v5800 = vadd.f32 %v5711, %v5799
    %v5801 = vpop.f32.mrf.mxu0
    %v5802 = vadd.f32 %v5713, %v5801
    %5803 = vmatmul.bf16.gmra.mxu0 %v4773
    %v5804 = vpop.f32.mrf.mxu0
    %v5805 = vadd.f32 %v5716, %v5804
    %v5806 = vpop.f32.mrf.mxu0
    %v5807 = vadd.f32 %v5718, %v5806
    %5808 = vmatmul.bf16.gmra.mxu0 %v4777
    %v5809 = vpop.f32.mrf.mxu0
    %v5810 = vadd.f32 %v5721, %v5809
    %v5811 = vpop.f32.mrf.mxu0
    %v5812 = vadd.f32 %v5723, %v5811
    %5813 = vmatmul.bf16.gmra.mxu0 %v4781
    %v5814 = vpop.f32.mrf.mxu0
    %v5815 = vadd.f32 %v5726, %v5814
    %v5816 = vpop.f32.mrf.mxu0
    %v5817 = vadd.f32 %v5728, %v5816
    %5818 = vmatmul.bf16.gmra.mxu0 %v4785
    %v5819 = vpop.f32.mrf.mxu0
    %v5820 = vadd.f32 %v5731, %v5819
    %v5821 = vpop.f32.mrf.mxu0
    %v5822 = vadd.f32 %v5733, %v5821
    %5823 = vmatmul.bf16.gmra.mxu0 %v4789
    %v5824 = vpop.f32.mrf.mxu0
    %v5825 = vadd.f32 %v5736, %v5824
    %v5826 = vpop.f32.mrf.mxu0
    %v5827 = vadd.f32 %v5738, %v5826
    %5828 = vmatmul.bf16.gmra.mxu0 %v4793
    %v5829 = vpop.f32.mrf.mxu0
    %v5830 = vadd.f32 %v5741, %v5829
    %v5831 = vpop.f32.mrf.mxu0
    %v5832 = vadd.f32 %v5743, %v5831
    %5833 = vmatmul.bf16.gmra.mxu0 %v4797
    %v5834 = vpop.f32.mrf.mxu0
    %v5835 = vadd.f32 %v5746, %v5834
    %v5836 = vpop.f32.mrf.mxu0
    %v5837 = vadd.f32 %v5748, %v5836
    %5838 = vmatmul.bf16.gmra.mxu0 %v4801
    %v5839 = vpop.f32.mrf.mxu0
    %v5840 = vadd.f32 %v5751, %v5839
    %v5841 = vpop.f32.mrf.mxu0
    %v5842 = vadd.f32 %v5753, %v5841
    %5843 = vmatmul.bf16.gmra.mxu0 %v4805
    %v5844 = vpop.f32.mrf.mxu0
    %v5845 = vadd.f32 %v5756, %v5844
    %v5846 = vpop.f32.mrf.mxu0
    %v5847 = vadd.f32 %v5758, %v5846
    %5848 = vmatmul.bf16.gmra.mxu0 %v4809
    %v5849 = vpop.f32.mrf.mxu0
    %v5850 = vadd.f32 %v5761, %v5849
    %v5851 = vpop.f32.mrf.mxu0
    %v5852 = vadd.f32 %v5763, %v5851
    %5853 = vmatmul.bf16.gmra.mxu0 %v4813
    %v5854 = vpop.f32.mrf.mxu0
    %v5855 = vadd.f32 %v5766, %v5854
    %v5856 = vpop.f32.mrf.mxu0
    %v5857 = vadd.f32 %v5768, %v5856
    %5858 = vmatmul.bf16.gmra.mxu0 %v4817
    %v5859 = vpop.f32.mrf.mxu0
    %v5860 = vadd.f32 %v5771, %v5859
    %v5861 = vpop.f32.mrf.mxu0
    %v5862 = vadd.f32 %v5773, %v5861
    %5863 = vdwg.mxu0
    %5864 = vmatpush.bf16.msra.mxu0 %v5465
    %5865 = vmatpush.bf16.msra.mxu0 %v5461
    %5866 = vmatpush.bf16.msra.mxu0 %v5457
    %5867 = vmatpush.bf16.msra.mxu0 %v5453
    %5868 = vmatpush.bf16.msra.mxu0 %v5449
    %5869 = vmatpush.bf16.msra.mxu0 %v5445
    %5870 = vmatpush.bf16.msra.mxu0 %v5441
    %5871 = vmatpush.bf16.msra.mxu0 %v5437
    %5872 = vmatmul.bf16.gmra.mxu0 %v4758
    %v5873 = vpop.f32.mrf.mxu0
    %v5874 = vadd.f32 %v5785, %v5873
    %v5875 = vpop.f32.mrf.mxu0
    %v5876 = vadd.f32 %v5787, %v5875
    %5877 = vmatmul.bf16.gmra.mxu0 %v4762
    %v5878 = vpop.f32.mrf.mxu0
    %v5879 = vadd.f32 %v5790, %v5878
    %v5880 = vpop.f32.mrf.mxu0
    %v5881 = vadd.f32 %v5792, %v5880
    %5882 = vmatmul.bf16.gmra.mxu0 %v4766
    %v5883 = vpop.f32.mrf.mxu0
    %v5884 = vadd.f32 %v5795, %v5883
    %v5885 = vpop.f32.mrf.mxu0
    %v5886 = vadd.f32 %v5797, %v5885
    %5887 = vmatmul.bf16.gmra.mxu0 %v4770
    %v5888 = vpop.f32.mrf.mxu0
    %v5889 = vadd.f32 %v5800, %v5888
    %v5890 = vpop.f32.mrf.mxu0
    %v5891 = vadd.f32 %v5802, %v5890
    %5892 = vmatmul.bf16.gmra.mxu0 %v4774
    %v5893 = vpop.f32.mrf.mxu0
    %v5894 = vadd.f32 %v5805, %v5893
    %v5895 = vpop.f32.mrf.mxu0
    %v5896 = vadd.f32 %v5807, %v5895
    %5897 = vmatmul.bf16.gmra.mxu0 %v4778
    %v5898 = vpop.f32.mrf.mxu0
    %v5899 = vadd.f32 %v5810, %v5898
    %v5900 = vpop.f32.mrf.mxu0
    %v5901 = vadd.f32 %v5812, %v5900
    %5902 = vmatmul.bf16.gmra.mxu0 %v4782
    %v5903 = vpop.f32.mrf.mxu0
    %v5904 = vadd.f32 %v5815, %v5903
    %v5905 = vpop.f32.mrf.mxu0
    %v5906 = vadd.f32 %v5817, %v5905
    %5907 = vmatmul.bf16.gmra.mxu0 %v4786
    %v5908 = vpop.f32.mrf.mxu0
    %v5909 = vadd.f32 %v5820, %v5908
    %v5910 = vpop.f32.mrf.mxu0
    %v5911 = vadd.f32 %v5822, %v5910
    %5912 = vmatmul.bf16.gmra.mxu0 %v4790
    %v5913 = vpop.f32.mrf.mxu0
    %v5914 = vadd.f32 %v5825, %v5913
    %v5915 = vpop.f32.mrf.mxu0
    %v5916 = vadd.f32 %v5827, %v5915
    %5917 = vmatmul.bf16.gmra.mxu0 %v4794
    %v5918 = vpop.f32.mrf.mxu0
    %v5919 = vadd.f32 %v5830, %v5918
    %v5920 = vpop.f32.mrf.mxu0
    %v5921 = vadd.f32 %v5832, %v5920
    %5922 = vmatmul.bf16.gmra.mxu0 %v4798
    %v5923 = vpop.f32.mrf.mxu0
    %v5924 = vadd.f32 %v5835, %v5923
    %v5925 = vpop.f32.mrf.mxu0
    %v5926 = vadd.f32 %v5837, %v5925
    %5927 = vmatmul.bf16.gmra.mxu0 %v4802
    %v5928 = vpop.f32.mrf.mxu0
    %v5929 = vadd.f32 %v5840, %v5928
    %v5930 = vpop.f32.mrf.mxu0
    %v5931 = vadd.f32 %v5842, %v5930
    %5932 = vmatmul.bf16.gmra.mxu0 %v4806
    %v5933 = vpop.f32.mrf.mxu0
    %v5934 = vadd.f32 %v5845, %v5933
    %v5935 = vpop.f32.mrf.mxu0
    %v5936 = vadd.f32 %v5847, %v5935
    %5937 = vmatmul.bf16.gmra.mxu0 %v4810
    %v5938 = vpop.f32.mrf.mxu0
    %v5939 = vadd.f32 %v5850, %v5938
    %v5940 = vpop.f32.mrf.mxu0
    %v5941 = vadd.f32 %v5852, %v5940
    %5942 = vmatmul.bf16.gmra.mxu0 %v4814
    %v5943 = vpop.f32.mrf.mxu0
    %v5944 = vadd.f32 %v5855, %v5943
    %v5945 = vpop.f32.mrf.mxu0
    %v5946 = vadd.f32 %v5857, %v5945
    %5947 = vmatmul.bf16.gmra.mxu0 %v4818
    %v5948 = vpop.f32.mrf.mxu0
    %v5949 = vadd.f32 %v5860, %v5948
    %v5950 = vpop.f32.mrf.mxu0
    %v5951 = vadd.f32 %v5862, %v5950
    %5952 = vdwg.mxu0
    %5953 = vmatpush.bf16.msra.mxu0 %v5370
    %5954 = vmatpush.bf16.msra.mxu0 %v5366
    %5955 = vmatpush.bf16.msra.mxu0 %v5362
    %5956 = vmatpush.bf16.msra.mxu0 %v5358
    %5957 = vmatpush.bf16.msra.mxu0 %v5354
    %5958 = vmatpush.bf16.msra.mxu0 %v5350
    %5959 = vmatpush.bf16.msra.mxu0 %v5346
    %5960 = vmatpush.bf16.msra.mxu0 %v5342
    %5961 = vmatmul.bf16.gmra.mxu0 %v4755
    %v5962 = vpop.f32.mrf.mxu0
    %v5963 = vadd.f32 %v4950, %v5962
    %v5964 = vpop.f32.mrf.mxu0
    %v5965 = vadd.f32 %v4950, %v5964
    %5966 = vmatmul.bf16.gmra.mxu0 %v4759
    %v5967 = vpop.f32.mrf.mxu0
    %v5968 = vadd.f32 %v4950, %v5967
    %v5969 = vpop.f32.mrf.mxu0
    %v5970 = vadd.f32 %v4950, %v5969
    %5971 = vmatmul.bf16.gmra.mxu0 %v4763
    %v5972 = vpop.f32.mrf.mxu0
    %v5973 = vadd.f32 %v4950, %v5972
    %v5974 = vpop.f32.mrf.mxu0
    %v5975 = vadd.f32 %v4950, %v5974
    %5976 = vmatmul.bf16.gmra.mxu0 %v4767
    %v5977 = vpop.f32.mrf.mxu0
    %v5978 = vadd.f32 %v4950, %v5977
    %v5979 = vpop.f32.mrf.mxu0
    %v5980 = vadd.f32 %v4950, %v5979
    %5981 = vmatmul.bf16.gmra.mxu0 %v4771
    %v5982 = vpop.f32.mrf.mxu0
    %v5983 = vadd.f32 %v4950, %v5982
    %v5984 = vpop.f32.mrf.mxu0
    %v5985 = vadd.f32 %v4950, %v5984
    %5986 = vmatmul.bf16.gmra.mxu0 %v4775
    %v5987 = vpop.f32.mrf.mxu0
    %v5988 = vadd.f32 %v4950, %v5987
    %v5989 = vpop.f32.mrf.mxu0
    %v5990 = vadd.f32 %v4950, %v5989
    %5991 = vmatmul.bf16.gmra.mxu0 %v4779
    %v5992 = vpop.f32.mrf.mxu0
    %v5993 = vadd.f32 %v4950, %v5992
    %v5994 = vpop.f32.mrf.mxu0
    %v5995 = vadd.f32 %v4950, %v5994
    %5996 = vmatmul.bf16.gmra.mxu0 %v4783
    %v5997 = vpop.f32.mrf.mxu0
    %v5998 = vadd.f32 %v4950, %v5997
    %v5999 = vpop.f32.mrf.mxu0
    %v6000 = vadd.f32 %v4950, %v5999
    %6001 = vmatmul.bf16.gmra.mxu0 %v4787
    %v6002 = vpop.f32.mrf.mxu0
    %v6003 = vadd.f32 %v4950, %v6002
    %v6004 = vpop.f32.mrf.mxu0
    %v6005 = vadd.f32 %v4950, %v6004
    %6006 = vmatmul.bf16.gmra.mxu0 %v4791
    %v6007 = vpop.f32.mrf.mxu0
    %v6008 = vadd.f32 %v4950, %v6007
    %v6009 = vpop.f32.mrf.mxu0
    %v6010 = vadd.f32 %v4950, %v6009
    %6011 = vmatmul.bf16.gmra.mxu0 %v4795
    %v6012 = vpop.f32.mrf.mxu0
    %v6013 = vadd.f32 %v4950, %v6012
    %v6014 = vpop.f32.mrf.mxu0
    %v6015 = vadd.f32 %v4950, %v6014
    %6016 = vmatmul.bf16.gmra.mxu0 %v4799
    %v6017 = vpop.f32.mrf.mxu0
    %v6018 = vadd.f32 %v4950, %v6017
    %v6019 = vpop.f32.mrf.mxu0
    %v6020 = vadd.f32 %v4950, %v6019
    %6021 = vmatmul.bf16.gmra.mxu0 %v4803
    %v6022 = vpop.f32.mrf.mxu0
    %v6023 = vadd.f32 %v4950, %v6022
    %v6024 = vpop.f32.mrf.mxu0
    %v6025 = vadd.f32 %v4950, %v6024
    %6026 = vmatmul.bf16.gmra.mxu0 %v4807
    %v6027 = vpop.f32.mrf.mxu0
    %v6028 = vadd.f32 %v4950, %v6027
    %v6029 = vpop.f32.mrf.mxu0
    %v6030 = vadd.f32 %v4950, %v6029
    %6031 = vmatmul.bf16.gmra.mxu0 %v4811
    %v6032 = vpop.f32.mrf.mxu0
    %v6033 = vadd.f32 %v4950, %v6032
    %v6034 = vpop.f32.mrf.mxu0
    %v6035 = vadd.f32 %v4950, %v6034
    %6036 = vmatmul.bf16.gmra.mxu0 %v4815
    %v6037 = vpop.f32.mrf.mxu0
    %v6038 = vadd.f32 %v4950, %v6037
    %v6039 = vpop.f32.mrf.mxu0
    %v6040 = vadd.f32 %v4950, %v6039
    %6041 = vdwg.mxu0
    %6042 = vmatpush.bf16.msra.mxu0 %v5402
    %6043 = vmatpush.bf16.msra.mxu0 %v5398
    %6044 = vmatpush.bf16.msra.mxu0 %v5394
    %6045 = vmatpush.bf16.msra.mxu0 %v5390
    %6046 = vmatpush.bf16.msra.mxu0 %v5386
    %6047 = vmatpush.bf16.msra.mxu0 %v5382
    %6048 = vmatpush.bf16.msra.mxu0 %v5378
    %6049 = vmatpush.bf16.msra.mxu0 %v5374
    %6050 = vmatmul.bf16.gmra.mxu0 %v4756
    %v6051 = vpop.f32.mrf.mxu0
    %v6052 = vadd.f32 %v5963, %v6051
    %v6053 = vpop.f32.mrf.mxu0
    %v6054 = vadd.f32 %v5965, %v6053
    %6055 = vmatmul.bf16.gmra.mxu0 %v4760
    %v6056 = vpop.f32.mrf.mxu0
    %v6057 = vadd.f32 %v5968, %v6056
    %v6058 = vpop.f32.mrf.mxu0
    %v6059 = vadd.f32 %v5970, %v6058
    %6060 = vmatmul.bf16.gmra.mxu0 %v4764
    %v6061 = vpop.f32.mrf.mxu0
    %v6062 = vadd.f32 %v5973, %v6061
    %v6063 = vpop.f32.mrf.mxu0
    %v6064 = vadd.f32 %v5975, %v6063
    %6065 = vmatmul.bf16.gmra.mxu0 %v4768
    %v6066 = vpop.f32.mrf.mxu0
    %v6067 = vadd.f32 %v5978, %v6066
    %v6068 = vpop.f32.mrf.mxu0
    %v6069 = vadd.f32 %v5980, %v6068
    %6070 = vmatmul.bf16.gmra.mxu0 %v4772
    %v6071 = vpop.f32.mrf.mxu0
    %v6072 = vadd.f32 %v5983, %v6071
    %v6073 = vpop.f32.mrf.mxu0
    %v6074 = vadd.f32 %v5985, %v6073
    %6075 = vmatmul.bf16.gmra.mxu0 %v4776
    %v6076 = vpop.f32.mrf.mxu0
    %v6077 = vadd.f32 %v5988, %v6076
    %v6078 = vpop.f32.mrf.mxu0
    %v6079 = vadd.f32 %v5990, %v6078
    %6080 = vmatmul.bf16.gmra.mxu0 %v4780
    %v6081 = vpop.f32.mrf.mxu0
    %v6082 = vadd.f32 %v5993, %v6081
    %v6083 = vpop.f32.mrf.mxu0
    %v6084 = vadd.f32 %v5995, %v6083
    %6085 = vmatmul.bf16.gmra.mxu0 %v4784
    %v6086 = vpop.f32.mrf.mxu0
    %v6087 = vadd.f32 %v5998, %v6086
    %v6088 = vpop.f32.mrf.mxu0
    %v6089 = vadd.f32 %v6000, %v6088
    %6090 = vmatmul.bf16.gmra.mxu0 %v4788
    %v6091 = vpop.f32.mrf.mxu0
    %v6092 = vadd.f32 %v6003, %v6091
    %v6093 = vpop.f32.mrf.mxu0
    %v6094 = vadd.f32 %v6005, %v6093
    %6095 = vmatmul.bf16.gmra.mxu0 %v4792
    %v6096 = vpop.f32.mrf.mxu0
    %v6097 = vadd.f32 %v6008, %v6096
    %v6098 = vpop.f32.mrf.mxu0
    %v6099 = vadd.f32 %v6010, %v6098
    %6100 = vmatmul.bf16.gmra.mxu0 %v4796
    %v6101 = vpop.f32.mrf.mxu0
    %v6102 = vadd.f32 %v6013, %v6101
    %v6103 = vpop.f32.mrf.mxu0
    %v6104 = vadd.f32 %v6015, %v6103
    %6105 = vmatmul.bf16.gmra.mxu0 %v4800
    %v6106 = vpop.f32.mrf.mxu0
    %v6107 = vadd.f32 %v6018, %v6106
    %v6108 = vpop.f32.mrf.mxu0
    %v6109 = vadd.f32 %v6020, %v6108
    %6110 = vmatmul.bf16.gmra.mxu0 %v4804
    %v6111 = vpop.f32.mrf.mxu0
    %v6112 = vadd.f32 %v6023, %v6111
    %v6113 = vpop.f32.mrf.mxu0
    %v6114 = vadd.f32 %v6025, %v6113
    %6115 = vmatmul.bf16.gmra.mxu0 %v4808
    %v6116 = vpop.f32.mrf.mxu0
    %v6117 = vadd.f32 %v6028, %v6116
    %v6118 = vpop.f32.mrf.mxu0
    %v6119 = vadd.f32 %v6030, %v6118
    %6120 = vmatmul.bf16.gmra.mxu0 %v4812
    %v6121 = vpop.f32.mrf.mxu0
    %v6122 = vadd.f32 %v6033, %v6121
    %v6123 = vpop.f32.mrf.mxu0
    %v6124 = vadd.f32 %v6035, %v6123
    %6125 = vmatmul.bf16.gmra.mxu0 %v4816
    %v6126 = vpop.f32.mrf.mxu0
    %v6127 = vadd.f32 %v6038, %v6126
    %v6128 = vpop.f32.mrf.mxu0
    %v6129 = vadd.f32 %v6040, %v6128
    %6130 = vdwg.mxu0
    %6131 = vmatpush.bf16.msra.mxu0 %v5434
    %6132 = vmatpush.bf16.msra.mxu0 %v5430
    %6133 = vmatpush.bf16.msra.mxu0 %v5426
    %6134 = vmatpush.bf16.msra.mxu0 %v5422
    %6135 = vmatpush.bf16.msra.mxu0 %v5418
    %6136 = vmatpush.bf16.msra.mxu0 %v5414
    %6137 = vmatpush.bf16.msra.mxu0 %v5410
    %6138 = vmatpush.bf16.msra.mxu0 %v5406
    %6139 = vmatmul.bf16.gmra.mxu0 %v4757
    %v6140 = vpop.f32.mrf.mxu0
    %v6141 = vadd.f32 %v6052, %v6140
    %v6142 = vpop.f32.mrf.mxu0
    %v6143 = vadd.f32 %v6054, %v6142
    %6144 = vmatmul.bf16.gmra.mxu0 %v4761
    %v6145 = vpop.f32.mrf.mxu0
    %v6146 = vadd.f32 %v6057, %v6145
    %v6147 = vpop.f32.mrf.mxu0
    %v6148 = vadd.f32 %v6059, %v6147
    %6149 = vmatmul.bf16.gmra.mxu0 %v4765
    %v6150 = vpop.f32.mrf.mxu0
    %v6151 = vadd.f32 %v6062, %v6150
    %v6152 = vpop.f32.mrf.mxu0
    %v6153 = vadd.f32 %v6064, %v6152
    %6154 = vmatmul.bf16.gmra.mxu0 %v4769
    %v6155 = vpop.f32.mrf.mxu0
    %v6156 = vadd.f32 %v6067, %v6155
    %v6157 = vpop.f32.mrf.mxu0
    %v6158 = vadd.f32 %v6069, %v6157
    %6159 = vmatmul.bf16.gmra.mxu0 %v4773
    %v6160 = vpop.f32.mrf.mxu0
    %v6161 = vadd.f32 %v6072, %v6160
    %v6162 = vpop.f32.mrf.mxu0
    %v6163 = vadd.f32 %v6074, %v6162
    %6164 = vmatmul.bf16.gmra.mxu0 %v4777
    %v6165 = vpop.f32.mrf.mxu0
    %v6166 = vadd.f32 %v6077, %v6165
    %v6167 = vpop.f32.mrf.mxu0
    %v6168 = vadd.f32 %v6079, %v6167
    %6169 = vmatmul.bf16.gmra.mxu0 %v4781
    %v6170 = vpop.f32.mrf.mxu0
    %v6171 = vadd.f32 %v6082, %v6170
    %v6172 = vpop.f32.mrf.mxu0
    %v6173 = vadd.f32 %v6084, %v6172
    %6174 = vmatmul.bf16.gmra.mxu0 %v4785
    %v6175 = vpop.f32.mrf.mxu0
    %v6176 = vadd.f32 %v6087, %v6175
    %v6177 = vpop.f32.mrf.mxu0
    %v6178 = vadd.f32 %v6089, %v6177
    %6179 = vmatmul.bf16.gmra.mxu0 %v4789
    %v6180 = vpop.f32.mrf.mxu0
    %v6181 = vadd.f32 %v6092, %v6180
    %v6182 = vpop.f32.mrf.mxu0
    %v6183 = vadd.f32 %v6094, %v6182
    %6184 = vmatmul.bf16.gmra.mxu0 %v4793
    %v6185 = vpop.f32.mrf.mxu0
    %v6186 = vadd.f32 %v6097, %v6185
    %v6187 = vpop.f32.mrf.mxu0
    %v6188 = vadd.f32 %v6099, %v6187
    %6189 = vmatmul.bf16.gmra.mxu0 %v4797
    %v6190 = vpop.f32.mrf.mxu0
    %v6191 = vadd.f32 %v6102, %v6190
    %v6192 = vpop.f32.mrf.mxu0
    %v6193 = vadd.f32 %v6104, %v6192
    %6194 = vmatmul.bf16.gmra.mxu0 %v4801
    %v6195 = vpop.f32.mrf.mxu0
    %v6196 = vadd.f32 %v6107, %v6195
    %v6197 = vpop.f32.mrf.mxu0
    %v6198 = vadd.f32 %v6109, %v6197
    %6199 = vmatmul.bf16.gmra.mxu0 %v4805
    %v6200 = vpop.f32.mrf.mxu0
    %v6201 = vadd.f32 %v6112, %v6200
    %v6202 = vpop.f32.mrf.mxu0
    %v6203 = vadd.f32 %v6114, %v6202
    %6204 = vmatmul.bf16.gmra.mxu0 %v4809
    %v6205 = vpop.f32.mrf.mxu0
    %v6206 = vadd.f32 %v6117, %v6205
    %v6207 = vpop.f32.mrf.mxu0
    %v6208 = vadd.f32 %v6119, %v6207
    %6209 = vmatmul.bf16.gmra.mxu0 %v4813
    %v6210 = vpop.f32.mrf.mxu0
    %v6211 = vadd.f32 %v6122, %v6210
    %v6212 = vpop.f32.mrf.mxu0
    %v6213 = vadd.f32 %v6124, %v6212
    %6214 = vmatmul.bf16.gmra.mxu0 %v4817
    %v6215 = vpop.f32.mrf.mxu0
    %v6216 = vadd.f32 %v6127, %v6215
    %v6217 = vpop.f32.mrf.mxu0
    %v6218 = vadd.f32 %v6129, %v6217
    %6219 = vdwg.mxu0
    %6220 = vmatpush.bf16.msra.mxu0 %v5466
    %6221 = vmatpush.bf16.msra.mxu0 %v5462
    %6222 = vmatpush.bf16.msra.mxu0 %v5458
    %6223 = vmatpush.bf16.msra.mxu0 %v5454
    %6224 = vmatpush.bf16.msra.mxu0 %v5450
    %6225 = vmatpush.bf16.msra.mxu0 %v5446
    %6226 = vmatpush.bf16.msra.mxu0 %v5442
    %6227 = vmatpush.bf16.msra.mxu0 %v5438
    %6228 = vmatmul.bf16.gmra.mxu0 %v4758
    %v6229 = vpop.f32.mrf.mxu0
    %v6230 = vadd.f32 %v6141, %v6229
    %v6231 = vpop.f32.mrf.mxu0
    %v6232 = vadd.f32 %v6143, %v6231
    %6233 = vmatmul.bf16.gmra.mxu0 %v4762
    %v6234 = vpop.f32.mrf.mxu0
    %v6235 = vadd.f32 %v6146, %v6234
    %v6236 = vpop.f32.mrf.mxu0
    %v6237 = vadd.f32 %v6148, %v6236
    %6238 = vmatmul.bf16.gmra.mxu0 %v4766
    %v6239 = vpop.f32.mrf.mxu0
    %v6240 = vadd.f32 %v6151, %v6239
    %v6241 = vpop.f32.mrf.mxu0
    %v6242 = vadd.f32 %v6153, %v6241
    %6243 = vmatmul.bf16.gmra.mxu0 %v4770
    %v6244 = vpop.f32.mrf.mxu0
    %v6245 = vadd.f32 %v6156, %v6244
    %v6246 = vpop.f32.mrf.mxu0
    %v6247 = vadd.f32 %v6158, %v6246
    %6248 = vmatmul.bf16.gmra.mxu0 %v4774
    %v6249 = vpop.f32.mrf.mxu0
    %v6250 = vadd.f32 %v6161, %v6249
    %v6251 = vpop.f32.mrf.mxu0
    %v6252 = vadd.f32 %v6163, %v6251
    %6253 = vmatmul.bf16.gmra.mxu0 %v4778
    %v6254 = vpop.f32.mrf.mxu0
    %v6255 = vadd.f32 %v6166, %v6254
    %v6256 = vpop.f32.mrf.mxu0
    %v6257 = vadd.f32 %v6168, %v6256
    %6258 = vmatmul.bf16.gmra.mxu0 %v4782
    %v6259 = vpop.f32.mrf.mxu0
    %v6260 = vadd.f32 %v6171, %v6259
    %v6261 = vpop.f32.mrf.mxu0
    %v6262 = vadd.f32 %v6173, %v6261
    %6263 = vmatmul.bf16.gmra.mxu0 %v4786
    %v6264 = vpop.f32.mrf.mxu0
    %v6265 = vadd.f32 %v6176, %v6264
    %v6266 = vpop.f32.mrf.mxu0
    %v6267 = vadd.f32 %v6178, %v6266
    %6268 = vmatmul.bf16.gmra.mxu0 %v4790
    %v6269 = vpop.f32.mrf.mxu0
    %v6270 = vadd.f32 %v6181, %v6269
    %v6271 = vpop.f32.mrf.mxu0
    %v6272 = vadd.f32 %v6183, %v6271
    %6273 = vmatmul.bf16.gmra.mxu0 %v4794
    %v6274 = vpop.f32.mrf.mxu0
    %v6275 = vadd.f32 %v6186, %v6274
    %v6276 = vpop.f32.mrf.mxu0
    %v6277 = vadd.f32 %v6188, %v6276
    %6278 = vmatmul.bf16.gmra.mxu0 %v4798
    %v6279 = vpop.f32.mrf.mxu0
    %v6280 = vadd.f32 %v6191, %v6279
    %v6281 = vpop.f32.mrf.mxu0
    %v6282 = vadd.f32 %v6193, %v6281
    %6283 = vmatmul.bf16.gmra.mxu0 %v4802
    %v6284 = vpop.f32.mrf.mxu0
    %v6285 = vadd.f32 %v6196, %v6284
    %v6286 = vpop.f32.mrf.mxu0
    %v6287 = vadd.f32 %v6198, %v6286
    %6288 = vmatmul.bf16.gmra.mxu0 %v4806
    %v6289 = vpop.f32.mrf.mxu0
    %v6290 = vadd.f32 %v6201, %v6289
    %v6291 = vpop.f32.mrf.mxu0
    %v6292 = vadd.f32 %v6203, %v6291
    %6293 = vmatmul.bf16.gmra.mxu0 %v4810
    %v6294 = vpop.f32.mrf.mxu0
    %v6295 = vadd.f32 %v6206, %v6294
    %v6296 = vpop.f32.mrf.mxu0
    %v6297 = vadd.f32 %v6208, %v6296
    %6298 = vmatmul.bf16.gmra.mxu0 %v4814
    %v6299 = vpop.f32.mrf.mxu0
    %v6300 = vadd.f32 %v6211, %v6299
    %v6301 = vpop.f32.mrf.mxu0
    %v6302 = vadd.f32 %v6213, %v6301
    %6303 = vmatmul.bf16.gmra.mxu0 %v4818
    %v6304 = vpop.f32.mrf.mxu0
    %v6305 = vadd.f32 %v6216, %v6304
    %v6306 = vpop.f32.mrf.mxu0
    %v6307 = vadd.f32 %v6218, %v6306
    %6308 = vdwg.mxu0
    %6309 = vmatpush.bf16.msra.mxu0 %v5371
    %6310 = vmatpush.bf16.msra.mxu0 %v5367
    %6311 = vmatpush.bf16.msra.mxu0 %v5363
    %6312 = vmatpush.bf16.msra.mxu0 %v5359
    %6313 = vmatpush.bf16.msra.mxu0 %v5355
    %6314 = vmatpush.bf16.msra.mxu0 %v5351
    %6315 = vmatpush.bf16.msra.mxu0 %v5347
    %6316 = vmatpush.bf16.msra.mxu0 %v5343
    %6317 = vmatmul.bf16.gmra.mxu0 %v4755
    %v6318 = vpop.f32.mrf.mxu0
    %v6319 = vadd.f32 %v4951, %v6318
    %v6320 = vpop.f32.mrf.mxu0
    %v6321 = vadd.f32 %v4951, %v6320
    %6322 = vmatmul.bf16.gmra.mxu0 %v4759
    %v6323 = vpop.f32.mrf.mxu0
    %v6324 = vadd.f32 %v4951, %v6323
    %v6325 = vpop.f32.mrf.mxu0
    %v6326 = vadd.f32 %v4951, %v6325
    %6327 = vmatmul.bf16.gmra.mxu0 %v4763
    %v6328 = vpop.f32.mrf.mxu0
    %v6329 = vadd.f32 %v4951, %v6328
    %v6330 = vpop.f32.mrf.mxu0
    %v6331 = vadd.f32 %v4951, %v6330
    %6332 = vmatmul.bf16.gmra.mxu0 %v4767
    %v6333 = vpop.f32.mrf.mxu0
    %v6334 = vadd.f32 %v4951, %v6333
    %v6335 = vpop.f32.mrf.mxu0
    %v6336 = vadd.f32 %v4951, %v6335
    %6337 = vmatmul.bf16.gmra.mxu0 %v4771
    %v6338 = vpop.f32.mrf.mxu0
    %v6339 = vadd.f32 %v4951, %v6338
    %v6340 = vpop.f32.mrf.mxu0
    %v6341 = vadd.f32 %v4951, %v6340
    %6342 = vmatmul.bf16.gmra.mxu0 %v4775
    %v6343 = vpop.f32.mrf.mxu0
    %v6344 = vadd.f32 %v4951, %v6343
    %v6345 = vpop.f32.mrf.mxu0
    %v6346 = vadd.f32 %v4951, %v6345
    %6347 = vmatmul.bf16.gmra.mxu0 %v4779
    %v6348 = vpop.f32.mrf.mxu0
    %v6349 = vadd.f32 %v4951, %v6348
    %v6350 = vpop.f32.mrf.mxu0
    %v6351 = vadd.f32 %v4951, %v6350
    %6352 = vmatmul.bf16.gmra.mxu0 %v4783
    %v6353 = vpop.f32.mrf.mxu0
    %v6354 = vadd.f32 %v4951, %v6353
    %v6355 = vpop.f32.mrf.mxu0
    %v6356 = vadd.f32 %v4951, %v6355
    %6357 = vmatmul.bf16.gmra.mxu0 %v4787
    %v6358 = vpop.f32.mrf.mxu0
    %v6359 = vadd.f32 %v4951, %v6358
    %v6360 = vpop.f32.mrf.mxu0
    %v6361 = vadd.f32 %v4951, %v6360
    %6362 = vmatmul.bf16.gmra.mxu0 %v4791
    %v6363 = vpop.f32.mrf.mxu0
    %v6364 = vadd.f32 %v4951, %v6363
    %v6365 = vpop.f32.mrf.mxu0
    %v6366 = vadd.f32 %v4951, %v6365
    %6367 = vmatmul.bf16.gmra.mxu0 %v4795
    %v6368 = vpop.f32.mrf.mxu0
    %v6369 = vadd.f32 %v4951, %v6368
    %v6370 = vpop.f32.mrf.mxu0
    %v6371 = vadd.f32 %v4951, %v6370
    %6372 = vmatmul.bf16.gmra.mxu0 %v4799
    %v6373 = vpop.f32.mrf.mxu0
    %v6374 = vadd.f32 %v4951, %v6373
    %v6375 = vpop.f32.mrf.mxu0
    %v6376 = vadd.f32 %v4951, %v6375
    %6377 = vmatmul.bf16.gmra.mxu0 %v4803
    %v6378 = vpop.f32.mrf.mxu0
    %v6379 = vadd.f32 %v4951, %v6378
    %v6380 = vpop.f32.mrf.mxu0
    %v6381 = vadd.f32 %v4951, %v6380
    %6382 = vmatmul.bf16.gmra.mxu0 %v4807
    %v6383 = vpop.f32.mrf.mxu0
    %v6384 = vadd.f32 %v4951, %v6383
    %v6385 = vpop.f32.mrf.mxu0
    %v6386 = vadd.f32 %v4951, %v6385
    %6387 = vmatmul.bf16.gmra.mxu0 %v4811
    %v6388 = vpop.f32.mrf.mxu0
    %v6389 = vadd.f32 %v4951, %v6388
    %v6390 = vpop.f32.mrf.mxu0
    %v6391 = vadd.f32 %v4951, %v6390
    %6392 = vmatmul.bf16.gmra.mxu0 %v4815
    %v6393 = vpop.f32.mrf.mxu0
    %v6394 = vadd.f32 %v4951, %v6393
    %v6395 = vpop.f32.mrf.mxu0
    %v6396 = vadd.f32 %v4951, %v6395
    %6397 = vdwg.mxu0
    %6398 = vmatpush.bf16.msra.mxu0 %v5403
    %6399 = vmatpush.bf16.msra.mxu0 %v5399
    %6400 = vmatpush.bf16.msra.mxu0 %v5395
    %6401 = vmatpush.bf16.msra.mxu0 %v5391
    %6402 = vmatpush.bf16.msra.mxu0 %v5387
    %6403 = vmatpush.bf16.msra.mxu0 %v5383
    %6404 = vmatpush.bf16.msra.mxu0 %v5379
    %6405 = vmatpush.bf16.msra.mxu0 %v5375
    %6406 = vmatmul.bf16.gmra.mxu0 %v4756
    %v6407 = vpop.f32.mrf.mxu0
    %v6408 = vadd.f32 %v6319, %v6407
    %v6409 = vpop.f32.mrf.mxu0
    %v6410 = vadd.f32 %v6321, %v6409
    %6411 = vmatmul.bf16.gmra.mxu0 %v4760
    %v6412 = vpop.f32.mrf.mxu0
    %v6413 = vadd.f32 %v6324, %v6412
    %v6414 = vpop.f32.mrf.mxu0
    %v6415 = vadd.f32 %v6326, %v6414
    %6416 = vmatmul.bf16.gmra.mxu0 %v4764
    %v6417 = vpop.f32.mrf.mxu0
    %v6418 = vadd.f32 %v6329, %v6417
    %v6419 = vpop.f32.mrf.mxu0
    %v6420 = vadd.f32 %v6331, %v6419
    %6421 = vmatmul.bf16.gmra.mxu0 %v4768
    %v6422 = vpop.f32.mrf.mxu0
    %v6423 = vadd.f32 %v6334, %v6422
    %v6424 = vpop.f32.mrf.mxu0
    %v6425 = vadd.f32 %v6336, %v6424
    %6426 = vmatmul.bf16.gmra.mxu0 %v4772
    %v6427 = vpop.f32.mrf.mxu0
    %v6428 = vadd.f32 %v6339, %v6427
    %v6429 = vpop.f32.mrf.mxu0
    %v6430 = vadd.f32 %v6341, %v6429
    %6431 = vmatmul.bf16.gmra.mxu0 %v4776
    %v6432 = vpop.f32.mrf.mxu0
    %v6433 = vadd.f32 %v6344, %v6432
    %v6434 = vpop.f32.mrf.mxu0
    %v6435 = vadd.f32 %v6346, %v6434
    %6436 = vmatmul.bf16.gmra.mxu0 %v4780
    %v6437 = vpop.f32.mrf.mxu0
    %v6438 = vadd.f32 %v6349, %v6437
    %v6439 = vpop.f32.mrf.mxu0
    %v6440 = vadd.f32 %v6351, %v6439
    %6441 = vmatmul.bf16.gmra.mxu0 %v4784
    %v6442 = vpop.f32.mrf.mxu0
    %v6443 = vadd.f32 %v6354, %v6442
    %v6444 = vpop.f32.mrf.mxu0
    %v6445 = vadd.f32 %v6356, %v6444
    %6446 = vmatmul.bf16.gmra.mxu0 %v4788
    %v6447 = vpop.f32.mrf.mxu0
    %v6448 = vadd.f32 %v6359, %v6447
    %v6449 = vpop.f32.mrf.mxu0
    %v6450 = vadd.f32 %v6361, %v6449
    %6451 = vmatmul.bf16.gmra.mxu0 %v4792
    %v6452 = vpop.f32.mrf.mxu0
    %v6453 = vadd.f32 %v6364, %v6452
    %v6454 = vpop.f32.mrf.mxu0
    %v6455 = vadd.f32 %v6366, %v6454
    %6456 = vmatmul.bf16.gmra.mxu0 %v4796
    %v6457 = vpop.f32.mrf.mxu0
    %v6458 = vadd.f32 %v6369, %v6457
    %v6459 = vpop.f32.mrf.mxu0
    %v6460 = vadd.f32 %v6371, %v6459
    %6461 = vmatmul.bf16.gmra.mxu0 %v4800
    %v6462 = vpop.f32.mrf.mxu0
    %v6463 = vadd.f32 %v6374, %v6462
    %v6464 = vpop.f32.mrf.mxu0
    %v6465 = vadd.f32 %v6376, %v6464
    %6466 = vmatmul.bf16.gmra.mxu0 %v4804
    %v6467 = vpop.f32.mrf.mxu0
    %v6468 = vadd.f32 %v6379, %v6467
    %v6469 = vpop.f32.mrf.mxu0
    %v6470 = vadd.f32 %v6381, %v6469
    %6471 = vmatmul.bf16.gmra.mxu0 %v4808
    %v6472 = vpop.f32.mrf.mxu0
    %v6473 = vadd.f32 %v6384, %v6472
    %v6474 = vpop.f32.mrf.mxu0
    %v6475 = vadd.f32 %v6386, %v6474
    %6476 = vmatmul.bf16.gmra.mxu0 %v4812
    %v6477 = vpop.f32.mrf.mxu0
    %v6478 = vadd.f32 %v6389, %v6477
    %v6479 = vpop.f32.mrf.mxu0
    %v6480 = vadd.f32 %v6391, %v6479
    %6481 = vmatmul.bf16.gmra.mxu0 %v4816
    %v6482 = vpop.f32.mrf.mxu0
    %v6483 = vadd.f32 %v6394, %v6482
    %v6484 = vpop.f32.mrf.mxu0
    %v6485 = vadd.f32 %v6396, %v6484
    %6486 = vdwg.mxu0
    %6487 = vmatpush.bf16.msra.mxu0 %v5435
    %6488 = vmatpush.bf16.msra.mxu0 %v5431
    %6489 = vmatpush.bf16.msra.mxu0 %v5427
    %6490 = vmatpush.bf16.msra.mxu0 %v5423
    %6491 = vmatpush.bf16.msra.mxu0 %v5419
    %6492 = vmatpush.bf16.msra.mxu0 %v5415
    %6493 = vmatpush.bf16.msra.mxu0 %v5411
    %6494 = vmatpush.bf16.msra.mxu0 %v5407
    %6495 = vmatmul.bf16.gmra.mxu0 %v4757
    %v6496 = vpop.f32.mrf.mxu0
    %v6497 = vadd.f32 %v6408, %v6496
    %v6498 = vpop.f32.mrf.mxu0
    %v6499 = vadd.f32 %v6410, %v6498
    %6500 = vmatmul.bf16.gmra.mxu0 %v4761
    %v6501 = vpop.f32.mrf.mxu0
    %v6502 = vadd.f32 %v6413, %v6501
    %v6503 = vpop.f32.mrf.mxu0
    %v6504 = vadd.f32 %v6415, %v6503
    %6505 = vmatmul.bf16.gmra.mxu0 %v4765
    %v6506 = vpop.f32.mrf.mxu0
    %v6507 = vadd.f32 %v6418, %v6506
    %v6508 = vpop.f32.mrf.mxu0
    %v6509 = vadd.f32 %v6420, %v6508
    %6510 = vmatmul.bf16.gmra.mxu0 %v4769
    %v6511 = vpop.f32.mrf.mxu0
    %v6512 = vadd.f32 %v6423, %v6511
    %v6513 = vpop.f32.mrf.mxu0
    %v6514 = vadd.f32 %v6425, %v6513
    %6515 = vmatmul.bf16.gmra.mxu0 %v4773
    %v6516 = vpop.f32.mrf.mxu0
    %v6517 = vadd.f32 %v6428, %v6516
    %v6518 = vpop.f32.mrf.mxu0
    %v6519 = vadd.f32 %v6430, %v6518
    %6520 = vmatmul.bf16.gmra.mxu0 %v4777
    %v6521 = vpop.f32.mrf.mxu0
    %v6522 = vadd.f32 %v6433, %v6521
    %v6523 = vpop.f32.mrf.mxu0
    %v6524 = vadd.f32 %v6435, %v6523
    %6525 = vmatmul.bf16.gmra.mxu0 %v4781
    %v6526 = vpop.f32.mrf.mxu0
    %v6527 = vadd.f32 %v6438, %v6526
    %v6528 = vpop.f32.mrf.mxu0
    %v6529 = vadd.f32 %v6440, %v6528
    %6530 = vmatmul.bf16.gmra.mxu0 %v4785
    %v6531 = vpop.f32.mrf.mxu0
    %v6532 = vadd.f32 %v6443, %v6531
    %v6533 = vpop.f32.mrf.mxu0
    %v6534 = vadd.f32 %v6445, %v6533
    %6535 = vmatmul.bf16.gmra.mxu0 %v4789
    %v6536 = vpop.f32.mrf.mxu0
    %v6537 = vadd.f32 %v6448, %v6536
    %v6538 = vpop.f32.mrf.mxu0
    %v6539 = vadd.f32 %v6450, %v6538
    %6540 = vmatmul.bf16.gmra.mxu0 %v4793
    %v6541 = vpop.f32.mrf.mxu0
    %v6542 = vadd.f32 %v6453, %v6541
    %v6543 = vpop.f32.mrf.mxu0
    %v6544 = vadd.f32 %v6455, %v6543
    %6545 = vmatmul.bf16.gmra.mxu0 %v4797
    %v6546 = vpop.f32.mrf.mxu0
    %v6547 = vadd.f32 %v6458, %v6546
    %v6548 = vpop.f32.mrf.mxu0
    %v6549 = vadd.f32 %v6460, %v6548
    %6550 = vmatmul.bf16.gmra.mxu0 %v4801
    %v6551 = vpop.f32.mrf.mxu0
    %v6552 = vadd.f32 %v6463, %v6551
    %v6553 = vpop.f32.mrf.mxu0
    %v6554 = vadd.f32 %v6465, %v6553
    %6555 = vmatmul.bf16.gmra.mxu0 %v4805
    %v6556 = vpop.f32.mrf.mxu0
    %v6557 = vadd.f32 %v6468, %v6556
    %v6558 = vpop.f32.mrf.mxu0
    %v6559 = vadd.f32 %v6470, %v6558
    %6560 = vmatmul.bf16.gmra.mxu0 %v4809
    %v6561 = vpop.f32.mrf.mxu0
    %v6562 = vadd.f32 %v6473, %v6561
    %v6563 = vpop.f32.mrf.mxu0
    %v6564 = vadd.f32 %v6475, %v6563
    %6565 = vmatmul.bf16.gmra.mxu0 %v4813
    %v6566 = vpop.f32.mrf.mxu0
    %v6567 = vadd.f32 %v6478, %v6566
    %v6568 = vpop.f32.mrf.mxu0
    %v6569 = vadd.f32 %v6480, %v6568
    %6570 = vmatmul.bf16.gmra.mxu0 %v4817
    %v6571 = vpop.f32.mrf.mxu0
    %v6572 = vadd.f32 %v6483, %v6571
    %v6573 = vpop.f32.mrf.mxu0
    %v6574 = vadd.f32 %v6485, %v6573
    %6575 = vdwg.mxu0
    %6576 = vmatpush.bf16.msra.mxu0 %v5467
    %6577 = vmatpush.bf16.msra.mxu0 %v5463
    %6578 = vmatpush.bf16.msra.mxu0 %v5459
    %6579 = vmatpush.bf16.msra.mxu0 %v5455
    %6580 = vmatpush.bf16.msra.mxu0 %v5451
    %6581 = vmatpush.bf16.msra.mxu0 %v5447
    %6582 = vmatpush.bf16.msra.mxu0 %v5443
    %6583 = vmatpush.bf16.msra.mxu0 %v5439
    %6584 = vmatmul.bf16.gmra.mxu0 %v4758
    %v6585 = vpop.f32.mrf.mxu0
    %v6586 = vadd.f32 %v6497, %v6585
    %v6587 = vpop.f32.mrf.mxu0
    %v6588 = vadd.f32 %v6499, %v6587
    %6589 = vmatmul.bf16.gmra.mxu0 %v4762
    %v6590 = vpop.f32.mrf.mxu0
    %v6591 = vadd.f32 %v6502, %v6590
    %v6592 = vpop.f32.mrf.mxu0
    %v6593 = vadd.f32 %v6504, %v6592
    %6594 = vmatmul.bf16.gmra.mxu0 %v4766
    %v6595 = vpop.f32.mrf.mxu0
    %v6596 = vadd.f32 %v6507, %v6595
    %v6597 = vpop.f32.mrf.mxu0
    %v6598 = vadd.f32 %v6509, %v6597
    %6599 = vmatmul.bf16.gmra.mxu0 %v4770
    %v6600 = vpop.f32.mrf.mxu0
    %v6601 = vadd.f32 %v6512, %v6600
    %v6602 = vpop.f32.mrf.mxu0
    %v6603 = vadd.f32 %v6514, %v6602
    %6604 = vmatmul.bf16.gmra.mxu0 %v4774
    %v6605 = vpop.f32.mrf.mxu0
    %v6606 = vadd.f32 %v6517, %v6605
    %v6607 = vpop.f32.mrf.mxu0
    %v6608 = vadd.f32 %v6519, %v6607
    %6609 = vmatmul.bf16.gmra.mxu0 %v4778
    %v6610 = vpop.f32.mrf.mxu0
    %v6611 = vadd.f32 %v6522, %v6610
    %v6612 = vpop.f32.mrf.mxu0
    %v6613 = vadd.f32 %v6524, %v6612
    %6614 = vmatmul.bf16.gmra.mxu0 %v4782
    %v6615 = vpop.f32.mrf.mxu0
    %v6616 = vadd.f32 %v6527, %v6615
    %v6617 = vpop.f32.mrf.mxu0
    %v6618 = vadd.f32 %v6529, %v6617
    %6619 = vmatmul.bf16.gmra.mxu0 %v4786
    %v6620 = vpop.f32.mrf.mxu0
    %v6621 = vadd.f32 %v6532, %v6620
    %v6622 = vpop.f32.mrf.mxu0
    %v6623 = vadd.f32 %v6534, %v6622
    %6624 = vmatmul.bf16.gmra.mxu0 %v4790
    %v6625 = vpop.f32.mrf.mxu0
    %v6626 = vadd.f32 %v6537, %v6625
    %v6627 = vpop.f32.mrf.mxu0
    %v6628 = vadd.f32 %v6539, %v6627
    %6629 = vmatmul.bf16.gmra.mxu0 %v4794
    %v6630 = vpop.f32.mrf.mxu0
    %v6631 = vadd.f32 %v6542, %v6630
    %v6632 = vpop.f32.mrf.mxu0
    %v6633 = vadd.f32 %v6544, %v6632
    %6634 = vmatmul.bf16.gmra.mxu0 %v4798
    %v6635 = vpop.f32.mrf.mxu0
    %v6636 = vadd.f32 %v6547, %v6635
    %v6637 = vpop.f32.mrf.mxu0
    %v6638 = vadd.f32 %v6549, %v6637
    %6639 = vmatmul.bf16.gmra.mxu0 %v4802
    %v6640 = vpop.f32.mrf.mxu0
    %v6641 = vadd.f32 %v6552, %v6640
    %v6642 = vpop.f32.mrf.mxu0
    %v6643 = vadd.f32 %v6554, %v6642
    %6644 = vmatmul.bf16.gmra.mxu0 %v4806
    %v6645 = vpop.f32.mrf.mxu0
    %v6646 = vadd.f32 %v6557, %v6645
    %v6647 = vpop.f32.mrf.mxu0
    %v6648 = vadd.f32 %v6559, %v6647
    %6649 = vmatmul.bf16.gmra.mxu0 %v4810
    %v6650 = vpop.f32.mrf.mxu0
    %v6651 = vadd.f32 %v6562, %v6650
    %v6652 = vpop.f32.mrf.mxu0
    %v6653 = vadd.f32 %v6564, %v6652
    %6654 = vmatmul.bf16.gmra.mxu0 %v4814
    %v6655 = vpop.f32.mrf.mxu0
    %v6656 = vadd.f32 %v6567, %v6655
    %v6657 = vpop.f32.mrf.mxu0
    %v6658 = vadd.f32 %v6569, %v6657
    %6659 = vmatmul.bf16.gmra.mxu0 %v4818
    %v6660 = vpop.f32.mrf.mxu0
    %v6661 = vadd.f32 %v6572, %v6660
    %v6662 = vpop.f32.mrf.mxu0
    %v6663 = vadd.f32 %v6574, %v6662
    %6664 = vdwg.mxu0
    %6665 = vmatpush.bf16.msra.mxu0 %v5372
    %6666 = vmatpush.bf16.msra.mxu0 %v5368
    %6667 = vmatpush.bf16.msra.mxu0 %v5364
    %6668 = vmatpush.bf16.msra.mxu0 %v5360
    %6669 = vmatpush.bf16.msra.mxu0 %v5356
    %6670 = vmatpush.bf16.msra.mxu0 %v5352
    %6671 = vmatpush.bf16.msra.mxu0 %v5348
    %6672 = vmatpush.bf16.msra.mxu0 %v5344
    %6673 = vmatmul.bf16.gmra.mxu0 %v4755
    %v6674 = vpop.f32.mrf.mxu0
    %v6675 = vadd.f32 %v4952, %v6674
    %v6676 = vpop.f32.mrf.mxu0
    %v6677 = vadd.f32 %v4952, %v6676
    %6678 = vmatmul.bf16.gmra.mxu0 %v4759
    %v6679 = vpop.f32.mrf.mxu0
    %v6680 = vadd.f32 %v4952, %v6679
    %v6681 = vpop.f32.mrf.mxu0
    %v6682 = vadd.f32 %v4952, %v6681
    %6683 = vmatmul.bf16.gmra.mxu0 %v4763
    %v6684 = vpop.f32.mrf.mxu0
    %v6685 = vadd.f32 %v4952, %v6684
    %v6686 = vpop.f32.mrf.mxu0
    %v6687 = vadd.f32 %v4952, %v6686
    %6688 = vmatmul.bf16.gmra.mxu0 %v4767
    %v6689 = vpop.f32.mrf.mxu0
    %v6690 = vadd.f32 %v4952, %v6689
    %v6691 = vpop.f32.mrf.mxu0
    %v6692 = vadd.f32 %v4952, %v6691
    %6693 = vmatmul.bf16.gmra.mxu0 %v4771
    %v6694 = vpop.f32.mrf.mxu0
    %v6695 = vadd.f32 %v4952, %v6694
    %v6696 = vpop.f32.mrf.mxu0
    %v6697 = vadd.f32 %v4952, %v6696
    %6698 = vmatmul.bf16.gmra.mxu0 %v4775
    %v6699 = vpop.f32.mrf.mxu0
    %v6700 = vadd.f32 %v4952, %v6699
    %v6701 = vpop.f32.mrf.mxu0
    %v6702 = vadd.f32 %v4952, %v6701
    %6703 = vmatmul.bf16.gmra.mxu0 %v4779
    %v6704 = vpop.f32.mrf.mxu0
    %v6705 = vadd.f32 %v4952, %v6704
    %v6706 = vpop.f32.mrf.mxu0
    %v6707 = vadd.f32 %v4952, %v6706
    %6708 = vmatmul.bf16.gmra.mxu0 %v4783
    %v6709 = vpop.f32.mrf.mxu0
    %v6710 = vadd.f32 %v4952, %v6709
    %v6711 = vpop.f32.mrf.mxu0
    %v6712 = vadd.f32 %v4952, %v6711
    %6713 = vmatmul.bf16.gmra.mxu0 %v4787
    %v6714 = vpop.f32.mrf.mxu0
    %v6715 = vadd.f32 %v4952, %v6714
    %v6716 = vpop.f32.mrf.mxu0
    %v6717 = vadd.f32 %v4952, %v6716
    %6718 = vmatmul.bf16.gmra.mxu0 %v4791
    %v6719 = vpop.f32.mrf.mxu0
    %v6720 = vadd.f32 %v4952, %v6719
    %v6721 = vpop.f32.mrf.mxu0
    %v6722 = vadd.f32 %v4952, %v6721
    %6723 = vmatmul.bf16.gmra.mxu0 %v4795
    %v6724 = vpop.f32.mrf.mxu0
    %v6725 = vadd.f32 %v4952, %v6724
    %v6726 = vpop.f32.mrf.mxu0
    %v6727 = vadd.f32 %v4952, %v6726
    %6728 = vmatmul.bf16.gmra.mxu0 %v4799
    %v6729 = vpop.f32.mrf.mxu0
    %v6730 = vadd.f32 %v4952, %v6729
    %v6731 = vpop.f32.mrf.mxu0
    %v6732 = vadd.f32 %v4952, %v6731
    %6733 = vmatmul.bf16.gmra.mxu0 %v4803
    %v6734 = vpop.f32.mrf.mxu0
    %v6735 = vadd.f32 %v4952, %v6734
    %v6736 = vpop.f32.mrf.mxu0
    %v6737 = vadd.f32 %v4952, %v6736
    %6738 = vmatmul.bf16.gmra.mxu0 %v4807
    %v6739 = vpop.f32.mrf.mxu0
    %v6740 = vadd.f32 %v4952, %v6739
    %v6741 = vpop.f32.mrf.mxu0
    %v6742 = vadd.f32 %v4952, %v6741
    %6743 = vmatmul.bf16.gmra.mxu0 %v4811
    %v6744 = vpop.f32.mrf.mxu0
    %v6745 = vadd.f32 %v4952, %v6744
    %v6746 = vpop.f32.mrf.mxu0
    %v6747 = vadd.f32 %v4952, %v6746
    %6748 = vmatmul.bf16.gmra.mxu0 %v4815
    %v6749 = vpop.f32.mrf.mxu0
    %v6750 = vadd.f32 %v4952, %v6749
    %v6751 = vpop.f32.mrf.mxu0
    %v6752 = vadd.f32 %v4952, %v6751
    %6753 = vdwg.mxu0
    %6754 = vmatpush.bf16.msra.mxu0 %v5404
    %6755 = vmatpush.bf16.msra.mxu0 %v5400
    %6756 = vmatpush.bf16.msra.mxu0 %v5396
    %6757 = vmatpush.bf16.msra.mxu0 %v5392
    %6758 = vmatpush.bf16.msra.mxu0 %v5388
    %6759 = vmatpush.bf16.msra.mxu0 %v5384
    %6760 = vmatpush.bf16.msra.mxu0 %v5380
    %6761 = vmatpush.bf16.msra.mxu0 %v5376
    %6762 = vmatmul.bf16.gmra.mxu0 %v4756
    %v6763 = vpop.f32.mrf.mxu0
    %v6764 = vadd.f32 %v6675, %v6763
    %v6765 = vpop.f32.mrf.mxu0
    %v6766 = vadd.f32 %v6677, %v6765
    %6767 = vmatmul.bf16.gmra.mxu0 %v4760
    %v6768 = vpop.f32.mrf.mxu0
    %v6769 = vadd.f32 %v6680, %v6768
    %v6770 = vpop.f32.mrf.mxu0
    %v6771 = vadd.f32 %v6682, %v6770
    %6772 = vmatmul.bf16.gmra.mxu0 %v4764
    %v6773 = vpop.f32.mrf.mxu0
    %v6774 = vadd.f32 %v6685, %v6773
    %v6775 = vpop.f32.mrf.mxu0
    %v6776 = vadd.f32 %v6687, %v6775
    %6777 = vmatmul.bf16.gmra.mxu0 %v4768
    %v6778 = vpop.f32.mrf.mxu0
    %v6779 = vadd.f32 %v6690, %v6778
    %v6780 = vpop.f32.mrf.mxu0
    %v6781 = vadd.f32 %v6692, %v6780
    %6782 = vmatmul.bf16.gmra.mxu0 %v4772
    %v6783 = vpop.f32.mrf.mxu0
    %v6784 = vadd.f32 %v6695, %v6783
    %v6785 = vpop.f32.mrf.mxu0
    %v6786 = vadd.f32 %v6697, %v6785
    %6787 = vmatmul.bf16.gmra.mxu0 %v4776
    %v6788 = vpop.f32.mrf.mxu0
    %v6789 = vadd.f32 %v6700, %v6788
    %v6790 = vpop.f32.mrf.mxu0
    %v6791 = vadd.f32 %v6702, %v6790
    %6792 = vmatmul.bf16.gmra.mxu0 %v4780
    %v6793 = vpop.f32.mrf.mxu0
    %v6794 = vadd.f32 %v6705, %v6793
    %v6795 = vpop.f32.mrf.mxu0
    %v6796 = vadd.f32 %v6707, %v6795
    %6797 = vmatmul.bf16.gmra.mxu0 %v4784
    %v6798 = vpop.f32.mrf.mxu0
    %v6799 = vadd.f32 %v6710, %v6798
    %v6800 = vpop.f32.mrf.mxu0
    %v6801 = vadd.f32 %v6712, %v6800
    %6802 = vmatmul.bf16.gmra.mxu0 %v4788
    %v6803 = vpop.f32.mrf.mxu0
    %v6804 = vadd.f32 %v6715, %v6803
    %v6805 = vpop.f32.mrf.mxu0
    %v6806 = vadd.f32 %v6717, %v6805
    %6807 = vmatmul.bf16.gmra.mxu0 %v4792
    %v6808 = vpop.f32.mrf.mxu0
    %v6809 = vadd.f32 %v6720, %v6808
    %v6810 = vpop.f32.mrf.mxu0
    %v6811 = vadd.f32 %v6722, %v6810
    %6812 = vmatmul.bf16.gmra.mxu0 %v4796
    %v6813 = vpop.f32.mrf.mxu0
    %v6814 = vadd.f32 %v6725, %v6813
    %v6815 = vpop.f32.mrf.mxu0
    %v6816 = vadd.f32 %v6727, %v6815
    %6817 = vmatmul.bf16.gmra.mxu0 %v4800
    %v6818 = vpop.f32.mrf.mxu0
    %v6819 = vadd.f32 %v6730, %v6818
    %v6820 = vpop.f32.mrf.mxu0
    %v6821 = vadd.f32 %v6732, %v6820
    %6822 = vmatmul.bf16.gmra.mxu0 %v4804
    %v6823 = vpop.f32.mrf.mxu0
    %v6824 = vadd.f32 %v6735, %v6823
    %v6825 = vpop.f32.mrf.mxu0
    %v6826 = vadd.f32 %v6737, %v6825
    %6827 = vmatmul.bf16.gmra.mxu0 %v4808
    %v6828 = vpop.f32.mrf.mxu0
    %v6829 = vadd.f32 %v6740, %v6828
    %v6830 = vpop.f32.mrf.mxu0
    %v6831 = vadd.f32 %v6742, %v6830
    %6832 = vmatmul.bf16.gmra.mxu0 %v4812
    %v6833 = vpop.f32.mrf.mxu0
    %v6834 = vadd.f32 %v6745, %v6833
    %v6835 = vpop.f32.mrf.mxu0
    %v6836 = vadd.f32 %v6747, %v6835
    %6837 = vmatmul.bf16.gmra.mxu0 %v4816
    %v6838 = vpop.f32.mrf.mxu0
    %v6839 = vadd.f32 %v6750, %v6838
    %v6840 = vpop.f32.mrf.mxu0
    %v6841 = vadd.f32 %v6752, %v6840
    %6842 = vdwg.mxu0
    %6843 = vmatpush.bf16.msra.mxu0 %v5436
    %6844 = vmatpush.bf16.msra.mxu0 %v5432
    %6845 = vmatpush.bf16.msra.mxu0 %v5428
    %6846 = vmatpush.bf16.msra.mxu0 %v5424
    %6847 = vmatpush.bf16.msra.mxu0 %v5420
    %6848 = vmatpush.bf16.msra.mxu0 %v5416
    %6849 = vmatpush.bf16.msra.mxu0 %v5412
    %6850 = vmatpush.bf16.msra.mxu0 %v5408
    %6851 = vmatmul.bf16.gmra.mxu0 %v4757
    %v6852 = vpop.f32.mrf.mxu0
    %v6853 = vadd.f32 %v6764, %v6852
    %v6854 = vpop.f32.mrf.mxu0
    %v6855 = vadd.f32 %v6766, %v6854
    %6856 = vmatmul.bf16.gmra.mxu0 %v4761
    %v6857 = vpop.f32.mrf.mxu0
    %v6858 = vadd.f32 %v6769, %v6857
    %v6859 = vpop.f32.mrf.mxu0
    %v6860 = vadd.f32 %v6771, %v6859
    %6861 = vmatmul.bf16.gmra.mxu0 %v4765
    %v6862 = vpop.f32.mrf.mxu0
    %v6863 = vadd.f32 %v6774, %v6862
    %v6864 = vpop.f32.mrf.mxu0
    %v6865 = vadd.f32 %v6776, %v6864
    %6866 = vmatmul.bf16.gmra.mxu0 %v4769
    %v6867 = vpop.f32.mrf.mxu0
    %v6868 = vadd.f32 %v6779, %v6867
    %v6869 = vpop.f32.mrf.mxu0
    %v6870 = vadd.f32 %v6781, %v6869
    %6871 = vmatmul.bf16.gmra.mxu0 %v4773
    %v6872 = vpop.f32.mrf.mxu0
    %v6873 = vadd.f32 %v6784, %v6872
    %v6874 = vpop.f32.mrf.mxu0
    %v6875 = vadd.f32 %v6786, %v6874
    %6876 = vmatmul.bf16.gmra.mxu0 %v4777
    %v6877 = vpop.f32.mrf.mxu0
    %v6878 = vadd.f32 %v6789, %v6877
    %v6879 = vpop.f32.mrf.mxu0
    %v6880 = vadd.f32 %v6791, %v6879
    %6881 = vmatmul.bf16.gmra.mxu0 %v4781
    %v6882 = vpop.f32.mrf.mxu0
    %v6883 = vadd.f32 %v6794, %v6882
    %v6884 = vpop.f32.mrf.mxu0
    %v6885 = vadd.f32 %v6796, %v6884
    %6886 = vmatmul.bf16.gmra.mxu0 %v4785
    %v6887 = vpop.f32.mrf.mxu0
    %v6888 = vadd.f32 %v6799, %v6887
    %v6889 = vpop.f32.mrf.mxu0
    %v6890 = vadd.f32 %v6801, %v6889
    %6891 = vmatmul.bf16.gmra.mxu0 %v4789
    %v6892 = vpop.f32.mrf.mxu0
    %v6893 = vadd.f32 %v6804, %v6892
    %v6894 = vpop.f32.mrf.mxu0
    %v6895 = vadd.f32 %v6806, %v6894
    %6896 = vmatmul.bf16.gmra.mxu0 %v4793
    %v6897 = vpop.f32.mrf.mxu0
    %v6898 = vadd.f32 %v6809, %v6897
    %v6899 = vpop.f32.mrf.mxu0
    %v6900 = vadd.f32 %v6811, %v6899
    %6901 = vmatmul.bf16.gmra.mxu0 %v4797
    %v6902 = vpop.f32.mrf.mxu0
    %v6903 = vadd.f32 %v6814, %v6902
    %v6904 = vpop.f32.mrf.mxu0
    %v6905 = vadd.f32 %v6816, %v6904
    %6906 = vmatmul.bf16.gmra.mxu0 %v4801
    %v6907 = vpop.f32.mrf.mxu0
    %v6908 = vadd.f32 %v6819, %v6907
    %v6909 = vpop.f32.mrf.mxu0
    %v6910 = vadd.f32 %v6821, %v6909
    %6911 = vmatmul.bf16.gmra.mxu0 %v4805
    %v6912 = vpop.f32.mrf.mxu0
    %v6913 = vadd.f32 %v6824, %v6912
    %v6914 = vpop.f32.mrf.mxu0
    %v6915 = vadd.f32 %v6826, %v6914
    %6916 = vmatmul.bf16.gmra.mxu0 %v4809
    %v6917 = vpop.f32.mrf.mxu0
    %v6918 = vadd.f32 %v6829, %v6917
    %v6919 = vpop.f32.mrf.mxu0
    %v6920 = vadd.f32 %v6831, %v6919
    %6921 = vmatmul.bf16.gmra.mxu0 %v4813
    %v6922 = vpop.f32.mrf.mxu0
    %v6923 = vadd.f32 %v6834, %v6922
    %v6924 = vpop.f32.mrf.mxu0
    %v6925 = vadd.f32 %v6836, %v6924
    %6926 = vmatmul.bf16.gmra.mxu0 %v4817
    %v6927 = vpop.f32.mrf.mxu0
    %v6928 = vadd.f32 %v6839, %v6927
    %v6929 = vpop.f32.mrf.mxu0
    %v6930 = vadd.f32 %v6841, %v6929
    %6931 = vdwg.mxu0
    %6932 = vmatpush.bf16.msra.mxu0 %v5468
    %6933 = vmatpush.bf16.msra.mxu0 %v5464
    %6934 = vmatpush.bf16.msra.mxu0 %v5460
    %6935 = vmatpush.bf16.msra.mxu0 %v5456
    %6936 = vmatpush.bf16.msra.mxu0 %v5452
    %6937 = vmatpush.bf16.msra.mxu0 %v5448
    %6938 = vmatpush.bf16.msra.mxu0 %v5444
    %6939 = vmatpush.bf16.msra.mxu0 %v5440
    %6940 = vmatmul.bf16.gmra.mxu0 %v4758
    %v6941 = vpop.f32.mrf.mxu0
    %v6942 = vadd.f32 %v6853, %v6941
    %v6943 = vpop.f32.mrf.mxu0
    %v6944 = vadd.f32 %v6855, %v6943
    %6945 = vmatmul.bf16.gmra.mxu0 %v4762
    %v6946 = vpop.f32.mrf.mxu0
    %v6947 = vadd.f32 %v6858, %v6946
    %v6948 = vpop.f32.mrf.mxu0
    %v6949 = vadd.f32 %v6860, %v6948
    %6950 = vmatmul.bf16.gmra.mxu0 %v4766
    %v6951 = vpop.f32.mrf.mxu0
    %v6952 = vadd.f32 %v6863, %v6951
    %v6953 = vpop.f32.mrf.mxu0
    %v6954 = vadd.f32 %v6865, %v6953
    %6955 = vmatmul.bf16.gmra.mxu0 %v4770
    %v6956 = vpop.f32.mrf.mxu0
    %v6957 = vadd.f32 %v6868, %v6956
    %v6958 = vpop.f32.mrf.mxu0
    %v6959 = vadd.f32 %v6870, %v6958
    %6960 = vmatmul.bf16.gmra.mxu0 %v4774
    %v6961 = vpop.f32.mrf.mxu0
    %v6962 = vadd.f32 %v6873, %v6961
    %v6963 = vpop.f32.mrf.mxu0
    %v6964 = vadd.f32 %v6875, %v6963
    %6965 = vmatmul.bf16.gmra.mxu0 %v4778
    %v6966 = vpop.f32.mrf.mxu0
    %v6967 = vadd.f32 %v6878, %v6966
    %v6968 = vpop.f32.mrf.mxu0
    %v6969 = vadd.f32 %v6880, %v6968
    %6970 = vmatmul.bf16.gmra.mxu0 %v4782
    %v6971 = vpop.f32.mrf.mxu0
    %v6972 = vadd.f32 %v6883, %v6971
    %v6973 = vpop.f32.mrf.mxu0
    %v6974 = vadd.f32 %v6885, %v6973
    %6975 = vmatmul.bf16.gmra.mxu0 %v4786
    %v6976 = vpop.f32.mrf.mxu0
    %v6977 = vadd.f32 %v6888, %v6976
    %v6978 = vpop.f32.mrf.mxu0
    %v6979 = vadd.f32 %v6890, %v6978
    %6980 = vmatmul.bf16.gmra.mxu0 %v4790
    %v6981 = vpop.f32.mrf.mxu0
    %v6982 = vadd.f32 %v6893, %v6981
    %v6983 = vpop.f32.mrf.mxu0
    %v6984 = vadd.f32 %v6895, %v6983
    %6985 = vmatmul.bf16.gmra.mxu0 %v4794
    %v6986 = vpop.f32.mrf.mxu0
    %v6987 = vadd.f32 %v6898, %v6986
    %v6988 = vpop.f32.mrf.mxu0
    %v6989 = vadd.f32 %v6900, %v6988
    %6990 = vmatmul.bf16.gmra.mxu0 %v4798
    %v6991 = vpop.f32.mrf.mxu0
    %v6992 = vadd.f32 %v6903, %v6991
    %v6993 = vpop.f32.mrf.mxu0
    %v6994 = vadd.f32 %v6905, %v6993
    %6995 = vmatmul.bf16.gmra.mxu0 %v4802
    %v6996 = vpop.f32.mrf.mxu0
    %v6997 = vadd.f32 %v6908, %v6996
    %v6998 = vpop.f32.mrf.mxu0
    %v6999 = vadd.f32 %v6910, %v6998
    %7000 = vmatmul.bf16.gmra.mxu0 %v4806
    %v7001 = vpop.f32.mrf.mxu0
    %v7002 = vadd.f32 %v6913, %v7001
    %v7003 = vpop.f32.mrf.mxu0
    %v7004 = vadd.f32 %v6915, %v7003
    %7005 = vmatmul.bf16.gmra.mxu0 %v4810
    %v7006 = vpop.f32.mrf.mxu0
    %v7007 = vadd.f32 %v6918, %v7006
    %v7008 = vpop.f32.mrf.mxu0
    %v7009 = vadd.f32 %v6920, %v7008
    %7010 = vmatmul.bf16.gmra.mxu0 %v4814
    %v7011 = vpop.f32.mrf.mxu0
    %v7012 = vadd.f32 %v6923, %v7011
    %v7013 = vpop.f32.mrf.mxu0
    %v7014 = vadd.f32 %v6925, %v7013
    %7015 = vmatmul.bf16.gmra.mxu0 %v4818
    %v7016 = vpop.f32.mrf.mxu0
    %v7017 = vadd.f32 %v6928, %v7016
    %v7018 = vpop.f32.mrf.mxu0
    %v7019 = vadd.f32 %v6930, %v7018
    %7020 = vdwg.mxu0
    %v7021 = vmax.f32 %v5874, 0.0
    %v7022 = vmax.f32 %v6230, 0.0
    %v7023 = vmax.f32 %v6586, 0.0
    %v7024 = vmax.f32 %v6942, 0.0
    %v7025 = vmax.f32 %v5876, 0.0
    %v7026 = vmax.f32 %v6232, 0.0
    %v7027 = vmax.f32 %v6588, 0.0
    %v7028 = vmax.f32 %v6944, 0.0
    %v7029 = vmax.f32 %v5879, 0.0
    %v7030 = vmax.f32 %v6235, 0.0
    %v7031 = vmax.f32 %v6591, 0.0
    %v7032 = vmax.f32 %v6947, 0.0
    %v7033 = vmax.f32 %v5881, 0.0
    %v7034 = vmax.f32 %v6237, 0.0
    %v7035 = vmax.f32 %v6593, 0.0
    %v7036 = vmax.f32 %v6949, 0.0
    %v7037 = vmax.f32 %v5884, 0.0
    %v7038 = vmax.f32 %v6240, 0.0
    %v7039 = vmax.f32 %v6596, 0.0
    %v7040 = vmax.f32 %v6952, 0.0
    %v7041 = vmax.f32 %v5886, 0.0
    %v7042 = vmax.f32 %v6242, 0.0
    %v7043 = vmax.f32 %v6598, 0.0
    %v7044 = vmax.f32 %v6954, 0.0
    %v7045 = vmax.f32 %v5889, 0.0
    %v7046 = vmax.f32 %v6245, 0.0
    %v7047 = vmax.f32 %v6601, 0.0
    %v7048 = vmax.f32 %v6957, 0.0
    %v7049 = vmax.f32 %v5891, 0.0
    %v7050 = vmax.f32 %v6247, 0.0
    %v7051 = vmax.f32 %v6603, 0.0
    %v7052 = vmax.f32 %v6959, 0.0
    %v7053 = vmax.f32 %v5894, 0.0
    %v7054 = vmax.f32 %v6250, 0.0
    %v7055 = vmax.f32 %v6606, 0.0
    %v7056 = vmax.f32 %v6962, 0.0
    %v7057 = vmax.f32 %v5896, 0.0
    %v7058 = vmax.f32 %v6252, 0.0
    %v7059 = vmax.f32 %v6608, 0.0
    %v7060 = vmax.f32 %v6964, 0.0
    %v7061 = vmax.f32 %v5899, 0.0
    %v7062 = vmax.f32 %v6255, 0.0
    %v7063 = vmax.f32 %v6611, 0.0
    %v7064 = vmax.f32 %v6967, 0.0
    %v7065 = vmax.f32 %v5901, 0.0
    %v7066 = vmax.f32 %v6257, 0.0
    %v7067 = vmax.f32 %v6613, 0.0
    %v7068 = vmax.f32 %v6969, 0.0
    %v7069 = vmax.f32 %v5904, 0.0
    %v7070 = vmax.f32 %v6260, 0.0
    %v7071 = vmax.f32 %v6616, 0.0
    %v7072 = vmax.f32 %v6972, 0.0
    %v7073 = vmax.f32 %v5906, 0.0
    %v7074 = vmax.f32 %v6262, 0.0
    %v7075 = vmax.f32 %v6618, 0.0
    %v7076 = vmax.f32 %v6974, 0.0
    %v7077 = vmax.f32 %v5909, 0.0
    %v7078 = vmax.f32 %v6265, 0.0
    %v7079 = vmax.f32 %v6621, 0.0
    %v7080 = vmax.f32 %v6977, 0.0
    %v7081 = vmax.f32 %v5911, 0.0
    %v7082 = vmax.f32 %v6267, 0.0
    %v7083 = vmax.f32 %v6623, 0.0
    %v7084 = vmax.f32 %v6979, 0.0
    %v7085 = vmax.f32 %v5914, 0.0
    %v7086 = vmax.f32 %v6270, 0.0
    %v7087 = vmax.f32 %v6626, 0.0
    %v7088 = vmax.f32 %v6982, 0.0
    %v7089 = vmax.f32 %v5916, 0.0
    %v7090 = vmax.f32 %v6272, 0.0
    %v7091 = vmax.f32 %v6628, 0.0
    %v7092 = vmax.f32 %v6984, 0.0
    %v7093 = vmax.f32 %v5919, 0.0
    %v7094 = vmax.f32 %v6275, 0.0
    %v7095 = vmax.f32 %v6631, 0.0
    %v7096 = vmax.f32 %v6987, 0.0
    %v7097 = vmax.f32 %v5921, 0.0
    %v7098 = vmax.f32 %v6277, 0.0
    %v7099 = vmax.f32 %v6633, 0.0
    %v7100 = vmax.f32 %v6989, 0.0
    %v7101 = vmax.f32 %v5924, 0.0
    %v7102 = vmax.f32 %v6280, 0.0
    %v7103 = vmax.f32 %v6636, 0.0
    %v7104 = vmax.f32 %v6992, 0.0
    %v7105 = vmax.f32 %v5926, 0.0
    %v7106 = vmax.f32 %v6282, 0.0
    %v7107 = vmax.f32 %v6638, 0.0
    %v7108 = vmax.f32 %v6994, 0.0
    %v7109 = vmax.f32 %v5929, 0.0
    %v7110 = vmax.f32 %v6285, 0.0
    %v7111 = vmax.f32 %v6641, 0.0
    %v7112 = vmax.f32 %v6997, 0.0
    %v7113 = vmax.f32 %v5931, 0.0
    %v7114 = vmax.f32 %v6287, 0.0
    %v7115 = vmax.f32 %v6643, 0.0
    %v7116 = vmax.f32 %v6999, 0.0
    %v7117 = vmax.f32 %v5934, 0.0
    %v7118 = vmax.f32 %v6290, 0.0
    %v7119 = vmax.f32 %v6646, 0.0
    %v7120 = vmax.f32 %v7002, 0.0
    %v7121 = vmax.f32 %v5936, 0.0
    %v7122 = vmax.f32 %v6292, 0.0
    %v7123 = vmax.f32 %v6648, 0.0
    %v7124 = vmax.f32 %v7004, 0.0
    %v7125 = vmax.f32 %v5939, 0.0
    %v7126 = vmax.f32 %v6295, 0.0
    %v7127 = vmax.f32 %v6651, 0.0
    %v7128 = vmax.f32 %v7007, 0.0
    %v7129 = vmax.f32 %v5941, 0.0
    %v7130 = vmax.f32 %v6297, 0.0
    %v7131 = vmax.f32 %v6653, 0.0
    %v7132 = vmax.f32 %v7009, 0.0
    %v7133 = vmax.f32 %v5944, 0.0
    %v7134 = vmax.f32 %v6300, 0.0
    %v7135 = vmax.f32 %v6656, 0.0
    %v7136 = vmax.f32 %v7012, 0.0
    %v7137 = vmax.f32 %v5946, 0.0
    %v7138 = vmax.f32 %v6302, 0.0
    %v7139 = vmax.f32 %v6658, 0.0
    %v7140 = vmax.f32 %v7014, 0.0
    %v7141 = vmax.f32 %v5949, 0.0
    %v7142 = vmax.f32 %v6305, 0.0
    %v7143 = vmax.f32 %v6661, 0.0
    %v7144 = vmax.f32 %v7017, 0.0
    %v7145 = vmax.f32 %v5951, 0.0
    %v7146 = vmax.f32 %v6307, 0.0
    %v7147 = vmax.f32 %v6663, 0.0
    %v7148 = vmax.f32 %v7019, 0.0
    %v7149 = vpack.c.bf16 %v7025, %v7021
    %v7150 = vpack.c.bf16 %v7026, %v7022
    %v7151 = vpack.c.bf16 %v7027, %v7023
    %v7152 = vpack.c.bf16 %v7028, %v7024
    %v7153 = vpack.c.bf16 %v7033, %v7029
    %v7154 = vpack.c.bf16 %v7034, %v7030
    %v7155 = vpack.c.bf16 %v7035, %v7031
    %v7156 = vpack.c.bf16 %v7036, %v7032
    %v7157 = vpack.c.bf16 %v7041, %v7037
    %v7158 = vpack.c.bf16 %v7042, %v7038
    %v7159 = vpack.c.bf16 %v7043, %v7039
    %v7160 = vpack.c.bf16 %v7044, %v7040
    %v7161 = vpack.c.bf16 %v7049, %v7045
    %v7162 = vpack.c.bf16 %v7050, %v7046
    %v7163 = vpack.c.bf16 %v7051, %v7047
    %v7164 = vpack.c.bf16 %v7052, %v7048
    %v7165 = vpack.c.bf16 %v7057, %v7053
    %v7166 = vpack.c.bf16 %v7058, %v7054
    %v7167 = vpack.c.bf16 %v7059, %v7055
    %v7168 = vpack.c.bf16 %v7060, %v7056
    %v7169 = vpack.c.bf16 %v7065, %v7061
    %v7170 = vpack.c.bf16 %v7066, %v7062
    %v7171 = vpack.c.bf16 %v7067, %v7063
    %v7172 = vpack.c.bf16 %v7068, %v7064
    %v7173 = vpack.c.bf16 %v7073, %v7069
    %v7174 = vpack.c.bf16 %v7074, %v7070
    %v7175 = vpack.c.bf16 %v7075, %v7071
    %v7176 = vpack.c.bf16 %v7076, %v7072
    %v7177 = vpack.c.bf16 %v7081, %v7077
    %v7178 = vpack.c.bf16 %v7082, %v7078
    %v7179 = vpack.c.bf16 %v7083, %v7079
    %v7180 = vpack.c.bf16 %v7084, %v7080
    %v7181 = vpack.c.bf16 %v7089, %v7085
    %v7182 = vpack.c.bf16 %v7090, %v7086
    %v7183 = vpack.c.bf16 %v7091, %v7087
    %v7184 = vpack.c.bf16 %v7092, %v7088
    %v7185 = vpack.c.bf16 %v7097, %v7093
    %v7186 = vpack.c.bf16 %v7098, %v7094
    %v7187 = vpack.c.bf16 %v7099, %v7095
    %v7188 = vpack.c.bf16 %v7100, %v7096
    %v7189 = vpack.c.bf16 %v7105, %v7101
    %v7190 = vpack.c.bf16 %v7106, %v7102
    %v7191 = vpack.c.bf16 %v7107, %v7103
    %v7192 = vpack.c.bf16 %v7108, %v7104
    %v7193 = vpack.c.bf16 %v7113, %v7109
    %v7194 = vpack.c.bf16 %v7114, %v7110
    %v7195 = vpack.c.bf16 %v7115, %v7111
    %v7196 = vpack.c.bf16 %v7116, %v7112
    %v7197 = vpack.c.bf16 %v7121, %v7117
    %v7198 = vpack.c.bf16 %v7122, %v7118
    %v7199 = vpack.c.bf16 %v7123, %v7119
    %v7200 = vpack.c.bf16 %v7124, %v7120
    %v7201 = vpack.c.bf16 %v7129, %v7125
    %v7202 = vpack.c.bf16 %v7130, %v7126
    %v7203 = vpack.c.bf16 %v7131, %v7127
    %v7204 = vpack.c.bf16 %v7132, %v7128
    %v7205 = vpack.c.bf16 %v7137, %v7133
    %v7206 = vpack.c.bf16 %v7138, %v7134
    %v7207 = vpack.c.bf16 %v7139, %v7135
    %v7208 = vpack.c.bf16 %v7140, %v7136
    %v7209 = vpack.c.bf16 %v7145, %v7141
    %v7210 = vpack.c.bf16 %v7146, %v7142
    %v7211 = vpack.c.bf16 %v7147, %v7143
    %v7212 = vpack.c.bf16 %v7148, %v7144
    %v7213 = vld [vmem:[#allocation7] sm:$0xf]
    %v7214 = vld [vmem:[#allocation7 + $0x4] sm:$0xf]
    %v7215 = vld [vmem:[#allocation7 + $0x8] sm:$0xf]
    %v7216 = vld [vmem:[#allocation7 + $0xc] sm:$0xf]
    %v7217 = vld [vmem:[#allocation7 + $0x10] sm:$0xf]
    %v7218 = vld [vmem:[#allocation7 + $0x14] sm:$0xf]
    %v7219 = vld [vmem:[#allocation7 + $0x18] sm:$0xf]
    %v7220 = vld [vmem:[#allocation7 + $0x1c] sm:$0xf]
    %v7221 = vld [vmem:[#allocation7 + $0x20] sm:$0xf]
    %v7222 = vld [vmem:[#allocation7 + $0x24] sm:$0xf]
    %v7223 = vld [vmem:[#allocation7 + $0x28] sm:$0xf]
    %v7224 = vld [vmem:[#allocation7 + $0x2c] sm:$0xf]
    %v7225 = vld [vmem:[#allocation7 + $0x30] sm:$0xf]
    %v7226 = vld [vmem:[#allocation7 + $0x34] sm:$0xf]
    %v7227 = vld [vmem:[#allocation7 + $0x38] sm:$0xf]
    %v7228 = vld [vmem:[#allocation7 + $0x3c] sm:$0xf]
    %v7229 = vld [vmem:[#allocation7 + $0x40] sm:$0xf]
    %v7230 = vld [vmem:[#allocation7 + $0x44] sm:$0xf]
    %v7231 = vld [vmem:[#allocation7 + $0x48] sm:$0xf]
    %v7232 = vld [vmem:[#allocation7 + $0x4c] sm:$0xf]
    %v7233 = vld [vmem:[#allocation7 + $0x50] sm:$0xf]
    %v7234 = vld [vmem:[#allocation7 + $0x54] sm:$0xf]
    %v7235 = vld [vmem:[#allocation7 + $0x58] sm:$0xf]
    %v7236 = vld [vmem:[#allocation7 + $0x5c] sm:$0xf]
    %v7237 = vld [vmem:[#allocation7 + $0x60] sm:$0xf]
    %v7238 = vld [vmem:[#allocation7 + $0x64] sm:$0xf]
    %v7239 = vld [vmem:[#allocation7 + $0x68] sm:$0xf]
    %v7240 = vld [vmem:[#allocation7 + $0x6c] sm:$0xf]
    %v7241 = vld [vmem:[#allocation7 + $0x70] sm:$0xf]
    %v7242 = vld [vmem:[#allocation7 + $0x74] sm:$0xf]
    %v7243 = vld [vmem:[#allocation7 + $0x78] sm:$0xf]
    %v7244 = vld [vmem:[#allocation7 + $0x7c] sm:$0xf]
    %v7245 = vld [vmem:[#allocation7 + $0x80] sm:$0xf]
    %v7246 = vld [vmem:[#allocation7 + $0x84] sm:$0xf]
    %v7247 = vld [vmem:[#allocation7 + $0x88] sm:$0xf]
    %v7248 = vld [vmem:[#allocation7 + $0x8c] sm:$0xf]
    %v7249 = vld [vmem:[#allocation7 + $0x90] sm:$0xf]
    %v7250 = vld [vmem:[#allocation7 + $0x94] sm:$0xf]
    %v7251 = vld [vmem:[#allocation7 + $0x98] sm:$0xf]
    %v7252 = vld [vmem:[#allocation7 + $0x9c] sm:$0xf]
    %v7253 = vld [vmem:[#allocation7 + $0xa0] sm:$0xf]
    %v7254 = vld [vmem:[#allocation7 + $0xa4] sm:$0xf]
    %v7255 = vld [vmem:[#allocation7 + $0xa8] sm:$0xf]
    %v7256 = vld [vmem:[#allocation7 + $0xac] sm:$0xf]
    %v7257 = vld [vmem:[#allocation7 + $0xb0] sm:$0xf]
    %v7258 = vld [vmem:[#allocation7 + $0xb4] sm:$0xf]
    %v7259 = vld [vmem:[#allocation7 + $0xb8] sm:$0xf]
    %v7260 = vld [vmem:[#allocation7 + $0xbc] sm:$0xf]
    %v7261 = vld [vmem:[#allocation7 + $0xc0] sm:$0xf]
    %v7262 = vld [vmem:[#allocation7 + $0xc4] sm:$0xf]
    %v7263 = vld [vmem:[#allocation7 + $0xc8] sm:$0xf]
    %v7264 = vld [vmem:[#allocation7 + $0xcc] sm:$0xf]
    %v7265 = vld [vmem:[#allocation7 + $0xd0] sm:$0xf]
    %v7266 = vld [vmem:[#allocation7 + $0xd4] sm:$0xf]
    %v7267 = vld [vmem:[#allocation7 + $0xd8] sm:$0xf]
    %v7268 = vld [vmem:[#allocation7 + $0xdc] sm:$0xf]
    %v7269 = vld [vmem:[#allocation7 + $0xe0] sm:$0xf]
    %v7270 = vld [vmem:[#allocation7 + $0xe4] sm:$0xf]
    %v7271 = vld [vmem:[#allocation7 + $0xe8] sm:$0xf]
    %v7272 = vld [vmem:[#allocation7 + $0xec] sm:$0xf]
    %v7273 = vld [vmem:[#allocation7 + $0xf0] sm:$0xf]
    %v7274 = vld [vmem:[#allocation7 + $0xf4] sm:$0xf]
    %v7275 = vld [vmem:[#allocation7 + $0xf8] sm:$0xf]
    %v7276 = vld [vmem:[#allocation7 + $0xfc] sm:$0xf]
    %v7277 = vld [vmem:[%s6] sm:$0x1]
    %v7279 = vperm.slane %v7277, 0
    %v7345 = vunpack.c.l.b16 %v7213
    %v7346 = vunpack.c.l.b16 %v7214
    %v7347 = vunpack.c.l.b16 %v7215
    %v7348 = vunpack.c.l.b16 %v7216
    %v7349 = vunpack.c.l.b16 %v7217
    %v7350 = vunpack.c.l.b16 %v7218
    %v7351 = vunpack.c.l.b16 %v7219
    %v7352 = vunpack.c.l.b16 %v7220
    %v7353 = vunpack.c.l.b16 %v7221
    %v7354 = vunpack.c.l.b16 %v7222
    %v7355 = vunpack.c.l.b16 %v7223
    %v7356 = vunpack.c.l.b16 %v7224
    %v7357 = vunpack.c.l.b16 %v7225
    %v7358 = vunpack.c.l.b16 %v7226
    %v7359 = vunpack.c.l.b16 %v7227
    %v7360 = vunpack.c.l.b16 %v7228
    %v7361 = vunpack.c.l.b16 %v7229
    %v7362 = vunpack.c.l.b16 %v7230
    %v7363 = vunpack.c.l.b16 %v7231
    %v7364 = vunpack.c.l.b16 %v7232
    %v7365 = vunpack.c.l.b16 %v7233
    %v7366 = vunpack.c.l.b16 %v7234
    %v7367 = vunpack.c.l.b16 %v7235
    %v7368 = vunpack.c.l.b16 %v7236
    %v7369 = vunpack.c.l.b16 %v7237
    %v7370 = vunpack.c.l.b16 %v7238
    %v7371 = vunpack.c.l.b16 %v7239
    %v7372 = vunpack.c.l.b16 %v7240
    %v7373 = vunpack.c.l.b16 %v7241
    %v7374 = vunpack.c.l.b16 %v7242
    %v7375 = vunpack.c.l.b16 %v7243
    %v7376 = vunpack.c.l.b16 %v7244
    %v7377 = vunpack.c.l.b16 %v7245
    %v7378 = vunpack.c.l.b16 %v7246
    %v7379 = vunpack.c.l.b16 %v7247
    %v7380 = vunpack.c.l.b16 %v7248
    %v7381 = vunpack.c.l.b16 %v7249
    %v7382 = vunpack.c.l.b16 %v7250
    %v7383 = vunpack.c.l.b16 %v7251
    %v7384 = vunpack.c.l.b16 %v7252
    %v7385 = vunpack.c.l.b16 %v7253
    %v7386 = vunpack.c.l.b16 %v7254
    %v7387 = vunpack.c.l.b16 %v7255
    %v7388 = vunpack.c.l.b16 %v7256
    %v7389 = vunpack.c.l.b16 %v7257
    %v7390 = vunpack.c.l.b16 %v7258
    %v7391 = vunpack.c.l.b16 %v7259
    %v7392 = vunpack.c.l.b16 %v7260
    %v7393 = vunpack.c.l.b16 %v7261
    %v7394 = vunpack.c.l.b16 %v7262
    %v7395 = vunpack.c.l.b16 %v7263
    %v7396 = vunpack.c.l.b16 %v7264
    %v7397 = vunpack.c.l.b16 %v7265
    %v7398 = vunpack.c.l.b16 %v7266
    %v7399 = vunpack.c.l.b16 %v7267
    %v7400 = vunpack.c.l.b16 %v7268
    %v7401 = vunpack.c.l.b16 %v7269
    %v7402 = vunpack.c.l.b16 %v7270
    %v7403 = vunpack.c.l.b16 %v7271
    %v7404 = vunpack.c.l.b16 %v7272
    %v7405 = vunpack.c.l.b16 %v7273
    %v7406 = vunpack.c.l.b16 %v7274
    %v7407 = vunpack.c.l.b16 %v7275
    %v7408 = vunpack.c.l.b16 %v7276
    %v7409 = vpack.c.b16 %v7346, %v7345
    %v7410 = vpack.c.b16 %v7348, %v7347
    %v7411 = vpack.c.b16 %v7350, %v7349
    %v7412 = vpack.c.b16 %v7352, %v7351
    %v7413 = vpack.c.b16 %v7354, %v7353
    %v7414 = vpack.c.b16 %v7356, %v7355
    %v7415 = vpack.c.b16 %v7358, %v7357
    %v7416 = vpack.c.b16 %v7360, %v7359
    %v7417 = vpack.c.b16 %v7362, %v7361
    %v7418 = vpack.c.b16 %v7364, %v7363
    %v7419 = vpack.c.b16 %v7366, %v7365
    %v7420 = vpack.c.b16 %v7368, %v7367
    %v7421 = vpack.c.b16 %v7370, %v7369
    %v7422 = vpack.c.b16 %v7372, %v7371
    %v7423 = vpack.c.b16 %v7374, %v7373
    %v7424 = vpack.c.b16 %v7376, %v7375
    %v7425 = vpack.c.b16 %v7378, %v7377
    %v7426 = vpack.c.b16 %v7380, %v7379
    %v7427 = vpack.c.b16 %v7382, %v7381
    %v7428 = vpack.c.b16 %v7384, %v7383
    %v7429 = vpack.c.b16 %v7386, %v7385
    %v7430 = vpack.c.b16 %v7388, %v7387
    %v7431 = vpack.c.b16 %v7390, %v7389
    %v7432 = vpack.c.b16 %v7392, %v7391
    %v7433 = vpack.c.b16 %v7394, %v7393
    %v7434 = vpack.c.b16 %v7396, %v7395
    %v7435 = vpack.c.b16 %v7398, %v7397
    %v7436 = vpack.c.b16 %v7400, %v7399
    %v7437 = vpack.c.b16 %v7402, %v7401
    %v7438 = vpack.c.b16 %v7404, %v7403
    %v7439 = vpack.c.b16 %v7406, %v7405
    %v7440 = vpack.c.b16 %v7408, %v7407
    %7473 = vmatpush.bf16.msra.mxu0 %v7416
    %7474 = vmatpush.bf16.msra.mxu0 %v7415
    %7475 = vmatpush.bf16.msra.mxu0 %v7414
    %7476 = vmatpush.bf16.msra.mxu0 %v7413
    %7477 = vmatpush.bf16.msra.mxu0 %v7412
    %7478 = vmatpush.bf16.msra.mxu0 %v7411
    %7479 = vmatpush.bf16.msra.mxu0 %v7410
    %7480 = vmatpush.bf16.msra.mxu0 %v7409
    %7481 = vmatmul.bf16.gmra.mxu0 %v7149
    %v7482 = vpop.f32.mrf.mxu0
    %v7483 = vadd.f32 %v7279, %v7482
    %v7484 = vpop.f32.mrf.mxu0
    %v7485 = vadd.f32 %v7279, %v7484
    %7486 = vmatmul.bf16.gmra.mxu0 %v7153
    %v7487 = vpop.f32.mrf.mxu0
    %v7488 = vadd.f32 %v7279, %v7487
    %v7489 = vpop.f32.mrf.mxu0
    %v7490 = vadd.f32 %v7279, %v7489
    %7491 = vmatmul.bf16.gmra.mxu0 %v7157
    %v7492 = vpop.f32.mrf.mxu0
    %v7493 = vadd.f32 %v7279, %v7492
    %v7494 = vpop.f32.mrf.mxu0
    %v7495 = vadd.f32 %v7279, %v7494
    %7496 = vmatmul.bf16.gmra.mxu0 %v7161
    %v7497 = vpop.f32.mrf.mxu0
    %v7498 = vadd.f32 %v7279, %v7497
    %v7499 = vpop.f32.mrf.mxu0
    %v7500 = vadd.f32 %v7279, %v7499
    %7501 = vmatmul.bf16.gmra.mxu0 %v7165
    %v7502 = vpop.f32.mrf.mxu0
    %v7503 = vadd.f32 %v7279, %v7502
    %v7504 = vpop.f32.mrf.mxu0
    %v7505 = vadd.f32 %v7279, %v7504
    %7506 = vmatmul.bf16.gmra.mxu0 %v7169
    %v7507 = vpop.f32.mrf.mxu0
    %v7508 = vadd.f32 %v7279, %v7507
    %v7509 = vpop.f32.mrf.mxu0
    %v7510 = vadd.f32 %v7279, %v7509
    %7511 = vmatmul.bf16.gmra.mxu0 %v7173
    %v7512 = vpop.f32.mrf.mxu0
    %v7513 = vadd.f32 %v7279, %v7512
    %v7514 = vpop.f32.mrf.mxu0
    %v7515 = vadd.f32 %v7279, %v7514
    %7516 = vmatmul.bf16.gmra.mxu0 %v7177
    %v7517 = vpop.f32.mrf.mxu0
    %v7518 = vadd.f32 %v7279, %v7517
    %v7519 = vpop.f32.mrf.mxu0
    %v7520 = vadd.f32 %v7279, %v7519
    %7521 = vmatmul.bf16.gmra.mxu0 %v7181
    %v7522 = vpop.f32.mrf.mxu0
    %v7523 = vadd.f32 %v7279, %v7522
    %v7524 = vpop.f32.mrf.mxu0
    %v7525 = vadd.f32 %v7279, %v7524
    %7526 = vmatmul.bf16.gmra.mxu0 %v7185
    %v7527 = vpop.f32.mrf.mxu0
    %v7528 = vadd.f32 %v7279, %v7527
    %v7529 = vpop.f32.mrf.mxu0
    %v7530 = vadd.f32 %v7279, %v7529
    %7531 = vmatmul.bf16.gmra.mxu0 %v7189
    %v7532 = vpop.f32.mrf.mxu0
    %v7533 = vadd.f32 %v7279, %v7532
    %v7534 = vpop.f32.mrf.mxu0
    %v7535 = vadd.f32 %v7279, %v7534
    %7536 = vmatmul.bf16.gmra.mxu0 %v7193
    %v7537 = vpop.f32.mrf.mxu0
    %v7538 = vadd.f32 %v7279, %v7537
    %v7539 = vpop.f32.mrf.mxu0
    %v7540 = vadd.f32 %v7279, %v7539
    %7541 = vmatmul.bf16.gmra.mxu0 %v7197
    %v7542 = vpop.f32.mrf.mxu0
    %v7543 = vadd.f32 %v7279, %v7542
    %v7544 = vpop.f32.mrf.mxu0
    %v7545 = vadd.f32 %v7279, %v7544
    %7546 = vmatmul.bf16.gmra.mxu0 %v7201
    %v7547 = vpop.f32.mrf.mxu0
    %v7548 = vadd.f32 %v7279, %v7547
    %v7549 = vpop.f32.mrf.mxu0
    %v7550 = vadd.f32 %v7279, %v7549
    %7551 = vmatmul.bf16.gmra.mxu0 %v7205
    %v7552 = vpop.f32.mrf.mxu0
    %v7553 = vadd.f32 %v7279, %v7552
    %v7554 = vpop.f32.mrf.mxu0
    %v7555 = vadd.f32 %v7279, %v7554
    %7556 = vmatmul.bf16.gmra.mxu0 %v7209
    %v7557 = vpop.f32.mrf.mxu0
    %v7558 = vadd.f32 %v7279, %v7557
    %v7559 = vpop.f32.mrf.mxu0
    %v7560 = vadd.f32 %v7279, %v7559
    %7561 = vdwg.mxu0
    %7562 = vmatpush.bf16.msra.mxu0 %v7424
    %7563 = vmatpush.bf16.msra.mxu0 %v7423
    %7564 = vmatpush.bf16.msra.mxu0 %v7422
    %7565 = vmatpush.bf16.msra.mxu0 %v7421
    %7566 = vmatpush.bf16.msra.mxu0 %v7420
    %7567 = vmatpush.bf16.msra.mxu0 %v7419
    %7568 = vmatpush.bf16.msra.mxu0 %v7418
    %7569 = vmatpush.bf16.msra.mxu0 %v7417
    %7570 = vmatmul.bf16.gmra.mxu0 %v7150
    %v7571 = vpop.f32.mrf.mxu0
    %v7572 = vadd.f32 %v7483, %v7571
    %v7573 = vpop.f32.mrf.mxu0
    %v7574 = vadd.f32 %v7485, %v7573
    %7575 = vmatmul.bf16.gmra.mxu0 %v7154
    %v7576 = vpop.f32.mrf.mxu0
    %v7577 = vadd.f32 %v7488, %v7576
    %v7578 = vpop.f32.mrf.mxu0
    %v7579 = vadd.f32 %v7490, %v7578
    %7580 = vmatmul.bf16.gmra.mxu0 %v7158
    %v7581 = vpop.f32.mrf.mxu0
    %v7582 = vadd.f32 %v7493, %v7581
    %v7583 = vpop.f32.mrf.mxu0
    %v7584 = vadd.f32 %v7495, %v7583
    %7585 = vmatmul.bf16.gmra.mxu0 %v7162
    %v7586 = vpop.f32.mrf.mxu0
    %v7587 = vadd.f32 %v7498, %v7586
    %v7588 = vpop.f32.mrf.mxu0
    %v7589 = vadd.f32 %v7500, %v7588
    %7590 = vmatmul.bf16.gmra.mxu0 %v7166
    %v7591 = vpop.f32.mrf.mxu0
    %v7592 = vadd.f32 %v7503, %v7591
    %v7593 = vpop.f32.mrf.mxu0
    %v7594 = vadd.f32 %v7505, %v7593
    %7595 = vmatmul.bf16.gmra.mxu0 %v7170
    %v7596 = vpop.f32.mrf.mxu0
    %v7597 = vadd.f32 %v7508, %v7596
    %v7598 = vpop.f32.mrf.mxu0
    %v7599 = vadd.f32 %v7510, %v7598
    %7600 = vmatmul.bf16.gmra.mxu0 %v7174
    %v7601 = vpop.f32.mrf.mxu0
    %v7602 = vadd.f32 %v7513, %v7601
    %v7603 = vpop.f32.mrf.mxu0
    %v7604 = vadd.f32 %v7515, %v7603
    %7605 = vmatmul.bf16.gmra.mxu0 %v7178
    %v7606 = vpop.f32.mrf.mxu0
    %v7607 = vadd.f32 %v7518, %v7606
    %v7608 = vpop.f32.mrf.mxu0
    %v7609 = vadd.f32 %v7520, %v7608
    %7610 = vmatmul.bf16.gmra.mxu0 %v7182
    %v7611 = vpop.f32.mrf.mxu0
    %v7612 = vadd.f32 %v7523, %v7611
    %v7613 = vpop.f32.mrf.mxu0
    %v7614 = vadd.f32 %v7525, %v7613
    %7615 = vmatmul.bf16.gmra.mxu0 %v7186
    %v7616 = vpop.f32.mrf.mxu0
    %v7617 = vadd.f32 %v7528, %v7616
    %v7618 = vpop.f32.mrf.mxu0
    %v7619 = vadd.f32 %v7530, %v7618
    %7620 = vmatmul.bf16.gmra.mxu0 %v7190
    %v7621 = vpop.f32.mrf.mxu0
    %v7622 = vadd.f32 %v7533, %v7621
    %v7623 = vpop.f32.mrf.mxu0
    %v7624 = vadd.f32 %v7535, %v7623
    %7625 = vmatmul.bf16.gmra.mxu0 %v7194
    %v7626 = vpop.f32.mrf.mxu0
    %v7627 = vadd.f32 %v7538, %v7626
    %v7628 = vpop.f32.mrf.mxu0
    %v7629 = vadd.f32 %v7540, %v7628
    %7630 = vmatmul.bf16.gmra.mxu0 %v7198
    %v7631 = vpop.f32.mrf.mxu0
    %v7632 = vadd.f32 %v7543, %v7631
    %v7633 = vpop.f32.mrf.mxu0
    %v7634 = vadd.f32 %v7545, %v7633
    %7635 = vmatmul.bf16.gmra.mxu0 %v7202
    %v7636 = vpop.f32.mrf.mxu0
    %v7637 = vadd.f32 %v7548, %v7636
    %v7638 = vpop.f32.mrf.mxu0
    %v7639 = vadd.f32 %v7550, %v7638
    %7640 = vmatmul.bf16.gmra.mxu0 %v7206
    %v7641 = vpop.f32.mrf.mxu0
    %v7642 = vadd.f32 %v7553, %v7641
    %v7643 = vpop.f32.mrf.mxu0
    %v7644 = vadd.f32 %v7555, %v7643
    %7645 = vmatmul.bf16.gmra.mxu0 %v7210
    %v7646 = vpop.f32.mrf.mxu0
    %v7647 = vadd.f32 %v7558, %v7646
    %v7648 = vpop.f32.mrf.mxu0
    %v7649 = vadd.f32 %v7560, %v7648
    %7650 = vdwg.mxu0
    %7651 = vmatpush.bf16.msra.mxu0 %v7432
    %7652 = vmatpush.bf16.msra.mxu0 %v7431
    %7653 = vmatpush.bf16.msra.mxu0 %v7430
    %7654 = vmatpush.bf16.msra.mxu0 %v7429
    %7655 = vmatpush.bf16.msra.mxu0 %v7428
    %7656 = vmatpush.bf16.msra.mxu0 %v7427
    %7657 = vmatpush.bf16.msra.mxu0 %v7426
    %7658 = vmatpush.bf16.msra.mxu0 %v7425
    %7659 = vmatmul.bf16.gmra.mxu0 %v7151
    %v7660 = vpop.f32.mrf.mxu0
    %v7661 = vadd.f32 %v7572, %v7660
    %v7662 = vpop.f32.mrf.mxu0
    %v7663 = vadd.f32 %v7574, %v7662
    %7664 = vmatmul.bf16.gmra.mxu0 %v7155
    %v7665 = vpop.f32.mrf.mxu0
    %v7666 = vadd.f32 %v7577, %v7665
    %v7667 = vpop.f32.mrf.mxu0
    %v7668 = vadd.f32 %v7579, %v7667
    %7669 = vmatmul.bf16.gmra.mxu0 %v7159
    %v7670 = vpop.f32.mrf.mxu0
    %v7671 = vadd.f32 %v7582, %v7670
    %v7672 = vpop.f32.mrf.mxu0
    %v7673 = vadd.f32 %v7584, %v7672
    %7674 = vmatmul.bf16.gmra.mxu0 %v7163
    %v7675 = vpop.f32.mrf.mxu0
    %v7676 = vadd.f32 %v7587, %v7675
    %v7677 = vpop.f32.mrf.mxu0
    %v7678 = vadd.f32 %v7589, %v7677
    %7679 = vmatmul.bf16.gmra.mxu0 %v7167
    %v7680 = vpop.f32.mrf.mxu0
    %v7681 = vadd.f32 %v7592, %v7680
    %v7682 = vpop.f32.mrf.mxu0
    %v7683 = vadd.f32 %v7594, %v7682
    %7684 = vmatmul.bf16.gmra.mxu0 %v7171
    %v7685 = vpop.f32.mrf.mxu0
    %v7686 = vadd.f32 %v7597, %v7685
    %v7687 = vpop.f32.mrf.mxu0
    %v7688 = vadd.f32 %v7599, %v7687
    %7689 = vmatmul.bf16.gmra.mxu0 %v7175
    %v7690 = vpop.f32.mrf.mxu0
    %v7691 = vadd.f32 %v7602, %v7690
    %v7692 = vpop.f32.mrf.mxu0
    %v7693 = vadd.f32 %v7604, %v7692
    %7694 = vmatmul.bf16.gmra.mxu0 %v7179
    %v7695 = vpop.f32.mrf.mxu0
    %v7696 = vadd.f32 %v7607, %v7695
    %v7697 = vpop.f32.mrf.mxu0
    %v7698 = vadd.f32 %v7609, %v7697
    %7699 = vmatmul.bf16.gmra.mxu0 %v7183
    %v7700 = vpop.f32.mrf.mxu0
    %v7701 = vadd.f32 %v7612, %v7700
    %v7702 = vpop.f32.mrf.mxu0
    %v7703 = vadd.f32 %v7614, %v7702
    %7704 = vmatmul.bf16.gmra.mxu0 %v7187
    %v7705 = vpop.f32.mrf.mxu0
    %v7706 = vadd.f32 %v7617, %v7705
    %v7707 = vpop.f32.mrf.mxu0
    %v7708 = vadd.f32 %v7619, %v7707
    %7709 = vmatmul.bf16.gmra.mxu0 %v7191
    %v7710 = vpop.f32.mrf.mxu0
    %v7711 = vadd.f32 %v7622, %v7710
    %v7712 = vpop.f32.mrf.mxu0
    %v7713 = vadd.f32 %v7624, %v7712
    %7714 = vmatmul.bf16.gmra.mxu0 %v7195
    %v7715 = vpop.f32.mrf.mxu0
    %v7716 = vadd.f32 %v7627, %v7715
    %v7717 = vpop.f32.mrf.mxu0
    %v7718 = vadd.f32 %v7629, %v7717
    %7719 = vmatmul.bf16.gmra.mxu0 %v7199
    %v7720 = vpop.f32.mrf.mxu0
    %v7721 = vadd.f32 %v7632, %v7720
    %v7722 = vpop.f32.mrf.mxu0
    %v7723 = vadd.f32 %v7634, %v7722
    %7724 = vmatmul.bf16.gmra.mxu0 %v7203
    %v7725 = vpop.f32.mrf.mxu0
    %v7726 = vadd.f32 %v7637, %v7725
    %v7727 = vpop.f32.mrf.mxu0
    %v7728 = vadd.f32 %v7639, %v7727
    %7729 = vmatmul.bf16.gmra.mxu0 %v7207
    %v7730 = vpop.f32.mrf.mxu0
    %v7731 = vadd.f32 %v7642, %v7730
    %v7732 = vpop.f32.mrf.mxu0
    %v7733 = vadd.f32 %v7644, %v7732
    %7734 = vmatmul.bf16.gmra.mxu0 %v7211
    %v7735 = vpop.f32.mrf.mxu0
    %v7736 = vadd.f32 %v7647, %v7735
    %v7737 = vpop.f32.mrf.mxu0
    %v7738 = vadd.f32 %v7649, %v7737
    %7739 = vdwg.mxu0
    %7740 = vmatpush.bf16.msra.mxu0 %v7440
    %7741 = vmatpush.bf16.msra.mxu0 %v7439
    %7742 = vmatpush.bf16.msra.mxu0 %v7438
    %7743 = vmatpush.bf16.msra.mxu0 %v7437
    %7744 = vmatpush.bf16.msra.mxu0 %v7436
    %7745 = vmatpush.bf16.msra.mxu0 %v7435
    %7746 = vmatpush.bf16.msra.mxu0 %v7434
    %7747 = vmatpush.bf16.msra.mxu0 %v7433
    %7748 = vmatmul.bf16.gmra.mxu0 %v7152
    %v7749 = vpop.f32.mrf.mxu0
    %v7750 = vadd.f32 %v7661, %v7749
    %v7751 = vpop.f32.mrf.mxu0
    %v7752 = vadd.f32 %v7663, %v7751
    %7753 = vmatmul.bf16.gmra.mxu0 %v7156
    %v7754 = vpop.f32.mrf.mxu0
    %v7755 = vadd.f32 %v7666, %v7754
    %v7756 = vpop.f32.mrf.mxu0
    %v7757 = vadd.f32 %v7668, %v7756
    %7758 = vmatmul.bf16.gmra.mxu0 %v7160
    %v7759 = vpop.f32.mrf.mxu0
    %v7760 = vadd.f32 %v7671, %v7759
    %v7761 = vpop.f32.mrf.mxu0
    %v7762 = vadd.f32 %v7673, %v7761
    %7763 = vmatmul.bf16.gmra.mxu0 %v7164
    %v7764 = vpop.f32.mrf.mxu0
    %v7765 = vadd.f32 %v7676, %v7764
    %v7766 = vpop.f32.mrf.mxu0
    %v7767 = vadd.f32 %v7678, %v7766
    %7768 = vmatmul.bf16.gmra.mxu0 %v7168
    %v7769 = vpop.f32.mrf.mxu0
    %v7770 = vadd.f32 %v7681, %v7769
    %v7771 = vpop.f32.mrf.mxu0
    %v7772 = vadd.f32 %v7683, %v7771
    %7773 = vmatmul.bf16.gmra.mxu0 %v7172
    %v7774 = vpop.f32.mrf.mxu0
    %v7775 = vadd.f32 %v7686, %v7774
    %v7776 = vpop.f32.mrf.mxu0
    %v7777 = vadd.f32 %v7688, %v7776
    %7778 = vmatmul.bf16.gmra.mxu0 %v7176
    %v7779 = vpop.f32.mrf.mxu0
    %v7780 = vadd.f32 %v7691, %v7779
    %v7781 = vpop.f32.mrf.mxu0
    %v7782 = vadd.f32 %v7693, %v7781
    %7783 = vmatmul.bf16.gmra.mxu0 %v7180
    %v7784 = vpop.f32.mrf.mxu0
    %v7785 = vadd.f32 %v7696, %v7784
    %v7786 = vpop.f32.mrf.mxu0
    %v7787 = vadd.f32 %v7698, %v7786
    %7788 = vmatmul.bf16.gmra.mxu0 %v7184
    %v7789 = vpop.f32.mrf.mxu0
    %v7790 = vadd.f32 %v7701, %v7789
    %v7791 = vpop.f32.mrf.mxu0
    %v7792 = vadd.f32 %v7703, %v7791
    %7793 = vmatmul.bf16.gmra.mxu0 %v7188
    %v7794 = vpop.f32.mrf.mxu0
    %v7795 = vadd.f32 %v7706, %v7794
    %v7796 = vpop.f32.mrf.mxu0
    %v7797 = vadd.f32 %v7708, %v7796
    %7798 = vmatmul.bf16.gmra.mxu0 %v7192
    %v7799 = vpop.f32.mrf.mxu0
    %v7800 = vadd.f32 %v7711, %v7799
    %v7801 = vpop.f32.mrf.mxu0
    %v7802 = vadd.f32 %v7713, %v7801
    %7803 = vmatmul.bf16.gmra.mxu0 %v7196
    %v7804 = vpop.f32.mrf.mxu0
    %v7805 = vadd.f32 %v7716, %v7804
    %v7806 = vpop.f32.mrf.mxu0
    %v7807 = vadd.f32 %v7718, %v7806
    %7808 = vmatmul.bf16.gmra.mxu0 %v7200
    %v7809 = vpop.f32.mrf.mxu0
    %v7810 = vadd.f32 %v7721, %v7809
    %v7811 = vpop.f32.mrf.mxu0
    %v7812 = vadd.f32 %v7723, %v7811
    %7813 = vmatmul.bf16.gmra.mxu0 %v7204
    %v7814 = vpop.f32.mrf.mxu0
    %v7815 = vadd.f32 %v7726, %v7814
    %v7816 = vpop.f32.mrf.mxu0
    %v7817 = vadd.f32 %v7728, %v7816
    %7818 = vmatmul.bf16.gmra.mxu0 %v7208
    %v7819 = vpop.f32.mrf.mxu0
    %v7820 = vadd.f32 %v7731, %v7819
    %v7821 = vpop.f32.mrf.mxu0
    %v7822 = vadd.f32 %v7733, %v7821
    %7823 = vmatmul.bf16.gmra.mxu0 %v7212
    %v7824 = vpop.f32.mrf.mxu0
    %v7825 = vadd.f32 %v7736, %v7824
    %v7826 = vpop.f32.mrf.mxu0
    %v7827 = vadd.f32 %v7738, %v7826
    %7828 = vdwg.mxu0
    %7829 = vst [vmem:[#allocation8] sm:$0xff] %v7750
    %7830 = vst [vmem:[#allocation8 + $0x8] sm:$0xff] %v7752
    %7831 = vst [vmem:[#allocation8 + $0x10] sm:$0xff] %v7755
    %7832 = vst [vmem:[#allocation8 + $0x18] sm:$0xff] %v7757
    %7833 = vst [vmem:[#allocation8 + $0x20] sm:$0xff] %v7760
    %7834 = vst [vmem:[#allocation8 + $0x28] sm:$0xff] %v7762
    %7835 = vst [vmem:[#allocation8 + $0x30] sm:$0xff] %v7765
    %7836 = vst [vmem:[#allocation8 + $0x38] sm:$0xff] %v7767
    %7837 = vst [vmem:[#allocation8 + $0x40] sm:$0xff] %v7770
    %7838 = vst [vmem:[#allocation8 + $0x48] sm:$0xff] %v7772
    %7839 = vst [vmem:[#allocation8 + $0x50] sm:$0xff] %v7775
    %7840 = vst [vmem:[#allocation8 + $0x58] sm:$0xff] %v7777
    %7841 = vst [vmem:[#allocation8 + $0x60] sm:$0xff] %v7780
    %7842 = vst [vmem:[#allocation8 + $0x68] sm:$0xff] %v7782
    %7843 = vst [vmem:[#allocation8 + $0x70] sm:$0xff] %v7785
    %7844 = vst [vmem:[#allocation8 + $0x78] sm:$0xff] %v7787
    %7845 = vst [vmem:[#allocation8 + $0x80] sm:$0xff] %v7790
    %7846 = vst [vmem:[#allocation8 + $0x88] sm:$0xff] %v7792
    %7847 = vst [vmem:[#allocation8 + $0x90] sm:$0xff] %v7795
    %7848 = vst [vmem:[#allocation8 + $0x98] sm:$0xff] %v7797
    %7849 = vst [vmem:[#allocation8 + $0xa0] sm:$0xff] %v7800
    %7850 = vst [vmem:[#allocation8 + $0xa8] sm:$0xff] %v7802
    %7851 = vst [vmem:[#allocation8 + $0xb0] sm:$0xff] %v7805
    %7852 = vst [vmem:[#allocation8 + $0xb8] sm:$0xff] %v7807
    %7853 = vst [vmem:[#allocation8 + $0xc0] sm:$0xff] %v7810
    %7854 = vst [vmem:[#allocation8 + $0xc8] sm:$0xff] %v7812
    %7855 = vst [vmem:[#allocation8 + $0xd0] sm:$0xff] %v7815
    %7856 = vst [vmem:[#allocation8 + $0xd8] sm:$0xff] %v7817
    %7857 = vst [vmem:[#allocation8 + $0xe0] sm:$0xff] %v7820
    %7858 = vst [vmem:[#allocation8 + $0xe8] sm:$0xff] %v7822
    %7859 = vst [vmem:[#allocation8 + $0xf0] sm:$0xff] %v7825
    %7860 = vst [vmem:[#allocation8 + $0xf8] sm:$0xff] %v7827
    // Predicated region
    $region42: #{feedforward.1} parent=1 // pred_check
      _
    $region43: #{feedforward.1} parent=1 // pred_check_branch
      %7862 = sbr.rel (0) target = $region45
    $region44: #{feedforward.1} parent=1 // pred_region
      %7864 = vsyncadd [#allocation4], 4064
      %s7865 = sshll.u32 [#allocation8], 4
      %s7866 = int_to_ptr.vmem [resolvable:$true] %s7865
      %s7867 = sshll.u32 %s7, 4
      %s7868 = int_to_ptr.hbm [resolvable:$true] %s7867
      %7873 = dma.vmem_to_hbm [thread:$0]  %s7866, 32, %s7868, [#allocation4], 32, 32, 2
    $region45: #{feedforward.1} parent=1 // pred_fallthru
      _
    // Predicated region
    $region46: #{feedforward.1} parent=1 // pred_check
      _
    $region47: #{feedforward.1} parent=1 // pred_check_branch
      %7875 = sbr.rel (0) target = $region49
    $region48: #{feedforward.1} parent=1 // pred_region
      %7877 = dma.done [#allocation4], 4096
    $region49: #{feedforward.1} parent=1 // pred_fallthru
      _
    %7878 = vsyncpa [#allocation3], 1
    %7879 = vsyncpa [#allocation6], 1
    %7880 = vsyncpa [#allocation4], 1

</llo_original>
